<compile_context>
chip_gen: v6e
topology: v6e:2x2x1
jax: 0.10.0
libtpu: 0.0.40
codegen_flags: <defaults>
</compile_context>

<pallas_src>
import functools

import jax
import jax.numpy as jnp
from jax import lax
from jax.experimental import pallas as pl
from jax.experimental.pallas import tpu as pltpu


TM = 128  # row tile per projection head (one clean MXU pass per head)


# --------------------------------------------------------------------------
# Pallas kernel: fused projection (bf16 matmul, f32 accumulate + bias)
# followed by per-row L2 normalization (f32 rsqrt), stored as bf16.
# --------------------------------------------------------------------------
def _proj_norm_kernel(src_ref, x_ref, w_ref, b_ref, o_ref):
    # src_ref: SMEM scalar-prefetch (used only by the index_maps)
    del src_ref
    x = x_ref[...]                                           # [tm, K] bf16
    w = w_ref[...]                                           # [K, N]  bf16
    y = jnp.dot(x, w, preferred_element_type=jnp.float32)    # f32 accumulate on MXU
    y = y + b_ref[...]                                       # [1, N] f32 bias broadcast
    sumsq = jnp.sum(y * y, axis=-1, keepdims=True)
    # == y / max(||y||, 1e-12): keep the clamp so padded rows stay finite.
    inv = lax.rsqrt(jnp.maximum(sumsq, 1e-24))
    o_ref[...] = (y * inv).astype(o_ref.dtype)               # bf16 store


def fused_proj_and_normalize(xs, w_stack, b_stack, *, tm=TM):
    """Fused multi-head projection + per-row L2 normalize.

    xs:       list of [M_i, K] float arrays, M_i <= tm (one entry per head)
    w_stack:  [n_src, K, N] bf16  (head i uses w_stack[i])
    b_stack:  [n_src, 1, N] f32
    returns:  [n_src*tm, N] bf16 — head i's rows live at [i*tm : i*tm+M_i];
              caller slices lazily (padded rows are junk, never copied out
              separately).
    """
    n_src, K, N = w_stack.shape
    assert len(xs) == n_src

    # Single padded activation buffer, built with dynamic_update_slice fused
    # with the bf16 cast (no per-head pad + concatenate round-trips).
    x_cat = jnp.zeros((n_src * tm, K), jnp.bfloat16)
    for i, x in enumerate(xs):
        assert x.shape[0] <= tm and x.shape[1] == K
        x_cat = lax.dynamic_update_slice(x_cat, x.astype(jnp.bfloat16), (i * tm, 0))

    src_idx = jnp.arange(n_src, dtype=jnp.int32)  # grid step i -> head i

    m_total = n_src * tm
    cost = pl.CostEstimate(
        flops=2 * m_total * K * N,
        transcendentals=m_total,                                  # one rsqrt / row
        bytes_accessed=(m_total * K * 2                           # x (bf16)
                        + n_src * K * N * 2                       # weights (bf16)
                        + n_src * N * 4                           # bias (f32)
                        + m_total * N * 2),                       # out (bf16)
    )

    out = pl.pallas_call(
        _proj_norm_kernel,
        out_shape=jax.ShapeDtypeStruct((m_total, N), jnp.bfloat16),
        grid_spec=pltpu.PrefetchScalarGridSpec(
            num_scalar_prefetch=1,
            grid=(n_src,),
            in_specs=[
                # activation row-tile for head i
                pl.BlockSpec((tm, K), lambda i, src: (i, 0)),
                # per-head weight block, selected via scalar prefetch
                pl.BlockSpec((None, K, N), lambda i, src: (src[i], 0, 0)),
                # per-head bias block
                pl.BlockSpec((None, 1, N), lambda i, src: (src[i], 0, 0)),
            ],
            out_specs=pl.BlockSpec((tm, N), lambda i, src: (i, 0)),
        ),
        compiler_params=pltpu.CompilerParams(
            # Each grid step is an independent head -> v7x megacore can place
            # one head per TensorCore.
            dimension_semantics=("parallel",),
            vmem_limit_bytes=32 * 1024 * 1024,
        ),
        cost_estimate=cost,
    )(src_idx, x_cat, w_stack, b_stack)
    return out


# --------------------------------------------------------------------------
# Plain-JAX ResNet18 backbone (deterministic synthetic weights)
# --------------------------------------------------------------------------
def _conv2d(x, w, stride, padding):
    return lax.conv_general_dilated(
        x, w,
        window_strides=(stride, stride),
        padding=((padding, padding), (padding, padding)),
        dimension_numbers=("NCHW", "OIHW", "NCHW"))


def _batchnorm(x, p):
    scale = p["weight"] / jnp.sqrt(p["var"] + 1e-5)
    shift = p["bias"] - p["mean"] * scale
    return x * scale[None, :, None, None] + shift[None, :, None, None]


def _maxpool(x, ksize=3, stride=2, pad=1):
    return lax.reduce_window(
        x, -jnp.inf, lax.max,
        window_dimensions=(1, 1, ksize, ksize),
        window_strides=(1, 1, stride, stride),
        padding=((0, 0), (0, 0), (pad, pad), (pad, pad)))


def _basic_block(x, p, stride):
    identity = x
    out = _conv2d(x, p["conv1"], stride, 1)
    out = jax.nn.relu(_batchnorm(out, p["bn1"]))
    out = _conv2d(out, p["conv2"], 1, 1)
    out = _batchnorm(out, p["bn2"])
    if "down_conv" in p:
        identity = _batchnorm(_conv2d(x, p["down_conv"], stride, 0),
                              p["down_bn"])
    return jax.nn.relu(out + identity)


def resnet18_features(x, p):
    x = _conv2d(x, p["conv1"], 2, 3)
    x = jax.nn.relu(_batchnorm(x, p["bn1"]))
    x = _maxpool(x)
    strides = [1, 2, 2, 2]
    for layer, stride in zip(p["layers"], strides):
        for b_idx, bp in enumerate(layer):
            x = _basic_block(x, bp, stride if b_idx == 0 else 1)
    return x  # [B, 512, H/32, W/32]


# --------------------------------------------------------------------------
# Deterministic parameter initialization
# --------------------------------------------------------------------------
def _kaiming_conv(key, out_c, in_c, kh, kw):
    fan_out = out_c * kh * kw
    std = (2.0 / fan_out) ** 0.5
    return std * jax.random.normal(key, (out_c, in_c, kh, kw), jnp.float32)


def _bn_params(key, c):
    return {"weight": 1.0 + 0.02 * jax.random.normal(key, (c,), jnp.float32),
            "bias": jnp.zeros((c,), jnp.float32),
            "mean": jnp.zeros((c,), jnp.float32),
            "var": jnp.ones((c,), jnp.float32)}


def init_resnet18(key, in_channels):
    keys = iter(jax.random.split(key, 64))
    p = {"conv1": _kaiming_conv(next(keys), 64, in_channels, 7, 7),
         "bn1": _bn_params(next(keys), 64)}
    layers = []
    in_c = 64
    for out_c, stride in [(64, 1), (128, 2), (256, 2), (512, 2)]:
        blocks = []
        for b in range(2):
            s = stride if b == 0 else 1
            bp = {"conv1": _kaiming_conv(next(keys), out_c, in_c, 3, 3),
                  "bn1": _bn_params(next(keys), out_c),
                  "conv2": _kaiming_conv(next(keys), out_c, out_c, 3, 3),
                  "bn2": _bn_params(next(keys), out_c)}
            if s != 1 or in_c != out_c:
                bp["down_conv"] = _kaiming_conv(next(keys), out_c, in_c, 1, 1)
                bp["down_bn"] = _bn_params(next(keys), out_c)
            blocks.append(bp)
            in_c = out_c
        layers.append(blocks)
    p["layers"] = layers
    return p


def init_ezvsl_params(key, dim=2048):
    k_img, k_aud, k_ip, k_ipb, k_ap, k_apb = jax.random.split(key, 6)
    # img_proj: Conv2d(512, dim, 1x1), kaiming_normal fan_out -> std sqrt(2/dim)
    img_w = (2.0 / dim) ** 0.5 * jax.random.normal(k_ip, (512, dim), jnp.float32)
    img_b = (1.0 / 512 ** 0.5) * jax.random.uniform(
        k_ipb, (dim,), jnp.float32, minval=-1.0, maxval=1.0)
    # aud_proj: Linear(512, dim), trunc_normal std=0.01
    aud_w = 0.01 * jax.random.truncated_normal(
        k_ap, -2.0, 2.0, (512, dim), jnp.float32)
    aud_b = (1.0 / 512 ** 0.5) * jax.random.uniform(
        k_apb, (dim,), jnp.float32, minval=-1.0, maxval=1.0)
    params = {
        "imgnet": init_resnet18(k_img, 3),
        "audnet": init_resnet18(k_aud, 1),
        # Projection weights pre-transposed to [512, dim], stacked (0=img, 1=aud),
        # stored bf16 to halve the dominant HBM weight DMA of the kernel.
        "proj_w": jnp.stack([img_w, aud_w]).astype(jnp.bfloat16),  # [2, 512, dim]
        "proj_b": jnp.stack([img_b.reshape(1, dim),
                             aud_b.reshape(1, dim)]),              # [2, 1, dim] f32
    }
    return params


# --------------------------------------------------------------------------
# EZVSL forward
# --------------------------------------------------------------------------
@functools.partial(jax.jit, static_argnames=())
def ezvsl_forward(image, audio, params):
    # imgnet (avgpool=Identity, fc=Identity): flatten + unflatten back -> [B,512,7,7]
    img_feat = resnet18_features(image, params["imgnet"])        # [B,512,7,7]
    B, C, H, W = img_feat.shape
    x_img = jnp.transpose(img_feat, (0, 2, 3, 1)).reshape(B * H * W, C)

    # audnet: AdaptiveMaxPool2d((1,1)) -> global max over spatial, then Linear.
    aud_feat = resnet18_features(audio, params["audnet"])        # [B,512,h,w]
    x_aud = jnp.max(aud_feat, axis=(2, 3))                       # [B,512]

    # Both projection heads in ONE fused Pallas call (scalar-prefetch selects
    # the weight/bias block per 128-row tile). Output is padded; slice lazily.
    out = fused_proj_and_normalize(
        [x_img, x_aud], params["proj_w"], params["proj_b"], tm=TM)
    img_flat = out[:B * H * W]                                   # [B*H*W, dim] bf16
    aud = out[TM:TM + B]                                         # [B, dim]     bf16

    # Restore the NCHW layout the PyTorch module returns (small: [2,2048,7,7]).
    img = jnp.transpose(img_flat.reshape(B, H, W, -1), (0, 3, 1, 2))
    return img, aud


if __name__ == "__main__":
    key = jax.random.PRNGKey(0)
    k_params, k_img, k_aud = jax.random.split(key, 3)

    params = init_ezvsl_params(k_params, dim=2048)

    # image must be 224x224 so the backbone yields the 512x7x7 feature map
    # implied by `unflatten(1, (512, 7, 7))`; audio is a small spectrogram.
    image = jax.random.normal(k_img, (2, 3, 224, 224), jnp.float32)
    audio = jax.random.normal(k_aud, (2, 1, 64, 64), jnp.float32)

    img_out, aud_out = ezvsl_forward(image, audio, params)
    img_out = jax.block_until_ready(img_out)
    aud_out = jax.block_until_ready(aud_out)

    assert img_out.shape == (2, 2048, 7, 7), img_out.shape
    assert aud_out.shape == (2, 2048), aud_out.shape
    # each channel-vector should be unit-norm after F.normalize(dim=1)
    # (norms computed in f32; outputs themselves are bf16 embeddings)
    img_f32 = img_out.astype(jnp.float32)
    aud_f32 = aud_out.astype(jnp.float32)
    img_norms = jnp.sqrt(jnp.sum(img_f32 ** 2, axis=1))
    aud_norms = jnp.sqrt(jnp.sum(aud_f32 ** 2, axis=1))
    assert jnp.allclose(img_norms, 1.0, atol=5e-3), img_norms
    assert jnp.allclose(aud_norms, 1.0, atol=5e-3), aud_norms
    assert bool(jnp.all(jnp.isfinite(img_f32))) and bool(jnp.all(jnp.isfinite(aud_f32)))

    print("KERNEL_OK")
</pallas_src>

<mosaic_0001>
module attributes {stable_mosaic.version = 11 : i64} {
  func.func @_proj_norm_kernel(%arg0: i32, %arg1: memref<2xi32, #tpu.memory_space<smem>>, %arg2: memref<128x512xbf16, #tpu.memory_space<vmem>>, %arg3: memref<1x512x2048xbf16, #tpu.memory_space<vmem>>, %arg4: memref<1x1x2048xf32, #tpu.memory_space<vmem>>, %arg5: memref<128x2048xbf16, #tpu.memory_space<vmem>>) attributes {dimension_semantics = [#tpu.dimension_semantics<parallel>], iteration_bounds = array<i64: 2>, scalar_prefetch = 1 : i64, scratch_operands = 0 : i64, tpu.core_type = #tpu.core_type<tc>, window_params = [{transform_indices = @transform_0, window_bounds = array<i64: 128, 512>}, {transform_indices = @transform_1, window_bounds = array<i64: 1, 512, 2048>}, {transform_indices = @transform_2, window_bounds = array<i64: 1, 1, 2048>}, {transform_indices = @transform_3, window_bounds = array<i64: 128, 2048>}]} {
    %c0 = arith.constant 0 : index
    %c0_0 = arith.constant 0 : index
    %0 = vector.load %arg2[%c0, %c0_0] : memref<128x512xbf16, #tpu.memory_space<vmem>>, vector<128x512xbf16>
    %c0_1 = arith.constant 0 : index
    %c0_2 = arith.constant 0 : index
    %c0_3 = arith.constant 0 : index
    %1 = vector.load %arg3[%c0_1, %c0_2, %c0_3] : memref<1x512x2048xbf16, #tpu.memory_space<vmem>>, vector<1x512x2048xbf16>
    %2 = vector.shape_cast %1 : vector<1x512x2048xbf16> to vector<512x2048xbf16>
    %cst = arith.constant dense<0.000000e+00> : vector<128x2048xf32>
    %3 = tpu.matmul %0, %2, %cst {dimension_numbers = #tpu.dot_dimension_numbers<[1], [0], [0], [1], [0, 0, 1, 1], [], []>} : vector<128x512xbf16>, vector<512x2048xbf16>, vector<128x2048xf32> -> vector<128x2048xf32>
    %c0_4 = arith.constant 0 : index
    %c0_5 = arith.constant 0 : index
    %c0_6 = arith.constant 0 : index
    %4 = vector.load %arg4[%c0_4, %c0_5, %c0_6] : memref<1x1x2048xf32, #tpu.memory_space<vmem>>, vector<1x1x2048xf32>
    %5 = vector.shape_cast %4 : vector<1x1x2048xf32> to vector<1x2048xf32>
    %6 = vector.broadcast %5 : vector<1x2048xf32> to vector<128x2048xf32>
    %7 = arith.addf %3, %6 : vector<128x2048xf32>
    %8 = arith.mulf %7, %7 : vector<128x2048xf32>
    %cst_7 = arith.constant dense<0.000000e+00> : vector<128xf32>
    %9 = vector.multi_reduction <add>, %8, %cst_7 [1] : vector<128x2048xf32> to vector<128xf32>
    %10 = vector.shape_cast %9 : vector<128xf32> to vector<128x1xf32>
    %cst_8 = arith.constant 1.000000e-24 : f32
    %11 = vector.broadcast %cst_8 : f32 to vector<128x1xf32>
    %12 = arith.maximumf %10, %11 : vector<128x1xf32>
    %13 = math.rsqrt %12 : vector<128x1xf32>
    %14 = vector.broadcast %13 : vector<128x1xf32> to vector<128x2048xf32>
    %15 = arith.mulf %7, %14 : vector<128x2048xf32>
    %16 = arith.truncf %15 : vector<128x2048xf32> to vector<128x2048xbf16>
    %c0_9 = arith.constant 0 : index
    %c0_10 = arith.constant 0 : index
    %17 = vector.load %arg5[%c0_9, %c0_10] : memref<128x2048xbf16, #tpu.memory_space<vmem>>, vector<128x2048xbf16>
    tpu.vector_store %arg5[%c0_9, %c0_10], %16 {strides = array<i32>} : memref<128x2048xbf16, #tpu.memory_space<vmem>>, vector<128x2048xbf16>,
    return
  }
  func.func @transform_0(%arg0: i32, %arg1: memref<2xi32, #tpu.memory_space<smem>>) -> (i32, i32) {
    %c0_i32 = arith.constant 0 : i32
    %c0_i32_0 = arith.constant 0 : i32
    return %arg0, %c0_i32 : i32, i32
  }
  func.func @transform_1(%arg0: i32, %arg1: memref<2xi32, #tpu.memory_space<smem>>) -> (i32, i32, i32) {
    %0 = arith.index_cast %arg0 : i32 to index
    %1 = memref.load %arg1[%0] : memref<2xi32, #tpu.memory_space<smem>>
    %c0_i32 = arith.constant 0 : i32
    %c0_i32_0 = arith.constant 0 : i32
    %c0_i32_1 = arith.constant 0 : i32
    return %1, %c0_i32, %c0_i32_0 : i32, i32, i32
  }
  func.func @transform_2(%arg0: i32, %arg1: memref<2xi32, #tpu.memory_space<smem>>) -> (i32, i32, i32) {
    %0 = arith.index_cast %arg0 : i32 to index
    %1 = memref.load %arg1[%0] : memref<2xi32, #tpu.memory_space<smem>>
    %c0_i32 = arith.constant 0 : i32
    %c0_i32_0 = arith.constant 0 : i32
    %c0_i32_1 = arith.constant 0 : i32
    return %1, %c0_i32, %c0_i32_0 : i32, i32, i32
  }
  func.func @transform_3(%arg0: i32, %arg1: memref<2xi32, #tpu.memory_space<smem>>) -> (i32, i32) {
    %c0_i32 = arith.constant 0 : i32
    %c0_i32_0 = arith.constant 0 : i32
    return %arg0, %c0_i32 : i32, i32
  }
}

</mosaic_0001>

<llo_original>
// kernel: reverse
$region0: #{reverse}
  #allocation0 [shape = 's32[1]{0}', space=sflag, size = 0x4, scoped, tag = 'scoped memory for reverse']
  %s0 = inlined_call_operand.vmem [shape: f32[512,512,3,3], index: 0, kind: input, shape index: {}]
  %s1 = inlined_call_operand.vmem [shape: bf16[512,512,3,3], index: 1, kind: output, shape index: {}]
  loop: start=0, step=1, limit=28
  $region2: #{reverse} parent=0 // loop_pre_header
    _
  $region3: #{reverse} parent=0 // loop_header
    %s3 = sphi 0, %s7
    %p4 = scmp.ge.s32.totalorder %s3, 28
    %s18 = sphi 0, %s76
    %s19 = sphi 0, %s72
    %s20 = sphi 0, %s68
    %s21 = sphi 0, %s64
    %s22 = sphi 0, %s18
    %s23 = sphi 0, %s19
    %s24 = sphi 0, %s20
    %s25 = sphi 0, %s21
    %s26 = sphi 0, %s22
    %s27 = sphi 0, %s23
    %s28 = sphi 0, %s24
    %s29 = sphi 0, %s25
    %s30 = sphi 0, %s26
    %s31 = sphi 0, %s27
    %s32 = sphi 0, %s28
    %s33 = sphi 0, %s29
    %s34 = sphi 0, %s30
    %s35 = sphi 0, %s31
    %s36 = sphi 0, %s32
    %s37 = sphi 0, %s33
    %s38 = sphi 0, %s34
    %s39 = sphi 0, %s35
    %s40 = sphi 0, %s36
    %s41 = sphi 0, %s37
    %s42 = sphi 0, %s38
    %s43 = sphi 0, %s39
    %s44 = sphi 0, %s40
    %s45 = sphi 0, %s41
    %s46 = sphi 0, %s42
    %s47 = sphi 0, %s43
    %s48 = sphi 0, %s44
    %s49 = sphi 0, %s45
    %s50 = sphi 0, %s46
    %s51 = sphi 0, %s47
    %s52 = sphi 0, %s48
    %s53 = sphi 0, %s49
    %s54 = sphi 0, %s50
    %s55 = sphi 0, %s51
    %s56 = sphi 0, %s52
    %s57 = sphi 0, %s53
    %s58 = sphi 0, %s54
    %s59 = sphi 0, %s55
    %s60 = sphi 0, %s56
    %s61 = sphi 0, %s57
  $region4: #{reverse} parent=0 // loop_header_branch
    %6 = sbr.rel (%p4) target = $region8
  $region5: #{reverse} parent=0 // loop_body
    %s8 = ssub.s32 %s3, 1
    %s9 = ssub.s32 %s3, 2
    %s10 = ssub.s32 %s3, 3
    %s11 = ssub.s32 %s3, 4
    %s12 = ssub.s32 %s3, 5
    %s13 = ssub.s32 %s3, 6
    %s14 = ssub.s32 %s3, 7
    %s15 = ssub.s32 %s3, 8
    %s16 = ssub.s32 %s3, 9
    %s17 = ssub.s32 %s3, 10
    %s62 = sadd.s32 1, %s21
    %p63 = scmp.ge.s32.totalorder %s62, 1
    %s64 = scalar_select %p63, 0, %s62
    %s65 = sadd.s32 1, %s20
    %s66 = scalar_select %p63, %s65, %s20
    %p67 = scmp.ge.s32.totalorder %s66, 2
    %s68 = scalar_select %p67, 0, %s66
    %s69 = sadd.s32 1, %s19
    %s70 = scalar_select %p67, %s69, %s19
    %p71 = scmp.ge.s32.totalorder %s70, 3
    %s72 = scalar_select %p71, 0, %s70
    %s73 = sadd.s32 1, %s18
    %s74 = scalar_select %p71, %s73, %s18
    %p75 = scmp.ge.s32.totalorder %s74, 3
    %s76 = scalar_select %p75, 0, %s74
    %p77 = scmp.le.s32.totalorder 5, %s3
    %p78 = scmp.lt.s32.totalorder %s3, 23
    %p79 = pnand %p77, %p78
    %p80 = pneg %p79
    // Predicated region
    $region9: #{reverse} parent=5 // pred_check
      _
    $region10: #{reverse} parent=5 // pred_check_branch
      %82 = sbr.rel (%p79) target = $region12
    $region11: #{reverse} parent=5 // pred_region
      %s83 = ssub.s32 %s3, 5
    $region12: #{reverse} parent=5 // pred_fallthru
      _
    %p84 = scmp.lt.s32.totalorder %s3, 18
    // Predicated region
    $region13: #{reverse} parent=5 // pred_check
      %p85 = pneg %p84
    $region14: #{reverse} parent=5 // pred_check_branch
      %87 = sbr.rel (%p85) target = $region16
    $region15: #{reverse} parent=5 // pred_region
      %s88 = ssub.s32 2, %s18
      %s89 = ssub.s32 2, %s19
      %s90 = smul.u32 32, %s20
      %s91 = smul.u32 4, %s21
      %p92 = scmp.lt.s32.totalorder %s88, 2
      %s93 = scalar_select %p92, %s88, 2
      %p94 = scmp.lt.s32.totalorder %s89, 2
      %s95 = scalar_select %p94, %s89, 2
      %p96 = scmp.lt.s32.totalorder %s90, 63
      %s97 = scalar_select %p96, %s90, 63
      %p98 = scmp.lt.s32.totalorder %s91, 3
      %s99 = scalar_select %p98, %s91, 3
      %s100 = smul.addr %s97, 4
      %s101 = sadd.s32 %s99, %s100
      %s102 = smul.addr %s95, 256
      %s103 = sadd.s32 %s101, %s102
      %s104 = smul.addr %s93, 768
      %s105 = sadd.s32 %s103, %s104
      %s106 = smul.addr %s105, 8
      %s107 = scalar_lea.vmem %s0, %s106
      %s108 = ssub.s32 2, %s18
      %s109 = ssub.s32 2, %s19
      %s110 = smul.u32 32, %s20
      %s111 = smul.u32 4, %s21
    $region16: #{reverse} parent=5 // pred_fallthru
      _
    %p112 = scmp.le.s32.totalorder 5, %s3
    %p113 = scmp.lt.s32.totalorder %s3, 23
    %p114 = pnand %p112, %p113
    %p115 = pneg %p114
    // Predicated region
    $region17: #{reverse} parent=5 // pred_check
      _
    $region18: #{reverse} parent=5 // pred_check_branch
      %117 = sbr.rel (%p114) target = $region20
    $region19: #{reverse} parent=5 // pred_region
      %s118 = ssub.s32 %s3, 5
      %s119 = ssub.s32 2, %s38
      %s120 = ssub.s32 2, %s39
      %s121 = smul.u32 32, %s40
      %s122 = smul.u32 4, %s41
      %p123 = scmp.lt.s32.totalorder %s119, 2
      %s124 = scalar_select %p123, %s119, 2
      %p125 = scmp.lt.s32.totalorder %s120, 2
      %s126 = scalar_select %p125, %s120, 2
      %p127 = scmp.lt.s32.totalorder %s121, 63
      %s128 = scalar_select %p127, %s121, 63
      %p129 = scmp.lt.s32.totalorder %s122, 3
      %s130 = scalar_select %p129, %s122, 3
      %s131 = smul.addr %s128, 4
      %s132 = sadd.s32 %s130, %s131
      %s133 = smul.addr %s126, 256
      %s134 = sadd.s32 %s132, %s133
      %s135 = smul.addr %s124, 768
      %s136 = sadd.s32 %s134, %s135
      %s137 = smul.addr %s136, 8
      %s138 = scalar_lea.vmem %s0, %s137
      %s139 = smul.u32 32, %s40
      %s140 = smul.u32 4, %s41
      %p141 = scmp.lt.s32.totalorder %s38, 2
      %s142 = scalar_select %p141, %s38, 2
      %p143 = scmp.lt.s32.totalorder %s39, 2
      %s144 = scalar_select %p143, %s39, 2
      %p145 = scmp.lt.s32.totalorder %s139, 63
      %s146 = scalar_select %p145, %s139, 63
      %p147 = scmp.lt.s32.totalorder %s140, 3
      %s148 = scalar_select %p147, %s140, 3
      %s149 = smul.addr %s146, 4
      %s150 = sadd.s32 %s148, %s149
      %s151 = smul.addr %s144, 256
      %s152 = sadd.s32 %s150, %s151
      %s153 = smul.addr %s142, 768
      %s154 = sadd.s32 %s152, %s153
      %s155 = smul.addr %s154, 4
      %s156 = scalar_lea.vmem %s1, %s155
      %s157 = smul.u32 32, %s40
      %s158 = smul.u32 4, %s41
      %s159 = ssub.s32 2, %s38
      %s160 = ssub.s32 2, %s39
      %s161 = smul.u32 32, %s40
      %s162 = smul.u32 4, %s41
      %p163 = scmp.lt.s32.totalorder %s159, 2
      %s164 = scalar_select %p163, %s159, 2
      %p165 = scmp.lt.s32.totalorder %s160, 2
      %s166 = scalar_select %p165, %s160, 2
      %p167 = scmp.lt.s32.totalorder %s161, 63
      %s168 = scalar_select %p167, %s161, 63
      %p169 = scmp.lt.s32.totalorder %s162, 3
      %s170 = scalar_select %p169, %s162, 3
      %s171 = smul.addr %s168, 4
      %s172 = sadd.s32 %s170, %s171
      %s173 = smul.addr %s166, 256
      %s174 = sadd.s32 %s172, %s173
      %s175 = smul.addr %s164, 768
      %s176 = sadd.s32 %s174, %s175
      %s177 = smul.addr %s176, 8
      %s178 = scalar_lea.vmem %s0, %s177
      %s179 = ssub.s32 2, %s38
      %s180 = ssub.s32 2, %s39
      %s181 = smul.u32 32, %s40
      %s182 = smul.u32 4, %s41
      %s183 = smul.u32 32, %s40
      %s184 = smul.u32 4, %s41
      %p185 = scmp.lt.s32.totalorder %s38, 2
      %s186 = scalar_select %p185, %s38, 2
      %p187 = scmp.lt.s32.totalorder %s39, 2
      %s188 = scalar_select %p187, %s39, 2
      %p189 = scmp.lt.s32.totalorder %s183, 63
      %s190 = scalar_select %p189, %s183, 63
      %p191 = scmp.lt.s32.totalorder %s184, 3
      %s192 = scalar_select %p191, %s184, 3
      %s193 = smul.addr %s190, 4
      %s194 = sadd.s32 %s192, %s193
      %s195 = smul.addr %s188, 256
      %s196 = sadd.s32 %s194, %s195
      %s197 = smul.addr %s186, 768
      %s198 = sadd.s32 %s196, %s197
      %s199 = smul.addr %s198, 4
      %s200 = scalar_lea.vmem %s1, %s199
      %s201 = smul.u32 32, %s40
      %s202 = smul.u32 4, %s41
      %v203 = vld [vmem:[%s178] sm:$0xff]
      %s204 = scalar_lea.vmem %s178, 32
      %v205 = vld [vmem:[%s204] sm:$0xff]
      %s206 = scalar_lea.vmem %s200, 16
      %s207 = scalar_lea.vmem %s178, 64
      %v208 = vld [vmem:[%s207] sm:$0xff]
      %s209 = scalar_lea.vmem %s200, 32
      %s210 = scalar_lea.vmem %s178, 96
      %v211 = vld [vmem:[%s210] sm:$0xff]
      %s212 = scalar_lea.vmem %s200, 48
      %s213 = scalar_lea.vmem %s178, 128
      %v214 = vld [vmem:[%s213] sm:$0xff]
      %s215 = scalar_lea.vmem %s200, 64
      %s216 = scalar_lea.vmem %s178, 160
      %v217 = vld [vmem:[%s216] sm:$0xff]
      %s218 = scalar_lea.vmem %s200, 80
      %s219 = scalar_lea.vmem %s178, 192
      %v220 = vld [vmem:[%s219] sm:$0xff]
      %s221 = scalar_lea.vmem %s200, 96
      %s222 = scalar_lea.vmem %s178, 224
      %v223 = vld [vmem:[%s222] sm:$0xff]
      %s224 = scalar_lea.vmem %s200, 112
      %s225 = scalar_lea.vmem %s178, 256
      %v226 = vld [vmem:[%s225] sm:$0xff]
      %s227 = scalar_lea.vmem %s200, 128
      %s228 = scalar_lea.vmem %s178, 288
      %v229 = vld [vmem:[%s228] sm:$0xff]
      %s230 = scalar_lea.vmem %s200, 144
      %s231 = scalar_lea.vmem %s178, 320
      %v232 = vld [vmem:[%s231] sm:$0xff]
      %s233 = scalar_lea.vmem %s200, 160
      %s234 = scalar_lea.vmem %s178, 352
      %v235 = vld [vmem:[%s234] sm:$0xff]
      %s236 = scalar_lea.vmem %s200, 176
      %s237 = scalar_lea.vmem %s178, 384
      %v238 = vld [vmem:[%s237] sm:$0xff]
      %s239 = scalar_lea.vmem %s200, 192
      %s240 = scalar_lea.vmem %s178, 416
      %v241 = vld [vmem:[%s240] sm:$0xff]
      %s242 = scalar_lea.vmem %s200, 208
      %s243 = scalar_lea.vmem %s178, 448
      %v244 = vld [vmem:[%s243] sm:$0xff]
      %s245 = scalar_lea.vmem %s200, 224
      %s246 = scalar_lea.vmem %s178, 480
      %v247 = vld [vmem:[%s246] sm:$0xff]
      %s248 = scalar_lea.vmem %s200, 240
      %s249 = scalar_lea.vmem %s178, 512
      %v250 = vld [vmem:[%s249] sm:$0xff]
      %s251 = scalar_lea.vmem %s200, 256
      %s252 = scalar_lea.vmem %s178, 544
      %v253 = vld [vmem:[%s252] sm:$0xff]
      %s254 = scalar_lea.vmem %s200, 272
      %s255 = scalar_lea.vmem %s178, 576
      %v256 = vld [vmem:[%s255] sm:$0xff]
      %s257 = scalar_lea.vmem %s200, 288
      %s258 = scalar_lea.vmem %s178, 608
      %v259 = vld [vmem:[%s258] sm:$0xff]
      %s260 = scalar_lea.vmem %s200, 304
      %s261 = scalar_lea.vmem %s178, 640
      %v262 = vld [vmem:[%s261] sm:$0xff]
      %s263 = scalar_lea.vmem %s200, 320
      %s264 = scalar_lea.vmem %s178, 672
      %v265 = vld [vmem:[%s264] sm:$0xff]
      %s266 = scalar_lea.vmem %s200, 336
      %s267 = scalar_lea.vmem %s178, 704
      %v268 = vld [vmem:[%s267] sm:$0xff]
      %s269 = scalar_lea.vmem %s200, 352
      %s270 = scalar_lea.vmem %s178, 736
      %v271 = vld [vmem:[%s270] sm:$0xff]
      %s272 = scalar_lea.vmem %s200, 368
      %s273 = scalar_lea.vmem %s178, 768
      %v274 = vld [vmem:[%s273] sm:$0xff]
      %s275 = scalar_lea.vmem %s200, 384
      %s276 = scalar_lea.vmem %s178, 800
      %v277 = vld [vmem:[%s276] sm:$0xff]
      %s278 = scalar_lea.vmem %s200, 400
      %s279 = scalar_lea.vmem %s178, 832
      %v280 = vld [vmem:[%s279] sm:$0xff]
      %s281 = scalar_lea.vmem %s200, 416
      %s282 = scalar_lea.vmem %s178, 864
      %v283 = vld [vmem:[%s282] sm:$0xff]
      %s284 = scalar_lea.vmem %s200, 432
      %s285 = scalar_lea.vmem %s178, 896
      %v286 = vld [vmem:[%s285] sm:$0xff]
      %s287 = scalar_lea.vmem %s200, 448
      %s288 = scalar_lea.vmem %s178, 928
      %v289 = vld [vmem:[%s288] sm:$0xff]
      %s290 = scalar_lea.vmem %s200, 464
      %s291 = scalar_lea.vmem %s178, 960
      %v292 = vld [vmem:[%s291] sm:$0xff]
      %s293 = scalar_lea.vmem %s200, 480
      %s294 = scalar_lea.vmem %s178, 992
      %v295 = vld [vmem:[%s294] sm:$0xff]
      %s296 = scalar_lea.vmem %s200, 496
      %s297 = scalar_lea.vmem %s178, 8
      %v298 = vld [vmem:[%s297] sm:$0xff]
      %s299 = scalar_lea.vmem %s200, 4
      %s301 = ssub.s32 0, 4
      %s302 = scalar_lea.vmem %s299, %s301
      %v303 = vpack.c.bf16 %v298, %v203
      %304 = vst [vmem:[%s302] sm:$0xff] %v303
      %s305 = scalar_lea.vmem %s178, 40
      %v306 = vld [vmem:[%s305] sm:$0xff]
      %s307 = scalar_lea.vmem %s200, 20
      %s309 = ssub.s32 0, 4
      %s310 = scalar_lea.vmem %s307, %s309
      %v311 = vpack.c.bf16 %v306, %v205
      %312 = vst [vmem:[%s310] sm:$0xff] %v311
      %s313 = scalar_lea.vmem %s178, 72
      %v314 = vld [vmem:[%s313] sm:$0xff]
      %s315 = scalar_lea.vmem %s200, 36
      %s317 = ssub.s32 0, 4
      %s318 = scalar_lea.vmem %s315, %s317
      %v319 = vpack.c.bf16 %v314, %v208
      %320 = vst [vmem:[%s318] sm:$0xff] %v319
      %s321 = scalar_lea.vmem %s178, 104
      %v322 = vld [vmem:[%s321] sm:$0xff]
      %s323 = scalar_lea.vmem %s200, 52
      %s325 = ssub.s32 0, 4
      %s326 = scalar_lea.vmem %s323, %s325
      %v327 = vpack.c.bf16 %v322, %v211
      %328 = vst [vmem:[%s326] sm:$0xff] %v327
      %s329 = scalar_lea.vmem %s178, 136
      %v330 = vld [vmem:[%s329] sm:$0xff]
      %s331 = scalar_lea.vmem %s200, 68
      %s333 = ssub.s32 0, 4
      %s334 = scalar_lea.vmem %s331, %s333
      %v335 = vpack.c.bf16 %v330, %v214
      %336 = vst [vmem:[%s334] sm:$0xff] %v335
      %s337 = scalar_lea.vmem %s178, 168
      %v338 = vld [vmem:[%s337] sm:$0xff]
      %s339 = scalar_lea.vmem %s200, 84
      %s341 = ssub.s32 0, 4
      %s342 = scalar_lea.vmem %s339, %s341
      %v343 = vpack.c.bf16 %v338, %v217
      %344 = vst [vmem:[%s342] sm:$0xff] %v343
      %s345 = scalar_lea.vmem %s178, 200
      %v346 = vld [vmem:[%s345] sm:$0xff]
      %s347 = scalar_lea.vmem %s200, 100
      %s349 = ssub.s32 0, 4
      %s350 = scalar_lea.vmem %s347, %s349
      %v351 = vpack.c.bf16 %v346, %v220
      %352 = vst [vmem:[%s350] sm:$0xff] %v351
      %s353 = scalar_lea.vmem %s178, 232
      %v354 = vld [vmem:[%s353] sm:$0xff]
      %s355 = scalar_lea.vmem %s200, 116
      %s357 = ssub.s32 0, 4
      %s358 = scalar_lea.vmem %s355, %s357
      %v359 = vpack.c.bf16 %v354, %v223
      %360 = vst [vmem:[%s358] sm:$0xff] %v359
      %s361 = scalar_lea.vmem %s178, 264
      %v362 = vld [vmem:[%s361] sm:$0xff]
      %s363 = scalar_lea.vmem %s200, 132
      %s365 = ssub.s32 0, 4
      %s366 = scalar_lea.vmem %s363, %s365
      %v367 = vpack.c.bf16 %v362, %v226
      %368 = vst [vmem:[%s366] sm:$0xff] %v367
      %s369 = scalar_lea.vmem %s178, 296
      %v370 = vld [vmem:[%s369] sm:$0xff]
      %s371 = scalar_lea.vmem %s200, 148
      %s373 = ssub.s32 0, 4
      %s374 = scalar_lea.vmem %s371, %s373
      %v375 = vpack.c.bf16 %v370, %v229
      %376 = vst [vmem:[%s374] sm:$0xff] %v375
      %s377 = scalar_lea.vmem %s178, 328
      %v378 = vld [vmem:[%s377] sm:$0xff]
      %s379 = scalar_lea.vmem %s200, 164
      %s381 = ssub.s32 0, 4
      %s382 = scalar_lea.vmem %s379, %s381
      %v383 = vpack.c.bf16 %v378, %v232
      %384 = vst [vmem:[%s382] sm:$0xff] %v383
      %s385 = scalar_lea.vmem %s178, 360
      %v386 = vld [vmem:[%s385] sm:$0xff]
      %s387 = scalar_lea.vmem %s200, 180
      %s389 = ssub.s32 0, 4
      %s390 = scalar_lea.vmem %s387, %s389
      %v391 = vpack.c.bf16 %v386, %v235
      %392 = vst [vmem:[%s390] sm:$0xff] %v391
      %s393 = scalar_lea.vmem %s178, 392
      %v394 = vld [vmem:[%s393] sm:$0xff]
      %s395 = scalar_lea.vmem %s200, 196
      %s397 = ssub.s32 0, 4
      %s398 = scalar_lea.vmem %s395, %s397
      %v399 = vpack.c.bf16 %v394, %v238
      %400 = vst [vmem:[%s398] sm:$0xff] %v399
      %s401 = scalar_lea.vmem %s178, 424
      %v402 = vld [vmem:[%s401] sm:$0xff]
      %s403 = scalar_lea.vmem %s200, 212
      %s405 = ssub.s32 0, 4
      %s406 = scalar_lea.vmem %s403, %s405
      %v407 = vpack.c.bf16 %v402, %v241
      %408 = vst [vmem:[%s406] sm:$0xff] %v407
      %s409 = scalar_lea.vmem %s178, 456
      %v410 = vld [vmem:[%s409] sm:$0xff]
      %s411 = scalar_lea.vmem %s200, 228
      %s413 = ssub.s32 0, 4
      %s414 = scalar_lea.vmem %s411, %s413
      %v415 = vpack.c.bf16 %v410, %v244
      %416 = vst [vmem:[%s414] sm:$0xff] %v415
      %s417 = scalar_lea.vmem %s178, 488
      %v418 = vld [vmem:[%s417] sm:$0xff]
      %s419 = scalar_lea.vmem %s200, 244
      %s421 = ssub.s32 0, 4
      %s422 = scalar_lea.vmem %s419, %s421
      %v423 = vpack.c.bf16 %v418, %v247
      %424 = vst [vmem:[%s422] sm:$0xff] %v423
      %s425 = scalar_lea.vmem %s178, 520
      %v426 = vld [vmem:[%s425] sm:$0xff]
      %s427 = scalar_lea.vmem %s200, 260
      %s429 = ssub.s32 0, 4
      %s430 = scalar_lea.vmem %s427, %s429
      %v431 = vpack.c.bf16 %v426, %v250
      %432 = vst [vmem:[%s430] sm:$0xff] %v431
      %s433 = scalar_lea.vmem %s178, 552
      %v434 = vld [vmem:[%s433] sm:$0xff]
      %s435 = scalar_lea.vmem %s200, 276
      %s437 = ssub.s32 0, 4
      %s438 = scalar_lea.vmem %s435, %s437
      %v439 = vpack.c.bf16 %v434, %v253
      %440 = vst [vmem:[%s438] sm:$0xff] %v439
      %s441 = scalar_lea.vmem %s178, 584
      %v442 = vld [vmem:[%s441] sm:$0xff]
      %s443 = scalar_lea.vmem %s200, 292
      %s445 = ssub.s32 0, 4
      %s446 = scalar_lea.vmem %s443, %s445
      %v447 = vpack.c.bf16 %v442, %v256
      %448 = vst [vmem:[%s446] sm:$0xff] %v447
      %s449 = scalar_lea.vmem %s178, 616
      %v450 = vld [vmem:[%s449] sm:$0xff]
      %s451 = scalar_lea.vmem %s200, 308
      %s453 = ssub.s32 0, 4
      %s454 = scalar_lea.vmem %s451, %s453
      %v455 = vpack.c.bf16 %v450, %v259
      %456 = vst [vmem:[%s454] sm:$0xff] %v455
      %s457 = scalar_lea.vmem %s178, 648
      %v458 = vld [vmem:[%s457] sm:$0xff]
      %s459 = scalar_lea.vmem %s200, 324
      %s461 = ssub.s32 0, 4
      %s462 = scalar_lea.vmem %s459, %s461
      %v463 = vpack.c.bf16 %v458, %v262
      %464 = vst [vmem:[%s462] sm:$0xff] %v463
      %s465 = scalar_lea.vmem %s178, 680
      %v466 = vld [vmem:[%s465] sm:$0xff]
      %s467 = scalar_lea.vmem %s200, 340
      %s469 = ssub.s32 0, 4
      %s470 = scalar_lea.vmem %s467, %s469
      %v471 = vpack.c.bf16 %v466, %v265
      %472 = vst [vmem:[%s470] sm:$0xff] %v471
      %s473 = scalar_lea.vmem %s178, 712
      %v474 = vld [vmem:[%s473] sm:$0xff]
      %s475 = scalar_lea.vmem %s200, 356
      %s477 = ssub.s32 0, 4
      %s478 = scalar_lea.vmem %s475, %s477
      %v479 = vpack.c.bf16 %v474, %v268
      %480 = vst [vmem:[%s478] sm:$0xff] %v479
      %s481 = scalar_lea.vmem %s178, 744
      %v482 = vld [vmem:[%s481] sm:$0xff]
      %s483 = scalar_lea.vmem %s200, 372
      %s485 = ssub.s32 0, 4
      %s486 = scalar_lea.vmem %s483, %s485
      %v487 = vpack.c.bf16 %v482, %v271
      %488 = vst [vmem:[%s486] sm:$0xff] %v487
      %s489 = scalar_lea.vmem %s178, 776
      %v490 = vld [vmem:[%s489] sm:$0xff]
      %s491 = scalar_lea.vmem %s200, 388
      %s493 = ssub.s32 0, 4
      %s494 = scalar_lea.vmem %s491, %s493
      %v495 = vpack.c.bf16 %v490, %v274
      %496 = vst [vmem:[%s494] sm:$0xff] %v495
      %s497 = scalar_lea.vmem %s178, 808
      %v498 = vld [vmem:[%s497] sm:$0xff]
      %s499 = scalar_lea.vmem %s200, 404
      %s501 = ssub.s32 0, 4
      %s502 = scalar_lea.vmem %s499, %s501
      %v503 = vpack.c.bf16 %v498, %v277
      %504 = vst [vmem:[%s502] sm:$0xff] %v503
      %s505 = scalar_lea.vmem %s178, 840
      %v506 = vld [vmem:[%s505] sm:$0xff]
      %s507 = scalar_lea.vmem %s200, 420
      %s509 = ssub.s32 0, 4
      %s510 = scalar_lea.vmem %s507, %s509
      %v511 = vpack.c.bf16 %v506, %v280
      %512 = vst [vmem:[%s510] sm:$0xff] %v511
      %s513 = scalar_lea.vmem %s178, 872
      %v514 = vld [vmem:[%s513] sm:$0xff]
      %s515 = scalar_lea.vmem %s200, 436
      %s517 = ssub.s32 0, 4
      %s518 = scalar_lea.vmem %s515, %s517
      %v519 = vpack.c.bf16 %v514, %v283
      %520 = vst [vmem:[%s518] sm:$0xff] %v519
      %s521 = scalar_lea.vmem %s178, 904
      %v522 = vld [vmem:[%s521] sm:$0xff]
      %s523 = scalar_lea.vmem %s200, 452
      %s525 = ssub.s32 0, 4
      %s526 = scalar_lea.vmem %s523, %s525
      %v527 = vpack.c.bf16 %v522, %v286
      %528 = vst [vmem:[%s526] sm:$0xff] %v527
      %s529 = scalar_lea.vmem %s178, 936
      %v530 = vld [vmem:[%s529] sm:$0xff]
      %s531 = scalar_lea.vmem %s200, 468
      %s533 = ssub.s32 0, 4
      %s534 = scalar_lea.vmem %s531, %s533
      %v535 = vpack.c.bf16 %v530, %v289
      %536 = vst [vmem:[%s534] sm:$0xff] %v535
      %s537 = scalar_lea.vmem %s178, 968
      %v538 = vld [vmem:[%s537] sm:$0xff]
      %s539 = scalar_lea.vmem %s200, 484
      %s541 = ssub.s32 0, 4
      %s542 = scalar_lea.vmem %s539, %s541
      %v543 = vpack.c.bf16 %v538, %v292
      %544 = vst [vmem:[%s542] sm:$0xff] %v543
      %s545 = scalar_lea.vmem %s178, 1000
      %v546 = vld [vmem:[%s545] sm:$0xff]
      %s547 = scalar_lea.vmem %s200, 500
      %s549 = ssub.s32 0, 4
      %s550 = scalar_lea.vmem %s547, %s549
      %v551 = vpack.c.bf16 %v546, %v295
      %552 = vst [vmem:[%s550] sm:$0xff] %v551
      %s553 = scalar_lea.vmem %s178, 16
      %v554 = vld [vmem:[%s553] sm:$0xff]
      %s555 = scalar_lea.vmem %s200, 8
      %s556 = scalar_lea.vmem %s178, 48
      %v557 = vld [vmem:[%s556] sm:$0xff]
      %s558 = scalar_lea.vmem %s200, 24
      %s559 = scalar_lea.vmem %s178, 80
      %v560 = vld [vmem:[%s559] sm:$0xff]
      %s561 = scalar_lea.vmem %s200, 40
      %s562 = scalar_lea.vmem %s178, 112
      %v563 = vld [vmem:[%s562] sm:$0xff]
      %s564 = scalar_lea.vmem %s200, 56
      %s565 = scalar_lea.vmem %s178, 144
      %v566 = vld [vmem:[%s565] sm:$0xff]
      %s567 = scalar_lea.vmem %s200, 72
      %s568 = scalar_lea.vmem %s178, 176
      %v569 = vld [vmem:[%s568] sm:$0xff]
      %s570 = scalar_lea.vmem %s200, 88
      %s571 = scalar_lea.vmem %s178, 208
      %v572 = vld [vmem:[%s571] sm:$0xff]
      %s573 = scalar_lea.vmem %s200, 104
      %s574 = scalar_lea.vmem %s178, 240
      %v575 = vld [vmem:[%s574] sm:$0xff]
      %s576 = scalar_lea.vmem %s200, 120
      %s577 = scalar_lea.vmem %s178, 272
      %v578 = vld [vmem:[%s577] sm:$0xff]
      %s579 = scalar_lea.vmem %s200, 136
      %s580 = scalar_lea.vmem %s178, 304
      %v581 = vld [vmem:[%s580] sm:$0xff]
      %s582 = scalar_lea.vmem %s200, 152
      %s583 = scalar_lea.vmem %s178, 336
      %v584 = vld [vmem:[%s583] sm:$0xff]
      %s585 = scalar_lea.vmem %s200, 168
      %s586 = scalar_lea.vmem %s178, 368
      %v587 = vld [vmem:[%s586] sm:$0xff]
      %s588 = scalar_lea.vmem %s200, 184
      %s589 = scalar_lea.vmem %s178, 400
      %v590 = vld [vmem:[%s589] sm:$0xff]
      %s591 = scalar_lea.vmem %s200, 200
      %s592 = scalar_lea.vmem %s178, 432
      %v593 = vld [vmem:[%s592] sm:$0xff]
      %s594 = scalar_lea.vmem %s200, 216
      %s595 = scalar_lea.vmem %s178, 464
      %v596 = vld [vmem:[%s595] sm:$0xff]
      %s597 = scalar_lea.vmem %s200, 232
      %s598 = scalar_lea.vmem %s178, 496
      %v599 = vld [vmem:[%s598] sm:$0xff]
      %s600 = scalar_lea.vmem %s200, 248
      %s601 = scalar_lea.vmem %s178, 528
      %v602 = vld [vmem:[%s601] sm:$0xff]
      %s603 = scalar_lea.vmem %s200, 264
      %s604 = scalar_lea.vmem %s178, 560
      %v605 = vld [vmem:[%s604] sm:$0xff]
      %s606 = scalar_lea.vmem %s200, 280
      %s607 = scalar_lea.vmem %s178, 592
      %v608 = vld [vmem:[%s607] sm:$0xff]
      %s609 = scalar_lea.vmem %s200, 296
      %s610 = scalar_lea.vmem %s178, 624
      %v611 = vld [vmem:[%s610] sm:$0xff]
      %s612 = scalar_lea.vmem %s200, 312
      %s613 = scalar_lea.vmem %s178, 656
      %v614 = vld [vmem:[%s613] sm:$0xff]
      %s615 = scalar_lea.vmem %s200, 328
      %s616 = scalar_lea.vmem %s178, 688
      %v617 = vld [vmem:[%s616] sm:$0xff]
      %s618 = scalar_lea.vmem %s200, 344
      %s619 = scalar_lea.vmem %s178, 720
      %v620 = vld [vmem:[%s619] sm:$0xff]
      %s621 = scalar_lea.vmem %s200, 360
      %s622 = scalar_lea.vmem %s178, 752
      %v623 = vld [vmem:[%s622] sm:$0xff]
      %s624 = scalar_lea.vmem %s200, 376
      %s625 = scalar_lea.vmem %s178, 784
      %v626 = vld [vmem:[%s625] sm:$0xff]
      %s627 = scalar_lea.vmem %s200, 392
      %s628 = scalar_lea.vmem %s178, 816
      %v629 = vld [vmem:[%s628] sm:$0xff]
      %s630 = scalar_lea.vmem %s200, 408
      %s631 = scalar_lea.vmem %s178, 848
      %v632 = vld [vmem:[%s631] sm:$0xff]
      %s633 = scalar_lea.vmem %s200, 424
      %s634 = scalar_lea.vmem %s178, 880
      %v635 = vld [vmem:[%s634] sm:$0xff]
      %s636 = scalar_lea.vmem %s200, 440
      %s637 = scalar_lea.vmem %s178, 912
      %v638 = vld [vmem:[%s637] sm:$0xff]
      %s639 = scalar_lea.vmem %s200, 456
      %s640 = scalar_lea.vmem %s178, 944
      %v641 = vld [vmem:[%s640] sm:$0xff]
      %s642 = scalar_lea.vmem %s200, 472
      %s643 = scalar_lea.vmem %s178, 976
      %v644 = vld [vmem:[%s643] sm:$0xff]
      %s645 = scalar_lea.vmem %s200, 488
      %s646 = scalar_lea.vmem %s178, 1008
      %v647 = vld [vmem:[%s646] sm:$0xff]
      %s648 = scalar_lea.vmem %s200, 504
      %s649 = scalar_lea.vmem %s178, 24
      %v650 = vld [vmem:[%s649] sm:$0xff]
      %s651 = scalar_lea.vmem %s200, 12
      %s653 = ssub.s32 0, 4
      %s654 = scalar_lea.vmem %s651, %s653
      %v655 = vpack.c.bf16 %v650, %v554
      %656 = vst [vmem:[%s654] sm:$0xff] %v655
      %s657 = scalar_lea.vmem %s178, 56
      %v658 = vld [vmem:[%s657] sm:$0xff]
      %s659 = scalar_lea.vmem %s200, 28
      %s661 = ssub.s32 0, 4
      %s662 = scalar_lea.vmem %s659, %s661
      %v663 = vpack.c.bf16 %v658, %v557
      %664 = vst [vmem:[%s662] sm:$0xff] %v663
      %s665 = scalar_lea.vmem %s178, 88
      %v666 = vld [vmem:[%s665] sm:$0xff]
      %s667 = scalar_lea.vmem %s200, 44
      %s669 = ssub.s32 0, 4
      %s670 = scalar_lea.vmem %s667, %s669
      %v671 = vpack.c.bf16 %v666, %v560
      %672 = vst [vmem:[%s670] sm:$0xff] %v671
      %s673 = scalar_lea.vmem %s178, 120
      %v674 = vld [vmem:[%s673] sm:$0xff]
      %s675 = scalar_lea.vmem %s200, 60
      %s677 = ssub.s32 0, 4
      %s678 = scalar_lea.vmem %s675, %s677
      %v679 = vpack.c.bf16 %v674, %v563
      %680 = vst [vmem:[%s678] sm:$0xff] %v679
      %s681 = scalar_lea.vmem %s178, 152
      %v682 = vld [vmem:[%s681] sm:$0xff]
      %s683 = scalar_lea.vmem %s200, 76
      %s685 = ssub.s32 0, 4
      %s686 = scalar_lea.vmem %s683, %s685
      %v687 = vpack.c.bf16 %v682, %v566
      %688 = vst [vmem:[%s686] sm:$0xff] %v687
      %s689 = scalar_lea.vmem %s178, 184
      %v690 = vld [vmem:[%s689] sm:$0xff]
      %s691 = scalar_lea.vmem %s200, 92
      %s693 = ssub.s32 0, 4
      %s694 = scalar_lea.vmem %s691, %s693
      %v695 = vpack.c.bf16 %v690, %v569
      %696 = vst [vmem:[%s694] sm:$0xff] %v695
      %s697 = scalar_lea.vmem %s178, 216
      %v698 = vld [vmem:[%s697] sm:$0xff]
      %s699 = scalar_lea.vmem %s200, 108
      %s701 = ssub.s32 0, 4
      %s702 = scalar_lea.vmem %s699, %s701
      %v703 = vpack.c.bf16 %v698, %v572
      %704 = vst [vmem:[%s702] sm:$0xff] %v703
      %s705 = scalar_lea.vmem %s178, 248
      %v706 = vld [vmem:[%s705] sm:$0xff]
      %s707 = scalar_lea.vmem %s200, 124
      %s709 = ssub.s32 0, 4
      %s710 = scalar_lea.vmem %s707, %s709
      %v711 = vpack.c.bf16 %v706, %v575
      %712 = vst [vmem:[%s710] sm:$0xff] %v711
      %s713 = scalar_lea.vmem %s178, 280
      %v714 = vld [vmem:[%s713] sm:$0xff]
      %s715 = scalar_lea.vmem %s200, 140
      %s717 = ssub.s32 0, 4
      %s718 = scalar_lea.vmem %s715, %s717
      %v719 = vpack.c.bf16 %v714, %v578
      %720 = vst [vmem:[%s718] sm:$0xff] %v719
      %s721 = scalar_lea.vmem %s178, 312
      %v722 = vld [vmem:[%s721] sm:$0xff]
      %s723 = scalar_lea.vmem %s200, 156
      %s725 = ssub.s32 0, 4
      %s726 = scalar_lea.vmem %s723, %s725
      %v727 = vpack.c.bf16 %v722, %v581
      %728 = vst [vmem:[%s726] sm:$0xff] %v727
      %s729 = scalar_lea.vmem %s178, 344
      %v730 = vld [vmem:[%s729] sm:$0xff]
      %s731 = scalar_lea.vmem %s200, 172
      %s733 = ssub.s32 0, 4
      %s734 = scalar_lea.vmem %s731, %s733
      %v735 = vpack.c.bf16 %v730, %v584
      %736 = vst [vmem:[%s734] sm:$0xff] %v735
      %s737 = scalar_lea.vmem %s178, 376
      %v738 = vld [vmem:[%s737] sm:$0xff]
      %s739 = scalar_lea.vmem %s200, 188
      %s741 = ssub.s32 0, 4
      %s742 = scalar_lea.vmem %s739, %s741
      %v743 = vpack.c.bf16 %v738, %v587
      %744 = vst [vmem:[%s742] sm:$0xff] %v743
      %s745 = scalar_lea.vmem %s178, 408
      %v746 = vld [vmem:[%s745] sm:$0xff]
      %s747 = scalar_lea.vmem %s200, 204
      %s749 = ssub.s32 0, 4
      %s750 = scalar_lea.vmem %s747, %s749
      %v751 = vpack.c.bf16 %v746, %v590
      %752 = vst [vmem:[%s750] sm:$0xff] %v751
      %s753 = scalar_lea.vmem %s178, 440
      %v754 = vld [vmem:[%s753] sm:$0xff]
      %s755 = scalar_lea.vmem %s200, 220
      %s757 = ssub.s32 0, 4
      %s758 = scalar_lea.vmem %s755, %s757
      %v759 = vpack.c.bf16 %v754, %v593
      %760 = vst [vmem:[%s758] sm:$0xff] %v759
      %s761 = scalar_lea.vmem %s178, 472
      %v762 = vld [vmem:[%s761] sm:$0xff]
      %s763 = scalar_lea.vmem %s200, 236
      %s765 = ssub.s32 0, 4
      %s766 = scalar_lea.vmem %s763, %s765
      %v767 = vpack.c.bf16 %v762, %v596
      %768 = vst [vmem:[%s766] sm:$0xff] %v767
      %s769 = scalar_lea.vmem %s178, 504
      %v770 = vld [vmem:[%s769] sm:$0xff]
      %s771 = scalar_lea.vmem %s200, 252
      %s773 = ssub.s32 0, 4
      %s774 = scalar_lea.vmem %s771, %s773
      %v775 = vpack.c.bf16 %v770, %v599
      %776 = vst [vmem:[%s774] sm:$0xff] %v775
      %s777 = scalar_lea.vmem %s178, 536
      %v778 = vld [vmem:[%s777] sm:$0xff]
      %s779 = scalar_lea.vmem %s200, 268
      %s781 = ssub.s32 0, 4
      %s782 = scalar_lea.vmem %s779, %s781
      %v783 = vpack.c.bf16 %v778, %v602
      %784 = vst [vmem:[%s782] sm:$0xff] %v783
      %s785 = scalar_lea.vmem %s178, 568
      %v786 = vld [vmem:[%s785] sm:$0xff]
      %s787 = scalar_lea.vmem %s200, 284
      %s789 = ssub.s32 0, 4
      %s790 = scalar_lea.vmem %s787, %s789
      %v791 = vpack.c.bf16 %v786, %v605
      %792 = vst [vmem:[%s790] sm:$0xff] %v791
      %s793 = scalar_lea.vmem %s178, 600
      %v794 = vld [vmem:[%s793] sm:$0xff]
      %s795 = scalar_lea.vmem %s200, 300
      %s797 = ssub.s32 0, 4
      %s798 = scalar_lea.vmem %s795, %s797
      %v799 = vpack.c.bf16 %v794, %v608
      %800 = vst [vmem:[%s798] sm:$0xff] %v799
      %s801 = scalar_lea.vmem %s178, 632
      %v802 = vld [vmem:[%s801] sm:$0xff]
      %s803 = scalar_lea.vmem %s200, 316
      %s805 = ssub.s32 0, 4
      %s806 = scalar_lea.vmem %s803, %s805
      %v807 = vpack.c.bf16 %v802, %v611
      %808 = vst [vmem:[%s806] sm:$0xff] %v807
      %s809 = scalar_lea.vmem %s178, 664
      %v810 = vld [vmem:[%s809] sm:$0xff]
      %s811 = scalar_lea.vmem %s200, 332
      %s813 = ssub.s32 0, 4
      %s814 = scalar_lea.vmem %s811, %s813
      %v815 = vpack.c.bf16 %v810, %v614
      %816 = vst [vmem:[%s814] sm:$0xff] %v815
      %s817 = scalar_lea.vmem %s178, 696
      %v818 = vld [vmem:[%s817] sm:$0xff]
      %s819 = scalar_lea.vmem %s200, 348
      %s821 = ssub.s32 0, 4
      %s822 = scalar_lea.vmem %s819, %s821
      %v823 = vpack.c.bf16 %v818, %v617
      %824 = vst [vmem:[%s822] sm:$0xff] %v823
      %s825 = scalar_lea.vmem %s178, 728
      %v826 = vld [vmem:[%s825] sm:$0xff]
      %s827 = scalar_lea.vmem %s200, 364
      %s829 = ssub.s32 0, 4
      %s830 = scalar_lea.vmem %s827, %s829
      %v831 = vpack.c.bf16 %v826, %v620
      %832 = vst [vmem:[%s830] sm:$0xff] %v831
      %s833 = scalar_lea.vmem %s178, 760
      %v834 = vld [vmem:[%s833] sm:$0xff]
      %s835 = scalar_lea.vmem %s200, 380
      %s837 = ssub.s32 0, 4
      %s838 = scalar_lea.vmem %s835, %s837
      %v839 = vpack.c.bf16 %v834, %v623
      %840 = vst [vmem:[%s838] sm:$0xff] %v839
      %s841 = scalar_lea.vmem %s178, 792
      %v842 = vld [vmem:[%s841] sm:$0xff]
      %s843 = scalar_lea.vmem %s200, 396
      %s845 = ssub.s32 0, 4
      %s846 = scalar_lea.vmem %s843, %s845
      %v847 = vpack.c.bf16 %v842, %v626
      %848 = vst [vmem:[%s846] sm:$0xff] %v847
      %s849 = scalar_lea.vmem %s178, 824
      %v850 = vld [vmem:[%s849] sm:$0xff]
      %s851 = scalar_lea.vmem %s200, 412
      %s853 = ssub.s32 0, 4
      %s854 = scalar_lea.vmem %s851, %s853
      %v855 = vpack.c.bf16 %v850, %v629
      %856 = vst [vmem:[%s854] sm:$0xff] %v855
      %s857 = scalar_lea.vmem %s178, 856
      %v858 = vld [vmem:[%s857] sm:$0xff]
      %s859 = scalar_lea.vmem %s200, 428
      %s861 = ssub.s32 0, 4
      %s862 = scalar_lea.vmem %s859, %s861
      %v863 = vpack.c.bf16 %v858, %v632
      %864 = vst [vmem:[%s862] sm:$0xff] %v863
      %s865 = scalar_lea.vmem %s178, 888
      %v866 = vld [vmem:[%s865] sm:$0xff]
      %s867 = scalar_lea.vmem %s200, 444
      %s869 = ssub.s32 0, 4
      %s870 = scalar_lea.vmem %s867, %s869
      %v871 = vpack.c.bf16 %v866, %v635
      %872 = vst [vmem:[%s870] sm:$0xff] %v871
      %s873 = scalar_lea.vmem %s178, 920
      %v874 = vld [vmem:[%s873] sm:$0xff]
      %s875 = scalar_lea.vmem %s200, 460
      %s877 = ssub.s32 0, 4
      %s878 = scalar_lea.vmem %s875, %s877
      %v879 = vpack.c.bf16 %v874, %v638
      %880 = vst [vmem:[%s878] sm:$0xff] %v879
      %s881 = scalar_lea.vmem %s178, 952
      %v882 = vld [vmem:[%s881] sm:$0xff]
      %s883 = scalar_lea.vmem %s200, 476
      %s885 = ssub.s32 0, 4
      %s886 = scalar_lea.vmem %s883, %s885
      %v887 = vpack.c.bf16 %v882, %v641
      %888 = vst [vmem:[%s886] sm:$0xff] %v887
      %s889 = scalar_lea.vmem %s178, 984
      %v890 = vld [vmem:[%s889] sm:$0xff]
      %s891 = scalar_lea.vmem %s200, 492
      %s893 = ssub.s32 0, 4
      %s894 = scalar_lea.vmem %s891, %s893
      %v895 = vpack.c.bf16 %v890, %v644
      %896 = vst [vmem:[%s894] sm:$0xff] %v895
      %s897 = scalar_lea.vmem %s178, 1016
      %v898 = vld [vmem:[%s897] sm:$0xff]
      %s899 = scalar_lea.vmem %s200, 508
      %s901 = ssub.s32 0, 4
      %s902 = scalar_lea.vmem %s899, %s901
      %v903 = vpack.c.bf16 %v898, %v647
      %904 = vst [vmem:[%s902] sm:$0xff] %v903
      %s905 = smul.u32 32, %s40
      %s906 = smul.u32 4, %s41
      %p907 = scmp.lt.s32.totalorder %s38, 2
      %s908 = scalar_select %p907, %s38, 2
      %p909 = scmp.lt.s32.totalorder %s39, 2
      %s910 = scalar_select %p909, %s39, 2
      %p911 = scmp.lt.s32.totalorder %s905, 63
      %s912 = scalar_select %p911, %s905, 63
      %p913 = scmp.lt.s32.totalorder %s906, 3
      %s914 = scalar_select %p913, %s906, 3
      %s915 = smul.addr %s912, 4
      %s916 = sadd.s32 %s914, %s915
      %s917 = smul.addr %s910, 256
      %s918 = sadd.s32 %s916, %s917
      %s919 = smul.addr %s908, 768
      %s920 = sadd.s32 %s918, %s919
      %s921 = smul.addr %s920, 4
      %s922 = scalar_lea.vmem %s1, %s921
      %s923 = smul.u32 32, %s40
      %s924 = smul.u32 4, %s41
    $region20: #{reverse} parent=5 // pred_fallthru
      _
    %p925 = scmp.le.s32.totalorder 10, %s3
    // Predicated region
    $region21: #{reverse} parent=5 // pred_check
      %p926 = pneg %p925
    $region22: #{reverse} parent=5 // pred_check_branch
      %928 = sbr.rel (%p926) target = $region24
    $region23: #{reverse} parent=5 // pred_region
      %s929 = ssub.s32 %s3, 10
      %s930 = smul.u32 32, %s60
      %s931 = smul.u32 4, %s61
      %p932 = scmp.lt.s32.totalorder %s58, 2
      %s933 = scalar_select %p932, %s58, 2
      %p934 = scmp.lt.s32.totalorder %s59, 2
      %s935 = scalar_select %p934, %s59, 2
      %p936 = scmp.lt.s32.totalorder %s930, 63
      %s937 = scalar_select %p936, %s930, 63
      %p938 = scmp.lt.s32.totalorder %s931, 3
      %s939 = scalar_select %p938, %s931, 3
      %s940 = smul.addr %s937, 4
      %s941 = sadd.s32 %s939, %s940
      %s942 = smul.addr %s935, 256
      %s943 = sadd.s32 %s941, %s942
      %s944 = smul.addr %s933, 768
      %s945 = sadd.s32 %s943, %s944
      %s946 = smul.addr %s945, 4
      %s947 = scalar_lea.vmem %s1, %s946
    $region24: #{reverse} parent=5 // pred_fallthru
      _
  $region6: #{reverse} parent=0 // loop_footer
    %s7 = sadd.s32 1, %s3
  $region7: #{reverse} parent=0 // loop_footer_branch
    %2 = sbr.rel target = $region3
  $region8: #{reverse} parent=0 // loop_exit
    _

// kernel: ezvsl_forward.1
$region0: #{ezvsl_forward.1}
  #allocation0 [shape = 'u32[]', space=smem, size = 0x4, offset = 0x4, fixed_abs, tag = 'smem constant byte address 0x4 - core index']
  #allocation1 [shape = 'u32[144,128]{1,0:T(1,128)}', space=vmem, size = 0x12000, scoped, tag = 'internal scratch']
  #allocation2 [shape = 's32[1]{0}', space=sflag, size = 0x4, scoped, tag = 'scoped memory for ezvsl_forward.1']
  #allocation3 [shape = 'u8[512]{0}', space=smem, size = 0x200, scoped, tag = 'prefetched SMEM operand 0']
  %s0 = inlined_call_operand.vmem [shape: s32[2], index: 0, kind: input, shape index: {}]
  %s1 = inlined_call_operand.vmem [shape: bf16[256,512], index: 1, kind: input, shape index: {}]
  %s2 = inlined_call_operand.vmem [shape: bf16[2,512,2048], index: 2, kind: input, shape index: {}]
  %s3 = inlined_call_operand.vmem [shape: f32[2,1,2048], index: 3, kind: input, shape index: {}]
  %s4 = inlined_call_operand.vmem [shape: bf16[256,2048], index: 4, kind: output, shape index: {}]
  %s5 = sld [smem:[#allocation0]]
  $region45: #{ezvsl_forward.1} parent=0
    _
  %s7 = ssub.s32 1, %s5
  %s8 = scalar_select 0, %s7, %s5
  %s9 = sshll.u32 %s0, 4
  %s10 = int_to_ptr.vmem [resolvable:$true] %s9
  %12 = dma.vmem_to_smem %s10, 16, [#allocation3], [#allocation2]
  %13 = dma.done [#allocation2], 16
  %14 = sfence
  loop: start=0, step=1, limit=4
  $region2: #{ezvsl_forward.1} parent=0 // loop_pre_header
    _
  $region3: #{ezvsl_forward.1} parent=0 // loop_header
    %s16 = sphi 0, %s20
    %p17 = scmp.ge.s32.totalorder %s16, 4
    %s26 = sphi 0, %s28
    %s29 = sphi 0, %s26
    %s30 = sphi 0, %s29
    %s46 = sphi 0, %s30
    %s54 = sphi 0, %s56
    %s57 = sphi 0, %s54
    %s58 = sphi 0, %s57
    %s74 = sphi 0, %s58
    %s82 = sphi 0, %s84
    %s85 = sphi 0, %s82
    %s86 = sphi 0, %s85
    %s102 = sphi 0, %s86
    %s108 = sphi 0, %s110
    %s111 = sphi 0, %s108
    %s112 = sphi 0, %s111
    %s128 = sphi 0, %s112
  $region4: #{ezvsl_forward.1} parent=0 // loop_header_branch
    %19 = sbr.rel (%p17) target = $region8
  $region5: #{ezvsl_forward.1} parent=0 // loop_body
    %s21 = ssub.s32 %s16, 1
    %s22 = ssub.s32 %s16, 2
    %s23 = sadd.s32 %s16, 1
    %s24 = ssub.s32 %s16, %s23
    %p25 = scmp.eq.s32.totalorder %s24, 0
    %s27 = sadd.s32 %s26, 1
    %s28 = scalar_select %p25, %s26, %s27
    %p31 = pneg %p25
    %p32 = scmp.eq.s32.totalorder %s16, 1
    %p33 = por %p31, %p32
    %p34 = scmp.ne.s32.totalorder %s26, %s29
    %p35 = scmp.eq.s32.totalorder %s16, 0
    %p36 = por %p34, %p35
    %p37 = scmp.ne.s32.totalorder %s26, %s29
    %p38 = scmp.eq.s32.totalorder %s21, 1
    %p39 = por %p37, %p38
    %p40 = scmp.ne.s32.totalorder %s29, %s30
    %p41 = scmp.eq.s32.totalorder %s21, 0
    %p42 = por %p40, %p41
    %p43 = scmp.ne.s32.totalorder %s29, %s30
    %p44 = scmp.eq.s32.totalorder %s22, 1
    %p45 = por %p43, %p44
    %p47 = scmp.ne.s32.totalorder %s30, %s46
    %p48 = scmp.eq.s32.totalorder %s22, 0
    %p49 = por %p47, %p48
    %s50 = sld [smem:[#allocation3 + %s16]]
    %s51 = sld [smem:[#allocation3 + %s23]]
    %s52 = ssub.s32 %s50, %s51
    %p53 = scmp.eq.s32.totalorder %s52, 0
    %s55 = sadd.s32 %s54, 1
    %s56 = scalar_select %p53, %s54, %s55
    %p59 = pneg %p53
    %p60 = scmp.eq.s32.totalorder %s16, 1
    %p61 = por %p59, %p60
    %p62 = scmp.ne.s32.totalorder %s54, %s57
    %p63 = scmp.eq.s32.totalorder %s16, 0
    %p64 = por %p62, %p63
    %p65 = scmp.ne.s32.totalorder %s54, %s57
    %p66 = scmp.eq.s32.totalorder %s21, 1
    %p67 = por %p65, %p66
    %p68 = scmp.ne.s32.totalorder %s57, %s58
    %p69 = scmp.eq.s32.totalorder %s21, 0
    %p70 = por %p68, %p69
    %p71 = scmp.ne.s32.totalorder %s57, %s58
    %p72 = scmp.eq.s32.totalorder %s22, 1
    %p73 = por %p71, %p72
    %p75 = scmp.ne.s32.totalorder %s58, %s74
    %p76 = scmp.eq.s32.totalorder %s22, 0
    %p77 = por %p75, %p76
    %s78 = sld [smem:[#allocation3 + %s16]]
    %s79 = sld [smem:[#allocation3 + %s23]]
    %s80 = ssub.s32 %s78, %s79
    %p81 = scmp.eq.s32.totalorder %s80, 0
    %s83 = sadd.s32 %s82, 1
    %s84 = scalar_select %p81, %s82, %s83
    %p87 = pneg %p81
    %p88 = scmp.eq.s32.totalorder %s16, 1
    %p89 = por %p87, %p88
    %p90 = scmp.ne.s32.totalorder %s82, %s85
    %p91 = scmp.eq.s32.totalorder %s16, 0
    %p92 = por %p90, %p91
    %p93 = scmp.ne.s32.totalorder %s82, %s85
    %p94 = scmp.eq.s32.totalorder %s21, 1
    %p95 = por %p93, %p94
    %p96 = scmp.ne.s32.totalorder %s85, %s86
    %p97 = scmp.eq.s32.totalorder %s21, 0
    %p98 = por %p96, %p97
    %p99 = scmp.ne.s32.totalorder %s85, %s86
    %p100 = scmp.eq.s32.totalorder %s22, 1
    %p101 = por %p99, %p100
    %p103 = scmp.ne.s32.totalorder %s86, %s102
    %p104 = scmp.eq.s32.totalorder %s22, 0
    %p105 = por %p103, %p104
    %s106 = ssub.s32 %s16, %s23
    %p107 = scmp.eq.s32.totalorder %s106, 0
    %s109 = sadd.s32 %s108, 1
    %s110 = scalar_select %p107, %s108, %s109
    %p113 = pneg %p107
    %p114 = scmp.eq.s32.totalorder %s16, 1
    %p115 = por %p113, %p114
    %p116 = scmp.ne.s32.totalorder %s108, %s111
    %p117 = scmp.eq.s32.totalorder %s16, 0
    %p118 = por %p116, %p117
    %p119 = scmp.ne.s32.totalorder %s108, %s111
    %p120 = scmp.eq.s32.totalorder %s21, 1
    %p121 = por %p119, %p120
    %p122 = scmp.ne.s32.totalorder %s111, %s112
    %p123 = scmp.eq.s32.totalorder %s21, 0
    %p124 = por %p122, %p123
    %p125 = scmp.ne.s32.totalorder %s111, %s112
    %p126 = scmp.eq.s32.totalorder %s22, 1
    %p127 = por %p125, %p126
    %p129 = scmp.ne.s32.totalorder %s112, %s128
    %p130 = scmp.eq.s32.totalorder %s22, 0
    %p131 = por %p129, %p130
    %p132 = scmp.le.s32.totalorder 1, %s16
    %p133 = scmp.lt.s32.totalorder %s16, 3
    %p134 = pnand %p132, %p133
    %p135 = pneg %p134
    // Predicated region
    $region9: #{ezvsl_forward.1} parent=5 // pred_check
      _
    $region10: #{ezvsl_forward.1} parent=5 // pred_check_branch
      %137 = sbr.rel (%p134) target = $region12
    $region11: #{ezvsl_forward.1} parent=5 // pred_region
      %s138 = ssub.s32 %s16, 1
    $region12: #{ezvsl_forward.1} parent=5 // pred_fallthru
      _
    %p139 = scmp.lt.s32.totalorder %s16, 2
    // Predicated region
    $region13: #{ezvsl_forward.1} parent=5 // pred_check
      %p140 = pneg %p139
    $region14: #{ezvsl_forward.1} parent=5 // pred_check_branch
      %142 = sbr.rel (%p140) target = $region16
    $region15: #{ezvsl_forward.1} parent=5 // pred_region
      // Predicated region
      $region17: #{ezvsl_forward.1} parent=15 // pred_check
        %p143 = pneg %p36
      $region18: #{ezvsl_forward.1} parent=15 // pred_check_branch
        %145 = sbr.rel (%p143) target = $region20
      $region19: #{ezvsl_forward.1} parent=15 // pred_region
        %s146 = smul.u32 16, %s16
        %p147 = scmp.lt.s32.totalorder %s146, 31
        %s148 = scalar_select %p147, %s146, 31
        %s149 = smul.addr %s148, 4
        %s150 = smul.addr %s149, 4
        %s151 = scalar_lea.vmem %s1, %s150
        %s152 = smul.u32 16, %s16
      $region20: #{ezvsl_forward.1} parent=15 // pred_fallthru
        _
      // Predicated region
      $region21: #{ezvsl_forward.1} parent=15 // pred_check
        %p153 = pneg %p64
      $region22: #{ezvsl_forward.1} parent=15 // pred_check_branch
        %155 = sbr.rel (%p153) target = $region24
      $region23: #{ezvsl_forward.1} parent=15 // pred_region
        %s156 = sld [smem:[#allocation3 + %s16]]
        %p157 = scmp.lt.s32.totalorder %s156, 1
        %s158 = scalar_select %p157, %s156, 1
        %s159 = smul.addr %s158, 1024
        %s160 = smul.addr %s159, 4
        %s161 = scalar_lea.vmem %s2, %s160
        %s162 = sld [smem:[#allocation3 + %s16]]
      $region24: #{ezvsl_forward.1} parent=15 // pred_fallthru
        _
      // Predicated region
      $region25: #{ezvsl_forward.1} parent=15 // pred_check
        %p163 = pneg %p92
      $region26: #{ezvsl_forward.1} parent=15 // pred_check_branch
        %165 = sbr.rel (%p163) target = $region28
      $region27: #{ezvsl_forward.1} parent=15 // pred_region
        %s166 = sld [smem:[#allocation3 + %s16]]
        %p167 = scmp.lt.s32.totalorder %s166, 1
        %s168 = scalar_select %p167, %s166, 1
        %s169 = smul.addr %s168, 16
        %s170 = scalar_lea.vmem %s3, %s169
        %s171 = sld [smem:[#allocation3 + %s16]]
      $region28: #{ezvsl_forward.1} parent=15 // pred_fallthru
        _
    $region16: #{ezvsl_forward.1} parent=5 // pred_fallthru
      _
    %p172 = scmp.le.s32.totalorder 1, %s16
    %p173 = scmp.lt.s32.totalorder %s16, 3
    %p174 = pnand %p172, %p173
    %p175 = pneg %p174
    // Predicated region
    $region29: #{ezvsl_forward.1} parent=5 // pred_check
      _
    $region30: #{ezvsl_forward.1} parent=5 // pred_check_branch
      %177 = sbr.rel (%p174) target = $region32
    $region31: #{ezvsl_forward.1} parent=5 // pred_region
      %s178 = ssub.s32 %s16, 1
      %s179 = smul.u32 16, %s21
      %p180 = scmp.lt.s32.totalorder %s179, 31
      %s181 = scalar_select %p180, %s179, 31
      %s182 = smul.addr %s181, 4
      %s183 = smul.addr %s182, 4
      %s184 = scalar_lea.vmem %s1, %s183
      %p185 = pneg %p42
      %p186 = pneg %p39
      %s187 = sld [smem:[#allocation3 + %s21]]
      %p188 = scmp.lt.s32.totalorder %s187, 1
      %s189 = scalar_select %p188, %s187, 1
      %s190 = smul.addr %s189, 1024
      %s191 = smul.addr %s190, 4
      %s192 = scalar_lea.vmem %s2, %s191
      %p193 = pneg %p70
      %p194 = pneg %p67
      %s195 = sld [smem:[#allocation3 + %s21]]
      %p196 = scmp.lt.s32.totalorder %s195, 1
      %s197 = scalar_select %p196, %s195, 1
      %s198 = smul.addr %s197, 16
      %s199 = scalar_lea.vmem %s3, %s198
      %p200 = pneg %p98
      %p201 = pneg %p95
      %p202 = pneg %p124
      %p203 = pneg %p121
      %s204 = smul.u32 16, %s21
      %p205 = scmp.lt.s32.totalorder %s204, 31
      %s206 = scalar_select %p205, %s204, 31
      %s207 = smul.addr %s206, 16
      %s208 = smul.addr %s207, 4
      %s209 = scalar_lea.vmem %s4, %s208
      %s210 = smul.u32 16, %s21
      %p211 = scmp.lt.s32.totalorder %s210, 31
      %s212 = scalar_select %p211, %s210, 31
      %s213 = smul.addr %s212, 4
      %s214 = smul.addr %s213, 4
      %s215 = scalar_lea.vmem %s1, %s214
      %s216 = smul.u32 16, %s21
      %s217 = sld [smem:[#allocation3 + %s21]]
      %p218 = scmp.lt.s32.totalorder %s217, 1
      %s219 = scalar_select %p218, %s217, 1
      %s220 = smul.addr %s219, 1024
      %s221 = smul.addr %s220, 4
      %s222 = scalar_lea.vmem %s2, %s221
      %s223 = sld [smem:[#allocation3 + %s21]]
      %s224 = sld [smem:[#allocation3 + %s21]]
      %p225 = scmp.lt.s32.totalorder %s224, 1
      %s226 = scalar_select %p225, %s224, 1
      %s227 = smul.addr %s226, 16
      %s228 = scalar_lea.vmem %s3, %s227
      %s229 = sld [smem:[#allocation3 + %s21]]
      %s230 = smul.u32 16, %s21
      %p231 = scmp.lt.s32.totalorder %s230, 31
      %s232 = scalar_select %p231, %s230, 31
      %s233 = smul.addr %s232, 16
      %s234 = smul.addr %s233, 4
      %s235 = scalar_lea.vmem %s4, %s234
      %s236 = smul.u32 16, %s21
      %v237 = vld [vmem:[%s215] sm:$0xff]
      %v238 = vld [vmem:[%s215 + $0x8] sm:$0xff]
      %v239 = vld [vmem:[%s215 + $0x10] sm:$0xff]
      %v240 = vld [vmem:[%s215 + $0x18] sm:$0xff]
      %v241 = vld [vmem:[%s215 + $0x20] sm:$0xff]
      %v242 = vld [vmem:[%s215 + $0x28] sm:$0xff]
      %v243 = vld [vmem:[%s215 + $0x30] sm:$0xff]
      %v244 = vld [vmem:[%s215 + $0x38] sm:$0xff]
      %v245 = vld [vmem:[%s215 + $0x40] sm:$0xff]
      %v246 = vld [vmem:[%s215 + $0x48] sm:$0xff]
      %v247 = vld [vmem:[%s215 + $0x50] sm:$0xff]
      %v248 = vld [vmem:[%s215 + $0x58] sm:$0xff]
      %v249 = vld [vmem:[%s215 + $0x60] sm:$0xff]
      %v250 = vld [vmem:[%s215 + $0x68] sm:$0xff]
      %v251 = vld [vmem:[%s215 + $0x70] sm:$0xff]
      %v252 = vld [vmem:[%s215 + $0x78] sm:$0xff]
      %v253 = vld [vmem:[%s215 + $0x80] sm:$0xff]
      %v254 = vld [vmem:[%s215 + $0x88] sm:$0xff]
      %v255 = vld [vmem:[%s215 + $0x90] sm:$0xff]
      %v256 = vld [vmem:[%s215 + $0x98] sm:$0xff]
      %v257 = vld [vmem:[%s215 + $0xa0] sm:$0xff]
      %v258 = vld [vmem:[%s215 + $0xa8] sm:$0xff]
      %v259 = vld [vmem:[%s215 + $0xb0] sm:$0xff]
      %v260 = vld [vmem:[%s215 + $0xb8] sm:$0xff]
      %v261 = vld [vmem:[%s215 + $0xc0] sm:$0xff]
      %v262 = vld [vmem:[%s215 + $0xc8] sm:$0xff]
      %v263 = vld [vmem:[%s215 + $0xd0] sm:$0xff]
      %v264 = vld [vmem:[%s215 + $0xd8] sm:$0xff]
      %v265 = vld [vmem:[%s215 + $0xe0] sm:$0xff]
      %v266 = vld [vmem:[%s215 + $0xe8] sm:$0xff]
      %v267 = vld [vmem:[%s215 + $0xf0] sm:$0xff]
      %v268 = vld [vmem:[%s215 + $0xf8] sm:$0xff]
      %v269 = vld [vmem:[%s222] sm:$0xff]
      %v270 = vld [vmem:[%s222 + $0x8] sm:$0xff]
      %v271 = vld [vmem:[%s222 + $0x10] sm:$0xff]
      %v272 = vld [vmem:[%s222 + $0x18] sm:$0xff]
      %v273 = vld [vmem:[%s222 + $0x20] sm:$0xff]
      %v274 = vld [vmem:[%s222 + $0x28] sm:$0xff]
      %v275 = vld [vmem:[%s222 + $0x30] sm:$0xff]
      %v276 = vld [vmem:[%s222 + $0x38] sm:$0xff]
      %v277 = vld [vmem:[%s222 + $0x40] sm:$0xff]
      %v278 = vld [vmem:[%s222 + $0x48] sm:$0xff]
      %v279 = vld [vmem:[%s222 + $0x50] sm:$0xff]
      %v280 = vld [vmem:[%s222 + $0x58] sm:$0xff]
      %v281 = vld [vmem:[%s222 + $0x60] sm:$0xff]
      %v282 = vld [vmem:[%s222 + $0x68] sm:$0xff]
      %v283 = vld [vmem:[%s222 + $0x70] sm:$0xff]
      %v284 = vld [vmem:[%s222 + $0x78] sm:$0xff]
      %v285 = vld [vmem:[%s222 + $0x80] sm:$0xff]
      %v286 = vld [vmem:[%s222 + $0x88] sm:$0xff]
      %v287 = vld [vmem:[%s222 + $0x90] sm:$0xff]
      %v288 = vld [vmem:[%s222 + $0x98] sm:$0xff]
      %v289 = vld [vmem:[%s222 + $0xa0] sm:$0xff]
      %v290 = vld [vmem:[%s222 + $0xa8] sm:$0xff]
      %v291 = vld [vmem:[%s222 + $0xb0] sm:$0xff]
      %v292 = vld [vmem:[%s222 + $0xb8] sm:$0xff]
      %v293 = vld [vmem:[%s222 + $0xc0] sm:$0xff]
      %v294 = vld [vmem:[%s222 + $0xc8] sm:$0xff]
      %v295 = vld [vmem:[%s222 + $0xd0] sm:$0xff]
      %v296 = vld [vmem:[%s222 + $0xd8] sm:$0xff]
      %v297 = vld [vmem:[%s222 + $0xe0] sm:$0xff]
      %v298 = vld [vmem:[%s222 + $0xe8] sm:$0xff]
      %v299 = vld [vmem:[%s222 + $0xf0] sm:$0xff]
      %v300 = vld [vmem:[%s222 + $0xf8] sm:$0xff]
      %v301 = vld [vmem:[%s222 + $0x100] sm:$0xff]
      %v302 = vld [vmem:[%s222 + $0x108] sm:$0xff]
      %v303 = vld [vmem:[%s222 + $0x110] sm:$0xff]
      %v304 = vld [vmem:[%s222 + $0x118] sm:$0xff]
      %v305 = vld [vmem:[%s222 + $0x120] sm:$0xff]
      %v306 = vld [vmem:[%s222 + $0x128] sm:$0xff]
      %v307 = vld [vmem:[%s222 + $0x130] sm:$0xff]
      %v308 = vld [vmem:[%s222 + $0x138] sm:$0xff]
      %v309 = vld [vmem:[%s222 + $0x140] sm:$0xff]
      %v310 = vld [vmem:[%s222 + $0x148] sm:$0xff]
      %v311 = vld [vmem:[%s222 + $0x150] sm:$0xff]
      %v312 = vld [vmem:[%s222 + $0x158] sm:$0xff]
      %v313 = vld [vmem:[%s222 + $0x160] sm:$0xff]
      %v314 = vld [vmem:[%s222 + $0x168] sm:$0xff]
      %v315 = vld [vmem:[%s222 + $0x170] sm:$0xff]
      %v316 = vld [vmem:[%s222 + $0x178] sm:$0xff]
      %v317 = vld [vmem:[%s222 + $0x180] sm:$0xff]
      %v318 = vld [vmem:[%s222 + $0x188] sm:$0xff]
      %v319 = vld [vmem:[%s222 + $0x190] sm:$0xff]
      %v320 = vld [vmem:[%s222 + $0x198] sm:$0xff]
      %v321 = vld [vmem:[%s222 + $0x1a0] sm:$0xff]
      %v322 = vld [vmem:[%s222 + $0x1a8] sm:$0xff]
      %v323 = vld [vmem:[%s222 + $0x1b0] sm:$0xff]
      %v324 = vld [vmem:[%s222 + $0x1b8] sm:$0xff]
      %v325 = vld [vmem:[%s222 + $0x1c0] sm:$0xff]
      %v326 = vld [vmem:[%s222 + $0x1c8] sm:$0xff]
      %v327 = vld [vmem:[%s222 + $0x1d0] sm:$0xff]
      %v328 = vld [vmem:[%s222 + $0x1d8] sm:$0xff]
      %v329 = vld [vmem:[%s222 + $0x1e0] sm:$0xff]
      %v330 = vld [vmem:[%s222 + $0x1e8] sm:$0xff]
      %v331 = vld [vmem:[%s222 + $0x1f0] sm:$0xff]
      %v332 = vld [vmem:[%s222 + $0x1f8] sm:$0xff]
      %v333 = vld [vmem:[%s222 + $0x200] sm:$0xff]
      %v334 = vld [vmem:[%s222 + $0x208] sm:$0xff]
      %v335 = vld [vmem:[%s222 + $0x210] sm:$0xff]
      %v336 = vld [vmem:[%s222 + $0x218] sm:$0xff]
      %v337 = vld [vmem:[%s222 + $0x220] sm:$0xff]
      %v338 = vld [vmem:[%s222 + $0x228] sm:$0xff]
      %v339 = vld [vmem:[%s222 + $0x230] sm:$0xff]
      %v340 = vld [vmem:[%s222 + $0x238] sm:$0xff]
      %v341 = vld [vmem:[%s222 + $0x240] sm:$0xff]
      %v342 = vld [vmem:[%s222 + $0x248] sm:$0xff]
      %v343 = vld [vmem:[%s222 + $0x250] sm:$0xff]
      %v344 = vld [vmem:[%s222 + $0x258] sm:$0xff]
      %v345 = vld [vmem:[%s222 + $0x260] sm:$0xff]
      %v346 = vld [vmem:[%s222 + $0x268] sm:$0xff]
      %v347 = vld [vmem:[%s222 + $0x270] sm:$0xff]
      %v348 = vld [vmem:[%s222 + $0x278] sm:$0xff]
      %v349 = vld [vmem:[%s222 + $0x280] sm:$0xff]
      %v350 = vld [vmem:[%s222 + $0x288] sm:$0xff]
      %v351 = vld [vmem:[%s222 + $0x290] sm:$0xff]
      %v352 = vld [vmem:[%s222 + $0x298] sm:$0xff]
      %v353 = vld [vmem:[%s222 + $0x2a0] sm:$0xff]
      %v354 = vld [vmem:[%s222 + $0x2a8] sm:$0xff]
      %v355 = vld [vmem:[%s222 + $0x2b0] sm:$0xff]
      %v356 = vld [vmem:[%s222 + $0x2b8] sm:$0xff]
      %v357 = vld [vmem:[%s222 + $0x2c0] sm:$0xff]
      %v358 = vld [vmem:[%s222 + $0x2c8] sm:$0xff]
      %v359 = vld [vmem:[%s222 + $0x2d0] sm:$0xff]
      %v360 = vld [vmem:[%s222 + $0x2d8] sm:$0xff]
      %v361 = vld [vmem:[%s222 + $0x2e0] sm:$0xff]
      %v362 = vld [vmem:[%s222 + $0x2e8] sm:$0xff]
      %v363 = vld [vmem:[%s222 + $0x2f0] sm:$0xff]
      %v364 = vld [vmem:[%s222 + $0x2f8] sm:$0xff]
      %v365 = vld [vmem:[%s222 + $0x300] sm:$0xff]
      %v366 = vld [vmem:[%s222 + $0x308] sm:$0xff]
      %v367 = vld [vmem:[%s222 + $0x310] sm:$0xff]
      %v368 = vld [vmem:[%s222 + $0x318] sm:$0xff]
      %v369 = vld [vmem:[%s222 + $0x320] sm:$0xff]
      %v370 = vld [vmem:[%s222 + $0x328] sm:$0xff]
      %v371 = vld [vmem:[%s222 + $0x330] sm:$0xff]
      %v372 = vld [vmem:[%s222 + $0x338] sm:$0xff]
      %v373 = vld [vmem:[%s222 + $0x340] sm:$0xff]
      %v374 = vld [vmem:[%s222 + $0x348] sm:$0xff]
      %v375 = vld [vmem:[%s222 + $0x350] sm:$0xff]
      %v376 = vld [vmem:[%s222 + $0x358] sm:$0xff]
      %v377 = vld [vmem:[%s222 + $0x360] sm:$0xff]
      %v378 = vld [vmem:[%s222 + $0x368] sm:$0xff]
      %v379 = vld [vmem:[%s222 + $0x370] sm:$0xff]
      %v380 = vld [vmem:[%s222 + $0x378] sm:$0xff]
      %v381 = vld [vmem:[%s222 + $0x380] sm:$0xff]
      %v382 = vld [vmem:[%s222 + $0x388] sm:$0xff]
      %v383 = vld [vmem:[%s222 + $0x390] sm:$0xff]
      %v384 = vld [vmem:[%s222 + $0x398] sm:$0xff]
      %v385 = vld [vmem:[%s222 + $0x3a0] sm:$0xff]
      %v386 = vld [vmem:[%s222 + $0x3a8] sm:$0xff]
      %v387 = vld [vmem:[%s222 + $0x3b0] sm:$0xff]
      %v388 = vld [vmem:[%s222 + $0x3b8] sm:$0xff]
      %v389 = vld [vmem:[%s222 + $0x3c0] sm:$0xff]
      %v390 = vld [vmem:[%s222 + $0x3c8] sm:$0xff]
      %v391 = vld [vmem:[%s222 + $0x3d0] sm:$0xff]
      %v392 = vld [vmem:[%s222 + $0x3d8] sm:$0xff]
      %v393 = vld [vmem:[%s222 + $0x3e0] sm:$0xff]
      %v394 = vld [vmem:[%s222 + $0x3e8] sm:$0xff]
      %v395 = vld [vmem:[%s222 + $0x3f0] sm:$0xff]
      %v396 = vld [vmem:[%s222 + $0x3f8] sm:$0xff]
      %v397 = vld [vmem:[%s222 + $0x400] sm:$0xff]
      %v398 = vld [vmem:[%s222 + $0x408] sm:$0xff]
      %v399 = vld [vmem:[%s222 + $0x410] sm:$0xff]
      %v400 = vld [vmem:[%s222 + $0x418] sm:$0xff]
      %v401 = vld [vmem:[%s222 + $0x420] sm:$0xff]
      %v402 = vld [vmem:[%s222 + $0x428] sm:$0xff]
      %v403 = vld [vmem:[%s222 + $0x430] sm:$0xff]
      %v404 = vld [vmem:[%s222 + $0x438] sm:$0xff]
      %v405 = vld [vmem:[%s222 + $0x440] sm:$0xff]
      %v406 = vld [vmem:[%s222 + $0x448] sm:$0xff]
      %v407 = vld [vmem:[%s222 + $0x450] sm:$0xff]
      %v408 = vld [vmem:[%s222 + $0x458] sm:$0xff]
      %v409 = vld [vmem:[%s222 + $0x460] sm:$0xff]
      %v410 = vld [vmem:[%s222 + $0x468] sm:$0xff]
      %v411 = vld [vmem:[%s222 + $0x470] sm:$0xff]
      %v412 = vld [vmem:[%s222 + $0x478] sm:$0xff]
      %v413 = vld [vmem:[%s222 + $0x480] sm:$0xff]
      %v414 = vld [vmem:[%s222 + $0x488] sm:$0xff]
      %v415 = vld [vmem:[%s222 + $0x490] sm:$0xff]
      %v416 = vld [vmem:[%s222 + $0x498] sm:$0xff]
      %v417 = vld [vmem:[%s222 + $0x4a0] sm:$0xff]
      %v418 = vld [vmem:[%s222 + $0x4a8] sm:$0xff]
      %v419 = vld [vmem:[%s222 + $0x4b0] sm:$0xff]
      %v420 = vld [vmem:[%s222 + $0x4b8] sm:$0xff]
      %v421 = vld [vmem:[%s222 + $0x4c0] sm:$0xff]
      %v422 = vld [vmem:[%s222 + $0x4c8] sm:$0xff]
      %v423 = vld [vmem:[%s222 + $0x4d0] sm:$0xff]
      %v424 = vld [vmem:[%s222 + $0x4d8] sm:$0xff]
      %v425 = vld [vmem:[%s222 + $0x4e0] sm:$0xff]
      %v426 = vld [vmem:[%s222 + $0x4e8] sm:$0xff]
      %v427 = vld [vmem:[%s222 + $0x4f0] sm:$0xff]
      %v428 = vld [vmem:[%s222 + $0x4f8] sm:$0xff]
      %v429 = vld [vmem:[%s222 + $0x500] sm:$0xff]
      %v430 = vld [vmem:[%s222 + $0x508] sm:$0xff]
      %v431 = vld [vmem:[%s222 + $0x510] sm:$0xff]
      %v432 = vld [vmem:[%s222 + $0x518] sm:$0xff]
      %v433 = vld [vmem:[%s222 + $0x520] sm:$0xff]
      %v434 = vld [vmem:[%s222 + $0x528] sm:$0xff]
      %v435 = vld [vmem:[%s222 + $0x530] sm:$0xff]
      %v436 = vld [vmem:[%s222 + $0x538] sm:$0xff]
      %v437 = vld [vmem:[%s222 + $0x540] sm:$0xff]
      %v438 = vld [vmem:[%s222 + $0x548] sm:$0xff]
      %v439 = vld [vmem:[%s222 + $0x550] sm:$0xff]
      %v440 = vld [vmem:[%s222 + $0x558] sm:$0xff]
      %v441 = vld [vmem:[%s222 + $0x560] sm:$0xff]
      %v442 = vld [vmem:[%s222 + $0x568] sm:$0xff]
      %v443 = vld [vmem:[%s222 + $0x570] sm:$0xff]
      %v444 = vld [vmem:[%s222 + $0x578] sm:$0xff]
      %v445 = vld [vmem:[%s222 + $0x580] sm:$0xff]
      %v446 = vld [vmem:[%s222 + $0x588] sm:$0xff]
      %v447 = vld [vmem:[%s222 + $0x590] sm:$0xff]
      %v448 = vld [vmem:[%s222 + $0x598] sm:$0xff]
      %v449 = vld [vmem:[%s222 + $0x5a0] sm:$0xff]
      %v450 = vld [vmem:[%s222 + $0x5a8] sm:$0xff]
      %v451 = vld [vmem:[%s222 + $0x5b0] sm:$0xff]
      %v452 = vld [vmem:[%s222 + $0x5b8] sm:$0xff]
      %v453 = vld [vmem:[%s222 + $0x5c0] sm:$0xff]
      %v454 = vld [vmem:[%s222 + $0x5c8] sm:$0xff]
      %v455 = vld [vmem:[%s222 + $0x5d0] sm:$0xff]
      %v456 = vld [vmem:[%s222 + $0x5d8] sm:$0xff]
      %v457 = vld [vmem:[%s222 + $0x5e0] sm:$0xff]
      %v458 = vld [vmem:[%s222 + $0x5e8] sm:$0xff]
      %v459 = vld [vmem:[%s222 + $0x5f0] sm:$0xff]
      %v460 = vld [vmem:[%s222 + $0x5f8] sm:$0xff]
      %v461 = vld [vmem:[%s222 + $0x600] sm:$0xff]
      %v462 = vld [vmem:[%s222 + $0x608] sm:$0xff]
      %v463 = vld [vmem:[%s222 + $0x610] sm:$0xff]
      %v464 = vld [vmem:[%s222 + $0x618] sm:$0xff]
      %v465 = vld [vmem:[%s222 + $0x620] sm:$0xff]
      %v466 = vld [vmem:[%s222 + $0x628] sm:$0xff]
      %v467 = vld [vmem:[%s222 + $0x630] sm:$0xff]
      %v468 = vld [vmem:[%s222 + $0x638] sm:$0xff]
      %v469 = vld [vmem:[%s222 + $0x640] sm:$0xff]
      %v470 = vld [vmem:[%s222 + $0x648] sm:$0xff]
      %v471 = vld [vmem:[%s222 + $0x650] sm:$0xff]
      %v472 = vld [vmem:[%s222 + $0x658] sm:$0xff]
      %v473 = vld [vmem:[%s222 + $0x660] sm:$0xff]
      %v474 = vld [vmem:[%s222 + $0x668] sm:$0xff]
      %v475 = vld [vmem:[%s222 + $0x670] sm:$0xff]
      %v476 = vld [vmem:[%s222 + $0x678] sm:$0xff]
      %v477 = vld [vmem:[%s222 + $0x680] sm:$0xff]
      %v478 = vld [vmem:[%s222 + $0x688] sm:$0xff]
      %v479 = vld [vmem:[%s222 + $0x690] sm:$0xff]
      %v480 = vld [vmem:[%s222 + $0x698] sm:$0xff]
      %v481 = vld [vmem:[%s222 + $0x6a0] sm:$0xff]
      %v482 = vld [vmem:[%s222 + $0x6a8] sm:$0xff]
      %v483 = vld [vmem:[%s222 + $0x6b0] sm:$0xff]
      %v484 = vld [vmem:[%s222 + $0x6b8] sm:$0xff]
      %v485 = vld [vmem:[%s222 + $0x6c0] sm:$0xff]
      %v486 = vld [vmem:[%s222 + $0x6c8] sm:$0xff]
      %v487 = vld [vmem:[%s222 + $0x6d0] sm:$0xff]
      %v488 = vld [vmem:[%s222 + $0x6d8] sm:$0xff]
      %v489 = vld [vmem:[%s222 + $0x6e0] sm:$0xff]
      %v490 = vld [vmem:[%s222 + $0x6e8] sm:$0xff]
      %v491 = vld [vmem:[%s222 + $0x6f0] sm:$0xff]
      %v492 = vld [vmem:[%s222 + $0x6f8] sm:$0xff]
      %v493 = vld [vmem:[%s222 + $0x700] sm:$0xff]
      %v494 = vld [vmem:[%s222 + $0x708] sm:$0xff]
      %v495 = vld [vmem:[%s222 + $0x710] sm:$0xff]
      %v496 = vld [vmem:[%s222 + $0x718] sm:$0xff]
      %v497 = vld [vmem:[%s222 + $0x720] sm:$0xff]
      %v498 = vld [vmem:[%s222 + $0x728] sm:$0xff]
      %v499 = vld [vmem:[%s222 + $0x730] sm:$0xff]
      %v500 = vld [vmem:[%s222 + $0x738] sm:$0xff]
      %v501 = vld [vmem:[%s222 + $0x740] sm:$0xff]
      %v502 = vld [vmem:[%s222 + $0x748] sm:$0xff]
      %v503 = vld [vmem:[%s222 + $0x750] sm:$0xff]
      %v504 = vld [vmem:[%s222 + $0x758] sm:$0xff]
      %v505 = vld [vmem:[%s222 + $0x760] sm:$0xff]
      %v506 = vld [vmem:[%s222 + $0x768] sm:$0xff]
      %v507 = vld [vmem:[%s222 + $0x770] sm:$0xff]
      %v508 = vld [vmem:[%s222 + $0x778] sm:$0xff]
      %v509 = vld [vmem:[%s222 + $0x780] sm:$0xff]
      %v510 = vld [vmem:[%s222 + $0x788] sm:$0xff]
      %v511 = vld [vmem:[%s222 + $0x790] sm:$0xff]
      %v512 = vld [vmem:[%s222 + $0x798] sm:$0xff]
      %v513 = vld [vmem:[%s222 + $0x7a0] sm:$0xff]
      %v514 = vld [vmem:[%s222 + $0x7a8] sm:$0xff]
      %v515 = vld [vmem:[%s222 + $0x7b0] sm:$0xff]
      %v516 = vld [vmem:[%s222 + $0x7b8] sm:$0xff]
      %v517 = vld [vmem:[%s222 + $0x7c0] sm:$0xff]
      %v518 = vld [vmem:[%s222 + $0x7c8] sm:$0xff]
      %v519 = vld [vmem:[%s222 + $0x7d0] sm:$0xff]
      %v520 = vld [vmem:[%s222 + $0x7d8] sm:$0xff]
      %v521 = vld [vmem:[%s222 + $0x7e0] sm:$0xff]
      %v522 = vld [vmem:[%s222 + $0x7e8] sm:$0xff]
      %v523 = vld [vmem:[%s222 + $0x7f0] sm:$0xff]
      %v524 = vld [vmem:[%s222 + $0x7f8] sm:$0xff]
      %v525 = vld [vmem:[%s222 + $0x800] sm:$0xff]
      %v526 = vld [vmem:[%s222 + $0x808] sm:$0xff]
      %v527 = vld [vmem:[%s222 + $0x810] sm:$0xff]
      %v528 = vld [vmem:[%s222 + $0x818] sm:$0xff]
      %v529 = vld [vmem:[%s222 + $0x820] sm:$0xff]
      %v530 = vld [vmem:[%s222 + $0x828] sm:$0xff]
      %v531 = vld [vmem:[%s222 + $0x830] sm:$0xff]
      %v532 = vld [vmem:[%s222 + $0x838] sm:$0xff]
      %v533 = vld [vmem:[%s222 + $0x840] sm:$0xff]
      %v534 = vld [vmem:[%s222 + $0x848] sm:$0xff]
      %v535 = vld [vmem:[%s222 + $0x850] sm:$0xff]
      %v536 = vld [vmem:[%s222 + $0x858] sm:$0xff]
      %v537 = vld [vmem:[%s222 + $0x860] sm:$0xff]
      %v538 = vld [vmem:[%s222 + $0x868] sm:$0xff]
      %v539 = vld [vmem:[%s222 + $0x870] sm:$0xff]
      %v540 = vld [vmem:[%s222 + $0x878] sm:$0xff]
      %v541 = vld [vmem:[%s222 + $0x880] sm:$0xff]
      %v542 = vld [vmem:[%s222 + $0x888] sm:$0xff]
      %v543 = vld [vmem:[%s222 + $0x890] sm:$0xff]
      %v544 = vld [vmem:[%s222 + $0x898] sm:$0xff]
      %v545 = vld [vmem:[%s222 + $0x8a0] sm:$0xff]
      %v546 = vld [vmem:[%s222 + $0x8a8] sm:$0xff]
      %v547 = vld [vmem:[%s222 + $0x8b0] sm:$0xff]
      %v548 = vld [vmem:[%s222 + $0x8b8] sm:$0xff]
      %v549 = vld [vmem:[%s222 + $0x8c0] sm:$0xff]
      %v550 = vld [vmem:[%s222 + $0x8c8] sm:$0xff]
      %v551 = vld [vmem:[%s222 + $0x8d0] sm:$0xff]
      %v552 = vld [vmem:[%s222 + $0x8d8] sm:$0xff]
      %v553 = vld [vmem:[%s222 + $0x8e0] sm:$0xff]
      %v554 = vld [vmem:[%s222 + $0x8e8] sm:$0xff]
      %v555 = vld [vmem:[%s222 + $0x8f0] sm:$0xff]
      %v556 = vld [vmem:[%s222 + $0x8f8] sm:$0xff]
      %v557 = vld [vmem:[%s222 + $0x900] sm:$0xff]
      %v558 = vld [vmem:[%s222 + $0x908] sm:$0xff]
      %v559 = vld [vmem:[%s222 + $0x910] sm:$0xff]
      %v560 = vld [vmem:[%s222 + $0x918] sm:$0xff]
      %v561 = vld [vmem:[%s222 + $0x920] sm:$0xff]
      %v562 = vld [vmem:[%s222 + $0x928] sm:$0xff]
      %v563 = vld [vmem:[%s222 + $0x930] sm:$0xff]
      %v564 = vld [vmem:[%s222 + $0x938] sm:$0xff]
      %v565 = vld [vmem:[%s222 + $0x940] sm:$0xff]
      %v566 = vld [vmem:[%s222 + $0x948] sm:$0xff]
      %v567 = vld [vmem:[%s222 + $0x950] sm:$0xff]
      %v568 = vld [vmem:[%s222 + $0x958] sm:$0xff]
      %v569 = vld [vmem:[%s222 + $0x960] sm:$0xff]
      %v570 = vld [vmem:[%s222 + $0x968] sm:$0xff]
      %v571 = vld [vmem:[%s222 + $0x970] sm:$0xff]
      %v572 = vld [vmem:[%s222 + $0x978] sm:$0xff]
      %v573 = vld [vmem:[%s222 + $0x980] sm:$0xff]
      %v574 = vld [vmem:[%s222 + $0x988] sm:$0xff]
      %v575 = vld [vmem:[%s222 + $0x990] sm:$0xff]
      %v576 = vld [vmem:[%s222 + $0x998] sm:$0xff]
      %v577 = vld [vmem:[%s222 + $0x9a0] sm:$0xff]
      %v578 = vld [vmem:[%s222 + $0x9a8] sm:$0xff]
      %v579 = vld [vmem:[%s222 + $0x9b0] sm:$0xff]
      %v580 = vld [vmem:[%s222 + $0x9b8] sm:$0xff]
      %v581 = vld [vmem:[%s222 + $0x9c0] sm:$0xff]
      %v582 = vld [vmem:[%s222 + $0x9c8] sm:$0xff]
      %v583 = vld [vmem:[%s222 + $0x9d0] sm:$0xff]
      %v584 = vld [vmem:[%s222 + $0x9d8] sm:$0xff]
      %v585 = vld [vmem:[%s222 + $0x9e0] sm:$0xff]
      %v586 = vld [vmem:[%s222 + $0x9e8] sm:$0xff]
      %v587 = vld [vmem:[%s222 + $0x9f0] sm:$0xff]
      %v588 = vld [vmem:[%s222 + $0x9f8] sm:$0xff]
      %v589 = vld [vmem:[%s222 + $0xa00] sm:$0xff]
      %v590 = vld [vmem:[%s222 + $0xa08] sm:$0xff]
      %v591 = vld [vmem:[%s222 + $0xa10] sm:$0xff]
      %v592 = vld [vmem:[%s222 + $0xa18] sm:$0xff]
      %v593 = vld [vmem:[%s222 + $0xa20] sm:$0xff]
      %v594 = vld [vmem:[%s222 + $0xa28] sm:$0xff]
      %v595 = vld [vmem:[%s222 + $0xa30] sm:$0xff]
      %v596 = vld [vmem:[%s222 + $0xa38] sm:$0xff]
      %v597 = vld [vmem:[%s222 + $0xa40] sm:$0xff]
      %v598 = vld [vmem:[%s222 + $0xa48] sm:$0xff]
      %v599 = vld [vmem:[%s222 + $0xa50] sm:$0xff]
      %v600 = vld [vmem:[%s222 + $0xa58] sm:$0xff]
      %v601 = vld [vmem:[%s222 + $0xa60] sm:$0xff]
      %v602 = vld [vmem:[%s222 + $0xa68] sm:$0xff]
      %v603 = vld [vmem:[%s222 + $0xa70] sm:$0xff]
      %v604 = vld [vmem:[%s222 + $0xa78] sm:$0xff]
      %v605 = vld [vmem:[%s222 + $0xa80] sm:$0xff]
      %v606 = vld [vmem:[%s222 + $0xa88] sm:$0xff]
      %v607 = vld [vmem:[%s222 + $0xa90] sm:$0xff]
      %v608 = vld [vmem:[%s222 + $0xa98] sm:$0xff]
      %v609 = vld [vmem:[%s222 + $0xaa0] sm:$0xff]
      %v610 = vld [vmem:[%s222 + $0xaa8] sm:$0xff]
      %v611 = vld [vmem:[%s222 + $0xab0] sm:$0xff]
      %v612 = vld [vmem:[%s222 + $0xab8] sm:$0xff]
      %v613 = vld [vmem:[%s222 + $0xac0] sm:$0xff]
      %v614 = vld [vmem:[%s222 + $0xac8] sm:$0xff]
      %v615 = vld [vmem:[%s222 + $0xad0] sm:$0xff]
      %v616 = vld [vmem:[%s222 + $0xad8] sm:$0xff]
      %v617 = vld [vmem:[%s222 + $0xae0] sm:$0xff]
      %v618 = vld [vmem:[%s222 + $0xae8] sm:$0xff]
      %v619 = vld [vmem:[%s222 + $0xaf0] sm:$0xff]
      %v620 = vld [vmem:[%s222 + $0xaf8] sm:$0xff]
      %v621 = vld [vmem:[%s222 + $0xb00] sm:$0xff]
      %v622 = vld [vmem:[%s222 + $0xb08] sm:$0xff]
      %v623 = vld [vmem:[%s222 + $0xb10] sm:$0xff]
      %v624 = vld [vmem:[%s222 + $0xb18] sm:$0xff]
      %v625 = vld [vmem:[%s222 + $0xb20] sm:$0xff]
      %v626 = vld [vmem:[%s222 + $0xb28] sm:$0xff]
      %v627 = vld [vmem:[%s222 + $0xb30] sm:$0xff]
      %v628 = vld [vmem:[%s222 + $0xb38] sm:$0xff]
      %v629 = vld [vmem:[%s222 + $0xb40] sm:$0xff]
      %v630 = vld [vmem:[%s222 + $0xb48] sm:$0xff]
      %v631 = vld [vmem:[%s222 + $0xb50] sm:$0xff]
      %v632 = vld [vmem:[%s222 + $0xb58] sm:$0xff]
      %v633 = vld [vmem:[%s222 + $0xb60] sm:$0xff]
      %v634 = vld [vmem:[%s222 + $0xb68] sm:$0xff]
      %v635 = vld [vmem:[%s222 + $0xb70] sm:$0xff]
      %v636 = vld [vmem:[%s222 + $0xb78] sm:$0xff]
      %v637 = vld [vmem:[%s222 + $0xb80] sm:$0xff]
      %v638 = vld [vmem:[%s222 + $0xb88] sm:$0xff]
      %v639 = vld [vmem:[%s222 + $0xb90] sm:$0xff]
      %v640 = vld [vmem:[%s222 + $0xb98] sm:$0xff]
      %v641 = vld [vmem:[%s222 + $0xba0] sm:$0xff]
      %v642 = vld [vmem:[%s222 + $0xba8] sm:$0xff]
      %v643 = vld [vmem:[%s222 + $0xbb0] sm:$0xff]
      %v644 = vld [vmem:[%s222 + $0xbb8] sm:$0xff]
      %v645 = vld [vmem:[%s222 + $0xbc0] sm:$0xff]
      %v646 = vld [vmem:[%s222 + $0xbc8] sm:$0xff]
      %v647 = vld [vmem:[%s222 + $0xbd0] sm:$0xff]
      %v648 = vld [vmem:[%s222 + $0xbd8] sm:$0xff]
      %v649 = vld [vmem:[%s222 + $0xbe0] sm:$0xff]
      %v650 = vld [vmem:[%s222 + $0xbe8] sm:$0xff]
      %v651 = vld [vmem:[%s222 + $0xbf0] sm:$0xff]
      %v652 = vld [vmem:[%s222 + $0xbf8] sm:$0xff]
      %v653 = vld [vmem:[%s222 + $0xc00] sm:$0xff]
      %v654 = vld [vmem:[%s222 + $0xc08] sm:$0xff]
      %v655 = vld [vmem:[%s222 + $0xc10] sm:$0xff]
      %v656 = vld [vmem:[%s222 + $0xc18] sm:$0xff]
      %v657 = vld [vmem:[%s222 + $0xc20] sm:$0xff]
      %v658 = vld [vmem:[%s222 + $0xc28] sm:$0xff]
      %v659 = vld [vmem:[%s222 + $0xc30] sm:$0xff]
      %v660 = vld [vmem:[%s222 + $0xc38] sm:$0xff]
      %v661 = vld [vmem:[%s222 + $0xc40] sm:$0xff]
      %v662 = vld [vmem:[%s222 + $0xc48] sm:$0xff]
      %v663 = vld [vmem:[%s222 + $0xc50] sm:$0xff]
      %v664 = vld [vmem:[%s222 + $0xc58] sm:$0xff]
      %v665 = vld [vmem:[%s222 + $0xc60] sm:$0xff]
      %v666 = vld [vmem:[%s222 + $0xc68] sm:$0xff]
      %v667 = vld [vmem:[%s222 + $0xc70] sm:$0xff]
      %v668 = vld [vmem:[%s222 + $0xc78] sm:$0xff]
      %v669 = vld [vmem:[%s222 + $0xc80] sm:$0xff]
      %v670 = vld [vmem:[%s222 + $0xc88] sm:$0xff]
      %v671 = vld [vmem:[%s222 + $0xc90] sm:$0xff]
      %v672 = vld [vmem:[%s222 + $0xc98] sm:$0xff]
      %v673 = vld [vmem:[%s222 + $0xca0] sm:$0xff]
      %v674 = vld [vmem:[%s222 + $0xca8] sm:$0xff]
      %v675 = vld [vmem:[%s222 + $0xcb0] sm:$0xff]
      %v676 = vld [vmem:[%s222 + $0xcb8] sm:$0xff]
      %v677 = vld [vmem:[%s222 + $0xcc0] sm:$0xff]
      %v678 = vld [vmem:[%s222 + $0xcc8] sm:$0xff]
      %v679 = vld [vmem:[%s222 + $0xcd0] sm:$0xff]
      %v680 = vld [vmem:[%s222 + $0xcd8] sm:$0xff]
      %v681 = vld [vmem:[%s222 + $0xce0] sm:$0xff]
      %v682 = vld [vmem:[%s222 + $0xce8] sm:$0xff]
      %v683 = vld [vmem:[%s222 + $0xcf0] sm:$0xff]
      %v684 = vld [vmem:[%s222 + $0xcf8] sm:$0xff]
      %v685 = vld [vmem:[%s222 + $0xd00] sm:$0xff]
      %v686 = vld [vmem:[%s222 + $0xd08] sm:$0xff]
      %v687 = vld [vmem:[%s222 + $0xd10] sm:$0xff]
      %v688 = vld [vmem:[%s222 + $0xd18] sm:$0xff]
      %v689 = vld [vmem:[%s222 + $0xd20] sm:$0xff]
      %v690 = vld [vmem:[%s222 + $0xd28] sm:$0xff]
      %v691 = vld [vmem:[%s222 + $0xd30] sm:$0xff]
      %v692 = vld [vmem:[%s222 + $0xd38] sm:$0xff]
      %v693 = vld [vmem:[%s222 + $0xd40] sm:$0xff]
      %v694 = vld [vmem:[%s222 + $0xd48] sm:$0xff]
      %v695 = vld [vmem:[%s222 + $0xd50] sm:$0xff]
      %v696 = vld [vmem:[%s222 + $0xd58] sm:$0xff]
      %v697 = vld [vmem:[%s222 + $0xd60] sm:$0xff]
      %v698 = vld [vmem:[%s222 + $0xd68] sm:$0xff]
      %v699 = vld [vmem:[%s222 + $0xd70] sm:$0xff]
      %v700 = vld [vmem:[%s222 + $0xd78] sm:$0xff]
      %v701 = vld [vmem:[%s222 + $0xd80] sm:$0xff]
      %v702 = vld [vmem:[%s222 + $0xd88] sm:$0xff]
      %v703 = vld [vmem:[%s222 + $0xd90] sm:$0xff]
      %v704 = vld [vmem:[%s222 + $0xd98] sm:$0xff]
      %v705 = vld [vmem:[%s222 + $0xda0] sm:$0xff]
      %v706 = vld [vmem:[%s222 + $0xda8] sm:$0xff]
      %v707 = vld [vmem:[%s222 + $0xdb0] sm:$0xff]
      %v708 = vld [vmem:[%s222 + $0xdb8] sm:$0xff]
      %v709 = vld [vmem:[%s222 + $0xdc0] sm:$0xff]
      %v710 = vld [vmem:[%s222 + $0xdc8] sm:$0xff]
      %v711 = vld [vmem:[%s222 + $0xdd0] sm:$0xff]
      %v712 = vld [vmem:[%s222 + $0xdd8] sm:$0xff]
      %v713 = vld [vmem:[%s222 + $0xde0] sm:$0xff]
      %v714 = vld [vmem:[%s222 + $0xde8] sm:$0xff]
      %v715 = vld [vmem:[%s222 + $0xdf0] sm:$0xff]
      %v716 = vld [vmem:[%s222 + $0xdf8] sm:$0xff]
      %v717 = vld [vmem:[%s222 + $0xe00] sm:$0xff]
      %v718 = vld [vmem:[%s222 + $0xe08] sm:$0xff]
      %v719 = vld [vmem:[%s222 + $0xe10] sm:$0xff]
      %v720 = vld [vmem:[%s222 + $0xe18] sm:$0xff]
      %v721 = vld [vmem:[%s222 + $0xe20] sm:$0xff]
      %v722 = vld [vmem:[%s222 + $0xe28] sm:$0xff]
      %v723 = vld [vmem:[%s222 + $0xe30] sm:$0xff]
      %v724 = vld [vmem:[%s222 + $0xe38] sm:$0xff]
      %v725 = vld [vmem:[%s222 + $0xe40] sm:$0xff]
      %v726 = vld [vmem:[%s222 + $0xe48] sm:$0xff]
      %v727 = vld [vmem:[%s222 + $0xe50] sm:$0xff]
      %v728 = vld [vmem:[%s222 + $0xe58] sm:$0xff]
      %v729 = vld [vmem:[%s222 + $0xe60] sm:$0xff]
      %v730 = vld [vmem:[%s222 + $0xe68] sm:$0xff]
      %v731 = vld [vmem:[%s222 + $0xe70] sm:$0xff]
      %v732 = vld [vmem:[%s222 + $0xe78] sm:$0xff]
      %v733 = vld [vmem:[%s222 + $0xe80] sm:$0xff]
      %v734 = vld [vmem:[%s222 + $0xe88] sm:$0xff]
      %v735 = vld [vmem:[%s222 + $0xe90] sm:$0xff]
      %v736 = vld [vmem:[%s222 + $0xe98] sm:$0xff]
      %v737 = vld [vmem:[%s222 + $0xea0] sm:$0xff]
      %v738 = vld [vmem:[%s222 + $0xea8] sm:$0xff]
      %v739 = vld [vmem:[%s222 + $0xeb0] sm:$0xff]
      %v740 = vld [vmem:[%s222 + $0xeb8] sm:$0xff]
      %v741 = vld [vmem:[%s222 + $0xec0] sm:$0xff]
      %v742 = vld [vmem:[%s222 + $0xec8] sm:$0xff]
      %v743 = vld [vmem:[%s222 + $0xed0] sm:$0xff]
      %v744 = vld [vmem:[%s222 + $0xed8] sm:$0xff]
      %v745 = vld [vmem:[%s222 + $0xee0] sm:$0xff]
      %v746 = vld [vmem:[%s222 + $0xee8] sm:$0xff]
      %v747 = vld [vmem:[%s222 + $0xef0] sm:$0xff]
      %v748 = vld [vmem:[%s222 + $0xef8] sm:$0xff]
      %v749 = vld [vmem:[%s222 + $0xf00] sm:$0xff]
      %v750 = vld [vmem:[%s222 + $0xf08] sm:$0xff]
      %v751 = vld [vmem:[%s222 + $0xf10] sm:$0xff]
      %v752 = vld [vmem:[%s222 + $0xf18] sm:$0xff]
      %v753 = vld [vmem:[%s222 + $0xf20] sm:$0xff]
      %v754 = vld [vmem:[%s222 + $0xf28] sm:$0xff]
      %v755 = vld [vmem:[%s222 + $0xf30] sm:$0xff]
      %v756 = vld [vmem:[%s222 + $0xf38] sm:$0xff]
      %v757 = vld [vmem:[%s222 + $0xf40] sm:$0xff]
      %v758 = vld [vmem:[%s222 + $0xf48] sm:$0xff]
      %v759 = vld [vmem:[%s222 + $0xf50] sm:$0xff]
      %v760 = vld [vmem:[%s222 + $0xf58] sm:$0xff]
      %v761 = vld [vmem:[%s222 + $0xf60] sm:$0xff]
      %v762 = vld [vmem:[%s222 + $0xf68] sm:$0xff]
      %v763 = vld [vmem:[%s222 + $0xf70] sm:$0xff]
      %v764 = vld [vmem:[%s222 + $0xf78] sm:$0xff]
      %v765 = vld [vmem:[%s222 + $0xf80] sm:$0xff]
      %v766 = vld [vmem:[%s222 + $0xf88] sm:$0xff]
      %v767 = vld [vmem:[%s222 + $0xf90] sm:$0xff]
      %v768 = vld [vmem:[%s222 + $0xf98] sm:$0xff]
      %v769 = vld [vmem:[%s222 + $0xfa0] sm:$0xff]
      %v770 = vld [vmem:[%s222 + $0xfa8] sm:$0xff]
      %v771 = vld [vmem:[%s222 + $0xfb0] sm:$0xff]
      %v772 = vld [vmem:[%s222 + $0xfb8] sm:$0xff]
      %v773 = vld [vmem:[%s222 + $0xfc0] sm:$0xff]
      %v774 = vld [vmem:[%s222 + $0xfc8] sm:$0xff]
      %v775 = vld [vmem:[%s222 + $0xfd0] sm:$0xff]
      %v776 = vld [vmem:[%s222 + $0xfd8] sm:$0xff]
      %v777 = vld [vmem:[%s222 + $0xfe0] sm:$0xff]
      %v778 = vld [vmem:[%s222 + $0xfe8] sm:$0xff]
      %v779 = vld [vmem:[%s222 + $0xff0] sm:$0xff]
      %v780 = vld [vmem:[%s222 + $0xff8] sm:$0xff]
      %v781 = vld [vmem:[%s228] sm:$0xff]
      %v782 = vld [vmem:[%s228 + $0x8] sm:$0xff]
      %v785 = vlaneseq
      %v786 = vshrl.u32 %v785, 7
      %v787 = vsub.s32 0, %v786
      %v788 = vrot.slane %v781, %v787
      %v789 = vlaneseq
      %v790 = vshrl.u32 %v789, 7
      %v791 = vsub.s32 1, %v790
      %v792 = vrot.slane %v781, %v791
      %v793 = vlaneseq
      %v794 = vshrl.u32 %v793, 7
      %v795 = vsub.s32 2, %v794
      %v796 = vrot.slane %v781, %v795
      %v797 = vlaneseq
      %v798 = vshrl.u32 %v797, 7
      %v799 = vsub.s32 3, %v798
      %v800 = vrot.slane %v781, %v799
      %v801 = vlaneseq
      %v802 = vshrl.u32 %v801, 7
      %v803 = vsub.s32 4, %v802
      %v804 = vrot.slane %v781, %v803
      %v805 = vlaneseq
      %v806 = vshrl.u32 %v805, 7
      %v807 = vsub.s32 5, %v806
      %v808 = vrot.slane %v781, %v807
      %v809 = vlaneseq
      %v810 = vshrl.u32 %v809, 7
      %v811 = vsub.s32 6, %v810
      %v812 = vrot.slane %v781, %v811
      %v813 = vlaneseq
      %v814 = vshrl.u32 %v813, 7
      %v815 = vsub.s32 7, %v814
      %v816 = vrot.slane %v781, %v815
      %v817 = vlaneseq
      %v818 = vshrl.u32 %v817, 7
      %v819 = vsub.s32 0, %v818
      %v820 = vrot.slane %v782, %v819
      %v821 = vlaneseq
      %v822 = vshrl.u32 %v821, 7
      %v823 = vsub.s32 1, %v822
      %v824 = vrot.slane %v782, %v823
      %v825 = vlaneseq
      %v826 = vshrl.u32 %v825, 7
      %v827 = vsub.s32 2, %v826
      %v828 = vrot.slane %v782, %v827
      %v829 = vlaneseq
      %v830 = vshrl.u32 %v829, 7
      %v831 = vsub.s32 3, %v830
      %v832 = vrot.slane %v782, %v831
      %v833 = vlaneseq
      %v834 = vshrl.u32 %v833, 7
      %v835 = vsub.s32 4, %v834
      %v836 = vrot.slane %v782, %v835
      %v837 = vlaneseq
      %v838 = vshrl.u32 %v837, 7
      %v839 = vsub.s32 5, %v838
      %v840 = vrot.slane %v782, %v839
      %v841 = vlaneseq
      %v842 = vshrl.u32 %v841, 7
      %v843 = vsub.s32 6, %v842
      %v844 = vrot.slane %v782, %v843
      %v845 = vlaneseq
      %v846 = vshrl.u32 %v845, 7
      %v847 = vsub.s32 7, %v846
      %v848 = vrot.slane %v782, %v847
      %v897 = vunpack.c.l.b16 %v237
      %v898 = vunpack.c.h.b16 %v237
      %v899 = vunpack.c.l.b16 %v238
      %v900 = vunpack.c.h.b16 %v238
      %v901 = vunpack.c.l.b16 %v239
      %v902 = vunpack.c.h.b16 %v239
      %v903 = vunpack.c.l.b16 %v240
      %v904 = vunpack.c.h.b16 %v240
      %v905 = vunpack.c.l.b16 %v241
      %v906 = vunpack.c.h.b16 %v241
      %v907 = vunpack.c.l.b16 %v242
      %v908 = vunpack.c.h.b16 %v242
      %v909 = vunpack.c.l.b16 %v243
      %v910 = vunpack.c.h.b16 %v243
      %v911 = vunpack.c.l.b16 %v244
      %v912 = vunpack.c.h.b16 %v244
      %v913 = vunpack.c.l.b16 %v245
      %v914 = vunpack.c.h.b16 %v245
      %v915 = vunpack.c.l.b16 %v246
      %v916 = vunpack.c.h.b16 %v246
      %v917 = vunpack.c.l.b16 %v247
      %v918 = vunpack.c.h.b16 %v247
      %v919 = vunpack.c.l.b16 %v248
      %v920 = vunpack.c.h.b16 %v248
      %v921 = vunpack.c.l.b16 %v249
      %v922 = vunpack.c.h.b16 %v249
      %v923 = vunpack.c.l.b16 %v250
      %v924 = vunpack.c.h.b16 %v250
      %v925 = vunpack.c.l.b16 %v251
      %v926 = vunpack.c.h.b16 %v251
      %v927 = vunpack.c.l.b16 %v252
      %v928 = vunpack.c.h.b16 %v252
      %v929 = vunpack.c.l.b16 %v253
      %v930 = vunpack.c.h.b16 %v253
      %v931 = vunpack.c.l.b16 %v254
      %v932 = vunpack.c.h.b16 %v254
      %v933 = vunpack.c.l.b16 %v255
      %v934 = vunpack.c.h.b16 %v255
      %v935 = vunpack.c.l.b16 %v256
      %v936 = vunpack.c.h.b16 %v256
      %v937 = vunpack.c.l.b16 %v257
      %v938 = vunpack.c.h.b16 %v257
      %v939 = vunpack.c.l.b16 %v258
      %v940 = vunpack.c.h.b16 %v258
      %v941 = vunpack.c.l.b16 %v259
      %v942 = vunpack.c.h.b16 %v259
      %v943 = vunpack.c.l.b16 %v260
      %v944 = vunpack.c.h.b16 %v260
      %v945 = vunpack.c.l.b16 %v261
      %v946 = vunpack.c.h.b16 %v261
      %v947 = vunpack.c.l.b16 %v262
      %v948 = vunpack.c.h.b16 %v262
      %v949 = vunpack.c.l.b16 %v263
      %v950 = vunpack.c.h.b16 %v263
      %v951 = vunpack.c.l.b16 %v264
      %v952 = vunpack.c.h.b16 %v264
      %v953 = vunpack.c.l.b16 %v265
      %v954 = vunpack.c.h.b16 %v265
      %v955 = vunpack.c.l.b16 %v266
      %v956 = vunpack.c.h.b16 %v266
      %v957 = vunpack.c.l.b16 %v267
      %v958 = vunpack.c.h.b16 %v267
      %v959 = vunpack.c.l.b16 %v268
      %v960 = vunpack.c.h.b16 %v268
      %v961 = vpack.c.b16 %v901, %v897
      %v962 = vpack.c.b16 %v902, %v898
      %v963 = vpack.c.b16 %v903, %v899
      %v964 = vpack.c.b16 %v904, %v900
      %v965 = vpack.c.b16 %v909, %v905
      %v966 = vpack.c.b16 %v910, %v906
      %v967 = vpack.c.b16 %v911, %v907
      %v968 = vpack.c.b16 %v912, %v908
      %v969 = vpack.c.b16 %v917, %v913
      %v970 = vpack.c.b16 %v918, %v914
      %v971 = vpack.c.b16 %v919, %v915
      %v972 = vpack.c.b16 %v920, %v916
      %v973 = vpack.c.b16 %v925, %v921
      %v974 = vpack.c.b16 %v926, %v922
      %v975 = vpack.c.b16 %v927, %v923
      %v976 = vpack.c.b16 %v928, %v924
      %v977 = vpack.c.b16 %v933, %v929
      %v978 = vpack.c.b16 %v934, %v930
      %v979 = vpack.c.b16 %v935, %v931
      %v980 = vpack.c.b16 %v936, %v932
      %v981 = vpack.c.b16 %v941, %v937
      %v982 = vpack.c.b16 %v942, %v938
      %v983 = vpack.c.b16 %v943, %v939
      %v984 = vpack.c.b16 %v944, %v940
      %v985 = vpack.c.b16 %v949, %v945
      %v986 = vpack.c.b16 %v950, %v946
      %v987 = vpack.c.b16 %v951, %v947
      %v988 = vpack.c.b16 %v952, %v948
      %v989 = vpack.c.b16 %v957, %v953
      %v990 = vpack.c.b16 %v958, %v954
      %v991 = vpack.c.b16 %v959, %v955
      %v992 = vpack.c.b16 %v960, %v956
      %v1537 = vunpack.c.l.b16 %v269
      %v1538 = vunpack.c.h.b16 %v269
      %v1539 = vunpack.c.l.b16 %v270
      %v1540 = vunpack.c.h.b16 %v270
      %v1541 = vunpack.c.l.b16 %v271
      %v1542 = vunpack.c.h.b16 %v271
      %v1543 = vunpack.c.l.b16 %v272
      %v1544 = vunpack.c.h.b16 %v272
      %v1545 = vunpack.c.l.b16 %v273
      %v1546 = vunpack.c.h.b16 %v273
      %v1547 = vunpack.c.l.b16 %v274
      %v1548 = vunpack.c.h.b16 %v274
      %v1549 = vunpack.c.l.b16 %v275
      %v1550 = vunpack.c.h.b16 %v275
      %v1551 = vunpack.c.l.b16 %v276
      %v1552 = vunpack.c.h.b16 %v276
      %v1553 = vunpack.c.l.b16 %v277
      %v1554 = vunpack.c.h.b16 %v277
      %v1555 = vunpack.c.l.b16 %v278
      %v1556 = vunpack.c.h.b16 %v278
      %v1557 = vunpack.c.l.b16 %v279
      %v1558 = vunpack.c.h.b16 %v279
      %v1559 = vunpack.c.l.b16 %v280
      %v1560 = vunpack.c.h.b16 %v280
      %v1561 = vunpack.c.l.b16 %v281
      %v1562 = vunpack.c.h.b16 %v281
      %v1563 = vunpack.c.l.b16 %v282
      %v1564 = vunpack.c.h.b16 %v282
      %v1565 = vunpack.c.l.b16 %v283
      %v1566 = vunpack.c.h.b16 %v283
      %v1567 = vunpack.c.l.b16 %v284
      %v1568 = vunpack.c.h.b16 %v284
      %v1569 = vunpack.c.l.b16 %v285
      %v1570 = vunpack.c.h.b16 %v285
      %v1571 = vunpack.c.l.b16 %v286
      %v1572 = vunpack.c.h.b16 %v286
      %v1573 = vunpack.c.l.b16 %v287
      %v1574 = vunpack.c.h.b16 %v287
      %v1575 = vunpack.c.l.b16 %v288
      %v1576 = vunpack.c.h.b16 %v288
      %v1577 = vunpack.c.l.b16 %v289
      %v1578 = vunpack.c.h.b16 %v289
      %v1579 = vunpack.c.l.b16 %v290
      %v1580 = vunpack.c.h.b16 %v290
      %v1581 = vunpack.c.l.b16 %v291
      %v1582 = vunpack.c.h.b16 %v291
      %v1583 = vunpack.c.l.b16 %v292
      %v1584 = vunpack.c.h.b16 %v292
      %v1585 = vunpack.c.l.b16 %v293
      %v1586 = vunpack.c.h.b16 %v293
      %v1587 = vunpack.c.l.b16 %v294
      %v1588 = vunpack.c.h.b16 %v294
      %v1589 = vunpack.c.l.b16 %v295
      %v1590 = vunpack.c.h.b16 %v295
      %v1591 = vunpack.c.l.b16 %v296
      %v1592 = vunpack.c.h.b16 %v296
      %v1593 = vunpack.c.l.b16 %v297
      %v1594 = vunpack.c.h.b16 %v297
      %v1595 = vunpack.c.l.b16 %v298
      %v1596 = vunpack.c.h.b16 %v298
      %v1597 = vunpack.c.l.b16 %v299
      %v1598 = vunpack.c.h.b16 %v299
      %v1599 = vunpack.c.l.b16 %v300
      %v1600 = vunpack.c.h.b16 %v300
      %v1601 = vunpack.c.l.b16 %v301
      %v1602 = vunpack.c.h.b16 %v301
      %v1603 = vunpack.c.l.b16 %v302
      %v1604 = vunpack.c.h.b16 %v302
      %v1605 = vunpack.c.l.b16 %v303
      %v1606 = vunpack.c.h.b16 %v303
      %v1607 = vunpack.c.l.b16 %v304
      %v1608 = vunpack.c.h.b16 %v304
      %v1609 = vunpack.c.l.b16 %v305
      %v1610 = vunpack.c.h.b16 %v305
      %v1611 = vunpack.c.l.b16 %v306
      %v1612 = vunpack.c.h.b16 %v306
      %v1613 = vunpack.c.l.b16 %v307
      %v1614 = vunpack.c.h.b16 %v307
      %v1615 = vunpack.c.l.b16 %v308
      %v1616 = vunpack.c.h.b16 %v308
      %v1617 = vunpack.c.l.b16 %v309
      %v1618 = vunpack.c.h.b16 %v309
      %v1619 = vunpack.c.l.b16 %v310
      %v1620 = vunpack.c.h.b16 %v310
      %v1621 = vunpack.c.l.b16 %v311
      %v1622 = vunpack.c.h.b16 %v311
      %v1623 = vunpack.c.l.b16 %v312
      %v1624 = vunpack.c.h.b16 %v312
      %v1625 = vunpack.c.l.b16 %v313
      %v1626 = vunpack.c.h.b16 %v313
      %v1627 = vunpack.c.l.b16 %v314
      %v1628 = vunpack.c.h.b16 %v314
      %v1629 = vunpack.c.l.b16 %v315
      %v1630 = vunpack.c.h.b16 %v315
      %v1631 = vunpack.c.l.b16 %v316
      %v1632 = vunpack.c.h.b16 %v316
      %v1633 = vunpack.c.l.b16 %v317
      %v1634 = vunpack.c.h.b16 %v317
      %v1635 = vunpack.c.l.b16 %v318
      %v1636 = vunpack.c.h.b16 %v318
      %v1637 = vunpack.c.l.b16 %v319
      %v1638 = vunpack.c.h.b16 %v319
      %v1639 = vunpack.c.l.b16 %v320
      %v1640 = vunpack.c.h.b16 %v320
      %v1641 = vunpack.c.l.b16 %v321
      %v1642 = vunpack.c.h.b16 %v321
      %v1643 = vunpack.c.l.b16 %v322
      %v1644 = vunpack.c.h.b16 %v322
      %v1645 = vunpack.c.l.b16 %v323
      %v1646 = vunpack.c.h.b16 %v323
      %v1647 = vunpack.c.l.b16 %v324
      %v1648 = vunpack.c.h.b16 %v324
      %v1649 = vunpack.c.l.b16 %v325
      %v1650 = vunpack.c.h.b16 %v325
      %v1651 = vunpack.c.l.b16 %v326
      %v1652 = vunpack.c.h.b16 %v326
      %v1653 = vunpack.c.l.b16 %v327
      %v1654 = vunpack.c.h.b16 %v327
      %v1655 = vunpack.c.l.b16 %v328
      %v1656 = vunpack.c.h.b16 %v328
      %v1657 = vunpack.c.l.b16 %v329
      %v1658 = vunpack.c.h.b16 %v329
      %v1659 = vunpack.c.l.b16 %v330
      %v1660 = vunpack.c.h.b16 %v330
      %v1661 = vunpack.c.l.b16 %v331
      %v1662 = vunpack.c.h.b16 %v331
      %v1663 = vunpack.c.l.b16 %v332
      %v1664 = vunpack.c.h.b16 %v332
      %v1665 = vunpack.c.l.b16 %v333
      %v1666 = vunpack.c.h.b16 %v333
      %v1667 = vunpack.c.l.b16 %v334
      %v1668 = vunpack.c.h.b16 %v334
      %v1669 = vunpack.c.l.b16 %v335
      %v1670 = vunpack.c.h.b16 %v335
      %v1671 = vunpack.c.l.b16 %v336
      %v1672 = vunpack.c.h.b16 %v336
      %v1673 = vunpack.c.l.b16 %v337
      %v1674 = vunpack.c.h.b16 %v337
      %v1675 = vunpack.c.l.b16 %v338
      %v1676 = vunpack.c.h.b16 %v338
      %v1677 = vunpack.c.l.b16 %v339
      %v1678 = vunpack.c.h.b16 %v339
      %v1679 = vunpack.c.l.b16 %v340
      %v1680 = vunpack.c.h.b16 %v340
      %v1681 = vunpack.c.l.b16 %v341
      %v1682 = vunpack.c.h.b16 %v341
      %v1683 = vunpack.c.l.b16 %v342
      %v1684 = vunpack.c.h.b16 %v342
      %v1685 = vunpack.c.l.b16 %v343
      %v1686 = vunpack.c.h.b16 %v343
      %v1687 = vunpack.c.l.b16 %v344
      %v1688 = vunpack.c.h.b16 %v344
      %v1689 = vunpack.c.l.b16 %v345
      %v1690 = vunpack.c.h.b16 %v345
      %v1691 = vunpack.c.l.b16 %v346
      %v1692 = vunpack.c.h.b16 %v346
      %v1693 = vunpack.c.l.b16 %v347
      %v1694 = vunpack.c.h.b16 %v347
      %v1695 = vunpack.c.l.b16 %v348
      %v1696 = vunpack.c.h.b16 %v348
      %v1697 = vunpack.c.l.b16 %v349
      %v1698 = vunpack.c.h.b16 %v349
      %v1699 = vunpack.c.l.b16 %v350
      %v1700 = vunpack.c.h.b16 %v350
      %v1701 = vunpack.c.l.b16 %v351
      %v1702 = vunpack.c.h.b16 %v351
      %v1703 = vunpack.c.l.b16 %v352
      %v1704 = vunpack.c.h.b16 %v352
      %v1705 = vunpack.c.l.b16 %v353
      %v1706 = vunpack.c.h.b16 %v353
      %v1707 = vunpack.c.l.b16 %v354
      %v1708 = vunpack.c.h.b16 %v354
      %v1709 = vunpack.c.l.b16 %v355
      %v1710 = vunpack.c.h.b16 %v355
      %v1711 = vunpack.c.l.b16 %v356
      %v1712 = vunpack.c.h.b16 %v356
      %v1713 = vunpack.c.l.b16 %v357
      %v1714 = vunpack.c.h.b16 %v357
      %v1715 = vunpack.c.l.b16 %v358
      %v1716 = vunpack.c.h.b16 %v358
      %v1717 = vunpack.c.l.b16 %v359
      %v1718 = vunpack.c.h.b16 %v359
      %v1719 = vunpack.c.l.b16 %v360
      %v1720 = vunpack.c.h.b16 %v360
      %v1721 = vunpack.c.l.b16 %v361
      %v1722 = vunpack.c.h.b16 %v361
      %v1723 = vunpack.c.l.b16 %v362
      %v1724 = vunpack.c.h.b16 %v362
      %v1725 = vunpack.c.l.b16 %v363
      %v1726 = vunpack.c.h.b16 %v363
      %v1727 = vunpack.c.l.b16 %v364
      %v1728 = vunpack.c.h.b16 %v364
      %v1729 = vunpack.c.l.b16 %v365
      %v1730 = vunpack.c.h.b16 %v365
      %v1731 = vunpack.c.l.b16 %v366
      %v1732 = vunpack.c.h.b16 %v366
      %v1733 = vunpack.c.l.b16 %v367
      %v1734 = vunpack.c.h.b16 %v367
      %v1735 = vunpack.c.l.b16 %v368
      %v1736 = vunpack.c.h.b16 %v368
      %v1737 = vunpack.c.l.b16 %v369
      %v1738 = vunpack.c.h.b16 %v369
      %v1739 = vunpack.c.l.b16 %v370
      %v1740 = vunpack.c.h.b16 %v370
      %v1741 = vunpack.c.l.b16 %v371
      %v1742 = vunpack.c.h.b16 %v371
      %v1743 = vunpack.c.l.b16 %v372
      %v1744 = vunpack.c.h.b16 %v372
      %v1745 = vunpack.c.l.b16 %v373
      %v1746 = vunpack.c.h.b16 %v373
      %v1747 = vunpack.c.l.b16 %v374
      %v1748 = vunpack.c.h.b16 %v374
      %v1749 = vunpack.c.l.b16 %v375
      %v1750 = vunpack.c.h.b16 %v375
      %v1751 = vunpack.c.l.b16 %v376
      %v1752 = vunpack.c.h.b16 %v376
      %v1753 = vunpack.c.l.b16 %v377
      %v1754 = vunpack.c.h.b16 %v377
      %v1755 = vunpack.c.l.b16 %v378
      %v1756 = vunpack.c.h.b16 %v378
      %v1757 = vunpack.c.l.b16 %v379
      %v1758 = vunpack.c.h.b16 %v379
      %v1759 = vunpack.c.l.b16 %v380
      %v1760 = vunpack.c.h.b16 %v380
      %v1761 = vunpack.c.l.b16 %v381
      %v1762 = vunpack.c.h.b16 %v381
      %v1763 = vunpack.c.l.b16 %v382
      %v1764 = vunpack.c.h.b16 %v382
      %v1765 = vunpack.c.l.b16 %v383
      %v1766 = vunpack.c.h.b16 %v383
      %v1767 = vunpack.c.l.b16 %v384
      %v1768 = vunpack.c.h.b16 %v384
      %v1769 = vunpack.c.l.b16 %v385
      %v1770 = vunpack.c.h.b16 %v385
      %v1771 = vunpack.c.l.b16 %v386
      %v1772 = vunpack.c.h.b16 %v386
      %v1773 = vunpack.c.l.b16 %v387
      %v1774 = vunpack.c.h.b16 %v387
      %v1775 = vunpack.c.l.b16 %v388
      %v1776 = vunpack.c.h.b16 %v388
      %v1777 = vunpack.c.l.b16 %v389
      %v1778 = vunpack.c.h.b16 %v389
      %v1779 = vunpack.c.l.b16 %v390
      %v1780 = vunpack.c.h.b16 %v390
      %v1781 = vunpack.c.l.b16 %v391
      %v1782 = vunpack.c.h.b16 %v391
      %v1783 = vunpack.c.l.b16 %v392
      %v1784 = vunpack.c.h.b16 %v392
      %v1785 = vunpack.c.l.b16 %v393
      %v1786 = vunpack.c.h.b16 %v393
      %v1787 = vunpack.c.l.b16 %v394
      %v1788 = vunpack.c.h.b16 %v394
      %v1789 = vunpack.c.l.b16 %v395
      %v1790 = vunpack.c.h.b16 %v395
      %v1791 = vunpack.c.l.b16 %v396
      %v1792 = vunpack.c.h.b16 %v396
      %v1793 = vunpack.c.l.b16 %v397
      %v1794 = vunpack.c.h.b16 %v397
      %v1795 = vunpack.c.l.b16 %v398
      %v1796 = vunpack.c.h.b16 %v398
      %v1797 = vunpack.c.l.b16 %v399
      %v1798 = vunpack.c.h.b16 %v399
      %v1799 = vunpack.c.l.b16 %v400
      %v1800 = vunpack.c.h.b16 %v400
      %v1801 = vunpack.c.l.b16 %v401
      %v1802 = vunpack.c.h.b16 %v401
      %v1803 = vunpack.c.l.b16 %v402
      %v1804 = vunpack.c.h.b16 %v402
      %v1805 = vunpack.c.l.b16 %v403
      %v1806 = vunpack.c.h.b16 %v403
      %v1807 = vunpack.c.l.b16 %v404
      %v1808 = vunpack.c.h.b16 %v404
      %v1809 = vunpack.c.l.b16 %v405
      %v1810 = vunpack.c.h.b16 %v405
      %v1811 = vunpack.c.l.b16 %v406
      %v1812 = vunpack.c.h.b16 %v406
      %v1813 = vunpack.c.l.b16 %v407
      %v1814 = vunpack.c.h.b16 %v407
      %v1815 = vunpack.c.l.b16 %v408
      %v1816 = vunpack.c.h.b16 %v408
      %v1817 = vunpack.c.l.b16 %v409
      %v1818 = vunpack.c.h.b16 %v409
      %v1819 = vunpack.c.l.b16 %v410
      %v1820 = vunpack.c.h.b16 %v410
      %v1821 = vunpack.c.l.b16 %v411
      %v1822 = vunpack.c.h.b16 %v411
      %v1823 = vunpack.c.l.b16 %v412
      %v1824 = vunpack.c.h.b16 %v412
      %v1825 = vunpack.c.l.b16 %v413
      %v1826 = vunpack.c.h.b16 %v413
      %v1827 = vunpack.c.l.b16 %v414
      %v1828 = vunpack.c.h.b16 %v414
      %v1829 = vunpack.c.l.b16 %v415
      %v1830 = vunpack.c.h.b16 %v415
      %v1831 = vunpack.c.l.b16 %v416
      %v1832 = vunpack.c.h.b16 %v416
      %v1833 = vunpack.c.l.b16 %v417
      %v1834 = vunpack.c.h.b16 %v417
      %v1835 = vunpack.c.l.b16 %v418
      %v1836 = vunpack.c.h.b16 %v418
      %v1837 = vunpack.c.l.b16 %v419
      %v1838 = vunpack.c.h.b16 %v419
      %v1839 = vunpack.c.l.b16 %v420
      %v1840 = vunpack.c.h.b16 %v420
      %v1841 = vunpack.c.l.b16 %v421
      %v1842 = vunpack.c.h.b16 %v421
      %v1843 = vunpack.c.l.b16 %v422
      %v1844 = vunpack.c.h.b16 %v422
      %v1845 = vunpack.c.l.b16 %v423
      %v1846 = vunpack.c.h.b16 %v423
      %v1847 = vunpack.c.l.b16 %v424
      %v1848 = vunpack.c.h.b16 %v424
      %v1849 = vunpack.c.l.b16 %v425
      %v1850 = vunpack.c.h.b16 %v425
      %v1851 = vunpack.c.l.b16 %v426
      %v1852 = vunpack.c.h.b16 %v426
      %v1853 = vunpack.c.l.b16 %v427
      %v1854 = vunpack.c.h.b16 %v427
      %v1855 = vunpack.c.l.b16 %v428
      %v1856 = vunpack.c.h.b16 %v428
      %v1857 = vunpack.c.l.b16 %v429
      %v1858 = vunpack.c.h.b16 %v429
      %v1859 = vunpack.c.l.b16 %v430
      %v1860 = vunpack.c.h.b16 %v430
      %v1861 = vunpack.c.l.b16 %v431
      %v1862 = vunpack.c.h.b16 %v431
      %v1863 = vunpack.c.l.b16 %v432
      %v1864 = vunpack.c.h.b16 %v432
      %v1865 = vunpack.c.l.b16 %v433
      %v1866 = vunpack.c.h.b16 %v433
      %v1867 = vunpack.c.l.b16 %v434
      %v1868 = vunpack.c.h.b16 %v434
      %v1869 = vunpack.c.l.b16 %v435
      %v1870 = vunpack.c.h.b16 %v435
      %v1871 = vunpack.c.l.b16 %v436
      %v1872 = vunpack.c.h.b16 %v436
      %v1873 = vunpack.c.l.b16 %v437
      %v1874 = vunpack.c.h.b16 %v437
      %v1875 = vunpack.c.l.b16 %v438
      %v1876 = vunpack.c.h.b16 %v438
      %v1877 = vunpack.c.l.b16 %v439
      %v1878 = vunpack.c.h.b16 %v439
      %v1879 = vunpack.c.l.b16 %v440
      %v1880 = vunpack.c.h.b16 %v440
      %v1881 = vunpack.c.l.b16 %v441
      %v1882 = vunpack.c.h.b16 %v441
      %v1883 = vunpack.c.l.b16 %v442
      %v1884 = vunpack.c.h.b16 %v442
      %v1885 = vunpack.c.l.b16 %v443
      %v1886 = vunpack.c.h.b16 %v443
      %v1887 = vunpack.c.l.b16 %v444
      %v1888 = vunpack.c.h.b16 %v444
      %v1889 = vunpack.c.l.b16 %v445
      %v1890 = vunpack.c.h.b16 %v445
      %v1891 = vunpack.c.l.b16 %v446
      %v1892 = vunpack.c.h.b16 %v446
      %v1893 = vunpack.c.l.b16 %v447
      %v1894 = vunpack.c.h.b16 %v447
      %v1895 = vunpack.c.l.b16 %v448
      %v1896 = vunpack.c.h.b16 %v448
      %v1897 = vunpack.c.l.b16 %v449
      %v1898 = vunpack.c.h.b16 %v449
      %v1899 = vunpack.c.l.b16 %v450
      %v1900 = vunpack.c.h.b16 %v450
      %v1901 = vunpack.c.l.b16 %v451
      %v1902 = vunpack.c.h.b16 %v451
      %v1903 = vunpack.c.l.b16 %v452
      %v1904 = vunpack.c.h.b16 %v452
      %v1905 = vunpack.c.l.b16 %v453
      %v1906 = vunpack.c.h.b16 %v453
      %v1907 = vunpack.c.l.b16 %v454
      %v1908 = vunpack.c.h.b16 %v454
      %v1909 = vunpack.c.l.b16 %v455
      %v1910 = vunpack.c.h.b16 %v455
      %v1911 = vunpack.c.l.b16 %v456
      %v1912 = vunpack.c.h.b16 %v456
      %v1913 = vunpack.c.l.b16 %v457
      %v1914 = vunpack.c.h.b16 %v457
      %v1915 = vunpack.c.l.b16 %v458
      %v1916 = vunpack.c.h.b16 %v458
      %v1917 = vunpack.c.l.b16 %v459
      %v1918 = vunpack.c.h.b16 %v459
      %v1919 = vunpack.c.l.b16 %v460
      %v1920 = vunpack.c.h.b16 %v460
      %v1921 = vunpack.c.l.b16 %v461
      %v1922 = vunpack.c.h.b16 %v461
      %v1923 = vunpack.c.l.b16 %v462
      %v1924 = vunpack.c.h.b16 %v462
      %v1925 = vunpack.c.l.b16 %v463
      %v1926 = vunpack.c.h.b16 %v463
      %v1927 = vunpack.c.l.b16 %v464
      %v1928 = vunpack.c.h.b16 %v464
      %v1929 = vunpack.c.l.b16 %v465
      %v1930 = vunpack.c.h.b16 %v465
      %v1931 = vunpack.c.l.b16 %v466
      %v1932 = vunpack.c.h.b16 %v466
      %v1933 = vunpack.c.l.b16 %v467
      %v1934 = vunpack.c.h.b16 %v467
      %v1935 = vunpack.c.l.b16 %v468
      %v1936 = vunpack.c.h.b16 %v468
      %v1937 = vunpack.c.l.b16 %v469
      %v1938 = vunpack.c.h.b16 %v469
      %v1939 = vunpack.c.l.b16 %v470
      %v1940 = vunpack.c.h.b16 %v470
      %v1941 = vunpack.c.l.b16 %v471
      %v1942 = vunpack.c.h.b16 %v471
      %v1943 = vunpack.c.l.b16 %v472
      %v1944 = vunpack.c.h.b16 %v472
      %v1945 = vunpack.c.l.b16 %v473
      %v1946 = vunpack.c.h.b16 %v473
      %v1947 = vunpack.c.l.b16 %v474
      %v1948 = vunpack.c.h.b16 %v474
      %v1949 = vunpack.c.l.b16 %v475
      %v1950 = vunpack.c.h.b16 %v475
      %v1951 = vunpack.c.l.b16 %v476
      %v1952 = vunpack.c.h.b16 %v476
      %v1953 = vunpack.c.l.b16 %v477
      %v1954 = vunpack.c.h.b16 %v477
      %v1955 = vunpack.c.l.b16 %v478
      %v1956 = vunpack.c.h.b16 %v478
      %v1957 = vunpack.c.l.b16 %v479
      %v1958 = vunpack.c.h.b16 %v479
      %v1959 = vunpack.c.l.b16 %v480
      %v1960 = vunpack.c.h.b16 %v480
      %v1961 = vunpack.c.l.b16 %v481
      %v1962 = vunpack.c.h.b16 %v481
      %v1963 = vunpack.c.l.b16 %v482
      %v1964 = vunpack.c.h.b16 %v482
      %v1965 = vunpack.c.l.b16 %v483
      %v1966 = vunpack.c.h.b16 %v483
      %v1967 = vunpack.c.l.b16 %v484
      %v1968 = vunpack.c.h.b16 %v484
      %v1969 = vunpack.c.l.b16 %v485
      %v1970 = vunpack.c.h.b16 %v485
      %v1971 = vunpack.c.l.b16 %v486
      %v1972 = vunpack.c.h.b16 %v486
      %v1973 = vunpack.c.l.b16 %v487
      %v1974 = vunpack.c.h.b16 %v487
      %v1975 = vunpack.c.l.b16 %v488
      %v1976 = vunpack.c.h.b16 %v488
      %v1977 = vunpack.c.l.b16 %v489
      %v1978 = vunpack.c.h.b16 %v489
      %v1979 = vunpack.c.l.b16 %v490
      %v1980 = vunpack.c.h.b16 %v490
      %v1981 = vunpack.c.l.b16 %v491
      %v1982 = vunpack.c.h.b16 %v491
      %v1983 = vunpack.c.l.b16 %v492
      %v1984 = vunpack.c.h.b16 %v492
      %v1985 = vunpack.c.l.b16 %v493
      %v1986 = vunpack.c.h.b16 %v493
      %v1987 = vunpack.c.l.b16 %v494
      %v1988 = vunpack.c.h.b16 %v494
      %v1989 = vunpack.c.l.b16 %v495
      %v1990 = vunpack.c.h.b16 %v495
      %v1991 = vunpack.c.l.b16 %v496
      %v1992 = vunpack.c.h.b16 %v496
      %v1993 = vunpack.c.l.b16 %v497
      %v1994 = vunpack.c.h.b16 %v497
      %v1995 = vunpack.c.l.b16 %v498
      %v1996 = vunpack.c.h.b16 %v498
      %v1997 = vunpack.c.l.b16 %v499
      %v1998 = vunpack.c.h.b16 %v499
      %v1999 = vunpack.c.l.b16 %v500
      %v2000 = vunpack.c.h.b16 %v500
      %v2001 = vunpack.c.l.b16 %v501
      %v2002 = vunpack.c.h.b16 %v501
      %v2003 = vunpack.c.l.b16 %v502
      %v2004 = vunpack.c.h.b16 %v502
      %v2005 = vunpack.c.l.b16 %v503
      %v2006 = vunpack.c.h.b16 %v503
      %v2007 = vunpack.c.l.b16 %v504
      %v2008 = vunpack.c.h.b16 %v504
      %v2009 = vunpack.c.l.b16 %v505
      %v2010 = vunpack.c.h.b16 %v505
      %v2011 = vunpack.c.l.b16 %v506
      %v2012 = vunpack.c.h.b16 %v506
      %v2013 = vunpack.c.l.b16 %v507
      %v2014 = vunpack.c.h.b16 %v507
      %v2015 = vunpack.c.l.b16 %v508
      %v2016 = vunpack.c.h.b16 %v508
      %v2017 = vunpack.c.l.b16 %v509
      %v2018 = vunpack.c.h.b16 %v509
      %v2019 = vunpack.c.l.b16 %v510
      %v2020 = vunpack.c.h.b16 %v510
      %v2021 = vunpack.c.l.b16 %v511
      %v2022 = vunpack.c.h.b16 %v511
      %v2023 = vunpack.c.l.b16 %v512
      %v2024 = vunpack.c.h.b16 %v512
      %v2025 = vunpack.c.l.b16 %v513
      %v2026 = vunpack.c.h.b16 %v513
      %v2027 = vunpack.c.l.b16 %v514
      %v2028 = vunpack.c.h.b16 %v514
      %v2029 = vunpack.c.l.b16 %v515
      %v2030 = vunpack.c.h.b16 %v515
      %v2031 = vunpack.c.l.b16 %v516
      %v2032 = vunpack.c.h.b16 %v516
      %v2033 = vunpack.c.l.b16 %v517
      %v2034 = vunpack.c.h.b16 %v517
      %v2035 = vunpack.c.l.b16 %v518
      %v2036 = vunpack.c.h.b16 %v518
      %v2037 = vunpack.c.l.b16 %v519
      %v2038 = vunpack.c.h.b16 %v519
      %v2039 = vunpack.c.l.b16 %v520
      %v2040 = vunpack.c.h.b16 %v520
      %v2041 = vunpack.c.l.b16 %v521
      %v2042 = vunpack.c.h.b16 %v521
      %v2043 = vunpack.c.l.b16 %v522
      %v2044 = vunpack.c.h.b16 %v522
      %v2045 = vunpack.c.l.b16 %v523
      %v2046 = vunpack.c.h.b16 %v523
      %v2047 = vunpack.c.l.b16 %v524
      %v2048 = vunpack.c.h.b16 %v524
      %v2049 = vunpack.c.l.b16 %v525
      %v2050 = vunpack.c.h.b16 %v525
      %v2051 = vunpack.c.l.b16 %v526
      %v2052 = vunpack.c.h.b16 %v526
      %v2053 = vunpack.c.l.b16 %v527
      %v2054 = vunpack.c.h.b16 %v527
      %v2055 = vunpack.c.l.b16 %v528
      %v2056 = vunpack.c.h.b16 %v528
      %v2057 = vunpack.c.l.b16 %v529
      %v2058 = vunpack.c.h.b16 %v529
      %v2059 = vunpack.c.l.b16 %v530
      %v2060 = vunpack.c.h.b16 %v530
      %v2061 = vunpack.c.l.b16 %v531
      %v2062 = vunpack.c.h.b16 %v531
      %v2063 = vunpack.c.l.b16 %v532
      %v2064 = vunpack.c.h.b16 %v532
      %v2065 = vunpack.c.l.b16 %v533
      %v2066 = vunpack.c.h.b16 %v533
      %v2067 = vunpack.c.l.b16 %v534
      %v2068 = vunpack.c.h.b16 %v534
      %v2069 = vunpack.c.l.b16 %v535
      %v2070 = vunpack.c.h.b16 %v535
      %v2071 = vunpack.c.l.b16 %v536
      %v2072 = vunpack.c.h.b16 %v536
      %v2073 = vunpack.c.l.b16 %v537
      %v2074 = vunpack.c.h.b16 %v537
      %v2075 = vunpack.c.l.b16 %v538
      %v2076 = vunpack.c.h.b16 %v538
      %v2077 = vunpack.c.l.b16 %v539
      %v2078 = vunpack.c.h.b16 %v539
      %v2079 = vunpack.c.l.b16 %v540
      %v2080 = vunpack.c.h.b16 %v540
      %v2081 = vunpack.c.l.b16 %v541
      %v2082 = vunpack.c.h.b16 %v541
      %v2083 = vunpack.c.l.b16 %v542
      %v2084 = vunpack.c.h.b16 %v542
      %v2085 = vunpack.c.l.b16 %v543
      %v2086 = vunpack.c.h.b16 %v543
      %v2087 = vunpack.c.l.b16 %v544
      %v2088 = vunpack.c.h.b16 %v544
      %v2089 = vunpack.c.l.b16 %v545
      %v2090 = vunpack.c.h.b16 %v545
      %v2091 = vunpack.c.l.b16 %v546
      %v2092 = vunpack.c.h.b16 %v546
      %v2093 = vunpack.c.l.b16 %v547
      %v2094 = vunpack.c.h.b16 %v547
      %v2095 = vunpack.c.l.b16 %v548
      %v2096 = vunpack.c.h.b16 %v548
      %v2097 = vunpack.c.l.b16 %v549
      %v2098 = vunpack.c.h.b16 %v549
      %v2099 = vunpack.c.l.b16 %v550
      %v2100 = vunpack.c.h.b16 %v550
      %v2101 = vunpack.c.l.b16 %v551
      %v2102 = vunpack.c.h.b16 %v551
      %v2103 = vunpack.c.l.b16 %v552
      %v2104 = vunpack.c.h.b16 %v552
      %v2105 = vunpack.c.l.b16 %v553
      %v2106 = vunpack.c.h.b16 %v553
      %v2107 = vunpack.c.l.b16 %v554
      %v2108 = vunpack.c.h.b16 %v554
      %v2109 = vunpack.c.l.b16 %v555
      %v2110 = vunpack.c.h.b16 %v555
      %v2111 = vunpack.c.l.b16 %v556
      %v2112 = vunpack.c.h.b16 %v556
      %v2113 = vunpack.c.l.b16 %v557
      %v2114 = vunpack.c.h.b16 %v557
      %v2115 = vunpack.c.l.b16 %v558
      %v2116 = vunpack.c.h.b16 %v558
      %v2117 = vunpack.c.l.b16 %v559
      %v2118 = vunpack.c.h.b16 %v559
      %v2119 = vunpack.c.l.b16 %v560
      %v2120 = vunpack.c.h.b16 %v560
      %v2121 = vunpack.c.l.b16 %v561
      %v2122 = vunpack.c.h.b16 %v561
      %v2123 = vunpack.c.l.b16 %v562
      %v2124 = vunpack.c.h.b16 %v562
      %v2125 = vunpack.c.l.b16 %v563
      %v2126 = vunpack.c.h.b16 %v563
      %v2127 = vunpack.c.l.b16 %v564
      %v2128 = vunpack.c.h.b16 %v564
      %v2129 = vunpack.c.l.b16 %v565
      %v2130 = vunpack.c.h.b16 %v565
      %v2131 = vunpack.c.l.b16 %v566
      %v2132 = vunpack.c.h.b16 %v566
      %v2133 = vunpack.c.l.b16 %v567
      %v2134 = vunpack.c.h.b16 %v567
      %v2135 = vunpack.c.l.b16 %v568
      %v2136 = vunpack.c.h.b16 %v568
      %v2137 = vunpack.c.l.b16 %v569
      %v2138 = vunpack.c.h.b16 %v569
      %v2139 = vunpack.c.l.b16 %v570
      %v2140 = vunpack.c.h.b16 %v570
      %v2141 = vunpack.c.l.b16 %v571
      %v2142 = vunpack.c.h.b16 %v571
      %v2143 = vunpack.c.l.b16 %v572
      %v2144 = vunpack.c.h.b16 %v572
      %v2145 = vunpack.c.l.b16 %v573
      %v2146 = vunpack.c.h.b16 %v573
      %v2147 = vunpack.c.l.b16 %v574
      %v2148 = vunpack.c.h.b16 %v574
      %v2149 = vunpack.c.l.b16 %v575
      %v2150 = vunpack.c.h.b16 %v575
      %v2151 = vunpack.c.l.b16 %v576
      %v2152 = vunpack.c.h.b16 %v576
      %v2153 = vunpack.c.l.b16 %v577
      %v2154 = vunpack.c.h.b16 %v577
      %v2155 = vunpack.c.l.b16 %v578
      %v2156 = vunpack.c.h.b16 %v578
      %v2157 = vunpack.c.l.b16 %v579
      %v2158 = vunpack.c.h.b16 %v579
      %v2159 = vunpack.c.l.b16 %v580
      %v2160 = vunpack.c.h.b16 %v580
      %v2161 = vunpack.c.l.b16 %v581
      %v2162 = vunpack.c.h.b16 %v581
      %v2163 = vunpack.c.l.b16 %v582
      %v2164 = vunpack.c.h.b16 %v582
      %v2165 = vunpack.c.l.b16 %v583
      %v2166 = vunpack.c.h.b16 %v583
      %v2167 = vunpack.c.l.b16 %v584
      %v2168 = vunpack.c.h.b16 %v584
      %v2169 = vunpack.c.l.b16 %v585
      %v2170 = vunpack.c.h.b16 %v585
      %v2171 = vunpack.c.l.b16 %v586
      %v2172 = vunpack.c.h.b16 %v586
      %v2173 = vunpack.c.l.b16 %v587
      %v2174 = vunpack.c.h.b16 %v587
      %v2175 = vunpack.c.l.b16 %v588
      %v2176 = vunpack.c.h.b16 %v588
      %v2177 = vunpack.c.l.b16 %v589
      %v2178 = vunpack.c.h.b16 %v589
      %v2179 = vunpack.c.l.b16 %v590
      %v2180 = vunpack.c.h.b16 %v590
      %v2181 = vunpack.c.l.b16 %v591
      %v2182 = vunpack.c.h.b16 %v591
      %v2183 = vunpack.c.l.b16 %v592
      %v2184 = vunpack.c.h.b16 %v592
      %v2185 = vunpack.c.l.b16 %v593
      %v2186 = vunpack.c.h.b16 %v593
      %v2187 = vunpack.c.l.b16 %v594
      %v2188 = vunpack.c.h.b16 %v594
      %v2189 = vunpack.c.l.b16 %v595
      %v2190 = vunpack.c.h.b16 %v595
      %v2191 = vunpack.c.l.b16 %v596
      %v2192 = vunpack.c.h.b16 %v596
      %v2193 = vunpack.c.l.b16 %v597
      %v2194 = vunpack.c.h.b16 %v597
      %v2195 = vunpack.c.l.b16 %v598
      %v2196 = vunpack.c.h.b16 %v598
      %v2197 = vunpack.c.l.b16 %v599
      %v2198 = vunpack.c.h.b16 %v599
      %v2199 = vunpack.c.l.b16 %v600
      %v2200 = vunpack.c.h.b16 %v600
      %v2201 = vunpack.c.l.b16 %v601
      %v2202 = vunpack.c.h.b16 %v601
      %v2203 = vunpack.c.l.b16 %v602
      %v2204 = vunpack.c.h.b16 %v602
      %v2205 = vunpack.c.l.b16 %v603
      %v2206 = vunpack.c.h.b16 %v603
      %v2207 = vunpack.c.l.b16 %v604
      %v2208 = vunpack.c.h.b16 %v604
      %v2209 = vunpack.c.l.b16 %v605
      %v2210 = vunpack.c.h.b16 %v605
      %v2211 = vunpack.c.l.b16 %v606
      %v2212 = vunpack.c.h.b16 %v606
      %v2213 = vunpack.c.l.b16 %v607
      %v2214 = vunpack.c.h.b16 %v607
      %v2215 = vunpack.c.l.b16 %v608
      %v2216 = vunpack.c.h.b16 %v608
      %v2217 = vunpack.c.l.b16 %v609
      %v2218 = vunpack.c.h.b16 %v609
      %v2219 = vunpack.c.l.b16 %v610
      %v2220 = vunpack.c.h.b16 %v610
      %v2221 = vunpack.c.l.b16 %v611
      %v2222 = vunpack.c.h.b16 %v611
      %v2223 = vunpack.c.l.b16 %v612
      %v2224 = vunpack.c.h.b16 %v612
      %v2225 = vunpack.c.l.b16 %v613
      %v2226 = vunpack.c.h.b16 %v613
      %v2227 = vunpack.c.l.b16 %v614
      %v2228 = vunpack.c.h.b16 %v614
      %v2229 = vunpack.c.l.b16 %v615
      %v2230 = vunpack.c.h.b16 %v615
      %v2231 = vunpack.c.l.b16 %v616
      %v2232 = vunpack.c.h.b16 %v616
      %v2233 = vunpack.c.l.b16 %v617
      %v2234 = vunpack.c.h.b16 %v617
      %v2235 = vunpack.c.l.b16 %v618
      %v2236 = vunpack.c.h.b16 %v618
      %v2237 = vunpack.c.l.b16 %v619
      %v2238 = vunpack.c.h.b16 %v619
      %v2239 = vunpack.c.l.b16 %v620
      %v2240 = vunpack.c.h.b16 %v620
      %v2241 = vunpack.c.l.b16 %v621
      %v2242 = vunpack.c.h.b16 %v621
      %v2243 = vunpack.c.l.b16 %v622
      %v2244 = vunpack.c.h.b16 %v622
      %v2245 = vunpack.c.l.b16 %v623
      %v2246 = vunpack.c.h.b16 %v623
      %v2247 = vunpack.c.l.b16 %v624
      %v2248 = vunpack.c.h.b16 %v624
      %v2249 = vunpack.c.l.b16 %v625
      %v2250 = vunpack.c.h.b16 %v625
      %v2251 = vunpack.c.l.b16 %v626
      %v2252 = vunpack.c.h.b16 %v626
      %v2253 = vunpack.c.l.b16 %v627
      %v2254 = vunpack.c.h.b16 %v627
      %v2255 = vunpack.c.l.b16 %v628
      %v2256 = vunpack.c.h.b16 %v628
      %v2257 = vunpack.c.l.b16 %v629
      %v2258 = vunpack.c.h.b16 %v629
      %v2259 = vunpack.c.l.b16 %v630
      %v2260 = vunpack.c.h.b16 %v630
      %v2261 = vunpack.c.l.b16 %v631
      %v2262 = vunpack.c.h.b16 %v631
      %v2263 = vunpack.c.l.b16 %v632
      %v2264 = vunpack.c.h.b16 %v632
      %v2265 = vunpack.c.l.b16 %v633
      %v2266 = vunpack.c.h.b16 %v633
      %v2267 = vunpack.c.l.b16 %v634
      %v2268 = vunpack.c.h.b16 %v634
      %v2269 = vunpack.c.l.b16 %v635
      %v2270 = vunpack.c.h.b16 %v635
      %v2271 = vunpack.c.l.b16 %v636
      %v2272 = vunpack.c.h.b16 %v636
      %v2273 = vunpack.c.l.b16 %v637
      %v2274 = vunpack.c.h.b16 %v637
      %v2275 = vunpack.c.l.b16 %v638
      %v2276 = vunpack.c.h.b16 %v638
      %v2277 = vunpack.c.l.b16 %v639
      %v2278 = vunpack.c.h.b16 %v639
      %v2279 = vunpack.c.l.b16 %v640
      %v2280 = vunpack.c.h.b16 %v640
      %v2281 = vunpack.c.l.b16 %v641
      %v2282 = vunpack.c.h.b16 %v641
      %v2283 = vunpack.c.l.b16 %v642
      %v2284 = vunpack.c.h.b16 %v642
      %v2285 = vunpack.c.l.b16 %v643
      %v2286 = vunpack.c.h.b16 %v643
      %v2287 = vunpack.c.l.b16 %v644
      %v2288 = vunpack.c.h.b16 %v644
      %v2289 = vunpack.c.l.b16 %v645
      %v2290 = vunpack.c.h.b16 %v645
      %v2291 = vunpack.c.l.b16 %v646
      %v2292 = vunpack.c.h.b16 %v646
      %v2293 = vunpack.c.l.b16 %v647
      %v2294 = vunpack.c.h.b16 %v647
      %v2295 = vunpack.c.l.b16 %v648
      %v2296 = vunpack.c.h.b16 %v648
      %v2297 = vunpack.c.l.b16 %v649
      %v2298 = vunpack.c.h.b16 %v649
      %v2299 = vunpack.c.l.b16 %v650
      %v2300 = vunpack.c.h.b16 %v650
      %v2301 = vunpack.c.l.b16 %v651
      %v2302 = vunpack.c.h.b16 %v651
      %v2303 = vunpack.c.l.b16 %v652
      %v2304 = vunpack.c.h.b16 %v652
      %v2305 = vunpack.c.l.b16 %v653
      %v2306 = vunpack.c.h.b16 %v653
      %v2307 = vunpack.c.l.b16 %v654
      %v2308 = vunpack.c.h.b16 %v654
      %v2309 = vunpack.c.l.b16 %v655
      %v2310 = vunpack.c.h.b16 %v655
      %v2311 = vunpack.c.l.b16 %v656
      %v2312 = vunpack.c.h.b16 %v656
      %v2313 = vunpack.c.l.b16 %v657
      %v2314 = vunpack.c.h.b16 %v657
      %v2315 = vunpack.c.l.b16 %v658
      %v2316 = vunpack.c.h.b16 %v658
      %v2317 = vunpack.c.l.b16 %v659
      %v2318 = vunpack.c.h.b16 %v659
      %v2319 = vunpack.c.l.b16 %v660
      %v2320 = vunpack.c.h.b16 %v660
      %v2321 = vunpack.c.l.b16 %v661
      %v2322 = vunpack.c.h.b16 %v661
      %v2323 = vunpack.c.l.b16 %v662
      %v2324 = vunpack.c.h.b16 %v662
      %v2325 = vunpack.c.l.b16 %v663
      %v2326 = vunpack.c.h.b16 %v663
      %v2327 = vunpack.c.l.b16 %v664
      %v2328 = vunpack.c.h.b16 %v664
      %v2329 = vunpack.c.l.b16 %v665
      %v2330 = vunpack.c.h.b16 %v665
      %v2331 = vunpack.c.l.b16 %v666
      %v2332 = vunpack.c.h.b16 %v666
      %v2333 = vunpack.c.l.b16 %v667
      %v2334 = vunpack.c.h.b16 %v667
      %v2335 = vunpack.c.l.b16 %v668
      %v2336 = vunpack.c.h.b16 %v668
      %v2337 = vunpack.c.l.b16 %v669
      %v2338 = vunpack.c.h.b16 %v669
      %v2339 = vunpack.c.l.b16 %v670
      %v2340 = vunpack.c.h.b16 %v670
      %v2341 = vunpack.c.l.b16 %v671
      %v2342 = vunpack.c.h.b16 %v671
      %v2343 = vunpack.c.l.b16 %v672
      %v2344 = vunpack.c.h.b16 %v672
      %v2345 = vunpack.c.l.b16 %v673
      %v2346 = vunpack.c.h.b16 %v673
      %v2347 = vunpack.c.l.b16 %v674
      %v2348 = vunpack.c.h.b16 %v674
      %v2349 = vunpack.c.l.b16 %v675
      %v2350 = vunpack.c.h.b16 %v675
      %v2351 = vunpack.c.l.b16 %v676
      %v2352 = vunpack.c.h.b16 %v676
      %v2353 = vunpack.c.l.b16 %v677
      %v2354 = vunpack.c.h.b16 %v677
      %v2355 = vunpack.c.l.b16 %v678
      %v2356 = vunpack.c.h.b16 %v678
      %v2357 = vunpack.c.l.b16 %v679
      %v2358 = vunpack.c.h.b16 %v679
      %v2359 = vunpack.c.l.b16 %v680
      %v2360 = vunpack.c.h.b16 %v680
      %v2361 = vunpack.c.l.b16 %v681
      %v2362 = vunpack.c.h.b16 %v681
      %v2363 = vunpack.c.l.b16 %v682
      %v2364 = vunpack.c.h.b16 %v682
      %v2365 = vunpack.c.l.b16 %v683
      %v2366 = vunpack.c.h.b16 %v683
      %v2367 = vunpack.c.l.b16 %v684
      %v2368 = vunpack.c.h.b16 %v684
      %v2369 = vunpack.c.l.b16 %v685
      %v2370 = vunpack.c.h.b16 %v685
      %v2371 = vunpack.c.l.b16 %v686
      %v2372 = vunpack.c.h.b16 %v686
      %v2373 = vunpack.c.l.b16 %v687
      %v2374 = vunpack.c.h.b16 %v687
      %v2375 = vunpack.c.l.b16 %v688
      %v2376 = vunpack.c.h.b16 %v688
      %v2377 = vunpack.c.l.b16 %v689
      %v2378 = vunpack.c.h.b16 %v689
      %v2379 = vunpack.c.l.b16 %v690
      %v2380 = vunpack.c.h.b16 %v690
      %v2381 = vunpack.c.l.b16 %v691
      %v2382 = vunpack.c.h.b16 %v691
      %v2383 = vunpack.c.l.b16 %v692
      %v2384 = vunpack.c.h.b16 %v692
      %v2385 = vunpack.c.l.b16 %v693
      %v2386 = vunpack.c.h.b16 %v693
      %v2387 = vunpack.c.l.b16 %v694
      %v2388 = vunpack.c.h.b16 %v694
      %v2389 = vunpack.c.l.b16 %v695
      %v2390 = vunpack.c.h.b16 %v695
      %v2391 = vunpack.c.l.b16 %v696
      %v2392 = vunpack.c.h.b16 %v696
      %v2393 = vunpack.c.l.b16 %v697
      %v2394 = vunpack.c.h.b16 %v697
      %v2395 = vunpack.c.l.b16 %v698
      %v2396 = vunpack.c.h.b16 %v698
      %v2397 = vunpack.c.l.b16 %v699
      %v2398 = vunpack.c.h.b16 %v699
      %v2399 = vunpack.c.l.b16 %v700
      %v2400 = vunpack.c.h.b16 %v700
      %v2401 = vunpack.c.l.b16 %v701
      %v2402 = vunpack.c.h.b16 %v701
      %v2403 = vunpack.c.l.b16 %v702
      %v2404 = vunpack.c.h.b16 %v702
      %v2405 = vunpack.c.l.b16 %v703
      %v2406 = vunpack.c.h.b16 %v703
      %v2407 = vunpack.c.l.b16 %v704
      %v2408 = vunpack.c.h.b16 %v704
      %v2409 = vunpack.c.l.b16 %v705
      %v2410 = vunpack.c.h.b16 %v705
      %v2411 = vunpack.c.l.b16 %v706
      %v2412 = vunpack.c.h.b16 %v706
      %v2413 = vunpack.c.l.b16 %v707
      %v2414 = vunpack.c.h.b16 %v707
      %v2415 = vunpack.c.l.b16 %v708
      %v2416 = vunpack.c.h.b16 %v708
      %v2417 = vunpack.c.l.b16 %v709
      %v2418 = vunpack.c.h.b16 %v709
      %v2419 = vunpack.c.l.b16 %v710
      %v2420 = vunpack.c.h.b16 %v710
      %v2421 = vunpack.c.l.b16 %v711
      %v2422 = vunpack.c.h.b16 %v711
      %v2423 = vunpack.c.l.b16 %v712
      %v2424 = vunpack.c.h.b16 %v712
      %v2425 = vunpack.c.l.b16 %v713
      %v2426 = vunpack.c.h.b16 %v713
      %v2427 = vunpack.c.l.b16 %v714
      %v2428 = vunpack.c.h.b16 %v714
      %v2429 = vunpack.c.l.b16 %v715
      %v2430 = vunpack.c.h.b16 %v715
      %v2431 = vunpack.c.l.b16 %v716
      %v2432 = vunpack.c.h.b16 %v716
      %v2433 = vunpack.c.l.b16 %v717
      %v2434 = vunpack.c.h.b16 %v717
      %v2435 = vunpack.c.l.b16 %v718
      %v2436 = vunpack.c.h.b16 %v718
      %v2437 = vunpack.c.l.b16 %v719
      %v2438 = vunpack.c.h.b16 %v719
      %v2439 = vunpack.c.l.b16 %v720
      %v2440 = vunpack.c.h.b16 %v720
      %v2441 = vunpack.c.l.b16 %v721
      %v2442 = vunpack.c.h.b16 %v721
      %v2443 = vunpack.c.l.b16 %v722
      %v2444 = vunpack.c.h.b16 %v722
      %v2445 = vunpack.c.l.b16 %v723
      %v2446 = vunpack.c.h.b16 %v723
      %v2447 = vunpack.c.l.b16 %v724
      %v2448 = vunpack.c.h.b16 %v724
      %v2449 = vunpack.c.l.b16 %v725
      %v2450 = vunpack.c.h.b16 %v725
      %v2451 = vunpack.c.l.b16 %v726
      %v2452 = vunpack.c.h.b16 %v726
      %v2453 = vunpack.c.l.b16 %v727
      %v2454 = vunpack.c.h.b16 %v727
      %v2455 = vunpack.c.l.b16 %v728
      %v2456 = vunpack.c.h.b16 %v728
      %v2457 = vunpack.c.l.b16 %v729
      %v2458 = vunpack.c.h.b16 %v729
      %v2459 = vunpack.c.l.b16 %v730
      %v2460 = vunpack.c.h.b16 %v730
      %v2461 = vunpack.c.l.b16 %v731
      %v2462 = vunpack.c.h.b16 %v731
      %v2463 = vunpack.c.l.b16 %v732
      %v2464 = vunpack.c.h.b16 %v732
      %v2465 = vunpack.c.l.b16 %v733
      %v2466 = vunpack.c.h.b16 %v733
      %v2467 = vunpack.c.l.b16 %v734
      %v2468 = vunpack.c.h.b16 %v734
      %v2469 = vunpack.c.l.b16 %v735
      %v2470 = vunpack.c.h.b16 %v735
      %v2471 = vunpack.c.l.b16 %v736
      %v2472 = vunpack.c.h.b16 %v736
      %v2473 = vunpack.c.l.b16 %v737
      %v2474 = vunpack.c.h.b16 %v737
      %v2475 = vunpack.c.l.b16 %v738
      %v2476 = vunpack.c.h.b16 %v738
      %v2477 = vunpack.c.l.b16 %v739
      %v2478 = vunpack.c.h.b16 %v739
      %v2479 = vunpack.c.l.b16 %v740
      %v2480 = vunpack.c.h.b16 %v740
      %v2481 = vunpack.c.l.b16 %v741
      %v2482 = vunpack.c.h.b16 %v741
      %v2483 = vunpack.c.l.b16 %v742
      %v2484 = vunpack.c.h.b16 %v742
      %v2485 = vunpack.c.l.b16 %v743
      %v2486 = vunpack.c.h.b16 %v743
      %v2487 = vunpack.c.l.b16 %v744
      %v2488 = vunpack.c.h.b16 %v744
      %v2489 = vunpack.c.l.b16 %v745
      %v2490 = vunpack.c.h.b16 %v745
      %v2491 = vunpack.c.l.b16 %v746
      %v2492 = vunpack.c.h.b16 %v746
      %v2493 = vunpack.c.l.b16 %v747
      %v2494 = vunpack.c.h.b16 %v747
      %v2495 = vunpack.c.l.b16 %v748
      %v2496 = vunpack.c.h.b16 %v748
      %v2497 = vunpack.c.l.b16 %v749
      %v2498 = vunpack.c.h.b16 %v749
      %v2499 = vunpack.c.l.b16 %v750
      %v2500 = vunpack.c.h.b16 %v750
      %v2501 = vunpack.c.l.b16 %v751
      %v2502 = vunpack.c.h.b16 %v751
      %v2503 = vunpack.c.l.b16 %v752
      %v2504 = vunpack.c.h.b16 %v752
      %v2505 = vunpack.c.l.b16 %v753
      %v2506 = vunpack.c.h.b16 %v753
      %v2507 = vunpack.c.l.b16 %v754
      %v2508 = vunpack.c.h.b16 %v754
      %v2509 = vunpack.c.l.b16 %v755
      %v2510 = vunpack.c.h.b16 %v755
      %v2511 = vunpack.c.l.b16 %v756
      %v2512 = vunpack.c.h.b16 %v756
      %v2513 = vunpack.c.l.b16 %v757
      %v2514 = vunpack.c.h.b16 %v757
      %v2515 = vunpack.c.l.b16 %v758
      %v2516 = vunpack.c.h.b16 %v758
      %v2517 = vunpack.c.l.b16 %v759
      %v2518 = vunpack.c.h.b16 %v759
      %v2519 = vunpack.c.l.b16 %v760
      %v2520 = vunpack.c.h.b16 %v760
      %v2521 = vunpack.c.l.b16 %v761
      %v2522 = vunpack.c.h.b16 %v761
      %v2523 = vunpack.c.l.b16 %v762
      %v2524 = vunpack.c.h.b16 %v762
      %v2525 = vunpack.c.l.b16 %v763
      %v2526 = vunpack.c.h.b16 %v763
      %v2527 = vunpack.c.l.b16 %v764
      %v2528 = vunpack.c.h.b16 %v764
      %v2529 = vunpack.c.l.b16 %v765
      %v2530 = vunpack.c.h.b16 %v765
      %v2531 = vunpack.c.l.b16 %v766
      %v2532 = vunpack.c.h.b16 %v766
      %v2533 = vunpack.c.l.b16 %v767
      %v2534 = vunpack.c.h.b16 %v767
      %v2535 = vunpack.c.l.b16 %v768
      %v2536 = vunpack.c.h.b16 %v768
      %v2537 = vunpack.c.l.b16 %v769
      %v2538 = vunpack.c.h.b16 %v769
      %v2539 = vunpack.c.l.b16 %v770
      %v2540 = vunpack.c.h.b16 %v770
      %v2541 = vunpack.c.l.b16 %v771
      %v2542 = vunpack.c.h.b16 %v771
      %v2543 = vunpack.c.l.b16 %v772
      %v2544 = vunpack.c.h.b16 %v772
      %v2545 = vunpack.c.l.b16 %v773
      %v2546 = vunpack.c.h.b16 %v773
      %v2547 = vunpack.c.l.b16 %v774
      %v2548 = vunpack.c.h.b16 %v774
      %v2549 = vunpack.c.l.b16 %v775
      %v2550 = vunpack.c.h.b16 %v775
      %v2551 = vunpack.c.l.b16 %v776
      %v2552 = vunpack.c.h.b16 %v776
      %v2553 = vunpack.c.l.b16 %v777
      %v2554 = vunpack.c.h.b16 %v777
      %v2555 = vunpack.c.l.b16 %v778
      %v2556 = vunpack.c.h.b16 %v778
      %v2557 = vunpack.c.l.b16 %v779
      %v2558 = vunpack.c.h.b16 %v779
      %v2559 = vunpack.c.l.b16 %v780
      %v2560 = vunpack.c.h.b16 %v780
      %v2561 = vpack.c.b16 %v1553, %v1537
      %v2562 = vpack.c.b16 %v1554, %v1538
      %v2563 = vpack.c.b16 %v1555, %v1539
      %v2564 = vpack.c.b16 %v1556, %v1540
      %v2565 = vpack.c.b16 %v1557, %v1541
      %v2566 = vpack.c.b16 %v1558, %v1542
      %v2567 = vpack.c.b16 %v1559, %v1543
      %v2568 = vpack.c.b16 %v1560, %v1544
      %v2569 = vpack.c.b16 %v1561, %v1545
      %v2570 = vpack.c.b16 %v1562, %v1546
      %v2571 = vpack.c.b16 %v1563, %v1547
      %v2572 = vpack.c.b16 %v1564, %v1548
      %v2573 = vpack.c.b16 %v1565, %v1549
      %v2574 = vpack.c.b16 %v1566, %v1550
      %v2575 = vpack.c.b16 %v1567, %v1551
      %v2576 = vpack.c.b16 %v1568, %v1552
      %v2577 = vpack.c.b16 %v1585, %v1569
      %v2578 = vpack.c.b16 %v1586, %v1570
      %v2579 = vpack.c.b16 %v1587, %v1571
      %v2580 = vpack.c.b16 %v1588, %v1572
      %v2581 = vpack.c.b16 %v1589, %v1573
      %v2582 = vpack.c.b16 %v1590, %v1574
      %v2583 = vpack.c.b16 %v1591, %v1575
      %v2584 = vpack.c.b16 %v1592, %v1576
      %v2585 = vpack.c.b16 %v1593, %v1577
      %v2586 = vpack.c.b16 %v1594, %v1578
      %v2587 = vpack.c.b16 %v1595, %v1579
      %v2588 = vpack.c.b16 %v1596, %v1580
      %v2589 = vpack.c.b16 %v1597, %v1581
      %v2590 = vpack.c.b16 %v1598, %v1582
      %v2591 = vpack.c.b16 %v1599, %v1583
      %v2592 = vpack.c.b16 %v1600, %v1584
      %v2593 = vpack.c.b16 %v1617, %v1601
      %v2594 = vpack.c.b16 %v1618, %v1602
      %v2595 = vpack.c.b16 %v1619, %v1603
      %v2596 = vpack.c.b16 %v1620, %v1604
      %v2597 = vpack.c.b16 %v1621, %v1605
      %v2598 = vpack.c.b16 %v1622, %v1606
      %v2599 = vpack.c.b16 %v1623, %v1607
      %v2600 = vpack.c.b16 %v1624, %v1608
      %v2601 = vpack.c.b16 %v1625, %v1609
      %v2602 = vpack.c.b16 %v1626, %v1610
      %v2603 = vpack.c.b16 %v1627, %v1611
      %v2604 = vpack.c.b16 %v1628, %v1612
      %v2605 = vpack.c.b16 %v1629, %v1613
      %v2606 = vpack.c.b16 %v1630, %v1614
      %v2607 = vpack.c.b16 %v1631, %v1615
      %v2608 = vpack.c.b16 %v1632, %v1616
      %v2609 = vpack.c.b16 %v1649, %v1633
      %v2610 = vpack.c.b16 %v1650, %v1634
      %v2611 = vpack.c.b16 %v1651, %v1635
      %v2612 = vpack.c.b16 %v1652, %v1636
      %v2613 = vpack.c.b16 %v1653, %v1637
      %v2614 = vpack.c.b16 %v1654, %v1638
      %v2615 = vpack.c.b16 %v1655, %v1639
      %v2616 = vpack.c.b16 %v1656, %v1640
      %v2617 = vpack.c.b16 %v1657, %v1641
      %v2618 = vpack.c.b16 %v1658, %v1642
      %v2619 = vpack.c.b16 %v1659, %v1643
      %v2620 = vpack.c.b16 %v1660, %v1644
      %v2621 = vpack.c.b16 %v1661, %v1645
      %v2622 = vpack.c.b16 %v1662, %v1646
      %v2623 = vpack.c.b16 %v1663, %v1647
      %v2624 = vpack.c.b16 %v1664, %v1648
      %v2625 = vpack.c.b16 %v1681, %v1665
      %v2626 = vpack.c.b16 %v1682, %v1666
      %v2627 = vpack.c.b16 %v1683, %v1667
      %v2628 = vpack.c.b16 %v1684, %v1668
      %v2629 = vpack.c.b16 %v1685, %v1669
      %v2630 = vpack.c.b16 %v1686, %v1670
      %v2631 = vpack.c.b16 %v1687, %v1671
      %v2632 = vpack.c.b16 %v1688, %v1672
      %v2633 = vpack.c.b16 %v1689, %v1673
      %v2634 = vpack.c.b16 %v1690, %v1674
      %v2635 = vpack.c.b16 %v1691, %v1675
      %v2636 = vpack.c.b16 %v1692, %v1676
      %v2637 = vpack.c.b16 %v1693, %v1677
      %v2638 = vpack.c.b16 %v1694, %v1678
      %v2639 = vpack.c.b16 %v1695, %v1679
      %v2640 = vpack.c.b16 %v1696, %v1680
      %v2641 = vpack.c.b16 %v1713, %v1697
      %v2642 = vpack.c.b16 %v1714, %v1698
      %v2643 = vpack.c.b16 %v1715, %v1699
      %v2644 = vpack.c.b16 %v1716, %v1700
      %v2645 = vpack.c.b16 %v1717, %v1701
      %v2646 = vpack.c.b16 %v1718, %v1702
      %v2647 = vpack.c.b16 %v1719, %v1703
      %v2648 = vpack.c.b16 %v1720, %v1704
      %v2649 = vpack.c.b16 %v1721, %v1705
      %v2650 = vpack.c.b16 %v1722, %v1706
      %v2651 = vpack.c.b16 %v1723, %v1707
      %v2652 = vpack.c.b16 %v1724, %v1708
      %v2653 = vpack.c.b16 %v1725, %v1709
      %v2654 = vpack.c.b16 %v1726, %v1710
      %v2655 = vpack.c.b16 %v1727, %v1711
      %v2656 = vpack.c.b16 %v1728, %v1712
      %v2657 = vpack.c.b16 %v1745, %v1729
      %v2658 = vpack.c.b16 %v1746, %v1730
      %v2659 = vpack.c.b16 %v1747, %v1731
      %v2660 = vpack.c.b16 %v1748, %v1732
      %v2661 = vpack.c.b16 %v1749, %v1733
      %v2662 = vpack.c.b16 %v1750, %v1734
      %v2663 = vpack.c.b16 %v1751, %v1735
      %v2664 = vpack.c.b16 %v1752, %v1736
      %v2665 = vpack.c.b16 %v1753, %v1737
      %v2666 = vpack.c.b16 %v1754, %v1738
      %v2667 = vpack.c.b16 %v1755, %v1739
      %v2668 = vpack.c.b16 %v1756, %v1740
      %v2669 = vpack.c.b16 %v1757, %v1741
      %v2670 = vpack.c.b16 %v1758, %v1742
      %v2671 = vpack.c.b16 %v1759, %v1743
      %v2672 = vpack.c.b16 %v1760, %v1744
      %v2673 = vpack.c.b16 %v1777, %v1761
      %v2674 = vpack.c.b16 %v1778, %v1762
      %v2675 = vpack.c.b16 %v1779, %v1763
      %v2676 = vpack.c.b16 %v1780, %v1764
      %v2677 = vpack.c.b16 %v1781, %v1765
      %v2678 = vpack.c.b16 %v1782, %v1766
      %v2679 = vpack.c.b16 %v1783, %v1767
      %v2680 = vpack.c.b16 %v1784, %v1768
      %v2681 = vpack.c.b16 %v1785, %v1769
      %v2682 = vpack.c.b16 %v1786, %v1770
      %v2683 = vpack.c.b16 %v1787, %v1771
      %v2684 = vpack.c.b16 %v1788, %v1772
      %v2685 = vpack.c.b16 %v1789, %v1773
      %v2686 = vpack.c.b16 %v1790, %v1774
      %v2687 = vpack.c.b16 %v1791, %v1775
      %v2688 = vpack.c.b16 %v1792, %v1776
      %v2689 = vpack.c.b16 %v1809, %v1793
      %v2690 = vpack.c.b16 %v1810, %v1794
      %v2691 = vpack.c.b16 %v1811, %v1795
      %v2692 = vpack.c.b16 %v1812, %v1796
      %v2693 = vpack.c.b16 %v1813, %v1797
      %v2694 = vpack.c.b16 %v1814, %v1798
      %v2695 = vpack.c.b16 %v1815, %v1799
      %v2696 = vpack.c.b16 %v1816, %v1800
      %v2697 = vpack.c.b16 %v1817, %v1801
      %v2698 = vpack.c.b16 %v1818, %v1802
      %v2699 = vpack.c.b16 %v1819, %v1803
      %v2700 = vpack.c.b16 %v1820, %v1804
      %v2701 = vpack.c.b16 %v1821, %v1805
      %v2702 = vpack.c.b16 %v1822, %v1806
      %v2703 = vpack.c.b16 %v1823, %v1807
      %v2704 = vpack.c.b16 %v1824, %v1808
      %v2705 = vpack.c.b16 %v1841, %v1825
      %v2706 = vpack.c.b16 %v1842, %v1826
      %v2707 = vpack.c.b16 %v1843, %v1827
      %v2708 = vpack.c.b16 %v1844, %v1828
      %v2709 = vpack.c.b16 %v1845, %v1829
      %v2710 = vpack.c.b16 %v1846, %v1830
      %v2711 = vpack.c.b16 %v1847, %v1831
      %v2712 = vpack.c.b16 %v1848, %v1832
      %v2713 = vpack.c.b16 %v1849, %v1833
      %v2714 = vpack.c.b16 %v1850, %v1834
      %v2715 = vpack.c.b16 %v1851, %v1835
      %v2716 = vpack.c.b16 %v1852, %v1836
      %v2717 = vpack.c.b16 %v1853, %v1837
      %v2718 = vpack.c.b16 %v1854, %v1838
      %v2719 = vpack.c.b16 %v1855, %v1839
      %v2720 = vpack.c.b16 %v1856, %v1840
      %v2721 = vpack.c.b16 %v1873, %v1857
      %v2722 = vpack.c.b16 %v1874, %v1858
      %v2723 = vpack.c.b16 %v1875, %v1859
      %v2724 = vpack.c.b16 %v1876, %v1860
      %v2725 = vpack.c.b16 %v1877, %v1861
      %v2726 = vpack.c.b16 %v1878, %v1862
      %v2727 = vpack.c.b16 %v1879, %v1863
      %v2728 = vpack.c.b16 %v1880, %v1864
      %v2729 = vpack.c.b16 %v1881, %v1865
      %v2730 = vpack.c.b16 %v1882, %v1866
      %v2731 = vpack.c.b16 %v1883, %v1867
      %v2732 = vpack.c.b16 %v1884, %v1868
      %v2733 = vpack.c.b16 %v1885, %v1869
      %v2734 = vpack.c.b16 %v1886, %v1870
      %v2735 = vpack.c.b16 %v1887, %v1871
      %v2736 = vpack.c.b16 %v1888, %v1872
      %v2737 = vpack.c.b16 %v1905, %v1889
      %v2738 = vpack.c.b16 %v1906, %v1890
      %v2739 = vpack.c.b16 %v1907, %v1891
      %v2740 = vpack.c.b16 %v1908, %v1892
      %v2741 = vpack.c.b16 %v1909, %v1893
      %v2742 = vpack.c.b16 %v1910, %v1894
      %v2743 = vpack.c.b16 %v1911, %v1895
      %v2744 = vpack.c.b16 %v1912, %v1896
      %v2745 = vpack.c.b16 %v1913, %v1897
      %v2746 = vpack.c.b16 %v1914, %v1898
      %v2747 = vpack.c.b16 %v1915, %v1899
      %v2748 = vpack.c.b16 %v1916, %v1900
      %v2749 = vpack.c.b16 %v1917, %v1901
      %v2750 = vpack.c.b16 %v1918, %v1902
      %v2751 = vpack.c.b16 %v1919, %v1903
      %v2752 = vpack.c.b16 %v1920, %v1904
      %v2753 = vpack.c.b16 %v1937, %v1921
      %v2754 = vpack.c.b16 %v1938, %v1922
      %v2755 = vpack.c.b16 %v1939, %v1923
      %v2756 = vpack.c.b16 %v1940, %v1924
      %v2757 = vpack.c.b16 %v1941, %v1925
      %v2758 = vpack.c.b16 %v1942, %v1926
      %v2759 = vpack.c.b16 %v1943, %v1927
      %v2760 = vpack.c.b16 %v1944, %v1928
      %v2761 = vpack.c.b16 %v1945, %v1929
      %v2762 = vpack.c.b16 %v1946, %v1930
      %v2763 = vpack.c.b16 %v1947, %v1931
      %v2764 = vpack.c.b16 %v1948, %v1932
      %v2765 = vpack.c.b16 %v1949, %v1933
      %v2766 = vpack.c.b16 %v1950, %v1934
      %v2767 = vpack.c.b16 %v1951, %v1935
      %v2768 = vpack.c.b16 %v1952, %v1936
      %v2769 = vpack.c.b16 %v1969, %v1953
      %v2770 = vpack.c.b16 %v1970, %v1954
      %v2771 = vpack.c.b16 %v1971, %v1955
      %v2772 = vpack.c.b16 %v1972, %v1956
      %v2773 = vpack.c.b16 %v1973, %v1957
      %v2774 = vpack.c.b16 %v1974, %v1958
      %v2775 = vpack.c.b16 %v1975, %v1959
      %v2776 = vpack.c.b16 %v1976, %v1960
      %v2777 = vpack.c.b16 %v1977, %v1961
      %v2778 = vpack.c.b16 %v1978, %v1962
      %v2779 = vpack.c.b16 %v1979, %v1963
      %v2780 = vpack.c.b16 %v1980, %v1964
      %v2781 = vpack.c.b16 %v1981, %v1965
      %v2782 = vpack.c.b16 %v1982, %v1966
      %v2783 = vpack.c.b16 %v1983, %v1967
      %v2784 = vpack.c.b16 %v1984, %v1968
      %v2785 = vpack.c.b16 %v2001, %v1985
      %v2786 = vpack.c.b16 %v2002, %v1986
      %v2787 = vpack.c.b16 %v2003, %v1987
      %v2788 = vpack.c.b16 %v2004, %v1988
      %v2789 = vpack.c.b16 %v2005, %v1989
      %v2790 = vpack.c.b16 %v2006, %v1990
      %v2791 = vpack.c.b16 %v2007, %v1991
      %v2792 = vpack.c.b16 %v2008, %v1992
      %v2793 = vpack.c.b16 %v2009, %v1993
      %v2794 = vpack.c.b16 %v2010, %v1994
      %v2795 = vpack.c.b16 %v2011, %v1995
      %v2796 = vpack.c.b16 %v2012, %v1996
      %v2797 = vpack.c.b16 %v2013, %v1997
      %v2798 = vpack.c.b16 %v2014, %v1998
      %v2799 = vpack.c.b16 %v2015, %v1999
      %v2800 = vpack.c.b16 %v2016, %v2000
      %v2801 = vpack.c.b16 %v2033, %v2017
      %v2802 = vpack.c.b16 %v2034, %v2018
      %v2803 = vpack.c.b16 %v2035, %v2019
      %v2804 = vpack.c.b16 %v2036, %v2020
      %v2805 = vpack.c.b16 %v2037, %v2021
      %v2806 = vpack.c.b16 %v2038, %v2022
      %v2807 = vpack.c.b16 %v2039, %v2023
      %v2808 = vpack.c.b16 %v2040, %v2024
      %v2809 = vpack.c.b16 %v2041, %v2025
      %v2810 = vpack.c.b16 %v2042, %v2026
      %v2811 = vpack.c.b16 %v2043, %v2027
      %v2812 = vpack.c.b16 %v2044, %v2028
      %v2813 = vpack.c.b16 %v2045, %v2029
      %v2814 = vpack.c.b16 %v2046, %v2030
      %v2815 = vpack.c.b16 %v2047, %v2031
      %v2816 = vpack.c.b16 %v2048, %v2032
      %v2817 = vpack.c.b16 %v2065, %v2049
      %v2818 = vpack.c.b16 %v2066, %v2050
      %v2819 = vpack.c.b16 %v2067, %v2051
      %v2820 = vpack.c.b16 %v2068, %v2052
      %v2821 = vpack.c.b16 %v2069, %v2053
      %v2822 = vpack.c.b16 %v2070, %v2054
      %v2823 = vpack.c.b16 %v2071, %v2055
      %v2824 = vpack.c.b16 %v2072, %v2056
      %v2825 = vpack.c.b16 %v2073, %v2057
      %v2826 = vpack.c.b16 %v2074, %v2058
      %v2827 = vpack.c.b16 %v2075, %v2059
      %v2828 = vpack.c.b16 %v2076, %v2060
      %v2829 = vpack.c.b16 %v2077, %v2061
      %v2830 = vpack.c.b16 %v2078, %v2062
      %v2831 = vpack.c.b16 %v2079, %v2063
      %v2832 = vpack.c.b16 %v2080, %v2064
      %v2833 = vpack.c.b16 %v2097, %v2081
      %v2834 = vpack.c.b16 %v2098, %v2082
      %v2835 = vpack.c.b16 %v2099, %v2083
      %v2836 = vpack.c.b16 %v2100, %v2084
      %v2837 = vpack.c.b16 %v2101, %v2085
      %v2838 = vpack.c.b16 %v2102, %v2086
      %v2839 = vpack.c.b16 %v2103, %v2087
      %v2840 = vpack.c.b16 %v2104, %v2088
      %v2841 = vpack.c.b16 %v2105, %v2089
      %v2842 = vpack.c.b16 %v2106, %v2090
      %v2843 = vpack.c.b16 %v2107, %v2091
      %v2844 = vpack.c.b16 %v2108, %v2092
      %v2845 = vpack.c.b16 %v2109, %v2093
      %v2846 = vpack.c.b16 %v2110, %v2094
      %v2847 = vpack.c.b16 %v2111, %v2095
      %v2848 = vpack.c.b16 %v2112, %v2096
      %v2849 = vpack.c.b16 %v2129, %v2113
      %v2850 = vpack.c.b16 %v2130, %v2114
      %v2851 = vpack.c.b16 %v2131, %v2115
      %v2852 = vpack.c.b16 %v2132, %v2116
      %v2853 = vpack.c.b16 %v2133, %v2117
      %v2854 = vpack.c.b16 %v2134, %v2118
      %v2855 = vpack.c.b16 %v2135, %v2119
      %v2856 = vpack.c.b16 %v2136, %v2120
      %v2857 = vpack.c.b16 %v2137, %v2121
      %v2858 = vpack.c.b16 %v2138, %v2122
      %v2859 = vpack.c.b16 %v2139, %v2123
      %v2860 = vpack.c.b16 %v2140, %v2124
      %v2861 = vpack.c.b16 %v2141, %v2125
      %v2862 = vpack.c.b16 %v2142, %v2126
      %v2863 = vpack.c.b16 %v2143, %v2127
      %v2864 = vpack.c.b16 %v2144, %v2128
      %v2865 = vpack.c.b16 %v2161, %v2145
      %v2866 = vpack.c.b16 %v2162, %v2146
      %v2867 = vpack.c.b16 %v2163, %v2147
      %v2868 = vpack.c.b16 %v2164, %v2148
      %v2869 = vpack.c.b16 %v2165, %v2149
      %v2870 = vpack.c.b16 %v2166, %v2150
      %v2871 = vpack.c.b16 %v2167, %v2151
      %v2872 = vpack.c.b16 %v2168, %v2152
      %v2873 = vpack.c.b16 %v2169, %v2153
      %v2874 = vpack.c.b16 %v2170, %v2154
      %v2875 = vpack.c.b16 %v2171, %v2155
      %v2876 = vpack.c.b16 %v2172, %v2156
      %v2877 = vpack.c.b16 %v2173, %v2157
      %v2878 = vpack.c.b16 %v2174, %v2158
      %v2879 = vpack.c.b16 %v2175, %v2159
      %v2880 = vpack.c.b16 %v2176, %v2160
      %v2881 = vpack.c.b16 %v2193, %v2177
      %v2882 = vpack.c.b16 %v2194, %v2178
      %v2883 = vpack.c.b16 %v2195, %v2179
      %v2884 = vpack.c.b16 %v2196, %v2180
      %v2885 = vpack.c.b16 %v2197, %v2181
      %v2886 = vpack.c.b16 %v2198, %v2182
      %v2887 = vpack.c.b16 %v2199, %v2183
      %v2888 = vpack.c.b16 %v2200, %v2184
      %v2889 = vpack.c.b16 %v2201, %v2185
      %v2890 = vpack.c.b16 %v2202, %v2186
      %v2891 = vpack.c.b16 %v2203, %v2187
      %v2892 = vpack.c.b16 %v2204, %v2188
      %v2893 = vpack.c.b16 %v2205, %v2189
      %v2894 = vpack.c.b16 %v2206, %v2190
      %v2895 = vpack.c.b16 %v2207, %v2191
      %v2896 = vpack.c.b16 %v2208, %v2192
      %v2897 = vpack.c.b16 %v2225, %v2209
      %v2898 = vpack.c.b16 %v2226, %v2210
      %v2899 = vpack.c.b16 %v2227, %v2211
      %v2900 = vpack.c.b16 %v2228, %v2212
      %v2901 = vpack.c.b16 %v2229, %v2213
      %v2902 = vpack.c.b16 %v2230, %v2214
      %v2903 = vpack.c.b16 %v2231, %v2215
      %v2904 = vpack.c.b16 %v2232, %v2216
      %v2905 = vpack.c.b16 %v2233, %v2217
      %v2906 = vpack.c.b16 %v2234, %v2218
      %v2907 = vpack.c.b16 %v2235, %v2219
      %v2908 = vpack.c.b16 %v2236, %v2220
      %v2909 = vpack.c.b16 %v2237, %v2221
      %v2910 = vpack.c.b16 %v2238, %v2222
      %v2911 = vpack.c.b16 %v2239, %v2223
      %v2912 = vpack.c.b16 %v2240, %v2224
      %v2913 = vpack.c.b16 %v2257, %v2241
      %v2914 = vpack.c.b16 %v2258, %v2242
      %v2915 = vpack.c.b16 %v2259, %v2243
      %v2916 = vpack.c.b16 %v2260, %v2244
      %v2917 = vpack.c.b16 %v2261, %v2245
      %v2918 = vpack.c.b16 %v2262, %v2246
      %v2919 = vpack.c.b16 %v2263, %v2247
      %v2920 = vpack.c.b16 %v2264, %v2248
      %v2921 = vpack.c.b16 %v2265, %v2249
      %v2922 = vpack.c.b16 %v2266, %v2250
      %v2923 = vpack.c.b16 %v2267, %v2251
      %v2924 = vpack.c.b16 %v2268, %v2252
      %v2925 = vpack.c.b16 %v2269, %v2253
      %v2926 = vpack.c.b16 %v2270, %v2254
      %v2927 = vpack.c.b16 %v2271, %v2255
      %v2928 = vpack.c.b16 %v2272, %v2256
      %v2929 = vpack.c.b16 %v2289, %v2273
      %v2930 = vpack.c.b16 %v2290, %v2274
      %v2931 = vpack.c.b16 %v2291, %v2275
      %v2932 = vpack.c.b16 %v2292, %v2276
      %v2933 = vpack.c.b16 %v2293, %v2277
      %v2934 = vpack.c.b16 %v2294, %v2278
      %v2935 = vpack.c.b16 %v2295, %v2279
      %v2936 = vpack.c.b16 %v2296, %v2280
      %v2937 = vpack.c.b16 %v2297, %v2281
      %v2938 = vpack.c.b16 %v2298, %v2282
      %v2939 = vpack.c.b16 %v2299, %v2283
      %v2940 = vpack.c.b16 %v2300, %v2284
      %v2941 = vpack.c.b16 %v2301, %v2285
      %v2942 = vpack.c.b16 %v2302, %v2286
      %v2943 = vpack.c.b16 %v2303, %v2287
      %v2944 = vpack.c.b16 %v2304, %v2288
      %v2945 = vpack.c.b16 %v2321, %v2305
      %v2946 = vpack.c.b16 %v2322, %v2306
      %v2947 = vpack.c.b16 %v2323, %v2307
      %v2948 = vpack.c.b16 %v2324, %v2308
      %v2949 = vpack.c.b16 %v2325, %v2309
      %v2950 = vpack.c.b16 %v2326, %v2310
      %v2951 = vpack.c.b16 %v2327, %v2311
      %v2952 = vpack.c.b16 %v2328, %v2312
      %v2953 = vpack.c.b16 %v2329, %v2313
      %v2954 = vpack.c.b16 %v2330, %v2314
      %v2955 = vpack.c.b16 %v2331, %v2315
      %v2956 = vpack.c.b16 %v2332, %v2316
      %v2957 = vpack.c.b16 %v2333, %v2317
      %v2958 = vpack.c.b16 %v2334, %v2318
      %v2959 = vpack.c.b16 %v2335, %v2319
      %v2960 = vpack.c.b16 %v2336, %v2320
      %v2961 = vpack.c.b16 %v2353, %v2337
      %v2962 = vpack.c.b16 %v2354, %v2338
      %v2963 = vpack.c.b16 %v2355, %v2339
      %v2964 = vpack.c.b16 %v2356, %v2340
      %v2965 = vpack.c.b16 %v2357, %v2341
      %v2966 = vpack.c.b16 %v2358, %v2342
      %v2967 = vpack.c.b16 %v2359, %v2343
      %v2968 = vpack.c.b16 %v2360, %v2344
      %v2969 = vpack.c.b16 %v2361, %v2345
      %v2970 = vpack.c.b16 %v2362, %v2346
      %v2971 = vpack.c.b16 %v2363, %v2347
      %v2972 = vpack.c.b16 %v2364, %v2348
      %v2973 = vpack.c.b16 %v2365, %v2349
      %v2974 = vpack.c.b16 %v2366, %v2350
      %v2975 = vpack.c.b16 %v2367, %v2351
      %v2976 = vpack.c.b16 %v2368, %v2352
      %v2977 = vpack.c.b16 %v2385, %v2369
      %v2978 = vpack.c.b16 %v2386, %v2370
      %v2979 = vpack.c.b16 %v2387, %v2371
      %v2980 = vpack.c.b16 %v2388, %v2372
      %v2981 = vpack.c.b16 %v2389, %v2373
      %v2982 = vpack.c.b16 %v2390, %v2374
      %v2983 = vpack.c.b16 %v2391, %v2375
      %v2984 = vpack.c.b16 %v2392, %v2376
      %v2985 = vpack.c.b16 %v2393, %v2377
      %v2986 = vpack.c.b16 %v2394, %v2378
      %v2987 = vpack.c.b16 %v2395, %v2379
      %v2988 = vpack.c.b16 %v2396, %v2380
      %v2989 = vpack.c.b16 %v2397, %v2381
      %v2990 = vpack.c.b16 %v2398, %v2382
      %v2991 = vpack.c.b16 %v2399, %v2383
      %v2992 = vpack.c.b16 %v2400, %v2384
      %v2993 = vpack.c.b16 %v2417, %v2401
      %v2994 = vpack.c.b16 %v2418, %v2402
      %v2995 = vpack.c.b16 %v2419, %v2403
      %v2996 = vpack.c.b16 %v2420, %v2404
      %v2997 = vpack.c.b16 %v2421, %v2405
      %v2998 = vpack.c.b16 %v2422, %v2406
      %v2999 = vpack.c.b16 %v2423, %v2407
      %v3000 = vpack.c.b16 %v2424, %v2408
      %v3001 = vpack.c.b16 %v2425, %v2409
      %v3002 = vpack.c.b16 %v2426, %v2410
      %v3003 = vpack.c.b16 %v2427, %v2411
      %v3004 = vpack.c.b16 %v2428, %v2412
      %v3005 = vpack.c.b16 %v2429, %v2413
      %v3006 = vpack.c.b16 %v2430, %v2414
      %v3007 = vpack.c.b16 %v2431, %v2415
      %v3008 = vpack.c.b16 %v2432, %v2416
      %v3009 = vpack.c.b16 %v2449, %v2433
      %v3010 = vpack.c.b16 %v2450, %v2434
      %v3011 = vpack.c.b16 %v2451, %v2435
      %v3012 = vpack.c.b16 %v2452, %v2436
      %v3013 = vpack.c.b16 %v2453, %v2437
      %v3014 = vpack.c.b16 %v2454, %v2438
      %v3015 = vpack.c.b16 %v2455, %v2439
      %v3016 = vpack.c.b16 %v2456, %v2440
      %v3017 = vpack.c.b16 %v2457, %v2441
      %v3018 = vpack.c.b16 %v2458, %v2442
      %v3019 = vpack.c.b16 %v2459, %v2443
      %v3020 = vpack.c.b16 %v2460, %v2444
      %v3021 = vpack.c.b16 %v2461, %v2445
      %v3022 = vpack.c.b16 %v2462, %v2446
      %v3023 = vpack.c.b16 %v2463, %v2447
      %v3024 = vpack.c.b16 %v2464, %v2448
      %v3025 = vpack.c.b16 %v2481, %v2465
      %v3026 = vpack.c.b16 %v2482, %v2466
      %v3027 = vpack.c.b16 %v2483, %v2467
      %v3028 = vpack.c.b16 %v2484, %v2468
      %v3029 = vpack.c.b16 %v2485, %v2469
      %v3030 = vpack.c.b16 %v2486, %v2470
      %v3031 = vpack.c.b16 %v2487, %v2471
      %v3032 = vpack.c.b16 %v2488, %v2472
      %v3033 = vpack.c.b16 %v2489, %v2473
      %v3034 = vpack.c.b16 %v2490, %v2474
      %v3035 = vpack.c.b16 %v2491, %v2475
      %v3036 = vpack.c.b16 %v2492, %v2476
      %v3037 = vpack.c.b16 %v2493, %v2477
      %v3038 = vpack.c.b16 %v2494, %v2478
      %v3039 = vpack.c.b16 %v2495, %v2479
      %v3040 = vpack.c.b16 %v2496, %v2480
      %v3041 = vpack.c.b16 %v2513, %v2497
      %v3042 = vpack.c.b16 %v2514, %v2498
      %v3043 = vpack.c.b16 %v2515, %v2499
      %v3044 = vpack.c.b16 %v2516, %v2500
      %v3045 = vpack.c.b16 %v2517, %v2501
      %v3046 = vpack.c.b16 %v2518, %v2502
      %v3047 = vpack.c.b16 %v2519, %v2503
      %v3048 = vpack.c.b16 %v2520, %v2504
      %v3049 = vpack.c.b16 %v2521, %v2505
      %v3050 = vpack.c.b16 %v2522, %v2506
      %v3051 = vpack.c.b16 %v2523, %v2507
      %v3052 = vpack.c.b16 %v2524, %v2508
      %v3053 = vpack.c.b16 %v2525, %v2509
      %v3054 = vpack.c.b16 %v2526, %v2510
      %v3055 = vpack.c.b16 %v2527, %v2511
      %v3056 = vpack.c.b16 %v2528, %v2512
      %v3057 = vpack.c.b16 %v2545, %v2529
      %v3058 = vpack.c.b16 %v2546, %v2530
      %v3059 = vpack.c.b16 %v2547, %v2531
      %v3060 = vpack.c.b16 %v2548, %v2532
      %v3061 = vpack.c.b16 %v2549, %v2533
      %v3062 = vpack.c.b16 %v2550, %v2534
      %v3063 = vpack.c.b16 %v2551, %v2535
      %v3064 = vpack.c.b16 %v2552, %v2536
      %v3065 = vpack.c.b16 %v2553, %v2537
      %v3066 = vpack.c.b16 %v2554, %v2538
      %v3067 = vpack.c.b16 %v2555, %v2539
      %v3068 = vpack.c.b16 %v2556, %v2540
      %v3069 = vpack.c.b16 %v2557, %v2541
      %v3070 = vpack.c.b16 %v2558, %v2542
      %v3071 = vpack.c.b16 %v2559, %v2543
      %v3072 = vpack.c.b16 %v2560, %v2544
      %3585 = vmatprep.subr.bf16.mxu0 %v2674
      %3586 = vmatpush1.bf16.msra.mxu0 %v2673
      %3587 = vmatprep.subr.bf16.mxu0 %v2658
      %3588 = vmatpush1.bf16.msra.mxu0 %v2657
      %3589 = vmatprep.subr.bf16.mxu0 %v2642
      %3590 = vmatpush1.bf16.msra.mxu0 %v2641
      %3591 = vmatprep.subr.bf16.mxu0 %v2626
      %3592 = vmatpush1.bf16.msra.mxu0 %v2625
      %3593 = vmatprep.subr.bf16.mxu0 %v2610
      %3594 = vmatpush1.bf16.msra.mxu0 %v2609
      %3595 = vmatprep.subr.bf16.mxu0 %v2594
      %3596 = vmatpush1.bf16.msra.mxu0 %v2593
      %3597 = vmatprep.subr.bf16.mxu0 %v2578
      %3598 = vmatpush1.bf16.msra.mxu0 %v2577
      %3599 = vmatprep.subr.bf16.mxu0 %v2562
      %3600 = vmatpush1.bf16.msra.mxu0 %v2561
      %3601 = vmatprep.subr.bf16.mxu0 %v2802
      %3602 = vmatpush2.bf16.msra.mxu0 %v2801
      %3603 = vmatprep.subr.bf16.mxu0 %v2786
      %3604 = vmatpush2.bf16.msra.mxu0 %v2785
      %3605 = vmatprep.subr.bf16.mxu0 %v2770
      %3606 = vmatpush2.bf16.msra.mxu0 %v2769
      %3607 = vmatprep.subr.bf16.mxu0 %v2754
      %3608 = vmatpush2.bf16.msra.mxu0 %v2753
      %3609 = vmatprep.subr.bf16.mxu0 %v2738
      %3610 = vmatpush2.bf16.msra.mxu0 %v2737
      %3611 = vmatprep.subr.bf16.mxu0 %v2722
      %3612 = vmatpush2.bf16.msra.mxu0 %v2721
      %3613 = vmatprep.subr.bf16.mxu0 %v2706
      %3614 = vmatpush2.bf16.msra.mxu0 %v2705
      %3615 = vmatprep.subr.bf16.mxu0 %v2690
      %3616 = vmatpush2.bf16.msra.mxu0 %v2689
      %3617 = vmatprep.mubr.bf16.mxu0 %v962
      %3618 = vmatmul.mubr.bf16.gmra.mxu0 %v961
      %v3619 = vpop.f32.mrf.mxu0
      %v3620 = vadd.f32 %v788, %v3619
      %v3621 = vpop.f32.mrf.mxu0
      %v3622 = vadd.f32 %v792, %v3621
      %v3623 = vpop.f32.mrf.mxu0
      %v3624 = vadd.f32 %v788, %v3623
      %v3625 = vpop.f32.mrf.mxu0
      %v3626 = vadd.f32 %v792, %v3625
      %3627 = vmatprep.mubr.bf16.mxu0 %v966
      %3628 = vmatmul.mubr.bf16.gmra.mxu0 %v965
      %v3629 = vpop.f32.mrf.mxu0
      %v3630 = vadd.f32 %v788, %v3629
      %v3631 = vpop.f32.mrf.mxu0
      %v3632 = vadd.f32 %v792, %v3631
      %v3633 = vpop.f32.mrf.mxu0
      %v3634 = vadd.f32 %v788, %v3633
      %v3635 = vpop.f32.mrf.mxu0
      %v3636 = vadd.f32 %v792, %v3635
      %3637 = vmatprep.mubr.bf16.mxu0 %v970
      %3638 = vmatmul.mubr.bf16.gmra.mxu0 %v969
      %v3639 = vpop.f32.mrf.mxu0
      %v3640 = vadd.f32 %v788, %v3639
      %v3641 = vpop.f32.mrf.mxu0
      %v3642 = vadd.f32 %v792, %v3641
      %v3643 = vpop.f32.mrf.mxu0
      %v3644 = vadd.f32 %v788, %v3643
      %v3645 = vpop.f32.mrf.mxu0
      %v3646 = vadd.f32 %v792, %v3645
      %3647 = vmatprep.mubr.bf16.mxu0 %v974
      %3648 = vmatmul.mubr.bf16.gmra.mxu0 %v973
      %v3649 = vpop.f32.mrf.mxu0
      %v3650 = vadd.f32 %v788, %v3649
      %v3651 = vpop.f32.mrf.mxu0
      %v3652 = vadd.f32 %v792, %v3651
      %v3653 = vpop.f32.mrf.mxu0
      %v3654 = vadd.f32 %v788, %v3653
      %v3655 = vpop.f32.mrf.mxu0
      %v3656 = vadd.f32 %v792, %v3655
      %3657 = vmatprep.mubr.bf16.mxu0 %v978
      %3658 = vmatmul.mubr.bf16.gmra.mxu0 %v977
      %v3659 = vpop.f32.mrf.mxu0
      %v3660 = vadd.f32 %v788, %v3659
      %v3661 = vpop.f32.mrf.mxu0
      %v3662 = vadd.f32 %v792, %v3661
      %v3663 = vpop.f32.mrf.mxu0
      %v3664 = vadd.f32 %v788, %v3663
      %v3665 = vpop.f32.mrf.mxu0
      %v3666 = vadd.f32 %v792, %v3665
      %3667 = vmatprep.mubr.bf16.mxu0 %v982
      %3668 = vmatmul.mubr.bf16.gmra.mxu0 %v981
      %v3669 = vpop.f32.mrf.mxu0
      %v3670 = vadd.f32 %v788, %v3669
      %v3671 = vpop.f32.mrf.mxu0
      %v3672 = vadd.f32 %v792, %v3671
      %v3673 = vpop.f32.mrf.mxu0
      %v3674 = vadd.f32 %v788, %v3673
      %v3675 = vpop.f32.mrf.mxu0
      %v3676 = vadd.f32 %v792, %v3675
      %3677 = vmatprep.mubr.bf16.mxu0 %v986
      %3678 = vmatmul.mubr.bf16.gmra.mxu0 %v985
      %v3679 = vpop.f32.mrf.mxu0
      %v3680 = vadd.f32 %v788, %v3679
      %v3681 = vpop.f32.mrf.mxu0
      %v3682 = vadd.f32 %v792, %v3681
      %v3683 = vpop.f32.mrf.mxu0
      %v3684 = vadd.f32 %v788, %v3683
      %v3685 = vpop.f32.mrf.mxu0
      %v3686 = vadd.f32 %v792, %v3685
      %3687 = vmatprep.mubr.bf16.mxu0 %v990
      %3688 = vmatmul.mubr.bf16.gmra.mxu0 %v989
      %v3689 = vpop.f32.mrf.mxu0
      %v3690 = vadd.f32 %v788, %v3689
      %v3691 = vpop.f32.mrf.mxu0
      %v3692 = vadd.f32 %v792, %v3691
      %v3693 = vpop.f32.mrf.mxu0
      %v3694 = vadd.f32 %v788, %v3693
      %v3695 = vpop.f32.mrf.mxu0
      %v3696 = vadd.f32 %v792, %v3695
      %3697 = vdwg.mxu0
      %3698 = vmatprep.subr.bf16.mxu0 %v2930
      %3699 = vmatpush1.bf16.msra.mxu0 %v2929
      %3700 = vmatprep.subr.bf16.mxu0 %v2914
      %3701 = vmatpush1.bf16.msra.mxu0 %v2913
      %3702 = vmatprep.subr.bf16.mxu0 %v2898
      %3703 = vmatpush1.bf16.msra.mxu0 %v2897
      %3704 = vmatprep.subr.bf16.mxu0 %v2882
      %3705 = vmatpush1.bf16.msra.mxu0 %v2881
      %3706 = vmatprep.subr.bf16.mxu0 %v2866
      %3707 = vmatpush1.bf16.msra.mxu0 %v2865
      %3708 = vmatprep.subr.bf16.mxu0 %v2850
      %3709 = vmatpush1.bf16.msra.mxu0 %v2849
      %3710 = vmatprep.subr.bf16.mxu0 %v2834
      %3711 = vmatpush1.bf16.msra.mxu0 %v2833
      %3712 = vmatprep.subr.bf16.mxu0 %v2818
      %3713 = vmatpush1.bf16.msra.mxu0 %v2817
      %3714 = vmatprep.subr.bf16.mxu0 %v3058
      %3715 = vmatpush2.bf16.msra.mxu0 %v3057
      %3716 = vmatprep.subr.bf16.mxu0 %v3042
      %3717 = vmatpush2.bf16.msra.mxu0 %v3041
      %3718 = vmatprep.subr.bf16.mxu0 %v3026
      %3719 = vmatpush2.bf16.msra.mxu0 %v3025
      %3720 = vmatprep.subr.bf16.mxu0 %v3010
      %3721 = vmatpush2.bf16.msra.mxu0 %v3009
      %3722 = vmatprep.subr.bf16.mxu0 %v2994
      %3723 = vmatpush2.bf16.msra.mxu0 %v2993
      %3724 = vmatprep.subr.bf16.mxu0 %v2978
      %3725 = vmatpush2.bf16.msra.mxu0 %v2977
      %3726 = vmatprep.subr.bf16.mxu0 %v2962
      %3727 = vmatpush2.bf16.msra.mxu0 %v2961
      %3728 = vmatprep.subr.bf16.mxu0 %v2946
      %3729 = vmatpush2.bf16.msra.mxu0 %v2945
      %3730 = vmatprep.mubr.bf16.mxu0 %v964
      %3731 = vmatmul.mubr.bf16.gmra.mxu0 %v963
      %v3732 = vpop.f32.mrf.mxu0
      %v3733 = vadd.f32 %v3620, %v3732
      %v3734 = vpop.f32.mrf.mxu0
      %v3735 = vadd.f32 %v3622, %v3734
      %v3736 = vpop.f32.mrf.mxu0
      %v3737 = vadd.f32 %v3624, %v3736
      %v3738 = vpop.f32.mrf.mxu0
      %v3739 = vadd.f32 %v3626, %v3738
      %3740 = vmatprep.mubr.bf16.mxu0 %v968
      %3741 = vmatmul.mubr.bf16.gmra.mxu0 %v967
      %v3742 = vpop.f32.mrf.mxu0
      %v3743 = vadd.f32 %v3630, %v3742
      %v3744 = vpop.f32.mrf.mxu0
      %v3745 = vadd.f32 %v3632, %v3744
      %v3746 = vpop.f32.mrf.mxu0
      %v3747 = vadd.f32 %v3634, %v3746
      %v3748 = vpop.f32.mrf.mxu0
      %v3749 = vadd.f32 %v3636, %v3748
      %3750 = vmatprep.mubr.bf16.mxu0 %v972
      %3751 = vmatmul.mubr.bf16.gmra.mxu0 %v971
      %v3752 = vpop.f32.mrf.mxu0
      %v3753 = vadd.f32 %v3640, %v3752
      %v3754 = vpop.f32.mrf.mxu0
      %v3755 = vadd.f32 %v3642, %v3754
      %v3756 = vpop.f32.mrf.mxu0
      %v3757 = vadd.f32 %v3644, %v3756
      %v3758 = vpop.f32.mrf.mxu0
      %v3759 = vadd.f32 %v3646, %v3758
      %3760 = vmatprep.mubr.bf16.mxu0 %v976
      %3761 = vmatmul.mubr.bf16.gmra.mxu0 %v975
      %v3762 = vpop.f32.mrf.mxu0
      %v3763 = vadd.f32 %v3650, %v3762
      %v3764 = vpop.f32.mrf.mxu0
      %v3765 = vadd.f32 %v3652, %v3764
      %v3766 = vpop.f32.mrf.mxu0
      %v3767 = vadd.f32 %v3654, %v3766
      %v3768 = vpop.f32.mrf.mxu0
      %v3769 = vadd.f32 %v3656, %v3768
      %3770 = vmatprep.mubr.bf16.mxu0 %v980
      %3771 = vmatmul.mubr.bf16.gmra.mxu0 %v979
      %v3772 = vpop.f32.mrf.mxu0
      %v3773 = vadd.f32 %v3660, %v3772
      %v3774 = vpop.f32.mrf.mxu0
      %v3775 = vadd.f32 %v3662, %v3774
      %v3776 = vpop.f32.mrf.mxu0
      %v3777 = vadd.f32 %v3664, %v3776
      %v3778 = vpop.f32.mrf.mxu0
      %v3779 = vadd.f32 %v3666, %v3778
      %3780 = vmatprep.mubr.bf16.mxu0 %v984
      %3781 = vmatmul.mubr.bf16.gmra.mxu0 %v983
      %v3782 = vpop.f32.mrf.mxu0
      %v3783 = vadd.f32 %v3670, %v3782
      %v3784 = vpop.f32.mrf.mxu0
      %v3785 = vadd.f32 %v3672, %v3784
      %v3786 = vpop.f32.mrf.mxu0
      %v3787 = vadd.f32 %v3674, %v3786
      %v3788 = vpop.f32.mrf.mxu0
      %v3789 = vadd.f32 %v3676, %v3788
      %3790 = vmatprep.mubr.bf16.mxu0 %v988
      %3791 = vmatmul.mubr.bf16.gmra.mxu0 %v987
      %v3792 = vpop.f32.mrf.mxu0
      %v3793 = vadd.f32 %v3680, %v3792
      %v3794 = vpop.f32.mrf.mxu0
      %v3795 = vadd.f32 %v3682, %v3794
      %v3796 = vpop.f32.mrf.mxu0
      %v3797 = vadd.f32 %v3684, %v3796
      %v3798 = vpop.f32.mrf.mxu0
      %v3799 = vadd.f32 %v3686, %v3798
      %3800 = vmatprep.mubr.bf16.mxu0 %v992
      %3801 = vmatmul.mubr.bf16.gmra.mxu0 %v991
      %v3802 = vpop.f32.mrf.mxu0
      %v3803 = vadd.f32 %v3690, %v3802
      %v3804 = vpop.f32.mrf.mxu0
      %v3805 = vadd.f32 %v3692, %v3804
      %v3806 = vpop.f32.mrf.mxu0
      %v3807 = vadd.f32 %v3694, %v3806
      %v3808 = vpop.f32.mrf.mxu0
      %v3809 = vadd.f32 %v3696, %v3808
      %3810 = vdwg.mxu0
      %3811 = vmatprep.subr.bf16.mxu0 %v2676
      %3812 = vmatpush1.bf16.msra.mxu0 %v2675
      %3813 = vmatprep.subr.bf16.mxu0 %v2660
      %3814 = vmatpush1.bf16.msra.mxu0 %v2659
      %3815 = vmatprep.subr.bf16.mxu0 %v2644
      %3816 = vmatpush1.bf16.msra.mxu0 %v2643
      %3817 = vmatprep.subr.bf16.mxu0 %v2628
      %3818 = vmatpush1.bf16.msra.mxu0 %v2627
      %3819 = vmatprep.subr.bf16.mxu0 %v2612
      %3820 = vmatpush1.bf16.msra.mxu0 %v2611
      %3821 = vmatprep.subr.bf16.mxu0 %v2596
      %3822 = vmatpush1.bf16.msra.mxu0 %v2595
      %3823 = vmatprep.subr.bf16.mxu0 %v2580
      %3824 = vmatpush1.bf16.msra.mxu0 %v2579
      %3825 = vmatprep.subr.bf16.mxu0 %v2564
      %3826 = vmatpush1.bf16.msra.mxu0 %v2563
      %3827 = vmatprep.subr.bf16.mxu0 %v2804
      %3828 = vmatpush2.bf16.msra.mxu0 %v2803
      %3829 = vmatprep.subr.bf16.mxu0 %v2788
      %3830 = vmatpush2.bf16.msra.mxu0 %v2787
      %3831 = vmatprep.subr.bf16.mxu0 %v2772
      %3832 = vmatpush2.bf16.msra.mxu0 %v2771
      %3833 = vmatprep.subr.bf16.mxu0 %v2756
      %3834 = vmatpush2.bf16.msra.mxu0 %v2755
      %3835 = vmatprep.subr.bf16.mxu0 %v2740
      %3836 = vmatpush2.bf16.msra.mxu0 %v2739
      %3837 = vmatprep.subr.bf16.mxu0 %v2724
      %3838 = vmatpush2.bf16.msra.mxu0 %v2723
      %3839 = vmatprep.subr.bf16.mxu0 %v2708
      %3840 = vmatpush2.bf16.msra.mxu0 %v2707
      %3841 = vmatprep.subr.bf16.mxu0 %v2692
      %3842 = vmatpush2.bf16.msra.mxu0 %v2691
      %3843 = vmatprep.mubr.bf16.mxu0 %v962
      %3844 = vmatmul.mubr.bf16.gmra.mxu0 %v961
      %v3845 = vpop.f32.mrf.mxu0
      %v3846 = vadd.f32 %v796, %v3845
      %v3847 = vpop.f32.mrf.mxu0
      %v3848 = vadd.f32 %v800, %v3847
      %v3849 = vpop.f32.mrf.mxu0
      %v3850 = vadd.f32 %v796, %v3849
      %v3851 = vpop.f32.mrf.mxu0
      %v3852 = vadd.f32 %v800, %v3851
      %3853 = vmatprep.mubr.bf16.mxu0 %v966
      %3854 = vmatmul.mubr.bf16.gmra.mxu0 %v965
      %v3855 = vpop.f32.mrf.mxu0
      %v3856 = vadd.f32 %v796, %v3855
      %v3857 = vpop.f32.mrf.mxu0
      %v3858 = vadd.f32 %v800, %v3857
      %v3859 = vpop.f32.mrf.mxu0
      %v3860 = vadd.f32 %v796, %v3859
      %v3861 = vpop.f32.mrf.mxu0
      %v3862 = vadd.f32 %v800, %v3861
      %3863 = vmatprep.mubr.bf16.mxu0 %v970
      %3864 = vmatmul.mubr.bf16.gmra.mxu0 %v969
      %v3865 = vpop.f32.mrf.mxu0
      %v3866 = vadd.f32 %v796, %v3865
      %v3867 = vpop.f32.mrf.mxu0
      %v3868 = vadd.f32 %v800, %v3867
      %v3869 = vpop.f32.mrf.mxu0
      %v3870 = vadd.f32 %v796, %v3869
      %v3871 = vpop.f32.mrf.mxu0
      %v3872 = vadd.f32 %v800, %v3871
      %3873 = vmatprep.mubr.bf16.mxu0 %v974
      %3874 = vmatmul.mubr.bf16.gmra.mxu0 %v973
      %v3875 = vpop.f32.mrf.mxu0
      %v3876 = vadd.f32 %v796, %v3875
      %v3877 = vpop.f32.mrf.mxu0
      %v3878 = vadd.f32 %v800, %v3877
      %v3879 = vpop.f32.mrf.mxu0
      %v3880 = vadd.f32 %v796, %v3879
      %v3881 = vpop.f32.mrf.mxu0
      %v3882 = vadd.f32 %v800, %v3881
      %3883 = vmatprep.mubr.bf16.mxu0 %v978
      %3884 = vmatmul.mubr.bf16.gmra.mxu0 %v977
      %v3885 = vpop.f32.mrf.mxu0
      %v3886 = vadd.f32 %v796, %v3885
      %v3887 = vpop.f32.mrf.mxu0
      %v3888 = vadd.f32 %v800, %v3887
      %v3889 = vpop.f32.mrf.mxu0
      %v3890 = vadd.f32 %v796, %v3889
      %v3891 = vpop.f32.mrf.mxu0
      %v3892 = vadd.f32 %v800, %v3891
      %3893 = vmatprep.mubr.bf16.mxu0 %v982
      %3894 = vmatmul.mubr.bf16.gmra.mxu0 %v981
      %v3895 = vpop.f32.mrf.mxu0
      %v3896 = vadd.f32 %v796, %v3895
      %v3897 = vpop.f32.mrf.mxu0
      %v3898 = vadd.f32 %v800, %v3897
      %v3899 = vpop.f32.mrf.mxu0
      %v3900 = vadd.f32 %v796, %v3899
      %v3901 = vpop.f32.mrf.mxu0
      %v3902 = vadd.f32 %v800, %v3901
      %3903 = vmatprep.mubr.bf16.mxu0 %v986
      %3904 = vmatmul.mubr.bf16.gmra.mxu0 %v985
      %v3905 = vpop.f32.mrf.mxu0
      %v3906 = vadd.f32 %v796, %v3905
      %v3907 = vpop.f32.mrf.mxu0
      %v3908 = vadd.f32 %v800, %v3907
      %v3909 = vpop.f32.mrf.mxu0
      %v3910 = vadd.f32 %v796, %v3909
      %v3911 = vpop.f32.mrf.mxu0
      %v3912 = vadd.f32 %v800, %v3911
      %3913 = vmatprep.mubr.bf16.mxu0 %v990
      %3914 = vmatmul.mubr.bf16.gmra.mxu0 %v989
      %v3915 = vpop.f32.mrf.mxu0
      %v3916 = vadd.f32 %v796, %v3915
      %v3917 = vpop.f32.mrf.mxu0
      %v3918 = vadd.f32 %v800, %v3917
      %v3919 = vpop.f32.mrf.mxu0
      %v3920 = vadd.f32 %v796, %v3919
      %v3921 = vpop.f32.mrf.mxu0
      %v3922 = vadd.f32 %v800, %v3921
      %3923 = vdwg.mxu0
      %3924 = vmatprep.subr.bf16.mxu0 %v2932
      %3925 = vmatpush1.bf16.msra.mxu0 %v2931
      %3926 = vmatprep.subr.bf16.mxu0 %v2916
      %3927 = vmatpush1.bf16.msra.mxu0 %v2915
      %3928 = vmatprep.subr.bf16.mxu0 %v2900
      %3929 = vmatpush1.bf16.msra.mxu0 %v2899
      %3930 = vmatprep.subr.bf16.mxu0 %v2884
      %3931 = vmatpush1.bf16.msra.mxu0 %v2883
      %3932 = vmatprep.subr.bf16.mxu0 %v2868
      %3933 = vmatpush1.bf16.msra.mxu0 %v2867
      %3934 = vmatprep.subr.bf16.mxu0 %v2852
      %3935 = vmatpush1.bf16.msra.mxu0 %v2851
      %3936 = vmatprep.subr.bf16.mxu0 %v2836
      %3937 = vmatpush1.bf16.msra.mxu0 %v2835
      %3938 = vmatprep.subr.bf16.mxu0 %v2820
      %3939 = vmatpush1.bf16.msra.mxu0 %v2819
      %3940 = vmatprep.subr.bf16.mxu0 %v3060
      %3941 = vmatpush2.bf16.msra.mxu0 %v3059
      %3942 = vmatprep.subr.bf16.mxu0 %v3044
      %3943 = vmatpush2.bf16.msra.mxu0 %v3043
      %3944 = vmatprep.subr.bf16.mxu0 %v3028
      %3945 = vmatpush2.bf16.msra.mxu0 %v3027
      %3946 = vmatprep.subr.bf16.mxu0 %v3012
      %3947 = vmatpush2.bf16.msra.mxu0 %v3011
      %3948 = vmatprep.subr.bf16.mxu0 %v2996
      %3949 = vmatpush2.bf16.msra.mxu0 %v2995
      %3950 = vmatprep.subr.bf16.mxu0 %v2980
      %3951 = vmatpush2.bf16.msra.mxu0 %v2979
      %3952 = vmatprep.subr.bf16.mxu0 %v2964
      %3953 = vmatpush2.bf16.msra.mxu0 %v2963
      %3954 = vmatprep.subr.bf16.mxu0 %v2948
      %3955 = vmatpush2.bf16.msra.mxu0 %v2947
      %3956 = vmatprep.mubr.bf16.mxu0 %v964
      %3957 = vmatmul.mubr.bf16.gmra.mxu0 %v963
      %v3958 = vpop.f32.mrf.mxu0
      %v3959 = vadd.f32 %v3846, %v3958
      %v3960 = vpop.f32.mrf.mxu0
      %v3961 = vadd.f32 %v3848, %v3960
      %v3962 = vpop.f32.mrf.mxu0
      %v3963 = vadd.f32 %v3850, %v3962
      %v3964 = vpop.f32.mrf.mxu0
      %v3965 = vadd.f32 %v3852, %v3964
      %3966 = vmatprep.mubr.bf16.mxu0 %v968
      %3967 = vmatmul.mubr.bf16.gmra.mxu0 %v967
      %v3968 = vpop.f32.mrf.mxu0
      %v3969 = vadd.f32 %v3856, %v3968
      %v3970 = vpop.f32.mrf.mxu0
      %v3971 = vadd.f32 %v3858, %v3970
      %v3972 = vpop.f32.mrf.mxu0
      %v3973 = vadd.f32 %v3860, %v3972
      %v3974 = vpop.f32.mrf.mxu0
      %v3975 = vadd.f32 %v3862, %v3974
      %3976 = vmatprep.mubr.bf16.mxu0 %v972
      %3977 = vmatmul.mubr.bf16.gmra.mxu0 %v971
      %v3978 = vpop.f32.mrf.mxu0
      %v3979 = vadd.f32 %v3866, %v3978
      %v3980 = vpop.f32.mrf.mxu0
      %v3981 = vadd.f32 %v3868, %v3980
      %v3982 = vpop.f32.mrf.mxu0
      %v3983 = vadd.f32 %v3870, %v3982
      %v3984 = vpop.f32.mrf.mxu0
      %v3985 = vadd.f32 %v3872, %v3984
      %3986 = vmatprep.mubr.bf16.mxu0 %v976
      %3987 = vmatmul.mubr.bf16.gmra.mxu0 %v975
      %v3988 = vpop.f32.mrf.mxu0
      %v3989 = vadd.f32 %v3876, %v3988
      %v3990 = vpop.f32.mrf.mxu0
      %v3991 = vadd.f32 %v3878, %v3990
      %v3992 = vpop.f32.mrf.mxu0
      %v3993 = vadd.f32 %v3880, %v3992
      %v3994 = vpop.f32.mrf.mxu0
      %v3995 = vadd.f32 %v3882, %v3994
      %3996 = vmatprep.mubr.bf16.mxu0 %v980
      %3997 = vmatmul.mubr.bf16.gmra.mxu0 %v979
      %v3998 = vpop.f32.mrf.mxu0
      %v3999 = vadd.f32 %v3886, %v3998
      %v4000 = vpop.f32.mrf.mxu0
      %v4001 = vadd.f32 %v3888, %v4000
      %v4002 = vpop.f32.mrf.mxu0
      %v4003 = vadd.f32 %v3890, %v4002
      %v4004 = vpop.f32.mrf.mxu0
      %v4005 = vadd.f32 %v3892, %v4004
      %4006 = vmatprep.mubr.bf16.mxu0 %v984
      %4007 = vmatmul.mubr.bf16.gmra.mxu0 %v983
      %v4008 = vpop.f32.mrf.mxu0
      %v4009 = vadd.f32 %v3896, %v4008
      %v4010 = vpop.f32.mrf.mxu0
      %v4011 = vadd.f32 %v3898, %v4010
      %v4012 = vpop.f32.mrf.mxu0
      %v4013 = vadd.f32 %v3900, %v4012
      %v4014 = vpop.f32.mrf.mxu0
      %v4015 = vadd.f32 %v3902, %v4014
      %4016 = vmatprep.mubr.bf16.mxu0 %v988
      %4017 = vmatmul.mubr.bf16.gmra.mxu0 %v987
      %v4018 = vpop.f32.mrf.mxu0
      %v4019 = vadd.f32 %v3906, %v4018
      %v4020 = vpop.f32.mrf.mxu0
      %v4021 = vadd.f32 %v3908, %v4020
      %v4022 = vpop.f32.mrf.mxu0
      %v4023 = vadd.f32 %v3910, %v4022
      %v4024 = vpop.f32.mrf.mxu0
      %v4025 = vadd.f32 %v3912, %v4024
      %4026 = vmatprep.mubr.bf16.mxu0 %v992
      %4027 = vmatmul.mubr.bf16.gmra.mxu0 %v991
      %v4028 = vpop.f32.mrf.mxu0
      %v4029 = vadd.f32 %v3916, %v4028
      %v4030 = vpop.f32.mrf.mxu0
      %v4031 = vadd.f32 %v3918, %v4030
      %v4032 = vpop.f32.mrf.mxu0
      %v4033 = vadd.f32 %v3920, %v4032
      %v4034 = vpop.f32.mrf.mxu0
      %v4035 = vadd.f32 %v3922, %v4034
      %4036 = vdwg.mxu0
      %4037 = vmatprep.subr.bf16.mxu0 %v2678
      %4038 = vmatpush1.bf16.msra.mxu0 %v2677
      %4039 = vmatprep.subr.bf16.mxu0 %v2662
      %4040 = vmatpush1.bf16.msra.mxu0 %v2661
      %4041 = vmatprep.subr.bf16.mxu0 %v2646
      %4042 = vmatpush1.bf16.msra.mxu0 %v2645
      %4043 = vmatprep.subr.bf16.mxu0 %v2630
      %4044 = vmatpush1.bf16.msra.mxu0 %v2629
      %4045 = vmatprep.subr.bf16.mxu0 %v2614
      %4046 = vmatpush1.bf16.msra.mxu0 %v2613
      %4047 = vmatprep.subr.bf16.mxu0 %v2598
      %4048 = vmatpush1.bf16.msra.mxu0 %v2597
      %4049 = vmatprep.subr.bf16.mxu0 %v2582
      %4050 = vmatpush1.bf16.msra.mxu0 %v2581
      %4051 = vmatprep.subr.bf16.mxu0 %v2566
      %4052 = vmatpush1.bf16.msra.mxu0 %v2565
      %4053 = vmatprep.subr.bf16.mxu0 %v2806
      %4054 = vmatpush2.bf16.msra.mxu0 %v2805
      %4055 = vmatprep.subr.bf16.mxu0 %v2790
      %4056 = vmatpush2.bf16.msra.mxu0 %v2789
      %4057 = vmatprep.subr.bf16.mxu0 %v2774
      %4058 = vmatpush2.bf16.msra.mxu0 %v2773
      %4059 = vmatprep.subr.bf16.mxu0 %v2758
      %4060 = vmatpush2.bf16.msra.mxu0 %v2757
      %4061 = vmatprep.subr.bf16.mxu0 %v2742
      %4062 = vmatpush2.bf16.msra.mxu0 %v2741
      %4063 = vmatprep.subr.bf16.mxu0 %v2726
      %4064 = vmatpush2.bf16.msra.mxu0 %v2725
      %4065 = vmatprep.subr.bf16.mxu0 %v2710
      %4066 = vmatpush2.bf16.msra.mxu0 %v2709
      %4067 = vmatprep.subr.bf16.mxu0 %v2694
      %4068 = vmatpush2.bf16.msra.mxu0 %v2693
      %4069 = vmatprep.mubr.bf16.mxu0 %v962
      %4070 = vmatmul.mubr.bf16.gmra.mxu0 %v961
      %v4071 = vpop.f32.mrf.mxu0
      %v4072 = vadd.f32 %v804, %v4071
      %v4073 = vpop.f32.mrf.mxu0
      %v4074 = vadd.f32 %v808, %v4073
      %v4075 = vpop.f32.mrf.mxu0
      %v4076 = vadd.f32 %v804, %v4075
      %v4077 = vpop.f32.mrf.mxu0
      %v4078 = vadd.f32 %v808, %v4077
      %4079 = vmatprep.mubr.bf16.mxu0 %v966
      %4080 = vmatmul.mubr.bf16.gmra.mxu0 %v965
      %v4081 = vpop.f32.mrf.mxu0
      %v4082 = vadd.f32 %v804, %v4081
      %v4083 = vpop.f32.mrf.mxu0
      %v4084 = vadd.f32 %v808, %v4083
      %v4085 = vpop.f32.mrf.mxu0
      %v4086 = vadd.f32 %v804, %v4085
      %v4087 = vpop.f32.mrf.mxu0
      %v4088 = vadd.f32 %v808, %v4087
      %4089 = vmatprep.mubr.bf16.mxu0 %v970
      %4090 = vmatmul.mubr.bf16.gmra.mxu0 %v969
      %v4091 = vpop.f32.mrf.mxu0
      %v4092 = vadd.f32 %v804, %v4091
      %v4093 = vpop.f32.mrf.mxu0
      %v4094 = vadd.f32 %v808, %v4093
      %v4095 = vpop.f32.mrf.mxu0
      %v4096 = vadd.f32 %v804, %v4095
      %v4097 = vpop.f32.mrf.mxu0
      %v4098 = vadd.f32 %v808, %v4097
      %4099 = vmatprep.mubr.bf16.mxu0 %v974
      %4100 = vmatmul.mubr.bf16.gmra.mxu0 %v973
      %v4101 = vpop.f32.mrf.mxu0
      %v4102 = vadd.f32 %v804, %v4101
      %v4103 = vpop.f32.mrf.mxu0
      %v4104 = vadd.f32 %v808, %v4103
      %v4105 = vpop.f32.mrf.mxu0
      %v4106 = vadd.f32 %v804, %v4105
      %v4107 = vpop.f32.mrf.mxu0
      %v4108 = vadd.f32 %v808, %v4107
      %4109 = vmatprep.mubr.bf16.mxu0 %v978
      %4110 = vmatmul.mubr.bf16.gmra.mxu0 %v977
      %v4111 = vpop.f32.mrf.mxu0
      %v4112 = vadd.f32 %v804, %v4111
      %v4113 = vpop.f32.mrf.mxu0
      %v4114 = vadd.f32 %v808, %v4113
      %v4115 = vpop.f32.mrf.mxu0
      %v4116 = vadd.f32 %v804, %v4115
      %v4117 = vpop.f32.mrf.mxu0
      %v4118 = vadd.f32 %v808, %v4117
      %4119 = vmatprep.mubr.bf16.mxu0 %v982
      %4120 = vmatmul.mubr.bf16.gmra.mxu0 %v981
      %v4121 = vpop.f32.mrf.mxu0
      %v4122 = vadd.f32 %v804, %v4121
      %v4123 = vpop.f32.mrf.mxu0
      %v4124 = vadd.f32 %v808, %v4123
      %v4125 = vpop.f32.mrf.mxu0
      %v4126 = vadd.f32 %v804, %v4125
      %v4127 = vpop.f32.mrf.mxu0
      %v4128 = vadd.f32 %v808, %v4127
      %4129 = vmatprep.mubr.bf16.mxu0 %v986
      %4130 = vmatmul.mubr.bf16.gmra.mxu0 %v985
      %v4131 = vpop.f32.mrf.mxu0
      %v4132 = vadd.f32 %v804, %v4131
      %v4133 = vpop.f32.mrf.mxu0
      %v4134 = vadd.f32 %v808, %v4133
      %v4135 = vpop.f32.mrf.mxu0
      %v4136 = vadd.f32 %v804, %v4135
      %v4137 = vpop.f32.mrf.mxu0
      %v4138 = vadd.f32 %v808, %v4137
      %4139 = vmatprep.mubr.bf16.mxu0 %v990
      %4140 = vmatmul.mubr.bf16.gmra.mxu0 %v989
      %v4141 = vpop.f32.mrf.mxu0
      %v4142 = vadd.f32 %v804, %v4141
      %v4143 = vpop.f32.mrf.mxu0
      %v4144 = vadd.f32 %v808, %v4143
      %v4145 = vpop.f32.mrf.mxu0
      %v4146 = vadd.f32 %v804, %v4145
      %v4147 = vpop.f32.mrf.mxu0
      %v4148 = vadd.f32 %v808, %v4147
      %4149 = vdwg.mxu0
      %4150 = vmatprep.subr.bf16.mxu0 %v2934
      %4151 = vmatpush1.bf16.msra.mxu0 %v2933
      %4152 = vmatprep.subr.bf16.mxu0 %v2918
      %4153 = vmatpush1.bf16.msra.mxu0 %v2917
      %4154 = vmatprep.subr.bf16.mxu0 %v2902
      %4155 = vmatpush1.bf16.msra.mxu0 %v2901
      %4156 = vmatprep.subr.bf16.mxu0 %v2886
      %4157 = vmatpush1.bf16.msra.mxu0 %v2885
      %4158 = vmatprep.subr.bf16.mxu0 %v2870
      %4159 = vmatpush1.bf16.msra.mxu0 %v2869
      %4160 = vmatprep.subr.bf16.mxu0 %v2854
      %4161 = vmatpush1.bf16.msra.mxu0 %v2853
      %4162 = vmatprep.subr.bf16.mxu0 %v2838
      %4163 = vmatpush1.bf16.msra.mxu0 %v2837
      %4164 = vmatprep.subr.bf16.mxu0 %v2822
      %4165 = vmatpush1.bf16.msra.mxu0 %v2821
      %4166 = vmatprep.subr.bf16.mxu0 %v3062
      %4167 = vmatpush2.bf16.msra.mxu0 %v3061
      %4168 = vmatprep.subr.bf16.mxu0 %v3046
      %4169 = vmatpush2.bf16.msra.mxu0 %v3045
      %4170 = vmatprep.subr.bf16.mxu0 %v3030
      %4171 = vmatpush2.bf16.msra.mxu0 %v3029
      %4172 = vmatprep.subr.bf16.mxu0 %v3014
      %4173 = vmatpush2.bf16.msra.mxu0 %v3013
      %4174 = vmatprep.subr.bf16.mxu0 %v2998
      %4175 = vmatpush2.bf16.msra.mxu0 %v2997
      %4176 = vmatprep.subr.bf16.mxu0 %v2982
      %4177 = vmatpush2.bf16.msra.mxu0 %v2981
      %4178 = vmatprep.subr.bf16.mxu0 %v2966
      %4179 = vmatpush2.bf16.msra.mxu0 %v2965
      %4180 = vmatprep.subr.bf16.mxu0 %v2950
      %4181 = vmatpush2.bf16.msra.mxu0 %v2949
      %4182 = vmatprep.mubr.bf16.mxu0 %v964
      %4183 = vmatmul.mubr.bf16.gmra.mxu0 %v963
      %v4184 = vpop.f32.mrf.mxu0
      %v4185 = vadd.f32 %v4072, %v4184
      %v4186 = vpop.f32.mrf.mxu0
      %v4187 = vadd.f32 %v4074, %v4186
      %v4188 = vpop.f32.mrf.mxu0
      %v4189 = vadd.f32 %v4076, %v4188
      %v4190 = vpop.f32.mrf.mxu0
      %v4191 = vadd.f32 %v4078, %v4190
      %4192 = vmatprep.mubr.bf16.mxu0 %v968
      %4193 = vmatmul.mubr.bf16.gmra.mxu0 %v967
      %v4194 = vpop.f32.mrf.mxu0
      %v4195 = vadd.f32 %v4082, %v4194
      %v4196 = vpop.f32.mrf.mxu0
      %v4197 = vadd.f32 %v4084, %v4196
      %v4198 = vpop.f32.mrf.mxu0
      %v4199 = vadd.f32 %v4086, %v4198
      %v4200 = vpop.f32.mrf.mxu0
      %v4201 = vadd.f32 %v4088, %v4200
      %4202 = vmatprep.mubr.bf16.mxu0 %v972
      %4203 = vmatmul.mubr.bf16.gmra.mxu0 %v971
      %v4204 = vpop.f32.mrf.mxu0
      %v4205 = vadd.f32 %v4092, %v4204
      %v4206 = vpop.f32.mrf.mxu0
      %v4207 = vadd.f32 %v4094, %v4206
      %v4208 = vpop.f32.mrf.mxu0
      %v4209 = vadd.f32 %v4096, %v4208
      %v4210 = vpop.f32.mrf.mxu0
      %v4211 = vadd.f32 %v4098, %v4210
      %4212 = vmatprep.mubr.bf16.mxu0 %v976
      %4213 = vmatmul.mubr.bf16.gmra.mxu0 %v975
      %v4214 = vpop.f32.mrf.mxu0
      %v4215 = vadd.f32 %v4102, %v4214
      %v4216 = vpop.f32.mrf.mxu0
      %v4217 = vadd.f32 %v4104, %v4216
      %v4218 = vpop.f32.mrf.mxu0
      %v4219 = vadd.f32 %v4106, %v4218
      %v4220 = vpop.f32.mrf.mxu0
      %v4221 = vadd.f32 %v4108, %v4220
      %4222 = vmatprep.mubr.bf16.mxu0 %v980
      %4223 = vmatmul.mubr.bf16.gmra.mxu0 %v979
      %v4224 = vpop.f32.mrf.mxu0
      %v4225 = vadd.f32 %v4112, %v4224
      %v4226 = vpop.f32.mrf.mxu0
      %v4227 = vadd.f32 %v4114, %v4226
      %v4228 = vpop.f32.mrf.mxu0
      %v4229 = vadd.f32 %v4116, %v4228
      %v4230 = vpop.f32.mrf.mxu0
      %v4231 = vadd.f32 %v4118, %v4230
      %4232 = vmatprep.mubr.bf16.mxu0 %v984
      %4233 = vmatmul.mubr.bf16.gmra.mxu0 %v983
      %v4234 = vpop.f32.mrf.mxu0
      %v4235 = vadd.f32 %v4122, %v4234
      %v4236 = vpop.f32.mrf.mxu0
      %v4237 = vadd.f32 %v4124, %v4236
      %v4238 = vpop.f32.mrf.mxu0
      %v4239 = vadd.f32 %v4126, %v4238
      %v4240 = vpop.f32.mrf.mxu0
      %v4241 = vadd.f32 %v4128, %v4240
      %4242 = vmatprep.mubr.bf16.mxu0 %v988
      %4243 = vmatmul.mubr.bf16.gmra.mxu0 %v987
      %v4244 = vpop.f32.mrf.mxu0
      %v4245 = vadd.f32 %v4132, %v4244
      %v4246 = vpop.f32.mrf.mxu0
      %v4247 = vadd.f32 %v4134, %v4246
      %v4248 = vpop.f32.mrf.mxu0
      %v4249 = vadd.f32 %v4136, %v4248
      %v4250 = vpop.f32.mrf.mxu0
      %v4251 = vadd.f32 %v4138, %v4250
      %4252 = vmatprep.mubr.bf16.mxu0 %v992
      %4253 = vmatmul.mubr.bf16.gmra.mxu0 %v991
      %v4254 = vpop.f32.mrf.mxu0
      %v4255 = vadd.f32 %v4142, %v4254
      %v4256 = vpop.f32.mrf.mxu0
      %v4257 = vadd.f32 %v4144, %v4256
      %v4258 = vpop.f32.mrf.mxu0
      %v4259 = vadd.f32 %v4146, %v4258
      %v4260 = vpop.f32.mrf.mxu0
      %v4261 = vadd.f32 %v4148, %v4260
      %4262 = vdwg.mxu0
      %4263 = vmatprep.subr.bf16.mxu0 %v2680
      %4264 = vmatpush1.bf16.msra.mxu0 %v2679
      %4265 = vmatprep.subr.bf16.mxu0 %v2664
      %4266 = vmatpush1.bf16.msra.mxu0 %v2663
      %4267 = vmatprep.subr.bf16.mxu0 %v2648
      %4268 = vmatpush1.bf16.msra.mxu0 %v2647
      %4269 = vmatprep.subr.bf16.mxu0 %v2632
      %4270 = vmatpush1.bf16.msra.mxu0 %v2631
      %4271 = vmatprep.subr.bf16.mxu0 %v2616
      %4272 = vmatpush1.bf16.msra.mxu0 %v2615
      %4273 = vmatprep.subr.bf16.mxu0 %v2600
      %4274 = vmatpush1.bf16.msra.mxu0 %v2599
      %4275 = vmatprep.subr.bf16.mxu0 %v2584
      %4276 = vmatpush1.bf16.msra.mxu0 %v2583
      %4277 = vmatprep.subr.bf16.mxu0 %v2568
      %4278 = vmatpush1.bf16.msra.mxu0 %v2567
      %4279 = vmatprep.subr.bf16.mxu0 %v2808
      %4280 = vmatpush2.bf16.msra.mxu0 %v2807
      %4281 = vmatprep.subr.bf16.mxu0 %v2792
      %4282 = vmatpush2.bf16.msra.mxu0 %v2791
      %4283 = vmatprep.subr.bf16.mxu0 %v2776
      %4284 = vmatpush2.bf16.msra.mxu0 %v2775
      %4285 = vmatprep.subr.bf16.mxu0 %v2760
      %4286 = vmatpush2.bf16.msra.mxu0 %v2759
      %4287 = vmatprep.subr.bf16.mxu0 %v2744
      %4288 = vmatpush2.bf16.msra.mxu0 %v2743
      %4289 = vmatprep.subr.bf16.mxu0 %v2728
      %4290 = vmatpush2.bf16.msra.mxu0 %v2727
      %4291 = vmatprep.subr.bf16.mxu0 %v2712
      %4292 = vmatpush2.bf16.msra.mxu0 %v2711
      %4293 = vmatprep.subr.bf16.mxu0 %v2696
      %4294 = vmatpush2.bf16.msra.mxu0 %v2695
      %4295 = vmatprep.mubr.bf16.mxu0 %v962
      %4296 = vmatmul.mubr.bf16.gmra.mxu0 %v961
      %v4297 = vpop.f32.mrf.mxu0
      %v4298 = vadd.f32 %v812, %v4297
      %v4299 = vpop.f32.mrf.mxu0
      %v4300 = vadd.f32 %v816, %v4299
      %v4301 = vpop.f32.mrf.mxu0
      %v4302 = vadd.f32 %v812, %v4301
      %v4303 = vpop.f32.mrf.mxu0
      %v4304 = vadd.f32 %v816, %v4303
      %4305 = vmatprep.mubr.bf16.mxu0 %v966
      %4306 = vmatmul.mubr.bf16.gmra.mxu0 %v965
      %v4307 = vpop.f32.mrf.mxu0
      %v4308 = vadd.f32 %v812, %v4307
      %v4309 = vpop.f32.mrf.mxu0
      %v4310 = vadd.f32 %v816, %v4309
      %v4311 = vpop.f32.mrf.mxu0
      %v4312 = vadd.f32 %v812, %v4311
      %v4313 = vpop.f32.mrf.mxu0
      %v4314 = vadd.f32 %v816, %v4313
      %4315 = vmatprep.mubr.bf16.mxu0 %v970
      %4316 = vmatmul.mubr.bf16.gmra.mxu0 %v969
      %v4317 = vpop.f32.mrf.mxu0
      %v4318 = vadd.f32 %v812, %v4317
      %v4319 = vpop.f32.mrf.mxu0
      %v4320 = vadd.f32 %v816, %v4319
      %v4321 = vpop.f32.mrf.mxu0
      %v4322 = vadd.f32 %v812, %v4321
      %v4323 = vpop.f32.mrf.mxu0
      %v4324 = vadd.f32 %v816, %v4323
      %4325 = vmatprep.mubr.bf16.mxu0 %v974
      %4326 = vmatmul.mubr.bf16.gmra.mxu0 %v973
      %v4327 = vpop.f32.mrf.mxu0
      %v4328 = vadd.f32 %v812, %v4327
      %v4329 = vpop.f32.mrf.mxu0
      %v4330 = vadd.f32 %v816, %v4329
      %v4331 = vpop.f32.mrf.mxu0
      %v4332 = vadd.f32 %v812, %v4331
      %v4333 = vpop.f32.mrf.mxu0
      %v4334 = vadd.f32 %v816, %v4333
      %4335 = vmatprep.mubr.bf16.mxu0 %v978
      %4336 = vmatmul.mubr.bf16.gmra.mxu0 %v977
      %v4337 = vpop.f32.mrf.mxu0
      %v4338 = vadd.f32 %v812, %v4337
      %v4339 = vpop.f32.mrf.mxu0
      %v4340 = vadd.f32 %v816, %v4339
      %v4341 = vpop.f32.mrf.mxu0
      %v4342 = vadd.f32 %v812, %v4341
      %v4343 = vpop.f32.mrf.mxu0
      %v4344 = vadd.f32 %v816, %v4343
      %4345 = vmatprep.mubr.bf16.mxu0 %v982
      %4346 = vmatmul.mubr.bf16.gmra.mxu0 %v981
      %v4347 = vpop.f32.mrf.mxu0
      %v4348 = vadd.f32 %v812, %v4347
      %v4349 = vpop.f32.mrf.mxu0
      %v4350 = vadd.f32 %v816, %v4349
      %v4351 = vpop.f32.mrf.mxu0
      %v4352 = vadd.f32 %v812, %v4351
      %v4353 = vpop.f32.mrf.mxu0
      %v4354 = vadd.f32 %v816, %v4353
      %4355 = vmatprep.mubr.bf16.mxu0 %v986
      %4356 = vmatmul.mubr.bf16.gmra.mxu0 %v985
      %v4357 = vpop.f32.mrf.mxu0
      %v4358 = vadd.f32 %v812, %v4357
      %v4359 = vpop.f32.mrf.mxu0
      %v4360 = vadd.f32 %v816, %v4359
      %v4361 = vpop.f32.mrf.mxu0
      %v4362 = vadd.f32 %v812, %v4361
      %v4363 = vpop.f32.mrf.mxu0
      %v4364 = vadd.f32 %v816, %v4363
      %4365 = vmatprep.mubr.bf16.mxu0 %v990
      %4366 = vmatmul.mubr.bf16.gmra.mxu0 %v989
      %v4367 = vpop.f32.mrf.mxu0
      %v4368 = vadd.f32 %v812, %v4367
      %v4369 = vpop.f32.mrf.mxu0
      %v4370 = vadd.f32 %v816, %v4369
      %v4371 = vpop.f32.mrf.mxu0
      %v4372 = vadd.f32 %v812, %v4371
      %v4373 = vpop.f32.mrf.mxu0
      %v4374 = vadd.f32 %v816, %v4373
      %4375 = vdwg.mxu0
      %4376 = vmatprep.subr.bf16.mxu0 %v2936
      %4377 = vmatpush1.bf16.msra.mxu0 %v2935
      %4378 = vmatprep.subr.bf16.mxu0 %v2920
      %4379 = vmatpush1.bf16.msra.mxu0 %v2919
      %4380 = vmatprep.subr.bf16.mxu0 %v2904
      %4381 = vmatpush1.bf16.msra.mxu0 %v2903
      %4382 = vmatprep.subr.bf16.mxu0 %v2888
      %4383 = vmatpush1.bf16.msra.mxu0 %v2887
      %4384 = vmatprep.subr.bf16.mxu0 %v2872
      %4385 = vmatpush1.bf16.msra.mxu0 %v2871
      %4386 = vmatprep.subr.bf16.mxu0 %v2856
      %4387 = vmatpush1.bf16.msra.mxu0 %v2855
      %4388 = vmatprep.subr.bf16.mxu0 %v2840
      %4389 = vmatpush1.bf16.msra.mxu0 %v2839
      %4390 = vmatprep.subr.bf16.mxu0 %v2824
      %4391 = vmatpush1.bf16.msra.mxu0 %v2823
      %4392 = vmatprep.subr.bf16.mxu0 %v3064
      %4393 = vmatpush2.bf16.msra.mxu0 %v3063
      %4394 = vmatprep.subr.bf16.mxu0 %v3048
      %4395 = vmatpush2.bf16.msra.mxu0 %v3047
      %4396 = vmatprep.subr.bf16.mxu0 %v3032
      %4397 = vmatpush2.bf16.msra.mxu0 %v3031
      %4398 = vmatprep.subr.bf16.mxu0 %v3016
      %4399 = vmatpush2.bf16.msra.mxu0 %v3015
      %4400 = vmatprep.subr.bf16.mxu0 %v3000
      %4401 = vmatpush2.bf16.msra.mxu0 %v2999
      %4402 = vmatprep.subr.bf16.mxu0 %v2984
      %4403 = vmatpush2.bf16.msra.mxu0 %v2983
      %4404 = vmatprep.subr.bf16.mxu0 %v2968
      %4405 = vmatpush2.bf16.msra.mxu0 %v2967
      %4406 = vmatprep.subr.bf16.mxu0 %v2952
      %4407 = vmatpush2.bf16.msra.mxu0 %v2951
      %4408 = vmatprep.mubr.bf16.mxu0 %v964
      %4409 = vmatmul.mubr.bf16.gmra.mxu0 %v963
      %v4410 = vpop.f32.mrf.mxu0
      %v4411 = vadd.f32 %v4298, %v4410
      %v4412 = vpop.f32.mrf.mxu0
      %v4413 = vadd.f32 %v4300, %v4412
      %v4414 = vpop.f32.mrf.mxu0
      %v4415 = vadd.f32 %v4302, %v4414
      %v4416 = vpop.f32.mrf.mxu0
      %v4417 = vadd.f32 %v4304, %v4416
      %4418 = vmatprep.mubr.bf16.mxu0 %v968
      %4419 = vmatmul.mubr.bf16.gmra.mxu0 %v967
      %v4420 = vpop.f32.mrf.mxu0
      %v4421 = vadd.f32 %v4308, %v4420
      %v4422 = vpop.f32.mrf.mxu0
      %v4423 = vadd.f32 %v4310, %v4422
      %v4424 = vpop.f32.mrf.mxu0
      %v4425 = vadd.f32 %v4312, %v4424
      %v4426 = vpop.f32.mrf.mxu0
      %v4427 = vadd.f32 %v4314, %v4426
      %4428 = vmatprep.mubr.bf16.mxu0 %v972
      %4429 = vmatmul.mubr.bf16.gmra.mxu0 %v971
      %v4430 = vpop.f32.mrf.mxu0
      %v4431 = vadd.f32 %v4318, %v4430
      %v4432 = vpop.f32.mrf.mxu0
      %v4433 = vadd.f32 %v4320, %v4432
      %v4434 = vpop.f32.mrf.mxu0
      %v4435 = vadd.f32 %v4322, %v4434
      %v4436 = vpop.f32.mrf.mxu0
      %v4437 = vadd.f32 %v4324, %v4436
      %4438 = vmatprep.mubr.bf16.mxu0 %v976
      %4439 = vmatmul.mubr.bf16.gmra.mxu0 %v975
      %v4440 = vpop.f32.mrf.mxu0
      %v4441 = vadd.f32 %v4328, %v4440
      %v4442 = vpop.f32.mrf.mxu0
      %v4443 = vadd.f32 %v4330, %v4442
      %v4444 = vpop.f32.mrf.mxu0
      %v4445 = vadd.f32 %v4332, %v4444
      %v4446 = vpop.f32.mrf.mxu0
      %v4447 = vadd.f32 %v4334, %v4446
      %4448 = vmatprep.mubr.bf16.mxu0 %v980
      %4449 = vmatmul.mubr.bf16.gmra.mxu0 %v979
      %v4450 = vpop.f32.mrf.mxu0
      %v4451 = vadd.f32 %v4338, %v4450
      %v4452 = vpop.f32.mrf.mxu0
      %v4453 = vadd.f32 %v4340, %v4452
      %v4454 = vpop.f32.mrf.mxu0
      %v4455 = vadd.f32 %v4342, %v4454
      %v4456 = vpop.f32.mrf.mxu0
      %v4457 = vadd.f32 %v4344, %v4456
      %4458 = vmatprep.mubr.bf16.mxu0 %v984
      %4459 = vmatmul.mubr.bf16.gmra.mxu0 %v983
      %v4460 = vpop.f32.mrf.mxu0
      %v4461 = vadd.f32 %v4348, %v4460
      %v4462 = vpop.f32.mrf.mxu0
      %v4463 = vadd.f32 %v4350, %v4462
      %v4464 = vpop.f32.mrf.mxu0
      %v4465 = vadd.f32 %v4352, %v4464
      %v4466 = vpop.f32.mrf.mxu0
      %v4467 = vadd.f32 %v4354, %v4466
      %4468 = vmatprep.mubr.bf16.mxu0 %v988
      %4469 = vmatmul.mubr.bf16.gmra.mxu0 %v987
      %v4470 = vpop.f32.mrf.mxu0
      %v4471 = vadd.f32 %v4358, %v4470
      %v4472 = vpop.f32.mrf.mxu0
      %v4473 = vadd.f32 %v4360, %v4472
      %v4474 = vpop.f32.mrf.mxu0
      %v4475 = vadd.f32 %v4362, %v4474
      %v4476 = vpop.f32.mrf.mxu0
      %v4477 = vadd.f32 %v4364, %v4476
      %4478 = vmatprep.mubr.bf16.mxu0 %v992
      %4479 = vmatmul.mubr.bf16.gmra.mxu0 %v991
      %v4480 = vpop.f32.mrf.mxu0
      %v4481 = vadd.f32 %v4368, %v4480
      %v4482 = vpop.f32.mrf.mxu0
      %v4483 = vadd.f32 %v4370, %v4482
      %v4484 = vpop.f32.mrf.mxu0
      %v4485 = vadd.f32 %v4372, %v4484
      %v4486 = vpop.f32.mrf.mxu0
      %v4487 = vadd.f32 %v4374, %v4486
      %4488 = vdwg.mxu0
      %4489 = vmatprep.subr.bf16.mxu0 %v2682
      %4490 = vmatpush1.bf16.msra.mxu0 %v2681
      %4491 = vmatprep.subr.bf16.mxu0 %v2666
      %4492 = vmatpush1.bf16.msra.mxu0 %v2665
      %4493 = vmatprep.subr.bf16.mxu0 %v2650
      %4494 = vmatpush1.bf16.msra.mxu0 %v2649
      %4495 = vmatprep.subr.bf16.mxu0 %v2634
      %4496 = vmatpush1.bf16.msra.mxu0 %v2633
      %4497 = vmatprep.subr.bf16.mxu0 %v2618
      %4498 = vmatpush1.bf16.msra.mxu0 %v2617
      %4499 = vmatprep.subr.bf16.mxu0 %v2602
      %4500 = vmatpush1.bf16.msra.mxu0 %v2601
      %4501 = vmatprep.subr.bf16.mxu0 %v2586
      %4502 = vmatpush1.bf16.msra.mxu0 %v2585
      %4503 = vmatprep.subr.bf16.mxu0 %v2570
      %4504 = vmatpush1.bf16.msra.mxu0 %v2569
      %4505 = vmatprep.subr.bf16.mxu0 %v2810
      %4506 = vmatpush2.bf16.msra.mxu0 %v2809
      %4507 = vmatprep.subr.bf16.mxu0 %v2794
      %4508 = vmatpush2.bf16.msra.mxu0 %v2793
      %4509 = vmatprep.subr.bf16.mxu0 %v2778
      %4510 = vmatpush2.bf16.msra.mxu0 %v2777
      %4511 = vmatprep.subr.bf16.mxu0 %v2762
      %4512 = vmatpush2.bf16.msra.mxu0 %v2761
      %4513 = vmatprep.subr.bf16.mxu0 %v2746
      %4514 = vmatpush2.bf16.msra.mxu0 %v2745
      %4515 = vmatprep.subr.bf16.mxu0 %v2730
      %4516 = vmatpush2.bf16.msra.mxu0 %v2729
      %4517 = vmatprep.subr.bf16.mxu0 %v2714
      %4518 = vmatpush2.bf16.msra.mxu0 %v2713
      %4519 = vmatprep.subr.bf16.mxu0 %v2698
      %4520 = vmatpush2.bf16.msra.mxu0 %v2697
      %4521 = vmatprep.mubr.bf16.mxu0 %v962
      %4522 = vmatmul.mubr.bf16.gmra.mxu0 %v961
      %v4523 = vpop.f32.mrf.mxu0
      %v4524 = vadd.f32 %v820, %v4523
      %v4525 = vpop.f32.mrf.mxu0
      %v4526 = vadd.f32 %v824, %v4525
      %v4527 = vpop.f32.mrf.mxu0
      %v4528 = vadd.f32 %v820, %v4527
      %v4529 = vpop.f32.mrf.mxu0
      %v4530 = vadd.f32 %v824, %v4529
      %4531 = vmatprep.mubr.bf16.mxu0 %v966
      %4532 = vmatmul.mubr.bf16.gmra.mxu0 %v965
      %v4533 = vpop.f32.mrf.mxu0
      %v4534 = vadd.f32 %v820, %v4533
      %v4535 = vpop.f32.mrf.mxu0
      %v4536 = vadd.f32 %v824, %v4535
      %v4537 = vpop.f32.mrf.mxu0
      %v4538 = vadd.f32 %v820, %v4537
      %v4539 = vpop.f32.mrf.mxu0
      %v4540 = vadd.f32 %v824, %v4539
      %4541 = vmatprep.mubr.bf16.mxu0 %v970
      %4542 = vmatmul.mubr.bf16.gmra.mxu0 %v969
      %v4543 = vpop.f32.mrf.mxu0
      %v4544 = vadd.f32 %v820, %v4543
      %v4545 = vpop.f32.mrf.mxu0
      %v4546 = vadd.f32 %v824, %v4545
      %v4547 = vpop.f32.mrf.mxu0
      %v4548 = vadd.f32 %v820, %v4547
      %v4549 = vpop.f32.mrf.mxu0
      %v4550 = vadd.f32 %v824, %v4549
      %4551 = vmatprep.mubr.bf16.mxu0 %v974
      %4552 = vmatmul.mubr.bf16.gmra.mxu0 %v973
      %v4553 = vpop.f32.mrf.mxu0
      %v4554 = vadd.f32 %v820, %v4553
      %v4555 = vpop.f32.mrf.mxu0
      %v4556 = vadd.f32 %v824, %v4555
      %v4557 = vpop.f32.mrf.mxu0
      %v4558 = vadd.f32 %v820, %v4557
      %v4559 = vpop.f32.mrf.mxu0
      %v4560 = vadd.f32 %v824, %v4559
      %4561 = vmatprep.mubr.bf16.mxu0 %v978
      %4562 = vmatmul.mubr.bf16.gmra.mxu0 %v977
      %v4563 = vpop.f32.mrf.mxu0
      %v4564 = vadd.f32 %v820, %v4563
      %v4565 = vpop.f32.mrf.mxu0
      %v4566 = vadd.f32 %v824, %v4565
      %v4567 = vpop.f32.mrf.mxu0
      %v4568 = vadd.f32 %v820, %v4567
      %v4569 = vpop.f32.mrf.mxu0
      %v4570 = vadd.f32 %v824, %v4569
      %4571 = vmatprep.mubr.bf16.mxu0 %v982
      %4572 = vmatmul.mubr.bf16.gmra.mxu0 %v981
      %v4573 = vpop.f32.mrf.mxu0
      %v4574 = vadd.f32 %v820, %v4573
      %v4575 = vpop.f32.mrf.mxu0
      %v4576 = vadd.f32 %v824, %v4575
      %v4577 = vpop.f32.mrf.mxu0
      %v4578 = vadd.f32 %v820, %v4577
      %v4579 = vpop.f32.mrf.mxu0
      %v4580 = vadd.f32 %v824, %v4579
      %4581 = vmatprep.mubr.bf16.mxu0 %v986
      %4582 = vmatmul.mubr.bf16.gmra.mxu0 %v985
      %v4583 = vpop.f32.mrf.mxu0
      %v4584 = vadd.f32 %v820, %v4583
      %v4585 = vpop.f32.mrf.mxu0
      %v4586 = vadd.f32 %v824, %v4585
      %v4587 = vpop.f32.mrf.mxu0
      %v4588 = vadd.f32 %v820, %v4587
      %v4589 = vpop.f32.mrf.mxu0
      %v4590 = vadd.f32 %v824, %v4589
      %4591 = vmatprep.mubr.bf16.mxu0 %v990
      %4592 = vmatmul.mubr.bf16.gmra.mxu0 %v989
      %v4593 = vpop.f32.mrf.mxu0
      %v4594 = vadd.f32 %v820, %v4593
      %v4595 = vpop.f32.mrf.mxu0
      %v4596 = vadd.f32 %v824, %v4595
      %v4597 = vpop.f32.mrf.mxu0
      %v4598 = vadd.f32 %v820, %v4597
      %v4599 = vpop.f32.mrf.mxu0
      %v4600 = vadd.f32 %v824, %v4599
      %4601 = vdwg.mxu0
      %4602 = vmatprep.subr.bf16.mxu0 %v2938
      %4603 = vmatpush1.bf16.msra.mxu0 %v2937
      %4604 = vmatprep.subr.bf16.mxu0 %v2922
      %4605 = vmatpush1.bf16.msra.mxu0 %v2921
      %4606 = vmatprep.subr.bf16.mxu0 %v2906
      %4607 = vmatpush1.bf16.msra.mxu0 %v2905
      %4608 = vmatprep.subr.bf16.mxu0 %v2890
      %4609 = vmatpush1.bf16.msra.mxu0 %v2889
      %4610 = vmatprep.subr.bf16.mxu0 %v2874
      %4611 = vmatpush1.bf16.msra.mxu0 %v2873
      %4612 = vmatprep.subr.bf16.mxu0 %v2858
      %4613 = vmatpush1.bf16.msra.mxu0 %v2857
      %4614 = vmatprep.subr.bf16.mxu0 %v2842
      %4615 = vmatpush1.bf16.msra.mxu0 %v2841
      %4616 = vmatprep.subr.bf16.mxu0 %v2826
      %4617 = vmatpush1.bf16.msra.mxu0 %v2825
      %4618 = vmatprep.subr.bf16.mxu0 %v3066
      %4619 = vmatpush2.bf16.msra.mxu0 %v3065
      %4620 = vmatprep.subr.bf16.mxu0 %v3050
      %4621 = vmatpush2.bf16.msra.mxu0 %v3049
      %4622 = vmatprep.subr.bf16.mxu0 %v3034
      %4623 = vmatpush2.bf16.msra.mxu0 %v3033
      %4624 = vmatprep.subr.bf16.mxu0 %v3018
      %4625 = vmatpush2.bf16.msra.mxu0 %v3017
      %4626 = vmatprep.subr.bf16.mxu0 %v3002
      %4627 = vmatpush2.bf16.msra.mxu0 %v3001
      %4628 = vmatprep.subr.bf16.mxu0 %v2986
      %4629 = vmatpush2.bf16.msra.mxu0 %v2985
      %4630 = vmatprep.subr.bf16.mxu0 %v2970
      %4631 = vmatpush2.bf16.msra.mxu0 %v2969
      %4632 = vmatprep.subr.bf16.mxu0 %v2954
      %4633 = vmatpush2.bf16.msra.mxu0 %v2953
      %4634 = vmatprep.mubr.bf16.mxu0 %v964
      %4635 = vmatmul.mubr.bf16.gmra.mxu0 %v963
      %v4636 = vpop.f32.mrf.mxu0
      %v4637 = vadd.f32 %v4524, %v4636
      %v4638 = vpop.f32.mrf.mxu0
      %v4639 = vadd.f32 %v4526, %v4638
      %v4640 = vpop.f32.mrf.mxu0
      %v4641 = vadd.f32 %v4528, %v4640
      %v4642 = vpop.f32.mrf.mxu0
      %v4643 = vadd.f32 %v4530, %v4642
      %4644 = vmatprep.mubr.bf16.mxu0 %v968
      %4645 = vmatmul.mubr.bf16.gmra.mxu0 %v967
      %v4646 = vpop.f32.mrf.mxu0
      %v4647 = vadd.f32 %v4534, %v4646
      %v4648 = vpop.f32.mrf.mxu0
      %v4649 = vadd.f32 %v4536, %v4648
      %v4650 = vpop.f32.mrf.mxu0
      %v4651 = vadd.f32 %v4538, %v4650
      %v4652 = vpop.f32.mrf.mxu0
      %v4653 = vadd.f32 %v4540, %v4652
      %4654 = vmatprep.mubr.bf16.mxu0 %v972
      %4655 = vmatmul.mubr.bf16.gmra.mxu0 %v971
      %v4656 = vpop.f32.mrf.mxu0
      %v4657 = vadd.f32 %v4544, %v4656
      %v4658 = vpop.f32.mrf.mxu0
      %v4659 = vadd.f32 %v4546, %v4658
      %v4660 = vpop.f32.mrf.mxu0
      %v4661 = vadd.f32 %v4548, %v4660
      %v4662 = vpop.f32.mrf.mxu0
      %v4663 = vadd.f32 %v4550, %v4662
      %4664 = vmatprep.mubr.bf16.mxu0 %v976
      %4665 = vmatmul.mubr.bf16.gmra.mxu0 %v975
      %v4666 = vpop.f32.mrf.mxu0
      %v4667 = vadd.f32 %v4554, %v4666
      %v4668 = vpop.f32.mrf.mxu0
      %v4669 = vadd.f32 %v4556, %v4668
      %v4670 = vpop.f32.mrf.mxu0
      %v4671 = vadd.f32 %v4558, %v4670
      %v4672 = vpop.f32.mrf.mxu0
      %v4673 = vadd.f32 %v4560, %v4672
      %4674 = vmatprep.mubr.bf16.mxu0 %v980
      %4675 = vmatmul.mubr.bf16.gmra.mxu0 %v979
      %v4676 = vpop.f32.mrf.mxu0
      %v4677 = vadd.f32 %v4564, %v4676
      %v4678 = vpop.f32.mrf.mxu0
      %v4679 = vadd.f32 %v4566, %v4678
      %v4680 = vpop.f32.mrf.mxu0
      %v4681 = vadd.f32 %v4568, %v4680
      %v4682 = vpop.f32.mrf.mxu0
      %v4683 = vadd.f32 %v4570, %v4682
      %4684 = vmatprep.mubr.bf16.mxu0 %v984
      %4685 = vmatmul.mubr.bf16.gmra.mxu0 %v983
      %v4686 = vpop.f32.mrf.mxu0
      %v4687 = vadd.f32 %v4574, %v4686
      %v4688 = vpop.f32.mrf.mxu0
      %v4689 = vadd.f32 %v4576, %v4688
      %v4690 = vpop.f32.mrf.mxu0
      %v4691 = vadd.f32 %v4578, %v4690
      %v4692 = vpop.f32.mrf.mxu0
      %v4693 = vadd.f32 %v4580, %v4692
      %4694 = vmatprep.mubr.bf16.mxu0 %v988
      %4695 = vmatmul.mubr.bf16.gmra.mxu0 %v987
      %v4696 = vpop.f32.mrf.mxu0
      %v4697 = vadd.f32 %v4584, %v4696
      %v4698 = vpop.f32.mrf.mxu0
      %v4699 = vadd.f32 %v4586, %v4698
      %v4700 = vpop.f32.mrf.mxu0
      %v4701 = vadd.f32 %v4588, %v4700
      %v4702 = vpop.f32.mrf.mxu0
      %v4703 = vadd.f32 %v4590, %v4702
      %4704 = vmatprep.mubr.bf16.mxu0 %v992
      %4705 = vmatmul.mubr.bf16.gmra.mxu0 %v991
      %v4706 = vpop.f32.mrf.mxu0
      %v4707 = vadd.f32 %v4594, %v4706
      %v4708 = vpop.f32.mrf.mxu0
      %v4709 = vadd.f32 %v4596, %v4708
      %v4710 = vpop.f32.mrf.mxu0
      %v4711 = vadd.f32 %v4598, %v4710
      %v4712 = vpop.f32.mrf.mxu0
      %v4713 = vadd.f32 %v4600, %v4712
      %4714 = vdwg.mxu0
      %4715 = vmatprep.subr.bf16.mxu0 %v2684
      %4716 = vmatpush1.bf16.msra.mxu0 %v2683
      %4717 = vmatprep.subr.bf16.mxu0 %v2668
      %4718 = vmatpush1.bf16.msra.mxu0 %v2667
      %4719 = vmatprep.subr.bf16.mxu0 %v2652
      %4720 = vmatpush1.bf16.msra.mxu0 %v2651
      %4721 = vmatprep.subr.bf16.mxu0 %v2636
      %4722 = vmatpush1.bf16.msra.mxu0 %v2635
      %4723 = vmatprep.subr.bf16.mxu0 %v2620
      %4724 = vmatpush1.bf16.msra.mxu0 %v2619
      %4725 = vmatprep.subr.bf16.mxu0 %v2604
      %4726 = vmatpush1.bf16.msra.mxu0 %v2603
      %4727 = vmatprep.subr.bf16.mxu0 %v2588
      %4728 = vmatpush1.bf16.msra.mxu0 %v2587
      %4729 = vmatprep.subr.bf16.mxu0 %v2572
      %4730 = vmatpush1.bf16.msra.mxu0 %v2571
      %4731 = vmatprep.subr.bf16.mxu0 %v2812
      %4732 = vmatpush2.bf16.msra.mxu0 %v2811
      %4733 = vmatprep.subr.bf16.mxu0 %v2796
      %4734 = vmatpush2.bf16.msra.mxu0 %v2795
      %4735 = vmatprep.subr.bf16.mxu0 %v2780
      %4736 = vmatpush2.bf16.msra.mxu0 %v2779
      %4737 = vmatprep.subr.bf16.mxu0 %v2764
      %4738 = vmatpush2.bf16.msra.mxu0 %v2763
      %4739 = vmatprep.subr.bf16.mxu0 %v2748
      %4740 = vmatpush2.bf16.msra.mxu0 %v2747
      %4741 = vmatprep.subr.bf16.mxu0 %v2732
      %4742 = vmatpush2.bf16.msra.mxu0 %v2731
      %4743 = vmatprep.subr.bf16.mxu0 %v2716
      %4744 = vmatpush2.bf16.msra.mxu0 %v2715
      %4745 = vmatprep.subr.bf16.mxu0 %v2700
      %4746 = vmatpush2.bf16.msra.mxu0 %v2699
      %4747 = vmatprep.mubr.bf16.mxu0 %v962
      %4748 = vmatmul.mubr.bf16.gmra.mxu0 %v961
      %v4749 = vpop.f32.mrf.mxu0
      %v4750 = vadd.f32 %v828, %v4749
      %v4751 = vpop.f32.mrf.mxu0
      %v4752 = vadd.f32 %v832, %v4751
      %v4753 = vpop.f32.mrf.mxu0
      %v4754 = vadd.f32 %v828, %v4753
      %v4755 = vpop.f32.mrf.mxu0
      %v4756 = vadd.f32 %v832, %v4755
      %4757 = vmatprep.mubr.bf16.mxu0 %v966
      %4758 = vmatmul.mubr.bf16.gmra.mxu0 %v965
      %v4759 = vpop.f32.mrf.mxu0
      %v4760 = vadd.f32 %v828, %v4759
      %v4761 = vpop.f32.mrf.mxu0
      %v4762 = vadd.f32 %v832, %v4761
      %v4763 = vpop.f32.mrf.mxu0
      %v4764 = vadd.f32 %v828, %v4763
      %v4765 = vpop.f32.mrf.mxu0
      %v4766 = vadd.f32 %v832, %v4765
      %4767 = vmatprep.mubr.bf16.mxu0 %v970
      %4768 = vmatmul.mubr.bf16.gmra.mxu0 %v969
      %v4769 = vpop.f32.mrf.mxu0
      %v4770 = vadd.f32 %v828, %v4769
      %v4771 = vpop.f32.mrf.mxu0
      %v4772 = vadd.f32 %v832, %v4771
      %v4773 = vpop.f32.mrf.mxu0
      %v4774 = vadd.f32 %v828, %v4773
      %v4775 = vpop.f32.mrf.mxu0
      %v4776 = vadd.f32 %v832, %v4775
      %4777 = vmatprep.mubr.bf16.mxu0 %v974
      %4778 = vmatmul.mubr.bf16.gmra.mxu0 %v973
      %v4779 = vpop.f32.mrf.mxu0
      %v4780 = vadd.f32 %v828, %v4779
      %v4781 = vpop.f32.mrf.mxu0
      %v4782 = vadd.f32 %v832, %v4781
      %v4783 = vpop.f32.mrf.mxu0
      %v4784 = vadd.f32 %v828, %v4783
      %v4785 = vpop.f32.mrf.mxu0
      %v4786 = vadd.f32 %v832, %v4785
      %4787 = vmatprep.mubr.bf16.mxu0 %v978
      %4788 = vmatmul.mubr.bf16.gmra.mxu0 %v977
      %v4789 = vpop.f32.mrf.mxu0
      %v4790 = vadd.f32 %v828, %v4789
      %v4791 = vpop.f32.mrf.mxu0
      %v4792 = vadd.f32 %v832, %v4791
      %v4793 = vpop.f32.mrf.mxu0
      %v4794 = vadd.f32 %v828, %v4793
      %v4795 = vpop.f32.mrf.mxu0
      %v4796 = vadd.f32 %v832, %v4795
      %4797 = vmatprep.mubr.bf16.mxu0 %v982
      %4798 = vmatmul.mubr.bf16.gmra.mxu0 %v981
      %v4799 = vpop.f32.mrf.mxu0
      %v4800 = vadd.f32 %v828, %v4799
      %v4801 = vpop.f32.mrf.mxu0
      %v4802 = vadd.f32 %v832, %v4801
      %v4803 = vpop.f32.mrf.mxu0
      %v4804 = vadd.f32 %v828, %v4803
      %v4805 = vpop.f32.mrf.mxu0
      %v4806 = vadd.f32 %v832, %v4805
      %4807 = vmatprep.mubr.bf16.mxu0 %v986
      %4808 = vmatmul.mubr.bf16.gmra.mxu0 %v985
      %v4809 = vpop.f32.mrf.mxu0
      %v4810 = vadd.f32 %v828, %v4809
      %v4811 = vpop.f32.mrf.mxu0
      %v4812 = vadd.f32 %v832, %v4811
      %v4813 = vpop.f32.mrf.mxu0
      %v4814 = vadd.f32 %v828, %v4813
      %v4815 = vpop.f32.mrf.mxu0
      %v4816 = vadd.f32 %v832, %v4815
      %4817 = vmatprep.mubr.bf16.mxu0 %v990
      %4818 = vmatmul.mubr.bf16.gmra.mxu0 %v989
      %v4819 = vpop.f32.mrf.mxu0
      %v4820 = vadd.f32 %v828, %v4819
      %v4821 = vpop.f32.mrf.mxu0
      %v4822 = vadd.f32 %v832, %v4821
      %v4823 = vpop.f32.mrf.mxu0
      %v4824 = vadd.f32 %v828, %v4823
      %v4825 = vpop.f32.mrf.mxu0
      %v4826 = vadd.f32 %v832, %v4825
      %4827 = vdwg.mxu0
      %4828 = vmatprep.subr.bf16.mxu0 %v2940
      %4829 = vmatpush1.bf16.msra.mxu0 %v2939
      %4830 = vmatprep.subr.bf16.mxu0 %v2924
      %4831 = vmatpush1.bf16.msra.mxu0 %v2923
      %4832 = vmatprep.subr.bf16.mxu0 %v2908
      %4833 = vmatpush1.bf16.msra.mxu0 %v2907
      %4834 = vmatprep.subr.bf16.mxu0 %v2892
      %4835 = vmatpush1.bf16.msra.mxu0 %v2891
      %4836 = vmatprep.subr.bf16.mxu0 %v2876
      %4837 = vmatpush1.bf16.msra.mxu0 %v2875
      %4838 = vmatprep.subr.bf16.mxu0 %v2860
      %4839 = vmatpush1.bf16.msra.mxu0 %v2859
      %4840 = vmatprep.subr.bf16.mxu0 %v2844
      %4841 = vmatpush1.bf16.msra.mxu0 %v2843
      %4842 = vmatprep.subr.bf16.mxu0 %v2828
      %4843 = vmatpush1.bf16.msra.mxu0 %v2827
      %4844 = vmatprep.subr.bf16.mxu0 %v3068
      %4845 = vmatpush2.bf16.msra.mxu0 %v3067
      %4846 = vmatprep.subr.bf16.mxu0 %v3052
      %4847 = vmatpush2.bf16.msra.mxu0 %v3051
      %4848 = vmatprep.subr.bf16.mxu0 %v3036
      %4849 = vmatpush2.bf16.msra.mxu0 %v3035
      %4850 = vmatprep.subr.bf16.mxu0 %v3020
      %4851 = vmatpush2.bf16.msra.mxu0 %v3019
      %4852 = vmatprep.subr.bf16.mxu0 %v3004
      %4853 = vmatpush2.bf16.msra.mxu0 %v3003
      %4854 = vmatprep.subr.bf16.mxu0 %v2988
      %4855 = vmatpush2.bf16.msra.mxu0 %v2987
      %4856 = vmatprep.subr.bf16.mxu0 %v2972
      %4857 = vmatpush2.bf16.msra.mxu0 %v2971
      %4858 = vmatprep.subr.bf16.mxu0 %v2956
      %4859 = vmatpush2.bf16.msra.mxu0 %v2955
      %4860 = vmatprep.mubr.bf16.mxu0 %v964
      %4861 = vmatmul.mubr.bf16.gmra.mxu0 %v963
      %v4862 = vpop.f32.mrf.mxu0
      %v4863 = vadd.f32 %v4750, %v4862
      %v4864 = vpop.f32.mrf.mxu0
      %v4865 = vadd.f32 %v4752, %v4864
      %v4866 = vpop.f32.mrf.mxu0
      %v4867 = vadd.f32 %v4754, %v4866
      %v4868 = vpop.f32.mrf.mxu0
      %v4869 = vadd.f32 %v4756, %v4868
      %4870 = vmatprep.mubr.bf16.mxu0 %v968
      %4871 = vmatmul.mubr.bf16.gmra.mxu0 %v967
      %v4872 = vpop.f32.mrf.mxu0
      %v4873 = vadd.f32 %v4760, %v4872
      %v4874 = vpop.f32.mrf.mxu0
      %v4875 = vadd.f32 %v4762, %v4874
      %v4876 = vpop.f32.mrf.mxu0
      %v4877 = vadd.f32 %v4764, %v4876
      %v4878 = vpop.f32.mrf.mxu0
      %v4879 = vadd.f32 %v4766, %v4878
      %4880 = vmatprep.mubr.bf16.mxu0 %v972
      %4881 = vmatmul.mubr.bf16.gmra.mxu0 %v971
      %v4882 = vpop.f32.mrf.mxu0
      %v4883 = vadd.f32 %v4770, %v4882
      %v4884 = vpop.f32.mrf.mxu0
      %v4885 = vadd.f32 %v4772, %v4884
      %v4886 = vpop.f32.mrf.mxu0
      %v4887 = vadd.f32 %v4774, %v4886
      %v4888 = vpop.f32.mrf.mxu0
      %v4889 = vadd.f32 %v4776, %v4888
      %4890 = vmatprep.mubr.bf16.mxu0 %v976
      %4891 = vmatmul.mubr.bf16.gmra.mxu0 %v975
      %v4892 = vpop.f32.mrf.mxu0
      %v4893 = vadd.f32 %v4780, %v4892
      %v4894 = vpop.f32.mrf.mxu0
      %v4895 = vadd.f32 %v4782, %v4894
      %v4896 = vpop.f32.mrf.mxu0
      %v4897 = vadd.f32 %v4784, %v4896
      %v4898 = vpop.f32.mrf.mxu0
      %v4899 = vadd.f32 %v4786, %v4898
      %4900 = vmatprep.mubr.bf16.mxu0 %v980
      %4901 = vmatmul.mubr.bf16.gmra.mxu0 %v979
      %v4902 = vpop.f32.mrf.mxu0
      %v4903 = vadd.f32 %v4790, %v4902
      %v4904 = vpop.f32.mrf.mxu0
      %v4905 = vadd.f32 %v4792, %v4904
      %v4906 = vpop.f32.mrf.mxu0
      %v4907 = vadd.f32 %v4794, %v4906
      %v4908 = vpop.f32.mrf.mxu0
      %v4909 = vadd.f32 %v4796, %v4908
      %4910 = vmatprep.mubr.bf16.mxu0 %v984
      %4911 = vmatmul.mubr.bf16.gmra.mxu0 %v983
      %v4912 = vpop.f32.mrf.mxu0
      %v4913 = vadd.f32 %v4800, %v4912
      %v4914 = vpop.f32.mrf.mxu0
      %v4915 = vadd.f32 %v4802, %v4914
      %v4916 = vpop.f32.mrf.mxu0
      %v4917 = vadd.f32 %v4804, %v4916
      %v4918 = vpop.f32.mrf.mxu0
      %v4919 = vadd.f32 %v4806, %v4918
      %4920 = vmatprep.mubr.bf16.mxu0 %v988
      %4921 = vmatmul.mubr.bf16.gmra.mxu0 %v987
      %v4922 = vpop.f32.mrf.mxu0
      %v4923 = vadd.f32 %v4810, %v4922
      %v4924 = vpop.f32.mrf.mxu0
      %v4925 = vadd.f32 %v4812, %v4924
      %v4926 = vpop.f32.mrf.mxu0
      %v4927 = vadd.f32 %v4814, %v4926
      %v4928 = vpop.f32.mrf.mxu0
      %v4929 = vadd.f32 %v4816, %v4928
      %4930 = vmatprep.mubr.bf16.mxu0 %v992
      %4931 = vmatmul.mubr.bf16.gmra.mxu0 %v991
      %v4932 = vpop.f32.mrf.mxu0
      %v4933 = vadd.f32 %v4820, %v4932
      %v4934 = vpop.f32.mrf.mxu0
      %v4935 = vadd.f32 %v4822, %v4934
      %v4936 = vpop.f32.mrf.mxu0
      %v4937 = vadd.f32 %v4824, %v4936
      %v4938 = vpop.f32.mrf.mxu0
      %v4939 = vadd.f32 %v4826, %v4938
      %4940 = vdwg.mxu0
      %4941 = vmatprep.subr.bf16.mxu0 %v2686
      %4942 = vmatpush1.bf16.msra.mxu0 %v2685
      %4943 = vmatprep.subr.bf16.mxu0 %v2670
      %4944 = vmatpush1.bf16.msra.mxu0 %v2669
      %4945 = vmatprep.subr.bf16.mxu0 %v2654
      %4946 = vmatpush1.bf16.msra.mxu0 %v2653
      %4947 = vmatprep.subr.bf16.mxu0 %v2638
      %4948 = vmatpush1.bf16.msra.mxu0 %v2637
      %4949 = vmatprep.subr.bf16.mxu0 %v2622
      %4950 = vmatpush1.bf16.msra.mxu0 %v2621
      %4951 = vmatprep.subr.bf16.mxu0 %v2606
      %4952 = vmatpush1.bf16.msra.mxu0 %v2605
      %4953 = vmatprep.subr.bf16.mxu0 %v2590
      %4954 = vmatpush1.bf16.msra.mxu0 %v2589
      %4955 = vmatprep.subr.bf16.mxu0 %v2574
      %4956 = vmatpush1.bf16.msra.mxu0 %v2573
      %4957 = vmatprep.subr.bf16.mxu0 %v2814
      %4958 = vmatpush2.bf16.msra.mxu0 %v2813
      %4959 = vmatprep.subr.bf16.mxu0 %v2798
      %4960 = vmatpush2.bf16.msra.mxu0 %v2797
      %4961 = vmatprep.subr.bf16.mxu0 %v2782
      %4962 = vmatpush2.bf16.msra.mxu0 %v2781
      %4963 = vmatprep.subr.bf16.mxu0 %v2766
      %4964 = vmatpush2.bf16.msra.mxu0 %v2765
      %4965 = vmatprep.subr.bf16.mxu0 %v2750
      %4966 = vmatpush2.bf16.msra.mxu0 %v2749
      %4967 = vmatprep.subr.bf16.mxu0 %v2734
      %4968 = vmatpush2.bf16.msra.mxu0 %v2733
      %4969 = vmatprep.subr.bf16.mxu0 %v2718
      %4970 = vmatpush2.bf16.msra.mxu0 %v2717
      %4971 = vmatprep.subr.bf16.mxu0 %v2702
      %4972 = vmatpush2.bf16.msra.mxu0 %v2701
      %4973 = vmatprep.mubr.bf16.mxu0 %v962
      %4974 = vmatmul.mubr.bf16.gmra.mxu0 %v961
      %v4975 = vpop.f32.mrf.mxu0
      %v4976 = vadd.f32 %v836, %v4975
      %v4977 = vpop.f32.mrf.mxu0
      %v4978 = vadd.f32 %v840, %v4977
      %v4979 = vpop.f32.mrf.mxu0
      %v4980 = vadd.f32 %v836, %v4979
      %v4981 = vpop.f32.mrf.mxu0
      %v4982 = vadd.f32 %v840, %v4981
      %4983 = vmatprep.mubr.bf16.mxu0 %v966
      %4984 = vmatmul.mubr.bf16.gmra.mxu0 %v965
      %v4985 = vpop.f32.mrf.mxu0
      %v4986 = vadd.f32 %v836, %v4985
      %v4987 = vpop.f32.mrf.mxu0
      %v4988 = vadd.f32 %v840, %v4987
      %v4989 = vpop.f32.mrf.mxu0
      %v4990 = vadd.f32 %v836, %v4989
      %v4991 = vpop.f32.mrf.mxu0
      %v4992 = vadd.f32 %v840, %v4991
      %4993 = vmatprep.mubr.bf16.mxu0 %v970
      %4994 = vmatmul.mubr.bf16.gmra.mxu0 %v969
      %v4995 = vpop.f32.mrf.mxu0
      %v4996 = vadd.f32 %v836, %v4995
      %v4997 = vpop.f32.mrf.mxu0
      %v4998 = vadd.f32 %v840, %v4997
      %v4999 = vpop.f32.mrf.mxu0
      %v5000 = vadd.f32 %v836, %v4999
      %v5001 = vpop.f32.mrf.mxu0
      %v5002 = vadd.f32 %v840, %v5001
      %5003 = vmatprep.mubr.bf16.mxu0 %v974
      %5004 = vmatmul.mubr.bf16.gmra.mxu0 %v973
      %v5005 = vpop.f32.mrf.mxu0
      %v5006 = vadd.f32 %v836, %v5005
      %v5007 = vpop.f32.mrf.mxu0
      %v5008 = vadd.f32 %v840, %v5007
      %v5009 = vpop.f32.mrf.mxu0
      %v5010 = vadd.f32 %v836, %v5009
      %v5011 = vpop.f32.mrf.mxu0
      %v5012 = vadd.f32 %v840, %v5011
      %5013 = vmatprep.mubr.bf16.mxu0 %v978
      %5014 = vmatmul.mubr.bf16.gmra.mxu0 %v977
      %v5015 = vpop.f32.mrf.mxu0
      %v5016 = vadd.f32 %v836, %v5015
      %v5017 = vpop.f32.mrf.mxu0
      %v5018 = vadd.f32 %v840, %v5017
      %v5019 = vpop.f32.mrf.mxu0
      %v5020 = vadd.f32 %v836, %v5019
      %v5021 = vpop.f32.mrf.mxu0
      %v5022 = vadd.f32 %v840, %v5021
      %5023 = vmatprep.mubr.bf16.mxu0 %v982
      %5024 = vmatmul.mubr.bf16.gmra.mxu0 %v981
      %v5025 = vpop.f32.mrf.mxu0
      %v5026 = vadd.f32 %v836, %v5025
      %v5027 = vpop.f32.mrf.mxu0
      %v5028 = vadd.f32 %v840, %v5027
      %v5029 = vpop.f32.mrf.mxu0
      %v5030 = vadd.f32 %v836, %v5029
      %v5031 = vpop.f32.mrf.mxu0
      %v5032 = vadd.f32 %v840, %v5031
      %5033 = vmatprep.mubr.bf16.mxu0 %v986
      %5034 = vmatmul.mubr.bf16.gmra.mxu0 %v985
      %v5035 = vpop.f32.mrf.mxu0
      %v5036 = vadd.f32 %v836, %v5035
      %v5037 = vpop.f32.mrf.mxu0
      %v5038 = vadd.f32 %v840, %v5037
      %v5039 = vpop.f32.mrf.mxu0
      %v5040 = vadd.f32 %v836, %v5039
      %v5041 = vpop.f32.mrf.mxu0
      %v5042 = vadd.f32 %v840, %v5041
      %5043 = vmatprep.mubr.bf16.mxu0 %v990
      %5044 = vmatmul.mubr.bf16.gmra.mxu0 %v989
      %v5045 = vpop.f32.mrf.mxu0
      %v5046 = vadd.f32 %v836, %v5045
      %v5047 = vpop.f32.mrf.mxu0
      %v5048 = vadd.f32 %v840, %v5047
      %v5049 = vpop.f32.mrf.mxu0
      %v5050 = vadd.f32 %v836, %v5049
      %v5051 = vpop.f32.mrf.mxu0
      %v5052 = vadd.f32 %v840, %v5051
      %5053 = vdwg.mxu0
      %5054 = vmatprep.subr.bf16.mxu0 %v2942
      %5055 = vmatpush1.bf16.msra.mxu0 %v2941
      %5056 = vmatprep.subr.bf16.mxu0 %v2926
      %5057 = vmatpush1.bf16.msra.mxu0 %v2925
      %5058 = vmatprep.subr.bf16.mxu0 %v2910
      %5059 = vmatpush1.bf16.msra.mxu0 %v2909
      %5060 = vmatprep.subr.bf16.mxu0 %v2894
      %5061 = vmatpush1.bf16.msra.mxu0 %v2893
      %5062 = vmatprep.subr.bf16.mxu0 %v2878
      %5063 = vmatpush1.bf16.msra.mxu0 %v2877
      %5064 = vmatprep.subr.bf16.mxu0 %v2862
      %5065 = vmatpush1.bf16.msra.mxu0 %v2861
      %5066 = vmatprep.subr.bf16.mxu0 %v2846
      %5067 = vmatpush1.bf16.msra.mxu0 %v2845
      %5068 = vmatprep.subr.bf16.mxu0 %v2830
      %5069 = vmatpush1.bf16.msra.mxu0 %v2829
      %5070 = vmatprep.subr.bf16.mxu0 %v3070
      %5071 = vmatpush2.bf16.msra.mxu0 %v3069
      %5072 = vmatprep.subr.bf16.mxu0 %v3054
      %5073 = vmatpush2.bf16.msra.mxu0 %v3053
      %5074 = vmatprep.subr.bf16.mxu0 %v3038
      %5075 = vmatpush2.bf16.msra.mxu0 %v3037
      %5076 = vmatprep.subr.bf16.mxu0 %v3022
      %5077 = vmatpush2.bf16.msra.mxu0 %v3021
      %5078 = vmatprep.subr.bf16.mxu0 %v3006
      %5079 = vmatpush2.bf16.msra.mxu0 %v3005
      %5080 = vmatprep.subr.bf16.mxu0 %v2990
      %5081 = vmatpush2.bf16.msra.mxu0 %v2989
      %5082 = vmatprep.subr.bf16.mxu0 %v2974
      %5083 = vmatpush2.bf16.msra.mxu0 %v2973
      %5084 = vmatprep.subr.bf16.mxu0 %v2958
      %5085 = vmatpush2.bf16.msra.mxu0 %v2957
      %5086 = vmatprep.mubr.bf16.mxu0 %v964
      %5087 = vmatmul.mubr.bf16.gmra.mxu0 %v963
      %v5088 = vpop.f32.mrf.mxu0
      %v5089 = vadd.f32 %v4976, %v5088
      %v5090 = vpop.f32.mrf.mxu0
      %v5091 = vadd.f32 %v4978, %v5090
      %v5092 = vpop.f32.mrf.mxu0
      %v5093 = vadd.f32 %v4980, %v5092
      %v5094 = vpop.f32.mrf.mxu0
      %v5095 = vadd.f32 %v4982, %v5094
      %5096 = vmatprep.mubr.bf16.mxu0 %v968
      %5097 = vmatmul.mubr.bf16.gmra.mxu0 %v967
      %v5098 = vpop.f32.mrf.mxu0
      %v5099 = vadd.f32 %v4986, %v5098
      %v5100 = vpop.f32.mrf.mxu0
      %v5101 = vadd.f32 %v4988, %v5100
      %v5102 = vpop.f32.mrf.mxu0
      %v5103 = vadd.f32 %v4990, %v5102
      %v5104 = vpop.f32.mrf.mxu0
      %v5105 = vadd.f32 %v4992, %v5104
      %5106 = vmatprep.mubr.bf16.mxu0 %v972
      %5107 = vmatmul.mubr.bf16.gmra.mxu0 %v971
      %v5108 = vpop.f32.mrf.mxu0
      %v5109 = vadd.f32 %v4996, %v5108
      %v5110 = vpop.f32.mrf.mxu0
      %v5111 = vadd.f32 %v4998, %v5110
      %v5112 = vpop.f32.mrf.mxu0
      %v5113 = vadd.f32 %v5000, %v5112
      %v5114 = vpop.f32.mrf.mxu0
      %v5115 = vadd.f32 %v5002, %v5114
      %5116 = vmatprep.mubr.bf16.mxu0 %v976
      %5117 = vmatmul.mubr.bf16.gmra.mxu0 %v975
      %v5118 = vpop.f32.mrf.mxu0
      %v5119 = vadd.f32 %v5006, %v5118
      %v5120 = vpop.f32.mrf.mxu0
      %v5121 = vadd.f32 %v5008, %v5120
      %v5122 = vpop.f32.mrf.mxu0
      %v5123 = vadd.f32 %v5010, %v5122
      %v5124 = vpop.f32.mrf.mxu0
      %v5125 = vadd.f32 %v5012, %v5124
      %5126 = vmatprep.mubr.bf16.mxu0 %v980
      %5127 = vmatmul.mubr.bf16.gmra.mxu0 %v979
      %v5128 = vpop.f32.mrf.mxu0
      %v5129 = vadd.f32 %v5016, %v5128
      %v5130 = vpop.f32.mrf.mxu0
      %v5131 = vadd.f32 %v5018, %v5130
      %v5132 = vpop.f32.mrf.mxu0
      %v5133 = vadd.f32 %v5020, %v5132
      %v5134 = vpop.f32.mrf.mxu0
      %v5135 = vadd.f32 %v5022, %v5134
      %5136 = vmatprep.mubr.bf16.mxu0 %v984
      %5137 = vmatmul.mubr.bf16.gmra.mxu0 %v983
      %v5138 = vpop.f32.mrf.mxu0
      %v5139 = vadd.f32 %v5026, %v5138
      %v5140 = vpop.f32.mrf.mxu0
      %v5141 = vadd.f32 %v5028, %v5140
      %v5142 = vpop.f32.mrf.mxu0
      %v5143 = vadd.f32 %v5030, %v5142
      %v5144 = vpop.f32.mrf.mxu0
      %v5145 = vadd.f32 %v5032, %v5144
      %5146 = vmatprep.mubr.bf16.mxu0 %v988
      %5147 = vmatmul.mubr.bf16.gmra.mxu0 %v987
      %v5148 = vpop.f32.mrf.mxu0
      %v5149 = vadd.f32 %v5036, %v5148
      %v5150 = vpop.f32.mrf.mxu0
      %v5151 = vadd.f32 %v5038, %v5150
      %v5152 = vpop.f32.mrf.mxu0
      %v5153 = vadd.f32 %v5040, %v5152
      %v5154 = vpop.f32.mrf.mxu0
      %v5155 = vadd.f32 %v5042, %v5154
      %5156 = vmatprep.mubr.bf16.mxu0 %v992
      %5157 = vmatmul.mubr.bf16.gmra.mxu0 %v991
      %v5158 = vpop.f32.mrf.mxu0
      %v5159 = vadd.f32 %v5046, %v5158
      %v5160 = vpop.f32.mrf.mxu0
      %v5161 = vadd.f32 %v5048, %v5160
      %v5162 = vpop.f32.mrf.mxu0
      %v5163 = vadd.f32 %v5050, %v5162
      %v5164 = vpop.f32.mrf.mxu0
      %v5165 = vadd.f32 %v5052, %v5164
      %5166 = vdwg.mxu0
      %5167 = vmatprep.subr.bf16.mxu0 %v2688
      %5168 = vmatpush1.bf16.msra.mxu0 %v2687
      %5169 = vmatprep.subr.bf16.mxu0 %v2672
      %5170 = vmatpush1.bf16.msra.mxu0 %v2671
      %5171 = vmatprep.subr.bf16.mxu0 %v2656
      %5172 = vmatpush1.bf16.msra.mxu0 %v2655
      %5173 = vmatprep.subr.bf16.mxu0 %v2640
      %5174 = vmatpush1.bf16.msra.mxu0 %v2639
      %5175 = vmatprep.subr.bf16.mxu0 %v2624
      %5176 = vmatpush1.bf16.msra.mxu0 %v2623
      %5177 = vmatprep.subr.bf16.mxu0 %v2608
      %5178 = vmatpush1.bf16.msra.mxu0 %v2607
      %5179 = vmatprep.subr.bf16.mxu0 %v2592
      %5180 = vmatpush1.bf16.msra.mxu0 %v2591
      %5181 = vmatprep.subr.bf16.mxu0 %v2576
      %5182 = vmatpush1.bf16.msra.mxu0 %v2575
      %5183 = vmatprep.subr.bf16.mxu0 %v2816
      %5184 = vmatpush2.bf16.msra.mxu0 %v2815
      %5185 = vmatprep.subr.bf16.mxu0 %v2800
      %5186 = vmatpush2.bf16.msra.mxu0 %v2799
      %5187 = vmatprep.subr.bf16.mxu0 %v2784
      %5188 = vmatpush2.bf16.msra.mxu0 %v2783
      %5189 = vmatprep.subr.bf16.mxu0 %v2768
      %5190 = vmatpush2.bf16.msra.mxu0 %v2767
      %5191 = vmatprep.subr.bf16.mxu0 %v2752
      %5192 = vmatpush2.bf16.msra.mxu0 %v2751
      %5193 = vmatprep.subr.bf16.mxu0 %v2736
      %5194 = vmatpush2.bf16.msra.mxu0 %v2735
      %5195 = vmatprep.subr.bf16.mxu0 %v2720
      %5196 = vmatpush2.bf16.msra.mxu0 %v2719
      %5197 = vmatprep.subr.bf16.mxu0 %v2704
      %5198 = vmatpush2.bf16.msra.mxu0 %v2703
      %5199 = vmatprep.mubr.bf16.mxu0 %v962
      %5200 = vmatmul.mubr.bf16.gmra.mxu0 %v961
      %v5201 = vpop.f32.mrf.mxu0
      %v5202 = vadd.f32 %v844, %v5201
      %v5203 = vpop.f32.mrf.mxu0
      %v5204 = vadd.f32 %v848, %v5203
      %v5205 = vpop.f32.mrf.mxu0
      %v5206 = vadd.f32 %v844, %v5205
      %v5207 = vpop.f32.mrf.mxu0
      %v5208 = vadd.f32 %v848, %v5207
      %5209 = vmatprep.mubr.bf16.mxu0 %v966
      %5210 = vmatmul.mubr.bf16.gmra.mxu0 %v965
      %v5211 = vpop.f32.mrf.mxu0
      %v5212 = vadd.f32 %v844, %v5211
      %v5213 = vpop.f32.mrf.mxu0
      %v5214 = vadd.f32 %v848, %v5213
      %v5215 = vpop.f32.mrf.mxu0
      %v5216 = vadd.f32 %v844, %v5215
      %v5217 = vpop.f32.mrf.mxu0
      %v5218 = vadd.f32 %v848, %v5217
      %5219 = vmatprep.mubr.bf16.mxu0 %v970
      %5220 = vmatmul.mubr.bf16.gmra.mxu0 %v969
      %v5221 = vpop.f32.mrf.mxu0
      %v5222 = vadd.f32 %v844, %v5221
      %v5223 = vpop.f32.mrf.mxu0
      %v5224 = vadd.f32 %v848, %v5223
      %v5225 = vpop.f32.mrf.mxu0
      %v5226 = vadd.f32 %v844, %v5225
      %v5227 = vpop.f32.mrf.mxu0
      %v5228 = vadd.f32 %v848, %v5227
      %5229 = vmatprep.mubr.bf16.mxu0 %v974
      %5230 = vmatmul.mubr.bf16.gmra.mxu0 %v973
      %v5231 = vpop.f32.mrf.mxu0
      %v5232 = vadd.f32 %v844, %v5231
      %v5233 = vpop.f32.mrf.mxu0
      %v5234 = vadd.f32 %v848, %v5233
      %v5235 = vpop.f32.mrf.mxu0
      %v5236 = vadd.f32 %v844, %v5235
      %v5237 = vpop.f32.mrf.mxu0
      %v5238 = vadd.f32 %v848, %v5237
      %5239 = vmatprep.mubr.bf16.mxu0 %v978
      %5240 = vmatmul.mubr.bf16.gmra.mxu0 %v977
      %v5241 = vpop.f32.mrf.mxu0
      %v5242 = vadd.f32 %v844, %v5241
      %v5243 = vpop.f32.mrf.mxu0
      %v5244 = vadd.f32 %v848, %v5243
      %v5245 = vpop.f32.mrf.mxu0
      %v5246 = vadd.f32 %v844, %v5245
      %v5247 = vpop.f32.mrf.mxu0
      %v5248 = vadd.f32 %v848, %v5247
      %5249 = vmatprep.mubr.bf16.mxu0 %v982
      %5250 = vmatmul.mubr.bf16.gmra.mxu0 %v981
      %v5251 = vpop.f32.mrf.mxu0
      %v5252 = vadd.f32 %v844, %v5251
      %v5253 = vpop.f32.mrf.mxu0
      %v5254 = vadd.f32 %v848, %v5253
      %v5255 = vpop.f32.mrf.mxu0
      %v5256 = vadd.f32 %v844, %v5255
      %v5257 = vpop.f32.mrf.mxu0
      %v5258 = vadd.f32 %v848, %v5257
      %5259 = vmatprep.mubr.bf16.mxu0 %v986
      %5260 = vmatmul.mubr.bf16.gmra.mxu0 %v985
      %v5261 = vpop.f32.mrf.mxu0
      %v5262 = vadd.f32 %v844, %v5261
      %v5263 = vpop.f32.mrf.mxu0
      %v5264 = vadd.f32 %v848, %v5263
      %v5265 = vpop.f32.mrf.mxu0
      %v5266 = vadd.f32 %v844, %v5265
      %v5267 = vpop.f32.mrf.mxu0
      %v5268 = vadd.f32 %v848, %v5267
      %5269 = vmatprep.mubr.bf16.mxu0 %v990
      %5270 = vmatmul.mubr.bf16.gmra.mxu0 %v989
      %v5271 = vpop.f32.mrf.mxu0
      %v5272 = vadd.f32 %v844, %v5271
      %v5273 = vpop.f32.mrf.mxu0
      %v5274 = vadd.f32 %v848, %v5273
      %v5275 = vpop.f32.mrf.mxu0
      %v5276 = vadd.f32 %v844, %v5275
      %v5277 = vpop.f32.mrf.mxu0
      %v5278 = vadd.f32 %v848, %v5277
      %5279 = vdwg.mxu0
      %5280 = vmatprep.subr.bf16.mxu0 %v2944
      %5281 = vmatpush1.bf16.msra.mxu0 %v2943
      %5282 = vmatprep.subr.bf16.mxu0 %v2928
      %5283 = vmatpush1.bf16.msra.mxu0 %v2927
      %5284 = vmatprep.subr.bf16.mxu0 %v2912
      %5285 = vmatpush1.bf16.msra.mxu0 %v2911
      %5286 = vmatprep.subr.bf16.mxu0 %v2896
      %5287 = vmatpush1.bf16.msra.mxu0 %v2895
      %5288 = vmatprep.subr.bf16.mxu0 %v2880
      %5289 = vmatpush1.bf16.msra.mxu0 %v2879
      %5290 = vmatprep.subr.bf16.mxu0 %v2864
      %5291 = vmatpush1.bf16.msra.mxu0 %v2863
      %5292 = vmatprep.subr.bf16.mxu0 %v2848
      %5293 = vmatpush1.bf16.msra.mxu0 %v2847
      %5294 = vmatprep.subr.bf16.mxu0 %v2832
      %5295 = vmatpush1.bf16.msra.mxu0 %v2831
      %5296 = vmatprep.subr.bf16.mxu0 %v3072
      %5297 = vmatpush2.bf16.msra.mxu0 %v3071
      %5298 = vmatprep.subr.bf16.mxu0 %v3056
      %5299 = vmatpush2.bf16.msra.mxu0 %v3055
      %5300 = vmatprep.subr.bf16.mxu0 %v3040
      %5301 = vmatpush2.bf16.msra.mxu0 %v3039
      %5302 = vmatprep.subr.bf16.mxu0 %v3024
      %5303 = vmatpush2.bf16.msra.mxu0 %v3023
      %5304 = vmatprep.subr.bf16.mxu0 %v3008
      %5305 = vmatpush2.bf16.msra.mxu0 %v3007
      %5306 = vmatprep.subr.bf16.mxu0 %v2992
      %5307 = vmatpush2.bf16.msra.mxu0 %v2991
      %5308 = vmatprep.subr.bf16.mxu0 %v2976
      %5309 = vmatpush2.bf16.msra.mxu0 %v2975
      %5310 = vmatprep.subr.bf16.mxu0 %v2960
      %5311 = vmatpush2.bf16.msra.mxu0 %v2959
      %5312 = vmatprep.mubr.bf16.mxu0 %v964
      %5313 = vmatmul.mubr.bf16.gmra.mxu0 %v963
      %v5314 = vpop.f32.mrf.mxu0
      %v5315 = vadd.f32 %v5202, %v5314
      %v5316 = vpop.f32.mrf.mxu0
      %v5317 = vadd.f32 %v5204, %v5316
      %v5318 = vpop.f32.mrf.mxu0
      %v5319 = vadd.f32 %v5206, %v5318
      %v5320 = vpop.f32.mrf.mxu0
      %v5321 = vadd.f32 %v5208, %v5320
      %5322 = vmatprep.mubr.bf16.mxu0 %v968
      %5323 = vmatmul.mubr.bf16.gmra.mxu0 %v967
      %v5324 = vpop.f32.mrf.mxu0
      %v5325 = vadd.f32 %v5212, %v5324
      %v5326 = vpop.f32.mrf.mxu0
      %v5327 = vadd.f32 %v5214, %v5326
      %v5328 = vpop.f32.mrf.mxu0
      %v5329 = vadd.f32 %v5216, %v5328
      %v5330 = vpop.f32.mrf.mxu0
      %v5331 = vadd.f32 %v5218, %v5330
      %5332 = vmatprep.mubr.bf16.mxu0 %v972
      %5333 = vmatmul.mubr.bf16.gmra.mxu0 %v971
      %v5334 = vpop.f32.mrf.mxu0
      %v5335 = vadd.f32 %v5222, %v5334
      %v5336 = vpop.f32.mrf.mxu0
      %v5337 = vadd.f32 %v5224, %v5336
      %v5338 = vpop.f32.mrf.mxu0
      %v5339 = vadd.f32 %v5226, %v5338
      %v5340 = vpop.f32.mrf.mxu0
      %v5341 = vadd.f32 %v5228, %v5340
      %5342 = vmatprep.mubr.bf16.mxu0 %v976
      %5343 = vmatmul.mubr.bf16.gmra.mxu0 %v975
      %v5344 = vpop.f32.mrf.mxu0
      %v5345 = vadd.f32 %v5232, %v5344
      %v5346 = vpop.f32.mrf.mxu0
      %v5347 = vadd.f32 %v5234, %v5346
      %v5348 = vpop.f32.mrf.mxu0
      %v5349 = vadd.f32 %v5236, %v5348
      %v5350 = vpop.f32.mrf.mxu0
      %v5351 = vadd.f32 %v5238, %v5350
      %5352 = vmatprep.mubr.bf16.mxu0 %v980
      %5353 = vmatmul.mubr.bf16.gmra.mxu0 %v979
      %v5354 = vpop.f32.mrf.mxu0
      %v5355 = vadd.f32 %v5242, %v5354
      %v5356 = vpop.f32.mrf.mxu0
      %v5357 = vadd.f32 %v5244, %v5356
      %v5358 = vpop.f32.mrf.mxu0
      %v5359 = vadd.f32 %v5246, %v5358
      %v5360 = vpop.f32.mrf.mxu0
      %v5361 = vadd.f32 %v5248, %v5360
      %5362 = vmatprep.mubr.bf16.mxu0 %v984
      %5363 = vmatmul.mubr.bf16.gmra.mxu0 %v983
      %v5364 = vpop.f32.mrf.mxu0
      %v5365 = vadd.f32 %v5252, %v5364
      %v5366 = vpop.f32.mrf.mxu0
      %v5367 = vadd.f32 %v5254, %v5366
      %v5368 = vpop.f32.mrf.mxu0
      %v5369 = vadd.f32 %v5256, %v5368
      %v5370 = vpop.f32.mrf.mxu0
      %v5371 = vadd.f32 %v5258, %v5370
      %5372 = vmatprep.mubr.bf16.mxu0 %v988
      %5373 = vmatmul.mubr.bf16.gmra.mxu0 %v987
      %v5374 = vpop.f32.mrf.mxu0
      %v5375 = vadd.f32 %v5262, %v5374
      %v5376 = vpop.f32.mrf.mxu0
      %v5377 = vadd.f32 %v5264, %v5376
      %v5378 = vpop.f32.mrf.mxu0
      %v5379 = vadd.f32 %v5266, %v5378
      %v5380 = vpop.f32.mrf.mxu0
      %v5381 = vadd.f32 %v5268, %v5380
      %5382 = vmatprep.mubr.bf16.mxu0 %v992
      %5383 = vmatmul.mubr.bf16.gmra.mxu0 %v991
      %v5384 = vpop.f32.mrf.mxu0
      %v5385 = vadd.f32 %v5272, %v5384
      %v5386 = vpop.f32.mrf.mxu0
      %v5387 = vadd.f32 %v5274, %v5386
      %v5388 = vpop.f32.mrf.mxu0
      %v5389 = vadd.f32 %v5276, %v5388
      %v5390 = vpop.f32.mrf.mxu0
      %v5391 = vadd.f32 %v5278, %v5390
      %5392 = vdwg.mxu0
      %v5393 = vmul.f32 %v3733, %v3733
      %v5394 = vmul.f32 %v3735, %v3735
      %v5395 = vmul.f32 %v3959, %v3959
      %v5396 = vmul.f32 %v3961, %v3961
      %v5397 = vmul.f32 %v4185, %v4185
      %v5398 = vmul.f32 %v4187, %v4187
      %v5399 = vmul.f32 %v4411, %v4411
      %v5400 = vmul.f32 %v4413, %v4413
      %v5401 = vmul.f32 %v4637, %v4637
      %v5402 = vmul.f32 %v4639, %v4639
      %v5403 = vmul.f32 %v4863, %v4863
      %v5404 = vmul.f32 %v4865, %v4865
      %v5405 = vmul.f32 %v5089, %v5089
      %v5406 = vmul.f32 %v5091, %v5091
      %v5407 = vmul.f32 %v5315, %v5315
      %v5408 = vmul.f32 %v5317, %v5317
      %v5409 = vmul.f32 %v3737, %v3737
      %v5410 = vmul.f32 %v3739, %v3739
      %v5411 = vmul.f32 %v3963, %v3963
      %v5412 = vmul.f32 %v3965, %v3965
      %v5413 = vmul.f32 %v4189, %v4189
      %v5414 = vmul.f32 %v4191, %v4191
      %v5415 = vmul.f32 %v4415, %v4415
      %v5416 = vmul.f32 %v4417, %v4417
      %v5417 = vmul.f32 %v4641, %v4641
      %v5418 = vmul.f32 %v4643, %v4643
      %v5419 = vmul.f32 %v4867, %v4867
      %v5420 = vmul.f32 %v4869, %v4869
      %v5421 = vmul.f32 %v5093, %v5093
      %v5422 = vmul.f32 %v5095, %v5095
      %v5423 = vmul.f32 %v5319, %v5319
      %v5424 = vmul.f32 %v5321, %v5321
      %v5425 = vmul.f32 %v3743, %v3743
      %v5426 = vmul.f32 %v3745, %v3745
      %v5427 = vmul.f32 %v3969, %v3969
      %v5428 = vmul.f32 %v3971, %v3971
      %v5429 = vmul.f32 %v4195, %v4195
      %v5430 = vmul.f32 %v4197, %v4197
      %v5431 = vmul.f32 %v4421, %v4421
      %v5432 = vmul.f32 %v4423, %v4423
      %v5433 = vmul.f32 %v4647, %v4647
      %v5434 = vmul.f32 %v4649, %v4649
      %v5435 = vmul.f32 %v4873, %v4873
      %v5436 = vmul.f32 %v4875, %v4875
      %v5437 = vmul.f32 %v5099, %v5099
      %v5438 = vmul.f32 %v5101, %v5101
      %v5439 = vmul.f32 %v5325, %v5325
      %v5440 = vmul.f32 %v5327, %v5327
      %v5441 = vmul.f32 %v3747, %v3747
      %v5442 = vmul.f32 %v3749, %v3749
      %v5443 = vmul.f32 %v3973, %v3973
      %v5444 = vmul.f32 %v3975, %v3975
      %v5445 = vmul.f32 %v4199, %v4199
      %v5446 = vmul.f32 %v4201, %v4201
      %v5447 = vmul.f32 %v4425, %v4425
      %v5448 = vmul.f32 %v4427, %v4427
      %v5449 = vmul.f32 %v4651, %v4651
      %v5450 = vmul.f32 %v4653, %v4653
      %v5451 = vmul.f32 %v4877, %v4877
      %v5452 = vmul.f32 %v4879, %v4879
      %v5453 = vmul.f32 %v5103, %v5103
      %v5454 = vmul.f32 %v5105, %v5105
      %v5455 = vmul.f32 %v5329, %v5329
      %v5456 = vmul.f32 %v5331, %v5331
      %v5457 = vmul.f32 %v3753, %v3753
      %v5458 = vmul.f32 %v3755, %v3755
      %v5459 = vmul.f32 %v3979, %v3979
      %v5460 = vmul.f32 %v3981, %v3981
      %v5461 = vmul.f32 %v4205, %v4205
      %v5462 = vmul.f32 %v4207, %v4207
      %v5463 = vmul.f32 %v4431, %v4431
      %v5464 = vmul.f32 %v4433, %v4433
      %v5465 = vmul.f32 %v4657, %v4657
      %v5466 = vmul.f32 %v4659, %v4659
      %v5467 = vmul.f32 %v4883, %v4883
      %v5468 = vmul.f32 %v4885, %v4885
      %v5469 = vmul.f32 %v5109, %v5109
      %v5470 = vmul.f32 %v5111, %v5111
      %v5471 = vmul.f32 %v5335, %v5335
      %v5472 = vmul.f32 %v5337, %v5337
      %v5473 = vmul.f32 %v3757, %v3757
      %v5474 = vmul.f32 %v3759, %v3759
      %v5475 = vmul.f32 %v3983, %v3983
      %v5476 = vmul.f32 %v3985, %v3985
      %v5477 = vmul.f32 %v4209, %v4209
      %v5478 = vmul.f32 %v4211, %v4211
      %v5479 = vmul.f32 %v4435, %v4435
      %v5480 = vmul.f32 %v4437, %v4437
      %v5481 = vmul.f32 %v4661, %v4661
      %v5482 = vmul.f32 %v4663, %v4663
      %v5483 = vmul.f32 %v4887, %v4887
      %v5484 = vmul.f32 %v4889, %v4889
      %v5485 = vmul.f32 %v5113, %v5113
      %v5486 = vmul.f32 %v5115, %v5115
      %v5487 = vmul.f32 %v5339, %v5339
      %v5488 = vmul.f32 %v5341, %v5341
      %v5489 = vmul.f32 %v3763, %v3763
      %v5490 = vmul.f32 %v3765, %v3765
      %v5491 = vmul.f32 %v3989, %v3989
      %v5492 = vmul.f32 %v3991, %v3991
      %v5493 = vmul.f32 %v4215, %v4215
      %v5494 = vmul.f32 %v4217, %v4217
      %v5495 = vmul.f32 %v4441, %v4441
      %v5496 = vmul.f32 %v4443, %v4443
      %v5497 = vmul.f32 %v4667, %v4667
      %v5498 = vmul.f32 %v4669, %v4669
      %v5499 = vmul.f32 %v4893, %v4893
      %v5500 = vmul.f32 %v4895, %v4895
      %v5501 = vmul.f32 %v5119, %v5119
      %v5502 = vmul.f32 %v5121, %v5121
      %v5503 = vmul.f32 %v5345, %v5345
      %v5504 = vmul.f32 %v5347, %v5347
      %v5505 = vmul.f32 %v3767, %v3767
      %v5506 = vmul.f32 %v3769, %v3769
      %v5507 = vmul.f32 %v3993, %v3993
      %v5508 = vmul.f32 %v3995, %v3995
      %v5509 = vmul.f32 %v4219, %v4219
      %v5510 = vmul.f32 %v4221, %v4221
      %v5511 = vmul.f32 %v4445, %v4445
      %v5512 = vmul.f32 %v4447, %v4447
      %v5513 = vmul.f32 %v4671, %v4671
      %v5514 = vmul.f32 %v4673, %v4673
      %v5515 = vmul.f32 %v4897, %v4897
      %v5516 = vmul.f32 %v4899, %v4899
      %v5517 = vmul.f32 %v5123, %v5123
      %v5518 = vmul.f32 %v5125, %v5125
      %v5519 = vmul.f32 %v5349, %v5349
      %v5520 = vmul.f32 %v5351, %v5351
      %v5521 = vmul.f32 %v3773, %v3773
      %v5522 = vmul.f32 %v3775, %v3775
      %v5523 = vmul.f32 %v3999, %v3999
      %v5524 = vmul.f32 %v4001, %v4001
      %v5525 = vmul.f32 %v4225, %v4225
      %v5526 = vmul.f32 %v4227, %v4227
      %v5527 = vmul.f32 %v4451, %v4451
      %v5528 = vmul.f32 %v4453, %v4453
      %v5529 = vmul.f32 %v4677, %v4677
      %v5530 = vmul.f32 %v4679, %v4679
      %v5531 = vmul.f32 %v4903, %v4903
      %v5532 = vmul.f32 %v4905, %v4905
      %v5533 = vmul.f32 %v5129, %v5129
      %v5534 = vmul.f32 %v5131, %v5131
      %v5535 = vmul.f32 %v5355, %v5355
      %v5536 = vmul.f32 %v5357, %v5357
      %v5537 = vmul.f32 %v3777, %v3777
      %v5538 = vmul.f32 %v3779, %v3779
      %v5539 = vmul.f32 %v4003, %v4003
      %v5540 = vmul.f32 %v4005, %v4005
      %v5541 = vmul.f32 %v4229, %v4229
      %v5542 = vmul.f32 %v4231, %v4231
      %v5543 = vmul.f32 %v4455, %v4455
      %v5544 = vmul.f32 %v4457, %v4457
      %v5545 = vmul.f32 %v4681, %v4681
      %v5546 = vmul.f32 %v4683, %v4683
      %v5547 = vmul.f32 %v4907, %v4907
      %v5548 = vmul.f32 %v4909, %v4909
      %v5549 = vmul.f32 %v5133, %v5133
      %v5550 = vmul.f32 %v5135, %v5135
      %v5551 = vmul.f32 %v5359, %v5359
      %v5552 = vmul.f32 %v5361, %v5361
      %v5553 = vmul.f32 %v3783, %v3783
      %v5554 = vmul.f32 %v3785, %v3785
      %v5555 = vmul.f32 %v4009, %v4009
      %v5556 = vmul.f32 %v4011, %v4011
      %v5557 = vmul.f32 %v4235, %v4235
      %v5558 = vmul.f32 %v4237, %v4237
      %v5559 = vmul.f32 %v4461, %v4461
      %v5560 = vmul.f32 %v4463, %v4463
      %v5561 = vmul.f32 %v4687, %v4687
      %v5562 = vmul.f32 %v4689, %v4689
      %v5563 = vmul.f32 %v4913, %v4913
      %v5564 = vmul.f32 %v4915, %v4915
      %v5565 = vmul.f32 %v5139, %v5139
      %v5566 = vmul.f32 %v5141, %v5141
      %v5567 = vmul.f32 %v5365, %v5365
      %v5568 = vmul.f32 %v5367, %v5367
      %v5569 = vmul.f32 %v3787, %v3787
      %v5570 = vmul.f32 %v3789, %v3789
      %v5571 = vmul.f32 %v4013, %v4013
      %v5572 = vmul.f32 %v4015, %v4015
      %v5573 = vmul.f32 %v4239, %v4239
      %v5574 = vmul.f32 %v4241, %v4241
      %v5575 = vmul.f32 %v4465, %v4465
      %v5576 = vmul.f32 %v4467, %v4467
      %v5577 = vmul.f32 %v4691, %v4691
      %v5578 = vmul.f32 %v4693, %v4693
      %v5579 = vmul.f32 %v4917, %v4917
      %v5580 = vmul.f32 %v4919, %v4919
      %v5581 = vmul.f32 %v5143, %v5143
      %v5582 = vmul.f32 %v5145, %v5145
      %v5583 = vmul.f32 %v5369, %v5369
      %v5584 = vmul.f32 %v5371, %v5371
      %v5585 = vmul.f32 %v3793, %v3793
      %v5586 = vmul.f32 %v3795, %v3795
      %v5587 = vmul.f32 %v4019, %v4019
      %v5588 = vmul.f32 %v4021, %v4021
      %v5589 = vmul.f32 %v4245, %v4245
      %v5590 = vmul.f32 %v4247, %v4247
      %v5591 = vmul.f32 %v4471, %v4471
      %v5592 = vmul.f32 %v4473, %v4473
      %v5593 = vmul.f32 %v4697, %v4697
      %v5594 = vmul.f32 %v4699, %v4699
      %v5595 = vmul.f32 %v4923, %v4923
      %v5596 = vmul.f32 %v4925, %v4925
      %v5597 = vmul.f32 %v5149, %v5149
      %v5598 = vmul.f32 %v5151, %v5151
      %v5599 = vmul.f32 %v5375, %v5375
      %v5600 = vmul.f32 %v5377, %v5377
      %v5601 = vmul.f32 %v3797, %v3797
      %v5602 = vmul.f32 %v3799, %v3799
      %v5603 = vmul.f32 %v4023, %v4023
      %v5604 = vmul.f32 %v4025, %v4025
      %v5605 = vmul.f32 %v4249, %v4249
      %v5606 = vmul.f32 %v4251, %v4251
      %v5607 = vmul.f32 %v4475, %v4475
      %v5608 = vmul.f32 %v4477, %v4477
      %v5609 = vmul.f32 %v4701, %v4701
      %v5610 = vmul.f32 %v4703, %v4703
      %v5611 = vmul.f32 %v4927, %v4927
      %v5612 = vmul.f32 %v4929, %v4929
      %v5613 = vmul.f32 %v5153, %v5153
      %v5614 = vmul.f32 %v5155, %v5155
      %v5615 = vmul.f32 %v5379, %v5379
      %v5616 = vmul.f32 %v5381, %v5381
      %v5617 = vmul.f32 %v3803, %v3803
      %v5618 = vmul.f32 %v3805, %v3805
      %v5619 = vmul.f32 %v4029, %v4029
      %v5620 = vmul.f32 %v4031, %v4031
      %v5621 = vmul.f32 %v4255, %v4255
      %v5622 = vmul.f32 %v4257, %v4257
      %v5623 = vmul.f32 %v4481, %v4481
      %v5624 = vmul.f32 %v4483, %v4483
      %v5625 = vmul.f32 %v4707, %v4707
      %v5626 = vmul.f32 %v4709, %v4709
      %v5627 = vmul.f32 %v4933, %v4933
      %v5628 = vmul.f32 %v4935, %v4935
      %v5629 = vmul.f32 %v5159, %v5159
      %v5630 = vmul.f32 %v5161, %v5161
      %v5631 = vmul.f32 %v5385, %v5385
      %v5632 = vmul.f32 %v5387, %v5387
      %v5633 = vmul.f32 %v3807, %v3807
      %v5634 = vmul.f32 %v3809, %v3809
      %v5635 = vmul.f32 %v4033, %v4033
      %v5636 = vmul.f32 %v4035, %v4035
      %v5637 = vmul.f32 %v4259, %v4259
      %v5638 = vmul.f32 %v4261, %v4261
      %v5639 = vmul.f32 %v4485, %v4485
      %v5640 = vmul.f32 %v4487, %v4487
      %v5641 = vmul.f32 %v4711, %v4711
      %v5642 = vmul.f32 %v4713, %v4713
      %v5643 = vmul.f32 %v4937, %v4937
      %v5644 = vmul.f32 %v4939, %v4939
      %v5645 = vmul.f32 %v5163, %v5163
      %v5646 = vmul.f32 %v5165, %v5165
      %v5647 = vmul.f32 %v5389, %v5389
      %v5648 = vmul.f32 %v5391, %v5391
      %v5649 = vadd.f32 %v5393, %v5394
      %v5650 = vadd.f32 %v5649, %v5395
      %v5651 = vadd.f32 %v5650, %v5396
      %v5652 = vadd.f32 %v5651, %v5397
      %v5653 = vadd.f32 %v5652, %v5398
      %v5654 = vadd.f32 %v5653, %v5399
      %v5655 = vadd.f32 %v5654, %v5400
      %v5656 = vadd.f32 %v5655, %v5401
      %v5657 = vadd.f32 %v5656, %v5402
      %v5658 = vadd.f32 %v5657, %v5403
      %v5659 = vadd.f32 %v5658, %v5404
      %v5660 = vadd.f32 %v5659, %v5405
      %v5661 = vadd.f32 %v5660, %v5406
      %v5662 = vadd.f32 %v5661, %v5407
      %v5663 = vadd.f32 %v5662, %v5408
      %5664 = vadd.xlane.f32.xlu0 %v5663
      %v5665 = vpop.xlane.xlu0 %5664
      %v5666 = vadd.f32 %v5409, %v5410
      %v5667 = vadd.f32 %v5666, %v5411
      %v5668 = vadd.f32 %v5667, %v5412
      %v5669 = vadd.f32 %v5668, %v5413
      %v5670 = vadd.f32 %v5669, %v5414
      %v5671 = vadd.f32 %v5670, %v5415
      %v5672 = vadd.f32 %v5671, %v5416
      %v5673 = vadd.f32 %v5672, %v5417
      %v5674 = vadd.f32 %v5673, %v5418
      %v5675 = vadd.f32 %v5674, %v5419
      %v5676 = vadd.f32 %v5675, %v5420
      %v5677 = vadd.f32 %v5676, %v5421
      %v5678 = vadd.f32 %v5677, %v5422
      %v5679 = vadd.f32 %v5678, %v5423
      %v5680 = vadd.f32 %v5679, %v5424
      %5681 = vadd.xlane.f32.xlu0 %v5680
      %v5682 = vpop.xlane.xlu0 %5681
      %v5683 = vadd.f32 %v5425, %v5426
      %v5684 = vadd.f32 %v5683, %v5427
      %v5685 = vadd.f32 %v5684, %v5428
      %v5686 = vadd.f32 %v5685, %v5429
      %v5687 = vadd.f32 %v5686, %v5430
      %v5688 = vadd.f32 %v5687, %v5431
      %v5689 = vadd.f32 %v5688, %v5432
      %v5690 = vadd.f32 %v5689, %v5433
      %v5691 = vadd.f32 %v5690, %v5434
      %v5692 = vadd.f32 %v5691, %v5435
      %v5693 = vadd.f32 %v5692, %v5436
      %v5694 = vadd.f32 %v5693, %v5437
      %v5695 = vadd.f32 %v5694, %v5438
      %v5696 = vadd.f32 %v5695, %v5439
      %v5697 = vadd.f32 %v5696, %v5440
      %5698 = vadd.xlane.f32.xlu0 %v5697
      %v5699 = vpop.xlane.xlu0 %5698
      %v5700 = vadd.f32 %v5441, %v5442
      %v5701 = vadd.f32 %v5700, %v5443
      %v5702 = vadd.f32 %v5701, %v5444
      %v5703 = vadd.f32 %v5702, %v5445
      %v5704 = vadd.f32 %v5703, %v5446
      %v5705 = vadd.f32 %v5704, %v5447
      %v5706 = vadd.f32 %v5705, %v5448
      %v5707 = vadd.f32 %v5706, %v5449
      %v5708 = vadd.f32 %v5707, %v5450
      %v5709 = vadd.f32 %v5708, %v5451
      %v5710 = vadd.f32 %v5709, %v5452
      %v5711 = vadd.f32 %v5710, %v5453
      %v5712 = vadd.f32 %v5711, %v5454
      %v5713 = vadd.f32 %v5712, %v5455
      %v5714 = vadd.f32 %v5713, %v5456
      %5715 = vadd.xlane.f32.xlu0 %v5714
      %v5716 = vpop.xlane.xlu0 %5715
      %v5717 = vadd.f32 %v5457, %v5458
      %v5718 = vadd.f32 %v5717, %v5459
      %v5719 = vadd.f32 %v5718, %v5460
      %v5720 = vadd.f32 %v5719, %v5461
      %v5721 = vadd.f32 %v5720, %v5462
      %v5722 = vadd.f32 %v5721, %v5463
      %v5723 = vadd.f32 %v5722, %v5464
      %v5724 = vadd.f32 %v5723, %v5465
      %v5725 = vadd.f32 %v5724, %v5466
      %v5726 = vadd.f32 %v5725, %v5467
      %v5727 = vadd.f32 %v5726, %v5468
      %v5728 = vadd.f32 %v5727, %v5469
      %v5729 = vadd.f32 %v5728, %v5470
      %v5730 = vadd.f32 %v5729, %v5471
      %v5731 = vadd.f32 %v5730, %v5472
      %5732 = vadd.xlane.f32.xlu0 %v5731
      %v5733 = vpop.xlane.xlu0 %5732
      %v5734 = vadd.f32 %v5473, %v5474
      %v5735 = vadd.f32 %v5734, %v5475
      %v5736 = vadd.f32 %v5735, %v5476
      %v5737 = vadd.f32 %v5736, %v5477
      %v5738 = vadd.f32 %v5737, %v5478
      %v5739 = vadd.f32 %v5738, %v5479
      %v5740 = vadd.f32 %v5739, %v5480
      %v5741 = vadd.f32 %v5740, %v5481
      %v5742 = vadd.f32 %v5741, %v5482
      %v5743 = vadd.f32 %v5742, %v5483
      %v5744 = vadd.f32 %v5743, %v5484
      %v5745 = vadd.f32 %v5744, %v5485
      %v5746 = vadd.f32 %v5745, %v5486
      %v5747 = vadd.f32 %v5746, %v5487
      %v5748 = vadd.f32 %v5747, %v5488
      %5749 = vadd.xlane.f32.xlu0 %v5748
      %v5750 = vpop.xlane.xlu0 %5749
      %v5751 = vadd.f32 %v5489, %v5490
      %v5752 = vadd.f32 %v5751, %v5491
      %v5753 = vadd.f32 %v5752, %v5492
      %v5754 = vadd.f32 %v5753, %v5493
      %v5755 = vadd.f32 %v5754, %v5494
      %v5756 = vadd.f32 %v5755, %v5495
      %v5757 = vadd.f32 %v5756, %v5496
      %v5758 = vadd.f32 %v5757, %v5497
      %v5759 = vadd.f32 %v5758, %v5498
      %v5760 = vadd.f32 %v5759, %v5499
      %v5761 = vadd.f32 %v5760, %v5500
      %v5762 = vadd.f32 %v5761, %v5501
      %v5763 = vadd.f32 %v5762, %v5502
      %v5764 = vadd.f32 %v5763, %v5503
      %v5765 = vadd.f32 %v5764, %v5504
      %5766 = vadd.xlane.f32.xlu0 %v5765
      %v5767 = vpop.xlane.xlu0 %5766
      %v5768 = vadd.f32 %v5505, %v5506
      %v5769 = vadd.f32 %v5768, %v5507
      %v5770 = vadd.f32 %v5769, %v5508
      %v5771 = vadd.f32 %v5770, %v5509
      %v5772 = vadd.f32 %v5771, %v5510
      %v5773 = vadd.f32 %v5772, %v5511
      %v5774 = vadd.f32 %v5773, %v5512
      %v5775 = vadd.f32 %v5774, %v5513
      %v5776 = vadd.f32 %v5775, %v5514
      %v5777 = vadd.f32 %v5776, %v5515
      %v5778 = vadd.f32 %v5777, %v5516
      %v5779 = vadd.f32 %v5778, %v5517
      %v5780 = vadd.f32 %v5779, %v5518
      %v5781 = vadd.f32 %v5780, %v5519
      %v5782 = vadd.f32 %v5781, %v5520
      %5783 = vadd.xlane.f32.xlu0 %v5782
      %v5784 = vpop.xlane.xlu0 %5783
      %v5785 = vadd.f32 %v5521, %v5522
      %v5786 = vadd.f32 %v5785, %v5523
      %v5787 = vadd.f32 %v5786, %v5524
      %v5788 = vadd.f32 %v5787, %v5525
      %v5789 = vadd.f32 %v5788, %v5526
      %v5790 = vadd.f32 %v5789, %v5527
      %v5791 = vadd.f32 %v5790, %v5528
      %v5792 = vadd.f32 %v5791, %v5529
      %v5793 = vadd.f32 %v5792, %v5530
      %v5794 = vadd.f32 %v5793, %v5531
      %v5795 = vadd.f32 %v5794, %v5532
      %v5796 = vadd.f32 %v5795, %v5533
      %v5797 = vadd.f32 %v5796, %v5534
      %v5798 = vadd.f32 %v5797, %v5535
      %v5799 = vadd.f32 %v5798, %v5536
      %5800 = vadd.xlane.f32.xlu0 %v5799
      %v5801 = vpop.xlane.xlu0 %5800
      %v5802 = vadd.f32 %v5537, %v5538
      %v5803 = vadd.f32 %v5802, %v5539
      %v5804 = vadd.f32 %v5803, %v5540
      %v5805 = vadd.f32 %v5804, %v5541
      %v5806 = vadd.f32 %v5805, %v5542
      %v5807 = vadd.f32 %v5806, %v5543
      %v5808 = vadd.f32 %v5807, %v5544
      %v5809 = vadd.f32 %v5808, %v5545
      %v5810 = vadd.f32 %v5809, %v5546
      %v5811 = vadd.f32 %v5810, %v5547
      %v5812 = vadd.f32 %v5811, %v5548
      %v5813 = vadd.f32 %v5812, %v5549
      %v5814 = vadd.f32 %v5813, %v5550
      %v5815 = vadd.f32 %v5814, %v5551
      %v5816 = vadd.f32 %v5815, %v5552
      %5817 = vadd.xlane.f32.xlu0 %v5816
      %v5818 = vpop.xlane.xlu0 %5817
      %v5819 = vadd.f32 %v5553, %v5554
      %v5820 = vadd.f32 %v5819, %v5555
      %v5821 = vadd.f32 %v5820, %v5556
      %v5822 = vadd.f32 %v5821, %v5557
      %v5823 = vadd.f32 %v5822, %v5558
      %v5824 = vadd.f32 %v5823, %v5559
      %v5825 = vadd.f32 %v5824, %v5560
      %v5826 = vadd.f32 %v5825, %v5561
      %v5827 = vadd.f32 %v5826, %v5562
      %v5828 = vadd.f32 %v5827, %v5563
      %v5829 = vadd.f32 %v5828, %v5564
      %v5830 = vadd.f32 %v5829, %v5565
      %v5831 = vadd.f32 %v5830, %v5566
      %v5832 = vadd.f32 %v5831, %v5567
      %v5833 = vadd.f32 %v5832, %v5568
      %5834 = vadd.xlane.f32.xlu0 %v5833
      %v5835 = vpop.xlane.xlu0 %5834
      %v5836 = vadd.f32 %v5569, %v5570
      %v5837 = vadd.f32 %v5836, %v5571
      %v5838 = vadd.f32 %v5837, %v5572
      %v5839 = vadd.f32 %v5838, %v5573
      %v5840 = vadd.f32 %v5839, %v5574
      %v5841 = vadd.f32 %v5840, %v5575
      %v5842 = vadd.f32 %v5841, %v5576
      %v5843 = vadd.f32 %v5842, %v5577
      %v5844 = vadd.f32 %v5843, %v5578
      %v5845 = vadd.f32 %v5844, %v5579
      %v5846 = vadd.f32 %v5845, %v5580
      %v5847 = vadd.f32 %v5846, %v5581
      %v5848 = vadd.f32 %v5847, %v5582
      %v5849 = vadd.f32 %v5848, %v5583
      %v5850 = vadd.f32 %v5849, %v5584
      %5851 = vadd.xlane.f32.xlu0 %v5850
      %v5852 = vpop.xlane.xlu0 %5851
      %v5853 = vadd.f32 %v5585, %v5586
      %v5854 = vadd.f32 %v5853, %v5587
      %v5855 = vadd.f32 %v5854, %v5588
      %v5856 = vadd.f32 %v5855, %v5589
      %v5857 = vadd.f32 %v5856, %v5590
      %v5858 = vadd.f32 %v5857, %v5591
      %v5859 = vadd.f32 %v5858, %v5592
      %v5860 = vadd.f32 %v5859, %v5593
      %v5861 = vadd.f32 %v5860, %v5594
      %v5862 = vadd.f32 %v5861, %v5595
      %v5863 = vadd.f32 %v5862, %v5596
      %v5864 = vadd.f32 %v5863, %v5597
      %v5865 = vadd.f32 %v5864, %v5598
      %v5866 = vadd.f32 %v5865, %v5599
      %v5867 = vadd.f32 %v5866, %v5600
      %5868 = vadd.xlane.f32.xlu0 %v5867
      %v5869 = vpop.xlane.xlu0 %5868
      %v5870 = vadd.f32 %v5601, %v5602
      %v5871 = vadd.f32 %v5870, %v5603
      %v5872 = vadd.f32 %v5871, %v5604
      %v5873 = vadd.f32 %v5872, %v5605
      %v5874 = vadd.f32 %v5873, %v5606
      %v5875 = vadd.f32 %v5874, %v5607
      %v5876 = vadd.f32 %v5875, %v5608
      %v5877 = vadd.f32 %v5876, %v5609
      %v5878 = vadd.f32 %v5877, %v5610
      %v5879 = vadd.f32 %v5878, %v5611
      %v5880 = vadd.f32 %v5879, %v5612
      %v5881 = vadd.f32 %v5880, %v5613
      %v5882 = vadd.f32 %v5881, %v5614
      %v5883 = vadd.f32 %v5882, %v5615
      %v5884 = vadd.f32 %v5883, %v5616
      %5885 = vadd.xlane.f32.xlu0 %v5884
      %v5886 = vpop.xlane.xlu0 %5885
      %v5887 = vadd.f32 %v5617, %v5618
      %v5888 = vadd.f32 %v5887, %v5619
      %v5889 = vadd.f32 %v5888, %v5620
      %v5890 = vadd.f32 %v5889, %v5621
      %v5891 = vadd.f32 %v5890, %v5622
      %v5892 = vadd.f32 %v5891, %v5623
      %v5893 = vadd.f32 %v5892, %v5624
      %v5894 = vadd.f32 %v5893, %v5625
      %v5895 = vadd.f32 %v5894, %v5626
      %v5896 = vadd.f32 %v5895, %v5627
      %v5897 = vadd.f32 %v5896, %v5628
      %v5898 = vadd.f32 %v5897, %v5629
      %v5899 = vadd.f32 %v5898, %v5630
      %v5900 = vadd.f32 %v5899, %v5631
      %v5901 = vadd.f32 %v5900, %v5632
      %5902 = vadd.xlane.f32.xlu0 %v5901
      %v5903 = vpop.xlane.xlu0 %5902
      %v5904 = vadd.f32 %v5633, %v5634
      %v5905 = vadd.f32 %v5904, %v5635
      %v5906 = vadd.f32 %v5905, %v5636
      %v5907 = vadd.f32 %v5906, %v5637
      %v5908 = vadd.f32 %v5907, %v5638
      %v5909 = vadd.f32 %v5908, %v5639
      %v5910 = vadd.f32 %v5909, %v5640
      %v5911 = vadd.f32 %v5910, %v5641
      %v5912 = vadd.f32 %v5911, %v5642
      %v5913 = vadd.f32 %v5912, %v5643
      %v5914 = vadd.f32 %v5913, %v5644
      %v5915 = vadd.f32 %v5914, %v5645
      %v5916 = vadd.f32 %v5915, %v5646
      %v5917 = vadd.f32 %v5916, %v5647
      %v5918 = vadd.f32 %v5917, %v5648
      %5919 = vadd.xlane.f32.xlu0 %v5918
      %v5920 = vpop.xlane.xlu0 %5919
      %v5921 = vmax.f32 %v5665, 1e-24
      %v5922 = vmax.f32 %v5682, 1e-24
      %v5923 = vmax.f32 %v5699, 1e-24
      %v5924 = vmax.f32 %v5716, 1e-24
      %v5925 = vmax.f32 %v5733, 1e-24
      %v5926 = vmax.f32 %v5750, 1e-24
      %v5927 = vmax.f32 %v5767, 1e-24
      %v5928 = vmax.f32 %v5784, 1e-24
      %v5929 = vmax.f32 %v5801, 1e-24
      %v5930 = vmax.f32 %v5818, 1e-24
      %v5931 = vmax.f32 %v5835, 1e-24
      %v5932 = vmax.f32 %v5852, 1e-24
      %v5933 = vmax.f32 %v5869, 1e-24
      %v5934 = vmax.f32 %v5886, 1e-24
      %v5935 = vmax.f32 %v5903, 1e-24
      %v5936 = vmax.f32 %v5920, 1e-24
      %v5937 = vrsqrt.pop %v5921
      %v5938 = vrsqrt.pop %v5922
      %v5939 = vrsqrt.pop %v5923
      %v5940 = vrsqrt.pop %v5924
      %v5941 = vrsqrt.pop %v5925
      %v5942 = vrsqrt.pop %v5926
      %v5943 = vrsqrt.pop %v5927
      %v5944 = vrsqrt.pop %v5928
      %v5945 = vrsqrt.pop %v5929
      %v5946 = vrsqrt.pop %v5930
      %v5947 = vrsqrt.pop %v5931
      %v5948 = vrsqrt.pop %v5932
      %v5949 = vrsqrt.pop %v5933
      %v5950 = vrsqrt.pop %v5934
      %v5951 = vrsqrt.pop %v5935
      %v5952 = vrsqrt.pop %v5936
      %v5953 = vmul.f32 %v3733, %v5937
      %v5954 = vmul.f32 %v3735, %v5937
      %v5955 = vmul.f32 %v3959, %v5937
      %v5956 = vmul.f32 %v3961, %v5937
      %v5957 = vmul.f32 %v4185, %v5937
      %v5958 = vmul.f32 %v4187, %v5937
      %v5959 = vmul.f32 %v4411, %v5937
      %v5960 = vmul.f32 %v4413, %v5937
      %v5961 = vmul.f32 %v4637, %v5937
      %v5962 = vmul.f32 %v4639, %v5937
      %v5963 = vmul.f32 %v4863, %v5937
      %v5964 = vmul.f32 %v4865, %v5937
      %v5965 = vmul.f32 %v5089, %v5937
      %v5966 = vmul.f32 %v5091, %v5937
      %v5967 = vmul.f32 %v5315, %v5937
      %v5968 = vmul.f32 %v5317, %v5937
      %v5969 = vmul.f32 %v3737, %v5938
      %v5970 = vmul.f32 %v3739, %v5938
      %v5971 = vmul.f32 %v3963, %v5938
      %v5972 = vmul.f32 %v3965, %v5938
      %v5973 = vmul.f32 %v4189, %v5938
      %v5974 = vmul.f32 %v4191, %v5938
      %v5975 = vmul.f32 %v4415, %v5938
      %v5976 = vmul.f32 %v4417, %v5938
      %v5977 = vmul.f32 %v4641, %v5938
      %v5978 = vmul.f32 %v4643, %v5938
      %v5979 = vmul.f32 %v4867, %v5938
      %v5980 = vmul.f32 %v4869, %v5938
      %v5981 = vmul.f32 %v5093, %v5938
      %v5982 = vmul.f32 %v5095, %v5938
      %v5983 = vmul.f32 %v5319, %v5938
      %v5984 = vmul.f32 %v5321, %v5938
      %v5985 = vmul.f32 %v3743, %v5939
      %v5986 = vmul.f32 %v3745, %v5939
      %v5987 = vmul.f32 %v3969, %v5939
      %v5988 = vmul.f32 %v3971, %v5939
      %v5989 = vmul.f32 %v4195, %v5939
      %v5990 = vmul.f32 %v4197, %v5939
      %v5991 = vmul.f32 %v4421, %v5939
      %v5992 = vmul.f32 %v4423, %v5939
      %v5993 = vmul.f32 %v4647, %v5939
      %v5994 = vmul.f32 %v4649, %v5939
      %v5995 = vmul.f32 %v4873, %v5939
      %v5996 = vmul.f32 %v4875, %v5939
      %v5997 = vmul.f32 %v5099, %v5939
      %v5998 = vmul.f32 %v5101, %v5939
      %v5999 = vmul.f32 %v5325, %v5939
      %v6000 = vmul.f32 %v5327, %v5939
      %v6001 = vmul.f32 %v3747, %v5940
      %v6002 = vmul.f32 %v3749, %v5940
      %v6003 = vmul.f32 %v3973, %v5940
      %v6004 = vmul.f32 %v3975, %v5940
      %v6005 = vmul.f32 %v4199, %v5940
      %v6006 = vmul.f32 %v4201, %v5940
      %v6007 = vmul.f32 %v4425, %v5940
      %v6008 = vmul.f32 %v4427, %v5940
      %v6009 = vmul.f32 %v4651, %v5940
      %v6010 = vmul.f32 %v4653, %v5940
      %v6011 = vmul.f32 %v4877, %v5940
      %v6012 = vmul.f32 %v4879, %v5940
      %v6013 = vmul.f32 %v5103, %v5940
      %v6014 = vmul.f32 %v5105, %v5940
      %v6015 = vmul.f32 %v5329, %v5940
      %v6016 = vmul.f32 %v5331, %v5940
      %v6017 = vmul.f32 %v3753, %v5941
      %v6018 = vmul.f32 %v3755, %v5941
      %v6019 = vmul.f32 %v3979, %v5941
      %v6020 = vmul.f32 %v3981, %v5941
      %v6021 = vmul.f32 %v4205, %v5941
      %v6022 = vmul.f32 %v4207, %v5941
      %v6023 = vmul.f32 %v4431, %v5941
      %v6024 = vmul.f32 %v4433, %v5941
      %v6025 = vmul.f32 %v4657, %v5941
      %v6026 = vmul.f32 %v4659, %v5941
      %v6027 = vmul.f32 %v4883, %v5941
      %v6028 = vmul.f32 %v4885, %v5941
      %v6029 = vmul.f32 %v5109, %v5941
      %v6030 = vmul.f32 %v5111, %v5941
      %v6031 = vmul.f32 %v5335, %v5941
      %v6032 = vmul.f32 %v5337, %v5941
      %v6033 = vmul.f32 %v3757, %v5942
      %v6034 = vmul.f32 %v3759, %v5942
      %v6035 = vmul.f32 %v3983, %v5942
      %v6036 = vmul.f32 %v3985, %v5942
      %v6037 = vmul.f32 %v4209, %v5942
      %v6038 = vmul.f32 %v4211, %v5942
      %v6039 = vmul.f32 %v4435, %v5942
      %v6040 = vmul.f32 %v4437, %v5942
      %v6041 = vmul.f32 %v4661, %v5942
      %v6042 = vmul.f32 %v4663, %v5942
      %v6043 = vmul.f32 %v4887, %v5942
      %v6044 = vmul.f32 %v4889, %v5942
      %v6045 = vmul.f32 %v5113, %v5942
      %v6046 = vmul.f32 %v5115, %v5942
      %v6047 = vmul.f32 %v5339, %v5942
      %v6048 = vmul.f32 %v5341, %v5942
      %v6049 = vmul.f32 %v3763, %v5943
      %v6050 = vmul.f32 %v3765, %v5943
      %v6051 = vmul.f32 %v3989, %v5943
      %v6052 = vmul.f32 %v3991, %v5943
      %v6053 = vmul.f32 %v4215, %v5943
      %v6054 = vmul.f32 %v4217, %v5943
      %v6055 = vmul.f32 %v4441, %v5943
      %v6056 = vmul.f32 %v4443, %v5943
      %v6057 = vmul.f32 %v4667, %v5943
      %v6058 = vmul.f32 %v4669, %v5943
      %v6059 = vmul.f32 %v4893, %v5943
      %v6060 = vmul.f32 %v4895, %v5943
      %v6061 = vmul.f32 %v5119, %v5943
      %v6062 = vmul.f32 %v5121, %v5943
      %v6063 = vmul.f32 %v5345, %v5943
      %v6064 = vmul.f32 %v5347, %v5943
      %v6065 = vmul.f32 %v3767, %v5944
      %v6066 = vmul.f32 %v3769, %v5944
      %v6067 = vmul.f32 %v3993, %v5944
      %v6068 = vmul.f32 %v3995, %v5944
      %v6069 = vmul.f32 %v4219, %v5944
      %v6070 = vmul.f32 %v4221, %v5944
      %v6071 = vmul.f32 %v4445, %v5944
      %v6072 = vmul.f32 %v4447, %v5944
      %v6073 = vmul.f32 %v4671, %v5944
      %v6074 = vmul.f32 %v4673, %v5944
      %v6075 = vmul.f32 %v4897, %v5944
      %v6076 = vmul.f32 %v4899, %v5944
      %v6077 = vmul.f32 %v5123, %v5944
      %v6078 = vmul.f32 %v5125, %v5944
      %v6079 = vmul.f32 %v5349, %v5944
      %v6080 = vmul.f32 %v5351, %v5944
      %v6081 = vmul.f32 %v3773, %v5945
      %v6082 = vmul.f32 %v3775, %v5945
      %v6083 = vmul.f32 %v3999, %v5945
      %v6084 = vmul.f32 %v4001, %v5945
      %v6085 = vmul.f32 %v4225, %v5945
      %v6086 = vmul.f32 %v4227, %v5945
      %v6087 = vmul.f32 %v4451, %v5945
      %v6088 = vmul.f32 %v4453, %v5945
      %v6089 = vmul.f32 %v4677, %v5945
      %v6090 = vmul.f32 %v4679, %v5945
      %v6091 = vmul.f32 %v4903, %v5945
      %v6092 = vmul.f32 %v4905, %v5945
      %v6093 = vmul.f32 %v5129, %v5945
      %v6094 = vmul.f32 %v5131, %v5945
      %v6095 = vmul.f32 %v5355, %v5945
      %v6096 = vmul.f32 %v5357, %v5945
      %v6097 = vmul.f32 %v3777, %v5946
      %v6098 = vmul.f32 %v3779, %v5946
      %v6099 = vmul.f32 %v4003, %v5946
      %v6100 = vmul.f32 %v4005, %v5946
      %v6101 = vmul.f32 %v4229, %v5946
      %v6102 = vmul.f32 %v4231, %v5946
      %v6103 = vmul.f32 %v4455, %v5946
      %v6104 = vmul.f32 %v4457, %v5946
      %v6105 = vmul.f32 %v4681, %v5946
      %v6106 = vmul.f32 %v4683, %v5946
      %v6107 = vmul.f32 %v4907, %v5946
      %v6108 = vmul.f32 %v4909, %v5946
      %v6109 = vmul.f32 %v5133, %v5946
      %v6110 = vmul.f32 %v5135, %v5946
      %v6111 = vmul.f32 %v5359, %v5946
      %v6112 = vmul.f32 %v5361, %v5946
      %v6113 = vmul.f32 %v3783, %v5947
      %v6114 = vmul.f32 %v3785, %v5947
      %v6115 = vmul.f32 %v4009, %v5947
      %v6116 = vmul.f32 %v4011, %v5947
      %v6117 = vmul.f32 %v4235, %v5947
      %v6118 = vmul.f32 %v4237, %v5947
      %v6119 = vmul.f32 %v4461, %v5947
      %v6120 = vmul.f32 %v4463, %v5947
      %v6121 = vmul.f32 %v4687, %v5947
      %v6122 = vmul.f32 %v4689, %v5947
      %v6123 = vmul.f32 %v4913, %v5947
      %v6124 = vmul.f32 %v4915, %v5947
      %v6125 = vmul.f32 %v5139, %v5947
      %v6126 = vmul.f32 %v5141, %v5947
      %v6127 = vmul.f32 %v5365, %v5947
      %v6128 = vmul.f32 %v5367, %v5947
      %v6129 = vmul.f32 %v3787, %v5948
      %v6130 = vmul.f32 %v3789, %v5948
      %v6131 = vmul.f32 %v4013, %v5948
      %v6132 = vmul.f32 %v4015, %v5948
      %v6133 = vmul.f32 %v4239, %v5948
      %v6134 = vmul.f32 %v4241, %v5948
      %v6135 = vmul.f32 %v4465, %v5948
      %v6136 = vmul.f32 %v4467, %v5948
      %v6137 = vmul.f32 %v4691, %v5948
      %v6138 = vmul.f32 %v4693, %v5948
      %v6139 = vmul.f32 %v4917, %v5948
      %v6140 = vmul.f32 %v4919, %v5948
      %v6141 = vmul.f32 %v5143, %v5948
      %v6142 = vmul.f32 %v5145, %v5948
      %v6143 = vmul.f32 %v5369, %v5948
      %v6144 = vmul.f32 %v5371, %v5948
      %v6145 = vmul.f32 %v3793, %v5949
      %v6146 = vmul.f32 %v3795, %v5949
      %v6147 = vmul.f32 %v4019, %v5949
      %v6148 = vmul.f32 %v4021, %v5949
      %v6149 = vmul.f32 %v4245, %v5949
      %v6150 = vmul.f32 %v4247, %v5949
      %v6151 = vmul.f32 %v4471, %v5949
      %v6152 = vmul.f32 %v4473, %v5949
      %v6153 = vmul.f32 %v4697, %v5949
      %v6154 = vmul.f32 %v4699, %v5949
      %v6155 = vmul.f32 %v4923, %v5949
      %v6156 = vmul.f32 %v4925, %v5949
      %v6157 = vmul.f32 %v5149, %v5949
      %v6158 = vmul.f32 %v5151, %v5949
      %v6159 = vmul.f32 %v5375, %v5949
      %v6160 = vmul.f32 %v5377, %v5949
      %v6161 = vmul.f32 %v3797, %v5950
      %v6162 = vmul.f32 %v3799, %v5950
      %v6163 = vmul.f32 %v4023, %v5950
      %v6164 = vmul.f32 %v4025, %v5950
      %v6165 = vmul.f32 %v4249, %v5950
      %v6166 = vmul.f32 %v4251, %v5950
      %v6167 = vmul.f32 %v4475, %v5950
      %v6168 = vmul.f32 %v4477, %v5950
      %v6169 = vmul.f32 %v4701, %v5950
      %v6170 = vmul.f32 %v4703, %v5950
      %v6171 = vmul.f32 %v4927, %v5950
      %v6172 = vmul.f32 %v4929, %v5950
      %v6173 = vmul.f32 %v5153, %v5950
      %v6174 = vmul.f32 %v5155, %v5950
      %v6175 = vmul.f32 %v5379, %v5950
      %v6176 = vmul.f32 %v5381, %v5950
      %v6177 = vmul.f32 %v3803, %v5951
      %v6178 = vmul.f32 %v3805, %v5951
      %v6179 = vmul.f32 %v4029, %v5951
      %v6180 = vmul.f32 %v4031, %v5951
      %v6181 = vmul.f32 %v4255, %v5951
      %v6182 = vmul.f32 %v4257, %v5951
      %v6183 = vmul.f32 %v4481, %v5951
      %v6184 = vmul.f32 %v4483, %v5951
      %v6185 = vmul.f32 %v4707, %v5951
      %v6186 = vmul.f32 %v4709, %v5951
      %v6187 = vmul.f32 %v4933, %v5951
      %v6188 = vmul.f32 %v4935, %v5951
      %v6189 = vmul.f32 %v5159, %v5951
      %v6190 = vmul.f32 %v5161, %v5951
      %v6191 = vmul.f32 %v5385, %v5951
      %v6192 = vmul.f32 %v5387, %v5951
      %v6193 = vmul.f32 %v3807, %v5952
      %v6194 = vmul.f32 %v3809, %v5952
      %v6195 = vmul.f32 %v4033, %v5952
      %v6196 = vmul.f32 %v4035, %v5952
      %v6197 = vmul.f32 %v4259, %v5952
      %v6198 = vmul.f32 %v4261, %v5952
      %v6199 = vmul.f32 %v4485, %v5952
      %v6200 = vmul.f32 %v4487, %v5952
      %v6201 = vmul.f32 %v4711, %v5952
      %v6202 = vmul.f32 %v4713, %v5952
      %v6203 = vmul.f32 %v4937, %v5952
      %v6204 = vmul.f32 %v4939, %v5952
      %v6205 = vmul.f32 %v5163, %v5952
      %v6206 = vmul.f32 %v5165, %v5952
      %v6207 = vmul.f32 %v5389, %v5952
      %v6208 = vmul.f32 %v5391, %v5952
      %v6209 = vpack.c.bf16 %v5969, %v5953
      %v6210 = vpack.c.bf16 %v5970, %v5954
      %v6211 = vpack.c.bf16 %v5971, %v5955
      %v6212 = vpack.c.bf16 %v5972, %v5956
      %v6213 = vpack.c.bf16 %v5973, %v5957
      %v6214 = vpack.c.bf16 %v5974, %v5958
      %v6215 = vpack.c.bf16 %v5975, %v5959
      %v6216 = vpack.c.bf16 %v5976, %v5960
      %v6217 = vpack.c.bf16 %v5977, %v5961
      %v6218 = vpack.c.bf16 %v5978, %v5962
      %v6219 = vpack.c.bf16 %v5979, %v5963
      %v6220 = vpack.c.bf16 %v5980, %v5964
      %v6221 = vpack.c.bf16 %v5981, %v5965
      %v6222 = vpack.c.bf16 %v5982, %v5966
      %v6223 = vpack.c.bf16 %v5983, %v5967
      %v6224 = vpack.c.bf16 %v5984, %v5968
      %v6225 = vpack.c.bf16 %v6001, %v5985
      %v6226 = vpack.c.bf16 %v6002, %v5986
      %v6227 = vpack.c.bf16 %v6003, %v5987
      %v6228 = vpack.c.bf16 %v6004, %v5988
      %v6229 = vpack.c.bf16 %v6005, %v5989
      %v6230 = vpack.c.bf16 %v6006, %v5990
      %v6231 = vpack.c.bf16 %v6007, %v5991
      %v6232 = vpack.c.bf16 %v6008, %v5992
      %v6233 = vpack.c.bf16 %v6009, %v5993
      %v6234 = vpack.c.bf16 %v6010, %v5994
      %v6235 = vpack.c.bf16 %v6011, %v5995
      %v6236 = vpack.c.bf16 %v6012, %v5996
      %v6237 = vpack.c.bf16 %v6013, %v5997
      %v6238 = vpack.c.bf16 %v6014, %v5998
      %v6239 = vpack.c.bf16 %v6015, %v5999
      %v6240 = vpack.c.bf16 %v6016, %v6000
      %v6241 = vpack.c.bf16 %v6033, %v6017
      %v6242 = vpack.c.bf16 %v6034, %v6018
      %v6243 = vpack.c.bf16 %v6035, %v6019
      %v6244 = vpack.c.bf16 %v6036, %v6020
      %v6245 = vpack.c.bf16 %v6037, %v6021
      %v6246 = vpack.c.bf16 %v6038, %v6022
      %v6247 = vpack.c.bf16 %v6039, %v6023
      %v6248 = vpack.c.bf16 %v6040, %v6024
      %v6249 = vpack.c.bf16 %v6041, %v6025
      %v6250 = vpack.c.bf16 %v6042, %v6026
      %v6251 = vpack.c.bf16 %v6043, %v6027
      %v6252 = vpack.c.bf16 %v6044, %v6028
      %v6253 = vpack.c.bf16 %v6045, %v6029
      %v6254 = vpack.c.bf16 %v6046, %v6030
      %v6255 = vpack.c.bf16 %v6047, %v6031
      %v6256 = vpack.c.bf16 %v6048, %v6032
      %v6257 = vpack.c.bf16 %v6065, %v6049
      %v6258 = vpack.c.bf16 %v6066, %v6050
      %v6259 = vpack.c.bf16 %v6067, %v6051
      %v6260 = vpack.c.bf16 %v6068, %v6052
      %v6261 = vpack.c.bf16 %v6069, %v6053
      %v6262 = vpack.c.bf16 %v6070, %v6054
      %v6263 = vpack.c.bf16 %v6071, %v6055
      %v6264 = vpack.c.bf16 %v6072, %v6056
      %v6265 = vpack.c.bf16 %v6073, %v6057
      %v6266 = vpack.c.bf16 %v6074, %v6058
      %v6267 = vpack.c.bf16 %v6075, %v6059
      %v6268 = vpack.c.bf16 %v6076, %v6060
      %v6269 = vpack.c.bf16 %v6077, %v6061
      %v6270 = vpack.c.bf16 %v6078, %v6062
      %v6271 = vpack.c.bf16 %v6079, %v6063
      %v6272 = vpack.c.bf16 %v6080, %v6064
      %v6273 = vpack.c.bf16 %v6097, %v6081
      %v6274 = vpack.c.bf16 %v6098, %v6082
      %v6275 = vpack.c.bf16 %v6099, %v6083
      %v6276 = vpack.c.bf16 %v6100, %v6084
      %v6277 = vpack.c.bf16 %v6101, %v6085
      %v6278 = vpack.c.bf16 %v6102, %v6086
      %v6279 = vpack.c.bf16 %v6103, %v6087
      %v6280 = vpack.c.bf16 %v6104, %v6088
      %v6281 = vpack.c.bf16 %v6105, %v6089
      %v6282 = vpack.c.bf16 %v6106, %v6090
      %v6283 = vpack.c.bf16 %v6107, %v6091
      %v6284 = vpack.c.bf16 %v6108, %v6092
      %v6285 = vpack.c.bf16 %v6109, %v6093
      %v6286 = vpack.c.bf16 %v6110, %v6094
      %v6287 = vpack.c.bf16 %v6111, %v6095
      %v6288 = vpack.c.bf16 %v6112, %v6096
      %v6289 = vpack.c.bf16 %v6129, %v6113
      %v6290 = vpack.c.bf16 %v6130, %v6114
      %v6291 = vpack.c.bf16 %v6131, %v6115
      %v6292 = vpack.c.bf16 %v6132, %v6116
      %v6293 = vpack.c.bf16 %v6133, %v6117
      %v6294 = vpack.c.bf16 %v6134, %v6118
      %v6295 = vpack.c.bf16 %v6135, %v6119
      %v6296 = vpack.c.bf16 %v6136, %v6120
      %v6297 = vpack.c.bf16 %v6137, %v6121
      %v6298 = vpack.c.bf16 %v6138, %v6122
      %v6299 = vpack.c.bf16 %v6139, %v6123
      %v6300 = vpack.c.bf16 %v6140, %v6124
      %v6301 = vpack.c.bf16 %v6141, %v6125
      %v6302 = vpack.c.bf16 %v6142, %v6126
      %v6303 = vpack.c.bf16 %v6143, %v6127
      %v6304 = vpack.c.bf16 %v6144, %v6128
      %v6305 = vpack.c.bf16 %v6161, %v6145
      %v6306 = vpack.c.bf16 %v6162, %v6146
      %v6307 = vpack.c.bf16 %v6163, %v6147
      %v6308 = vpack.c.bf16 %v6164, %v6148
      %v6309 = vpack.c.bf16 %v6165, %v6149
      %v6310 = vpack.c.bf16 %v6166, %v6150
      %v6311 = vpack.c.bf16 %v6167, %v6151
      %v6312 = vpack.c.bf16 %v6168, %v6152
      %v6313 = vpack.c.bf16 %v6169, %v6153
      %v6314 = vpack.c.bf16 %v6170, %v6154
      %v6315 = vpack.c.bf16 %v6171, %v6155
      %v6316 = vpack.c.bf16 %v6172, %v6156
      %v6317 = vpack.c.bf16 %v6173, %v6157
      %v6318 = vpack.c.bf16 %v6174, %v6158
      %v6319 = vpack.c.bf16 %v6175, %v6159
      %v6320 = vpack.c.bf16 %v6176, %v6160
      %v6321 = vpack.c.bf16 %v6193, %v6177
      %v6322 = vpack.c.bf16 %v6194, %v6178
      %v6323 = vpack.c.bf16 %v6195, %v6179
      %v6324 = vpack.c.bf16 %v6196, %v6180
      %v6325 = vpack.c.bf16 %v6197, %v6181
      %v6326 = vpack.c.bf16 %v6198, %v6182
      %v6327 = vpack.c.bf16 %v6199, %v6183
      %v6328 = vpack.c.bf16 %v6200, %v6184
      %v6329 = vpack.c.bf16 %v6201, %v6185
      %v6330 = vpack.c.bf16 %v6202, %v6186
      %v6331 = vpack.c.bf16 %v6203, %v6187
      %v6332 = vpack.c.bf16 %v6204, %v6188
      %v6333 = vpack.c.bf16 %v6205, %v6189
      %v6334 = vpack.c.bf16 %v6206, %v6190
      %v6335 = vpack.c.bf16 %v6207, %v6191
      %v6336 = vpack.c.bf16 %v6208, %v6192
      %v6465 = vunpack.c.l.b16 %v6209
      %v6466 = vunpack.c.l.b16 %v6210
      %v6467 = vunpack.c.l.b16 %v6211
      %v6468 = vunpack.c.l.b16 %v6212
      %v6469 = vunpack.c.l.b16 %v6213
      %v6470 = vunpack.c.l.b16 %v6214
      %v6471 = vunpack.c.l.b16 %v6215
      %v6472 = vunpack.c.l.b16 %v6216
      %v6473 = vunpack.c.l.b16 %v6217
      %v6474 = vunpack.c.l.b16 %v6218
      %v6475 = vunpack.c.l.b16 %v6219
      %v6476 = vunpack.c.l.b16 %v6220
      %v6477 = vunpack.c.l.b16 %v6221
      %v6478 = vunpack.c.l.b16 %v6222
      %v6479 = vunpack.c.l.b16 %v6223
      %v6480 = vunpack.c.l.b16 %v6224
      %v6481 = vunpack.c.h.b16 %v6209
      %v6482 = vunpack.c.h.b16 %v6210
      %v6483 = vunpack.c.h.b16 %v6211
      %v6484 = vunpack.c.h.b16 %v6212
      %v6485 = vunpack.c.h.b16 %v6213
      %v6486 = vunpack.c.h.b16 %v6214
      %v6487 = vunpack.c.h.b16 %v6215
      %v6488 = vunpack.c.h.b16 %v6216
      %v6489 = vunpack.c.h.b16 %v6217
      %v6490 = vunpack.c.h.b16 %v6218
      %v6491 = vunpack.c.h.b16 %v6219
      %v6492 = vunpack.c.h.b16 %v6220
      %v6493 = vunpack.c.h.b16 %v6221
      %v6494 = vunpack.c.h.b16 %v6222
      %v6495 = vunpack.c.h.b16 %v6223
      %v6496 = vunpack.c.h.b16 %v6224
      %v6497 = vunpack.c.l.b16 %v6225
      %v6498 = vunpack.c.l.b16 %v6226
      %v6499 = vunpack.c.l.b16 %v6227
      %v6500 = vunpack.c.l.b16 %v6228
      %v6501 = vunpack.c.l.b16 %v6229
      %v6502 = vunpack.c.l.b16 %v6230
      %v6503 = vunpack.c.l.b16 %v6231
      %v6504 = vunpack.c.l.b16 %v6232
      %v6505 = vunpack.c.l.b16 %v6233
      %v6506 = vunpack.c.l.b16 %v6234
      %v6507 = vunpack.c.l.b16 %v6235
      %v6508 = vunpack.c.l.b16 %v6236
      %v6509 = vunpack.c.l.b16 %v6237
      %v6510 = vunpack.c.l.b16 %v6238
      %v6511 = vunpack.c.l.b16 %v6239
      %v6512 = vunpack.c.l.b16 %v6240
      %v6513 = vunpack.c.h.b16 %v6225
      %v6514 = vunpack.c.h.b16 %v6226
      %v6515 = vunpack.c.h.b16 %v6227
      %v6516 = vunpack.c.h.b16 %v6228
      %v6517 = vunpack.c.h.b16 %v6229
      %v6518 = vunpack.c.h.b16 %v6230
      %v6519 = vunpack.c.h.b16 %v6231
      %v6520 = vunpack.c.h.b16 %v6232
      %v6521 = vunpack.c.h.b16 %v6233
      %v6522 = vunpack.c.h.b16 %v6234
      %v6523 = vunpack.c.h.b16 %v6235
      %v6524 = vunpack.c.h.b16 %v6236
      %v6525 = vunpack.c.h.b16 %v6237
      %v6526 = vunpack.c.h.b16 %v6238
      %v6527 = vunpack.c.h.b16 %v6239
      %v6528 = vunpack.c.h.b16 %v6240
      %v6529 = vunpack.c.l.b16 %v6241
      %v6530 = vunpack.c.l.b16 %v6242
      %v6531 = vunpack.c.l.b16 %v6243
      %v6532 = vunpack.c.l.b16 %v6244
      %v6533 = vunpack.c.l.b16 %v6245
      %v6534 = vunpack.c.l.b16 %v6246
      %v6535 = vunpack.c.l.b16 %v6247
      %v6536 = vunpack.c.l.b16 %v6248
      %v6537 = vunpack.c.l.b16 %v6249
      %v6538 = vunpack.c.l.b16 %v6250
      %v6539 = vunpack.c.l.b16 %v6251
      %v6540 = vunpack.c.l.b16 %v6252
      %v6541 = vunpack.c.l.b16 %v6253
      %v6542 = vunpack.c.l.b16 %v6254
      %v6543 = vunpack.c.l.b16 %v6255
      %v6544 = vunpack.c.l.b16 %v6256
      %v6545 = vunpack.c.h.b16 %v6241
      %v6546 = vunpack.c.h.b16 %v6242
      %v6547 = vunpack.c.h.b16 %v6243
      %v6548 = vunpack.c.h.b16 %v6244
      %v6549 = vunpack.c.h.b16 %v6245
      %v6550 = vunpack.c.h.b16 %v6246
      %v6551 = vunpack.c.h.b16 %v6247
      %v6552 = vunpack.c.h.b16 %v6248
      %v6553 = vunpack.c.h.b16 %v6249
      %v6554 = vunpack.c.h.b16 %v6250
      %v6555 = vunpack.c.h.b16 %v6251
      %v6556 = vunpack.c.h.b16 %v6252
      %v6557 = vunpack.c.h.b16 %v6253
      %v6558 = vunpack.c.h.b16 %v6254
      %v6559 = vunpack.c.h.b16 %v6255
      %v6560 = vunpack.c.h.b16 %v6256
      %v6561 = vunpack.c.l.b16 %v6257
      %v6562 = vunpack.c.l.b16 %v6258
      %v6563 = vunpack.c.l.b16 %v6259
      %v6564 = vunpack.c.l.b16 %v6260
      %v6565 = vunpack.c.l.b16 %v6261
      %v6566 = vunpack.c.l.b16 %v6262
      %v6567 = vunpack.c.l.b16 %v6263
      %v6568 = vunpack.c.l.b16 %v6264
      %v6569 = vunpack.c.l.b16 %v6265
      %v6570 = vunpack.c.l.b16 %v6266
      %v6571 = vunpack.c.l.b16 %v6267
      %v6572 = vunpack.c.l.b16 %v6268
      %v6573 = vunpack.c.l.b16 %v6269
      %v6574 = vunpack.c.l.b16 %v6270
      %v6575 = vunpack.c.l.b16 %v6271
      %v6576 = vunpack.c.l.b16 %v6272
      %v6577 = vunpack.c.h.b16 %v6257
      %v6578 = vunpack.c.h.b16 %v6258
      %v6579 = vunpack.c.h.b16 %v6259
      %v6580 = vunpack.c.h.b16 %v6260
      %v6581 = vunpack.c.h.b16 %v6261
      %v6582 = vunpack.c.h.b16 %v6262
      %v6583 = vunpack.c.h.b16 %v6263
      %v6584 = vunpack.c.h.b16 %v6264
      %v6585 = vunpack.c.h.b16 %v6265
      %v6586 = vunpack.c.h.b16 %v6266
      %v6587 = vunpack.c.h.b16 %v6267
      %v6588 = vunpack.c.h.b16 %v6268
      %v6589 = vunpack.c.h.b16 %v6269
      %v6590 = vunpack.c.h.b16 %v6270
      %v6591 = vunpack.c.h.b16 %v6271
      %v6592 = vunpack.c.h.b16 %v6272
      %v6593 = vunpack.c.l.b16 %v6273
      %v6594 = vunpack.c.l.b16 %v6274
      %v6595 = vunpack.c.l.b16 %v6275
      %v6596 = vunpack.c.l.b16 %v6276
      %v6597 = vunpack.c.l.b16 %v6277
      %v6598 = vunpack.c.l.b16 %v6278
      %v6599 = vunpack.c.l.b16 %v6279
      %v6600 = vunpack.c.l.b16 %v6280
      %v6601 = vunpack.c.l.b16 %v6281
      %v6602 = vunpack.c.l.b16 %v6282
      %v6603 = vunpack.c.l.b16 %v6283
      %v6604 = vunpack.c.l.b16 %v6284
      %v6605 = vunpack.c.l.b16 %v6285
      %v6606 = vunpack.c.l.b16 %v6286
      %v6607 = vunpack.c.l.b16 %v6287
      %v6608 = vunpack.c.l.b16 %v6288
      %v6609 = vunpack.c.h.b16 %v6273
      %v6610 = vunpack.c.h.b16 %v6274
      %v6611 = vunpack.c.h.b16 %v6275
      %v6612 = vunpack.c.h.b16 %v6276
      %v6613 = vunpack.c.h.b16 %v6277
      %v6614 = vunpack.c.h.b16 %v6278
      %v6615 = vunpack.c.h.b16 %v6279
      %v6616 = vunpack.c.h.b16 %v6280
      %v6617 = vunpack.c.h.b16 %v6281
      %v6618 = vunpack.c.h.b16 %v6282
      %v6619 = vunpack.c.h.b16 %v6283
      %v6620 = vunpack.c.h.b16 %v6284
      %v6621 = vunpack.c.h.b16 %v6285
      %v6622 = vunpack.c.h.b16 %v6286
      %v6623 = vunpack.c.h.b16 %v6287
      %v6624 = vunpack.c.h.b16 %v6288
      %v6625 = vunpack.c.l.b16 %v6289
      %v6626 = vunpack.c.l.b16 %v6290
      %v6627 = vunpack.c.l.b16 %v6291
      %v6628 = vunpack.c.l.b16 %v6292
      %v6629 = vunpack.c.l.b16 %v6293
      %v6630 = vunpack.c.l.b16 %v6294
      %v6631 = vunpack.c.l.b16 %v6295
      %v6632 = vunpack.c.l.b16 %v6296
      %v6633 = vunpack.c.l.b16 %v6297
      %v6634 = vunpack.c.l.b16 %v6298
      %v6635 = vunpack.c.l.b16 %v6299
      %v6636 = vunpack.c.l.b16 %v6300
      %v6637 = vunpack.c.l.b16 %v6301
      %v6638 = vunpack.c.l.b16 %v6302
      %v6639 = vunpack.c.l.b16 %v6303
      %v6640 = vunpack.c.l.b16 %v6304
      %v6641 = vunpack.c.h.b16 %v6289
      %v6642 = vunpack.c.h.b16 %v6290
      %v6643 = vunpack.c.h.b16 %v6291
      %v6644 = vunpack.c.h.b16 %v6292
      %v6645 = vunpack.c.h.b16 %v6293
      %v6646 = vunpack.c.h.b16 %v6294
      %v6647 = vunpack.c.h.b16 %v6295
      %v6648 = vunpack.c.h.b16 %v6296
      %v6649 = vunpack.c.h.b16 %v6297
      %v6650 = vunpack.c.h.b16 %v6298
      %v6651 = vunpack.c.h.b16 %v6299
      %v6652 = vunpack.c.h.b16 %v6300
      %v6653 = vunpack.c.h.b16 %v6301
      %v6654 = vunpack.c.h.b16 %v6302
      %v6655 = vunpack.c.h.b16 %v6303
      %v6656 = vunpack.c.h.b16 %v6304
      %v6657 = vunpack.c.l.b16 %v6305
      %v6658 = vunpack.c.l.b16 %v6306
      %v6659 = vunpack.c.l.b16 %v6307
      %v6660 = vunpack.c.l.b16 %v6308
      %v6661 = vunpack.c.l.b16 %v6309
      %v6662 = vunpack.c.l.b16 %v6310
      %v6663 = vunpack.c.l.b16 %v6311
      %v6664 = vunpack.c.l.b16 %v6312
      %v6665 = vunpack.c.l.b16 %v6313
      %v6666 = vunpack.c.l.b16 %v6314
      %v6667 = vunpack.c.l.b16 %v6315
      %v6668 = vunpack.c.l.b16 %v6316
      %v6669 = vunpack.c.l.b16 %v6317
      %v6670 = vunpack.c.l.b16 %v6318
      %v6671 = vunpack.c.l.b16 %v6319
      %v6672 = vunpack.c.l.b16 %v6320
      %v6673 = vunpack.c.h.b16 %v6305
      %v6674 = vunpack.c.h.b16 %v6306
      %v6675 = vunpack.c.h.b16 %v6307
      %v6676 = vunpack.c.h.b16 %v6308
      %v6677 = vunpack.c.h.b16 %v6309
      %v6678 = vunpack.c.h.b16 %v6310
      %v6679 = vunpack.c.h.b16 %v6311
      %v6680 = vunpack.c.h.b16 %v6312
      %v6681 = vunpack.c.h.b16 %v6313
      %v6682 = vunpack.c.h.b16 %v6314
      %v6683 = vunpack.c.h.b16 %v6315
      %v6684 = vunpack.c.h.b16 %v6316
      %v6685 = vunpack.c.h.b16 %v6317
      %v6686 = vunpack.c.h.b16 %v6318
      %v6687 = vunpack.c.h.b16 %v6319
      %v6688 = vunpack.c.h.b16 %v6320
      %v6689 = vunpack.c.l.b16 %v6321
      %v6690 = vunpack.c.l.b16 %v6322
      %v6691 = vunpack.c.l.b16 %v6323
      %v6692 = vunpack.c.l.b16 %v6324
      %v6693 = vunpack.c.l.b16 %v6325
      %v6694 = vunpack.c.l.b16 %v6326
      %v6695 = vunpack.c.l.b16 %v6327
      %v6696 = vunpack.c.l.b16 %v6328
      %v6697 = vunpack.c.l.b16 %v6329
      %v6698 = vunpack.c.l.b16 %v6330
      %v6699 = vunpack.c.l.b16 %v6331
      %v6700 = vunpack.c.l.b16 %v6332
      %v6701 = vunpack.c.l.b16 %v6333
      %v6702 = vunpack.c.l.b16 %v6334
      %v6703 = vunpack.c.l.b16 %v6335
      %v6704 = vunpack.c.l.b16 %v6336
      %v6705 = vunpack.c.h.b16 %v6321
      %v6706 = vunpack.c.h.b16 %v6322
      %v6707 = vunpack.c.h.b16 %v6323
      %v6708 = vunpack.c.h.b16 %v6324
      %v6709 = vunpack.c.h.b16 %v6325
      %v6710 = vunpack.c.h.b16 %v6326
      %v6711 = vunpack.c.h.b16 %v6327
      %v6712 = vunpack.c.h.b16 %v6328
      %v6713 = vunpack.c.h.b16 %v6329
      %v6714 = vunpack.c.h.b16 %v6330
      %v6715 = vunpack.c.h.b16 %v6331
      %v6716 = vunpack.c.h.b16 %v6332
      %v6717 = vunpack.c.h.b16 %v6333
      %v6718 = vunpack.c.h.b16 %v6334
      %v6719 = vunpack.c.h.b16 %v6335
      %v6720 = vunpack.c.h.b16 %v6336
      %v6721 = vpack.c.b16 %v6466, %v6465
      %v6722 = vpack.c.b16 %v6468, %v6467
      %v6723 = vpack.c.b16 %v6470, %v6469
      %v6724 = vpack.c.b16 %v6472, %v6471
      %v6725 = vpack.c.b16 %v6474, %v6473
      %v6726 = vpack.c.b16 %v6476, %v6475
      %v6727 = vpack.c.b16 %v6478, %v6477
      %v6728 = vpack.c.b16 %v6480, %v6479
      %v6729 = vpack.c.b16 %v6482, %v6481
      %v6730 = vpack.c.b16 %v6484, %v6483
      %v6731 = vpack.c.b16 %v6486, %v6485
      %v6732 = vpack.c.b16 %v6488, %v6487
      %v6733 = vpack.c.b16 %v6490, %v6489
      %v6734 = vpack.c.b16 %v6492, %v6491
      %v6735 = vpack.c.b16 %v6494, %v6493
      %v6736 = vpack.c.b16 %v6496, %v6495
      %v6737 = vpack.c.b16 %v6498, %v6497
      %v6738 = vpack.c.b16 %v6500, %v6499
      %v6739 = vpack.c.b16 %v6502, %v6501
      %v6740 = vpack.c.b16 %v6504, %v6503
      %v6741 = vpack.c.b16 %v6506, %v6505
      %v6742 = vpack.c.b16 %v6508, %v6507
      %v6743 = vpack.c.b16 %v6510, %v6509
      %v6744 = vpack.c.b16 %v6512, %v6511
      %v6745 = vpack.c.b16 %v6514, %v6513
      %v6746 = vpack.c.b16 %v6516, %v6515
      %v6747 = vpack.c.b16 %v6518, %v6517
      %v6748 = vpack.c.b16 %v6520, %v6519
      %v6749 = vpack.c.b16 %v6522, %v6521
      %v6750 = vpack.c.b16 %v6524, %v6523
      %v6751 = vpack.c.b16 %v6526, %v6525
      %v6752 = vpack.c.b16 %v6528, %v6527
      %v6753 = vpack.c.b16 %v6530, %v6529
      %v6754 = vpack.c.b16 %v6532, %v6531
      %v6755 = vpack.c.b16 %v6534, %v6533
      %v6756 = vpack.c.b16 %v6536, %v6535
      %v6757 = vpack.c.b16 %v6538, %v6537
      %v6758 = vpack.c.b16 %v6540, %v6539
      %v6759 = vpack.c.b16 %v6542, %v6541
      %v6760 = vpack.c.b16 %v6544, %v6543
      %v6761 = vpack.c.b16 %v6546, %v6545
      %v6762 = vpack.c.b16 %v6548, %v6547
      %v6763 = vpack.c.b16 %v6550, %v6549
      %v6764 = vpack.c.b16 %v6552, %v6551
      %v6765 = vpack.c.b16 %v6554, %v6553
      %v6766 = vpack.c.b16 %v6556, %v6555
      %v6767 = vpack.c.b16 %v6558, %v6557
      %v6768 = vpack.c.b16 %v6560, %v6559
      %v6769 = vpack.c.b16 %v6562, %v6561
      %v6770 = vpack.c.b16 %v6564, %v6563
      %v6771 = vpack.c.b16 %v6566, %v6565
      %v6772 = vpack.c.b16 %v6568, %v6567
      %v6773 = vpack.c.b16 %v6570, %v6569
      %v6774 = vpack.c.b16 %v6572, %v6571
      %v6775 = vpack.c.b16 %v6574, %v6573
      %v6776 = vpack.c.b16 %v6576, %v6575
      %v6777 = vpack.c.b16 %v6578, %v6577
      %v6778 = vpack.c.b16 %v6580, %v6579
      %v6779 = vpack.c.b16 %v6582, %v6581
      %v6780 = vpack.c.b16 %v6584, %v6583
      %v6781 = vpack.c.b16 %v6586, %v6585
      %v6782 = vpack.c.b16 %v6588, %v6587
      %v6783 = vpack.c.b16 %v6590, %v6589
      %v6784 = vpack.c.b16 %v6592, %v6591
      %v6785 = vpack.c.b16 %v6594, %v6593
      %v6786 = vpack.c.b16 %v6596, %v6595
      %v6787 = vpack.c.b16 %v6598, %v6597
      %v6788 = vpack.c.b16 %v6600, %v6599
      %v6789 = vpack.c.b16 %v6602, %v6601
      %v6790 = vpack.c.b16 %v6604, %v6603
      %v6791 = vpack.c.b16 %v6606, %v6605
      %v6792 = vpack.c.b16 %v6608, %v6607
      %v6793 = vpack.c.b16 %v6610, %v6609
      %v6794 = vpack.c.b16 %v6612, %v6611
      %v6795 = vpack.c.b16 %v6614, %v6613
      %v6796 = vpack.c.b16 %v6616, %v6615
      %v6797 = vpack.c.b16 %v6618, %v6617
      %v6798 = vpack.c.b16 %v6620, %v6619
      %v6799 = vpack.c.b16 %v6622, %v6621
      %v6800 = vpack.c.b16 %v6624, %v6623
      %v6801 = vpack.c.b16 %v6626, %v6625
      %v6802 = vpack.c.b16 %v6628, %v6627
      %v6803 = vpack.c.b16 %v6630, %v6629
      %v6804 = vpack.c.b16 %v6632, %v6631
      %v6805 = vpack.c.b16 %v6634, %v6633
      %v6806 = vpack.c.b16 %v6636, %v6635
      %v6807 = vpack.c.b16 %v6638, %v6637
      %v6808 = vpack.c.b16 %v6640, %v6639
      %v6809 = vpack.c.b16 %v6642, %v6641
      %v6810 = vpack.c.b16 %v6644, %v6643
      %v6811 = vpack.c.b16 %v6646, %v6645
      %v6812 = vpack.c.b16 %v6648, %v6647
      %v6813 = vpack.c.b16 %v6650, %v6649
      %v6814 = vpack.c.b16 %v6652, %v6651
      %v6815 = vpack.c.b16 %v6654, %v6653
      %v6816 = vpack.c.b16 %v6656, %v6655
      %v6817 = vpack.c.b16 %v6658, %v6657
      %v6818 = vpack.c.b16 %v6660, %v6659
      %v6819 = vpack.c.b16 %v6662, %v6661
      %v6820 = vpack.c.b16 %v6664, %v6663
      %v6821 = vpack.c.b16 %v6666, %v6665
      %v6822 = vpack.c.b16 %v6668, %v6667
      %v6823 = vpack.c.b16 %v6670, %v6669
      %v6824 = vpack.c.b16 %v6672, %v6671
      %v6825 = vpack.c.b16 %v6674, %v6673
      %v6826 = vpack.c.b16 %v6676, %v6675
      %v6827 = vpack.c.b16 %v6678, %v6677
      %v6828 = vpack.c.b16 %v6680, %v6679
      %v6829 = vpack.c.b16 %v6682, %v6681
      %v6830 = vpack.c.b16 %v6684, %v6683
      %v6831 = vpack.c.b16 %v6686, %v6685
      %v6832 = vpack.c.b16 %v6688, %v6687
      %v6833 = vpack.c.b16 %v6690, %v6689
      %v6834 = vpack.c.b16 %v6692, %v6691
      %v6835 = vpack.c.b16 %v6694, %v6693
      %v6836 = vpack.c.b16 %v6696, %v6695
      %v6837 = vpack.c.b16 %v6698, %v6697
      %v6838 = vpack.c.b16 %v6700, %v6699
      %v6839 = vpack.c.b16 %v6702, %v6701
      %v6840 = vpack.c.b16 %v6704, %v6703
      %v6841 = vpack.c.b16 %v6706, %v6705
      %v6842 = vpack.c.b16 %v6708, %v6707
      %v6843 = vpack.c.b16 %v6710, %v6709
      %v6844 = vpack.c.b16 %v6712, %v6711
      %v6845 = vpack.c.b16 %v6714, %v6713
      %v6846 = vpack.c.b16 %v6716, %v6715
      %v6847 = vpack.c.b16 %v6718, %v6717
      %v6848 = vpack.c.b16 %v6720, %v6719
      %6977 = vst [vmem:[%s235] sm:$0xff] %v6721
      %6978 = vst [vmem:[%s235 + $0x8] sm:$0xff] %v6722
      %6979 = vst [vmem:[%s235 + $0x10] sm:$0xff] %v6723
      %6980 = vst [vmem:[%s235 + $0x18] sm:$0xff] %v6724
      %6981 = vst [vmem:[%s235 + $0x20] sm:$0xff] %v6725
      %6982 = vst [vmem:[%s235 + $0x28] sm:$0xff] %v6726
      %6983 = vst [vmem:[%s235 + $0x30] sm:$0xff] %v6727
      %6984 = vst [vmem:[%s235 + $0x38] sm:$0xff] %v6728
      %6985 = vst [vmem:[%s235 + $0x40] sm:$0xff] %v6729
      %6986 = vst [vmem:[%s235 + $0x48] sm:$0xff] %v6730
      %6987 = vst [vmem:[%s235 + $0x50] sm:$0xff] %v6731
      %6988 = vst [vmem:[%s235 + $0x58] sm:$0xff] %v6732
      %6989 = vst [vmem:[%s235 + $0x60] sm:$0xff] %v6733
      %6990 = vst [vmem:[%s235 + $0x68] sm:$0xff] %v6734
      %6991 = vst [vmem:[%s235 + $0x70] sm:$0xff] %v6735
      %6992 = vst [vmem:[%s235 + $0x78] sm:$0xff] %v6736
      %6993 = vst [vmem:[%s235 + $0x80] sm:$0xff] %v6737
      %6994 = vst [vmem:[%s235 + $0x88] sm:$0xff] %v6738
      %6995 = vst [vmem:[%s235 + $0x90] sm:$0xff] %v6739
      %6996 = vst [vmem:[%s235 + $0x98] sm:$0xff] %v6740
      %6997 = vst [vmem:[%s235 + $0xa0] sm:$0xff] %v6741
      %6998 = vst [vmem:[%s235 + $0xa8] sm:$0xff] %v6742
      %6999 = vst [vmem:[%s235 + $0xb0] sm:$0xff] %v6743
      %7000 = vst [vmem:[%s235 + $0xb8] sm:$0xff] %v6744
      %7001 = vst [vmem:[%s235 + $0xc0] sm:$0xff] %v6745
      %7002 = vst [vmem:[%s235 + $0xc8] sm:$0xff] %v6746
      %7003 = vst [vmem:[%s235 + $0xd0] sm:$0xff] %v6747
      %7004 = vst [vmem:[%s235 + $0xd8] sm:$0xff] %v6748
      %7005 = vst [vmem:[%s235 + $0xe0] sm:$0xff] %v6749
      %7006 = vst [vmem:[%s235 + $0xe8] sm:$0xff] %v6750
      %7007 = vst [vmem:[%s235 + $0xf0] sm:$0xff] %v6751
      %7008 = vst [vmem:[%s235 + $0xf8] sm:$0xff] %v6752
      %7009 = vst [vmem:[%s235 + $0x100] sm:$0xff] %v6753
      %7010 = vst [vmem:[%s235 + $0x108] sm:$0xff] %v6754
      %7011 = vst [vmem:[%s235 + $0x110] sm:$0xff] %v6755
      %7012 = vst [vmem:[%s235 + $0x118] sm:$0xff] %v6756
      %7013 = vst [vmem:[%s235 + $0x120] sm:$0xff] %v6757
      %7014 = vst [vmem:[%s235 + $0x128] sm:$0xff] %v6758
      %7015 = vst [vmem:[%s235 + $0x130] sm:$0xff] %v6759
      %7016 = vst [vmem:[%s235 + $0x138] sm:$0xff] %v6760
      %7017 = vst [vmem:[%s235 + $0x140] sm:$0xff] %v6761
      %7018 = vst [vmem:[%s235 + $0x148] sm:$0xff] %v6762
      %7019 = vst [vmem:[%s235 + $0x150] sm:$0xff] %v6763
      %7020 = vst [vmem:[%s235 + $0x158] sm:$0xff] %v6764
      %7021 = vst [vmem:[%s235 + $0x160] sm:$0xff] %v6765
      %7022 = vst [vmem:[%s235 + $0x168] sm:$0xff] %v6766
      %7023 = vst [vmem:[%s235 + $0x170] sm:$0xff] %v6767
      %7024 = vst [vmem:[%s235 + $0x178] sm:$0xff] %v6768
      %7025 = vst [vmem:[%s235 + $0x180] sm:$0xff] %v6769
      %7026 = vst [vmem:[%s235 + $0x188] sm:$0xff] %v6770
      %7027 = vst [vmem:[%s235 + $0x190] sm:$0xff] %v6771
      %7028 = vst [vmem:[%s235 + $0x198] sm:$0xff] %v6772
      %7029 = vst [vmem:[%s235 + $0x1a0] sm:$0xff] %v6773
      %7030 = vst [vmem:[%s235 + $0x1a8] sm:$0xff] %v6774
      %7031 = vst [vmem:[%s235 + $0x1b0] sm:$0xff] %v6775
      %7032 = vst [vmem:[%s235 + $0x1b8] sm:$0xff] %v6776
      %7033 = vst [vmem:[%s235 + $0x1c0] sm:$0xff] %v6777
      %7034 = vst [vmem:[%s235 + $0x1c8] sm:$0xff] %v6778
      %7035 = vst [vmem:[%s235 + $0x1d0] sm:$0xff] %v6779
      %7036 = vst [vmem:[%s235 + $0x1d8] sm:$0xff] %v6780
      %7037 = vst [vmem:[%s235 + $0x1e0] sm:$0xff] %v6781
      %7038 = vst [vmem:[%s235 + $0x1e8] sm:$0xff] %v6782
      %7039 = vst [vmem:[%s235 + $0x1f0] sm:$0xff] %v6783
      %7040 = vst [vmem:[%s235 + $0x1f8] sm:$0xff] %v6784
      %7041 = vst [vmem:[%s235 + $0x200] sm:$0xff] %v6785
      %7042 = vst [vmem:[%s235 + $0x208] sm:$0xff] %v6786
      %7043 = vst [vmem:[%s235 + $0x210] sm:$0xff] %v6787
      %7044 = vst [vmem:[%s235 + $0x218] sm:$0xff] %v6788
      %7045 = vst [vmem:[%s235 + $0x220] sm:$0xff] %v6789
      %7046 = vst [vmem:[%s235 + $0x228] sm:$0xff] %v6790
      %7047 = vst [vmem:[%s235 + $0x230] sm:$0xff] %v6791
      %7048 = vst [vmem:[%s235 + $0x238] sm:$0xff] %v6792
      %7049 = vst [vmem:[%s235 + $0x240] sm:$0xff] %v6793
      %7050 = vst [vmem:[%s235 + $0x248] sm:$0xff] %v6794
      %7051 = vst [vmem:[%s235 + $0x250] sm:$0xff] %v6795
      %7052 = vst [vmem:[%s235 + $0x258] sm:$0xff] %v6796
      %7053 = vst [vmem:[%s235 + $0x260] sm:$0xff] %v6797
      %7054 = vst [vmem:[%s235 + $0x268] sm:$0xff] %v6798
      %7055 = vst [vmem:[%s235 + $0x270] sm:$0xff] %v6799
      %7056 = vst [vmem:[%s235 + $0x278] sm:$0xff] %v6800
      %7057 = vst [vmem:[%s235 + $0x280] sm:$0xff] %v6801
      %7058 = vst [vmem:[%s235 + $0x288] sm:$0xff] %v6802
      %7059 = vst [vmem:[%s235 + $0x290] sm:$0xff] %v6803
      %7060 = vst [vmem:[%s235 + $0x298] sm:$0xff] %v6804
      %7061 = vst [vmem:[%s235 + $0x2a0] sm:$0xff] %v6805
      %7062 = vst [vmem:[%s235 + $0x2a8] sm:$0xff] %v6806
      %7063 = vst [vmem:[%s235 + $0x2b0] sm:$0xff] %v6807
      %7064 = vst [vmem:[%s235 + $0x2b8] sm:$0xff] %v6808
      %7065 = vst [vmem:[%s235 + $0x2c0] sm:$0xff] %v6809
      %7066 = vst [vmem:[%s235 + $0x2c8] sm:$0xff] %v6810
      %7067 = vst [vmem:[%s235 + $0x2d0] sm:$0xff] %v6811
      %7068 = vst [vmem:[%s235 + $0x2d8] sm:$0xff] %v6812
      %7069 = vst [vmem:[%s235 + $0x2e0] sm:$0xff] %v6813
      %7070 = vst [vmem:[%s235 + $0x2e8] sm:$0xff] %v6814
      %7071 = vst [vmem:[%s235 + $0x2f0] sm:$0xff] %v6815
      %7072 = vst [vmem:[%s235 + $0x2f8] sm:$0xff] %v6816
      %7073 = vst [vmem:[%s235 + $0x300] sm:$0xff] %v6817
      %7074 = vst [vmem:[%s235 + $0x308] sm:$0xff] %v6818
      %7075 = vst [vmem:[%s235 + $0x310] sm:$0xff] %v6819
      %7076 = vst [vmem:[%s235 + $0x318] sm:$0xff] %v6820
      %7077 = vst [vmem:[%s235 + $0x320] sm:$0xff] %v6821
      %7078 = vst [vmem:[%s235 + $0x328] sm:$0xff] %v6822
      %7079 = vst [vmem:[%s235 + $0x330] sm:$0xff] %v6823
      %7080 = vst [vmem:[%s235 + $0x338] sm:$0xff] %v6824
      %7081 = vst [vmem:[%s235 + $0x340] sm:$0xff] %v6825
      %7082 = vst [vmem:[%s235 + $0x348] sm:$0xff] %v6826
      %7083 = vst [vmem:[%s235 + $0x350] sm:$0xff] %v6827
      %7084 = vst [vmem:[%s235 + $0x358] sm:$0xff] %v6828
      %7085 = vst [vmem:[%s235 + $0x360] sm:$0xff] %v6829
      %7086 = vst [vmem:[%s235 + $0x368] sm:$0xff] %v6830
      %7087 = vst [vmem:[%s235 + $0x370] sm:$0xff] %v6831
      %7088 = vst [vmem:[%s235 + $0x378] sm:$0xff] %v6832
      %7089 = vst [vmem:[%s235 + $0x380] sm:$0xff] %v6833
      %7090 = vst [vmem:[%s235 + $0x388] sm:$0xff] %v6834
      %7091 = vst [vmem:[%s235 + $0x390] sm:$0xff] %v6835
      %7092 = vst [vmem:[%s235 + $0x398] sm:$0xff] %v6836
      %7093 = vst [vmem:[%s235 + $0x3a0] sm:$0xff] %v6837
      %7094 = vst [vmem:[%s235 + $0x3a8] sm:$0xff] %v6838
      %7095 = vst [vmem:[%s235 + $0x3b0] sm:$0xff] %v6839
      %7096 = vst [vmem:[%s235 + $0x3b8] sm:$0xff] %v6840
      %7097 = vst [vmem:[%s235 + $0x3c0] sm:$0xff] %v6841
      %7098 = vst [vmem:[%s235 + $0x3c8] sm:$0xff] %v6842
      %7099 = vst [vmem:[%s235 + $0x3d0] sm:$0xff] %v6843
      %7100 = vst [vmem:[%s235 + $0x3d8] sm:$0xff] %v6844
      %7101 = vst [vmem:[%s235 + $0x3e0] sm:$0xff] %v6845
      %7102 = vst [vmem:[%s235 + $0x3e8] sm:$0xff] %v6846
      %7103 = vst [vmem:[%s235 + $0x3f0] sm:$0xff] %v6847
      %7104 = vst [vmem:[%s235 + $0x3f8] sm:$0xff] %v6848
      %s7105 = smul.u32 16, %s21
      %p7106 = scmp.lt.s32.totalorder %s7105, 31
      %s7107 = scalar_select %p7106, %s7105, 31
      %s7108 = smul.addr %s7107, 16
      %s7109 = smul.addr %s7108, 4
      %s7110 = scalar_lea.vmem %s4, %s7109
      // Predicated region
      $region33: #{ezvsl_forward.1} parent=31 // pred_check
        %p7111 = pneg %p121
      $region34: #{ezvsl_forward.1} parent=31 // pred_check_branch
        %7113 = sbr.rel (%p7111) target = $region36
      $region35: #{ezvsl_forward.1} parent=31 // pred_region
        %s7114 = smul.u32 16, %s21
      $region36: #{ezvsl_forward.1} parent=31 // pred_fallthru
        _
    $region32: #{ezvsl_forward.1} parent=5 // pred_fallthru
      _
    %p7115 = scmp.le.s32.totalorder 2, %s16
    // Predicated region
    $region37: #{ezvsl_forward.1} parent=5 // pred_check
      %p7116 = pneg %p7115
    $region38: #{ezvsl_forward.1} parent=5 // pred_check_branch
      %7118 = sbr.rel (%p7116) target = $region40
    $region39: #{ezvsl_forward.1} parent=5 // pred_region
      %s7119 = ssub.s32 %s16, 2
      // Predicated region
      $region41: #{ezvsl_forward.1} parent=39 // pred_check
        %p7120 = pneg %p127
      $region42: #{ezvsl_forward.1} parent=39 // pred_check_branch
        %7122 = sbr.rel (%p7120) target = $region44
      $region43: #{ezvsl_forward.1} parent=39 // pred_region
        %s7123 = smul.u32 16, %s22
        %p7124 = scmp.lt.s32.totalorder %s7123, 31
        %s7125 = scalar_select %p7124, %s7123, 31
        %s7126 = smul.addr %s7125, 16
        %s7127 = smul.addr %s7126, 4
        %s7128 = scalar_lea.vmem %s4, %s7127
      $region44: #{ezvsl_forward.1} parent=39 // pred_fallthru
        _
    $region40: #{ezvsl_forward.1} parent=5 // pred_fallthru
      _
  $region6: #{ezvsl_forward.1} parent=0 // loop_footer
    %s20 = sadd.s32 1, %s16
  $region7: #{ezvsl_forward.1} parent=0 // loop_footer_branch
    %15 = sbr.rel target = $region3
  $region8: #{ezvsl_forward.1} parent=0 // loop_exit
    _

</llo_original>
